<compile_context>
chip_gen: v7x
topology: tpu7x:2x2x1
jax: 0.10.0
libtpu: 0.0.40
codegen_flags: <defaults>
</compile_context>

<pallas_src>
import jax
import jax.numpy as jnp
from jax.experimental import pallas as pl
from jax.experimental.pallas import tpu as pltpu

IOTA = 0.5      # composite_percent
MU = 0.5        # boundary_percent
THETA0 = 3      # first max-pool kernel size
THETA = 5       # second max-pool kernel size
EPS = 1e-7
SMOOTH = 1.0    # DiceBCELoss default smooth

_MAX_PLANES_PER_BLOCK = 8     # bound for the unrolled per-plane loop
_MAX_BLOCK_BYTES = 2 << 20    # ~2 MiB per input block (x2 inputs, x2 pipeline bufs)


# ---------------------------------------------------------------------------
# In-kernel helpers: stride-1 "same" max pooling via XLU rolls + edge masks.
# All pooled operands are >= 0, so zero padding is mathematically identical to
# PyTorch's implicit -inf padding for max_pool2d here.
# ---------------------------------------------------------------------------
def _shift_cols(v, d, col_idx, w):
    """y[r, q] = v[r, q + d] if 0 <= q + d < w else 0   (static d != 0)."""
    rolled = pltpu.roll(v, (-d) % w, axis=1)          # lane rotation (XLU)
    mask = (col_idx < w - d) if d > 0 else (col_idx >= -d)
    return jnp.where(mask, rolled, 0.0)


def _shift_rows(v, d, row_idx, h):
    """y[r, q] = v[r + d, q] if 0 <= r + d < h else 0   (static d != 0)."""
    rolled = pltpu.roll(v, (-d) % h, axis=0)          # sublane rotation (XLU)
    mask = (row_idx < h - d) if d > 0 else (row_idx >= -d)
    return jnp.where(mask, rolled, 0.0)


def _max_pool_same(v, k, row_idx, col_idx):
    """Separable k x k, stride-1, 'same' max pool of a non-negative (H, W) tile."""
    h, w = v.shape
    r = (k - 1) // 2
    acc = v
    for d in range(1, r + 1):
        acc = jnp.maximum(acc, _shift_cols(v, d, col_idx, w))
        acc = jnp.maximum(acc, _shift_cols(v, -d, col_idx, w))
    out = acc
    for d in range(1, r + 1):
        out = jnp.maximum(out, _shift_rows(acc, d, row_idx, h))
        out = jnp.maximum(out, _shift_rows(acc, -d, row_idx, h))
    return out


# ---------------------------------------------------------------------------
# Pallas kernel + wrapper
# ---------------------------------------------------------------------------
def composite_boundary_loss(pred, target,
                            composite_percent=IOTA, boundary_percent=MU):
    n, c, h, w = pred.shape
    nplanes = n * c
    total_elems = float(nplanes * h * w)

    pred3 = pred.reshape(nplanes, h, w).astype(jnp.float32)
    tgt3 = target.reshape(nplanes, h, w).astype(jnp.float32)

    # Planes per grid step: largest divisor of nplanes within the VMEM /
    # unroll budget (test case: all 8 planes in a single step).
    limit = min(_MAX_PLANES_PER_BLOCK,
                max(1, _MAX_BLOCK_BYTES // (h * w * 4)),
                nplanes)
    block_p = 1
    for cand in range(1, limit + 1):
        if nplanes % cand == 0:
            block_p = cand
    num_blocks = nplanes // block_p

    def kernel(pred_ref, gt_ref, out_ref, inter_ref, st_ref, bce_ref, bnd_ref):
        i = pl.program_id(0)

        @pl.when(i == 0)
        def _init():
            inter_ref[...] = jnp.zeros((h, w), jnp.float32)
            st_ref[...] = jnp.zeros((h, w), jnp.float32)
            bce_ref[...] = jnp.zeros((h, w), jnp.float32)
            bnd_ref[...] = jnp.zeros((1, 1), jnp.float32)

        # Hoisted iotas for the shift edge masks (reused by every shift below).
        row_idx = jax.lax.broadcasted_iota(jnp.int32, (h, w), 0)
        col_idx = jax.lax.broadcasted_iota(jnp.int32, (h, w), 1)

        inter_part = jnp.zeros((h, w), jnp.float32)
        st_part = jnp.zeros((h, w), jnp.float32)
        bce_part = jnp.zeros((h, w), jnp.float32)
        bnd_part = jnp.zeros((1, 1), jnp.float32)

        for p in range(block_p):            # static unroll over planes in block
            x = pred_ref[p]                 # (H, W) logits
            t = gt_ref[p]                   # (H, W) {0, 1} mask

            # sigmoid + numerically stable BCE sharing one exp.
            e = jnp.exp(-jnp.abs(x))
            inv = 1.0 / (1.0 + e)           # sigmoid(|x|)
            s = jnp.where(x >= 0, inv, e * inv)
            bce = jnp.maximum(x, 0.0) - x * t + jnp.log(1.0 + e)

            # DiceBCE partial slabs (pure VPU adds; reduced once at the end).
            inter_part = inter_part + s * t
            st_part = st_part + (s + t)
            bce_part = bce_part + bce

            # Boundary-F1 for this plane.
            one_m_t = 1.0 - t
            one_m_s = 1.0 - s
            gt_b = _max_pool_same(one_m_t, THETA0, row_idx, col_idx) - one_m_t
            pred_b = _max_pool_same(one_m_s, THETA0, row_idx, col_idx) - one_m_s
            gt_b_ext = _max_pool_same(gt_b, THETA, row_idx, col_idx)
            pred_b_ext = _max_pool_same(pred_b, THETA, row_idx, col_idx)

            p_num = jnp.sum(pred_b * gt_b_ext, keepdims=True)     # (1, 1)
            p_den = jnp.sum(pred_b, keepdims=True) + EPS
            r_num = jnp.sum(pred_b_ext * gt_b, keepdims=True)
            r_den = jnp.sum(gt_b, keepdims=True) + EPS
            prec = p_num / p_den
            rec = r_num / r_den
            bf1 = 2.0 * prec * rec / (prec + rec + EPS)
            bnd_part = bnd_part + (1.0 - bf1)

        inter_ref[...] += inter_part
        st_ref[...] += st_part
        bce_ref[...] += bce_part
        bnd_ref[...] += bnd_part

        @pl.when(i == num_blocks - 1)
        def _finalize():
            inter = jnp.sum(inter_ref[...], keepdims=True)        # (1, 1)
            st = jnp.sum(st_ref[...], keepdims=True)
            bce_sum = jnp.sum(bce_ref[...], keepdims=True)
            dice = 1.0 - (2.0 * inter + SMOOTH) / (st + SMOOTH)
            bce_mean = bce_sum / total_elems
            composite = bce_mean + dice
            boundary = bnd_ref[...] / float(nplanes)
            out_ref[...] = (composite_percent * composite
                            + boundary_percent * boundary)

    out = pl.pallas_call(
        kernel,
        out_shape=jax.ShapeDtypeStruct((1, 1), jnp.float32),
        grid_spec=pltpu.PrefetchScalarGridSpec(
            num_scalar_prefetch=0,
            grid=(num_blocks,),
            in_specs=[
                pl.BlockSpec((block_p, h, w), lambda i: (i, 0, 0)),
                pl.BlockSpec((block_p, h, w), lambda i: (i, 0, 0)),
            ],
            out_specs=pl.BlockSpec((1, 1), lambda i: (0, 0)),
            scratch_shapes=[
                pltpu.VMEM((h, w), jnp.float32),   # sum(sigmoid * target)
                pltpu.VMEM((h, w), jnp.float32),   # sum(sigmoid + target)
                pltpu.VMEM((h, w), jnp.float32),   # sum(bce)
                pltpu.VMEM((1, 1), jnp.float32),   # sum over planes of 1 - BF1
            ],
        ),
        compiler_params=pltpu.CompilerParams(
            dimension_semantics=("arbitrary",)),
    )(pred3, tgt3)
    return out[0, 0]


# ---------------------------------------------------------------------------
# Pure-JAX reference (mirrors the PyTorch module) for a correctness check.
# ---------------------------------------------------------------------------
def _reference_loss(pred, gt):
    n, c, _, _ = pred.shape
    s = jax.nn.sigmoid(pred.astype(jnp.float32))
    t = gt.astype(jnp.float32)

    # DiceBCE
    sf = s.reshape(-1)
    tf = t.reshape(-1)
    inter = jnp.sum(sf * tf)
    dice = 1.0 - (2.0 * inter + SMOOTH) / (jnp.sum(sf) + jnp.sum(tf) + SMOOTH)
    bce = jnp.mean(-(tf * jnp.log(sf) + (1.0 - tf) * jnp.log(1.0 - sf)))
    composite = bce + dice

    # Boundary
    def mp(x, k):
        return jax.lax.reduce_window(x, -jnp.inf, jax.lax.max,
                                     (1, 1, k, k), (1, 1, 1, 1), "SAME")

    gt_b = mp(1.0 - t, THETA0) - (1.0 - t)
    pred_b = mp(1.0 - s, THETA0) - (1.0 - s)
    gt_b_ext = mp(gt_b, THETA)
    pred_b_ext = mp(pred_b, THETA)

    gb = gt_b.reshape(n, c, -1)
    pb = pred_b.reshape(n, c, -1)
    gbe = gt_b_ext.reshape(n, c, -1)
    pbe = pred_b_ext.reshape(n, c, -1)
    P = jnp.sum(pb * gbe, axis=2) / (jnp.sum(pb, axis=2) + EPS)
    R = jnp.sum(pbe * gb, axis=2) / (jnp.sum(gb, axis=2) + EPS)
    BF1 = 2.0 * P * R / (P + R + EPS)
    boundary = jnp.mean(1.0 - BF1)

    return IOTA * composite + MU * boundary


if __name__ == "__main__":
    key = jax.random.PRNGKey(0)
    k1, k2 = jax.random.split(key)
    N, C, H, W = 2, 4, 16, 16
    logits = jax.random.normal(k1, (N, C, H, W), dtype=jnp.float32)
    target = jax.random.bernoulli(k2, 0.5, (N, C, H, W)).astype(jnp.float32)

    loss = composite_boundary_loss(logits, target)
    loss = jax.block_until_ready(loss)

    ref = jax.block_until_ready(_reference_loss(logits, target))
    assert jnp.allclose(loss, ref, rtol=1e-4, atol=1e-5), (loss, ref)

    print("KERNEL_OK")
</pallas_src>

<mosaic_0001>
module attributes {stable_mosaic.version = 11 : i64} {
  func.func @kernel(%arg0: i32, %arg1: memref<8x16x16xf32, #tpu.memory_space<vmem>>, %arg2: memref<8x16x16xf32, #tpu.memory_space<vmem>>, %arg3: memref<1x1xf32, #tpu.memory_space<vmem>>, %arg4: memref<16x16xf32, #tpu.memory_space<vmem>>, %arg5: memref<16x16xf32, #tpu.memory_space<vmem>>, %arg6: memref<16x16xf32, #tpu.memory_space<vmem>>, %arg7: memref<1x1xf32, #tpu.memory_space<vmem>>) attributes {dimension_semantics = [#tpu.dimension_semantics<arbitrary>], iteration_bounds = array<i64: 1>, scalar_prefetch = 0 : i64, scratch_operands = 4 : i64, tpu.core_type = #tpu.core_type<tc>, window_params = [{transform_indices = @transform_0, window_bounds = array<i64: 8, 16, 16>}, {transform_indices = @transform_1, window_bounds = array<i64: 8, 16, 16>}, {pipeline_mode = #tpu.pipeline_mode<synchronous>, transform_indices = @transform_2, window_bounds = array<i64: 1, 1>}]} {
    %c0_i32 = arith.constant 0 : i32
    %0 = arith.cmpi eq, %arg0, %c0_i32 : i32
    %1 = arith.extui %0 : i1 to i32
    %c0_i32_0 = arith.constant 0 : i32
    %2 = arith.cmpi ne, %1, %c0_i32_0 : i32
    scf.if %2 {
      %cst_770 = arith.constant 0.000000e+00 : f32
      %1760 = vector.broadcast %cst_770 : f32 to vector<16x16xf32>
      %c0_771 = arith.constant 0 : index
      %c0_772 = arith.constant 0 : index
      %1761 = vector.load %arg4[%c0_771, %c0_772] : memref<16x16xf32, #tpu.memory_space<vmem>>, vector<16x16xf32>
      tpu.vector_store %arg4[%c0_771, %c0_772], %1760 {strides = array<i32>} : memref<16x16xf32, #tpu.memory_space<vmem>>, vector<16x16xf32>,
      %cst_773 = arith.constant 0.000000e+00 : f32
      %1762 = vector.broadcast %cst_773 : f32 to vector<16x16xf32>
      %c0_774 = arith.constant 0 : index
      %c0_775 = arith.constant 0 : index
      %1763 = vector.load %arg5[%c0_774, %c0_775] : memref<16x16xf32, #tpu.memory_space<vmem>>, vector<16x16xf32>
      tpu.vector_store %arg5[%c0_774, %c0_775], %1762 {strides = array<i32>} : memref<16x16xf32, #tpu.memory_space<vmem>>, vector<16x16xf32>,
      %cst_776 = arith.constant 0.000000e+00 : f32
      %1764 = vector.broadcast %cst_776 : f32 to vector<16x16xf32>
      %c0_777 = arith.constant 0 : index
      %c0_778 = arith.constant 0 : index
      %1765 = vector.load %arg6[%c0_777, %c0_778] : memref<16x16xf32, #tpu.memory_space<vmem>>, vector<16x16xf32>
      tpu.vector_store %arg6[%c0_777, %c0_778], %1764 {strides = array<i32>} : memref<16x16xf32, #tpu.memory_space<vmem>>, vector<16x16xf32>,
      %cst_779 = arith.constant 0.000000e+00 : f32
      %1766 = vector.broadcast %cst_779 : f32 to vector<1x1xf32>
      %c0_780 = arith.constant 0 : index
      %c0_781 = arith.constant 0 : index
      %1767 = vector.load %arg7[%c0_780, %c0_781] : memref<1x1xf32, #tpu.memory_space<vmem>>, vector<1x1xf32>
      tpu.vector_store %arg7[%c0_780, %c0_781], %1766 {strides = array<i32>} : memref<1x1xf32, #tpu.memory_space<vmem>>, vector<1x1xf32>,
    } else {
    }
    %3 = tpu.iota {dimensions = array<i32: 0>} : vector<16x16xi32>
    %4 = tpu.iota {dimensions = array<i32: 1>} : vector<16x16xi32>
    %cst = arith.constant 0.000000e+00 : f32
    %5 = vector.broadcast %cst : f32 to vector<16x16xf32>
    %cst_1 = arith.constant 0.000000e+00 : f32
    %6 = vector.broadcast %cst_1 : f32 to vector<16x16xf32>
    %cst_2 = arith.constant 0.000000e+00 : f32
    %7 = vector.broadcast %cst_2 : f32 to vector<16x16xf32>
    %cst_3 = arith.constant 0.000000e+00 : f32
    %8 = vector.broadcast %cst_3 : f32 to vector<1x1xf32>
    %c0 = arith.constant 0 : index
    %c0_4 = arith.constant 0 : index
    %c0_5 = arith.constant 0 : index
    %9 = vector.load %arg1[%c0, %c0_4, %c0_5] : memref<8x16x16xf32, #tpu.memory_space<vmem>>, vector<1x16x16xf32>
    %10 = vector.shape_cast %9 : vector<1x16x16xf32> to vector<16x16xf32>
    %c0_6 = arith.constant 0 : index
    %c0_7 = arith.constant 0 : index
    %c0_8 = arith.constant 0 : index
    %11 = vector.load %arg2[%c0_6, %c0_7, %c0_8] : memref<8x16x16xf32, #tpu.memory_space<vmem>>, vector<1x16x16xf32>
    %12 = vector.shape_cast %11 : vector<1x16x16xf32> to vector<16x16xf32>
    %13 = math.absf %10 : vector<16x16xf32>
    %cst_9 = arith.constant 0.000000e+00 : f32
    %14 = vector.broadcast %cst_9 : f32 to vector<16x16xf32>
    %15 = arith.subf %14, %13 : vector<16x16xf32>
    %16 = math.exp %15 : vector<16x16xf32>
    %cst_10 = arith.constant 1.000000e+00 : f32
    %17 = vector.broadcast %cst_10 : f32 to vector<16x16xf32>
    %18 = arith.addf %17, %16 : vector<16x16xf32>
    %cst_11 = arith.constant 1.000000e+00 : f32
    %19 = vector.broadcast %cst_11 : f32 to vector<16x16xf32>
    %20 = arith.divf %19, %18 : vector<16x16xf32>
    %cst_12 = arith.constant 0.000000e+00 : f32
    %21 = vector.broadcast %cst_12 : f32 to vector<16x16xf32>
    %22 = arith.cmpf oge, %10, %21 : vector<16x16xf32>
    %23 = arith.mulf %16, %20 : vector<16x16xf32>
    %24 = arith.select %22, %20, %23 : vector<16x16xi1>, vector<16x16xf32>
    %cst_13 = arith.constant 0.000000e+00 : f32
    %25 = vector.broadcast %cst_13 : f32 to vector<16x16xf32>
    %26 = arith.maximumf %10, %25 : vector<16x16xf32>
    %27 = arith.mulf %10, %12 : vector<16x16xf32>
    %28 = arith.subf %26, %27 : vector<16x16xf32>
    %cst_14 = arith.constant 1.000000e+00 : f32
    %29 = vector.broadcast %cst_14 : f32 to vector<16x16xf32>
    %30 = arith.addf %29, %16 : vector<16x16xf32>
    %31 = math.log %30 : vector<16x16xf32>
    %32 = arith.addf %28, %31 : vector<16x16xf32>
    %33 = arith.mulf %24, %12 : vector<16x16xf32>
    %34 = arith.addf %5, %33 : vector<16x16xf32>
    %35 = arith.addf %24, %12 : vector<16x16xf32>
    %36 = arith.addf %6, %35 : vector<16x16xf32>
    %37 = arith.addf %7, %32 : vector<16x16xf32>
    %cst_15 = arith.constant 1.000000e+00 : f32
    %38 = vector.broadcast %cst_15 : f32 to vector<16x16xf32>
    %39 = arith.subf %38, %12 : vector<16x16xf32>
    %cst_16 = arith.constant 1.000000e+00 : f32
    %40 = vector.broadcast %cst_16 : f32 to vector<16x16xf32>
    %41 = arith.subf %40, %24 : vector<16x16xf32>
    %c15_i32 = arith.constant 15 : i32
    %42 = tpu.dynamic_rotate %39 by %c15_i32 dim 1 : vector<16x16xf32>, i32 -> vector<16x16xf32>
    %c15_i32_17 = arith.constant 15 : i32
    %43 = vector.broadcast %c15_i32_17 : i32 to vector<16x16xi32>
    %44 = arith.cmpi slt, %4, %43 : vector<16x16xi32>
    %cst_18 = arith.constant 0.000000e+00 : f32
    %45 = vector.broadcast %cst_18 : f32 to vector<16x16xf32>
    %46 = arith.select %44, %42, %45 : vector<16x16xi1>, vector<16x16xf32>
    %47 = arith.maximumf %39, %46 : vector<16x16xf32>
    %c1_i32 = arith.constant 1 : i32
    %48 = tpu.dynamic_rotate %39 by %c1_i32 dim 1 : vector<16x16xf32>, i32 -> vector<16x16xf32>
    %c1_i32_19 = arith.constant 1 : i32
    %49 = vector.broadcast %c1_i32_19 : i32 to vector<16x16xi32>
    %50 = arith.cmpi sge, %4, %49 : vector<16x16xi32>
    %cst_20 = arith.constant 0.000000e+00 : f32
    %51 = vector.broadcast %cst_20 : f32 to vector<16x16xf32>
    %52 = arith.select %50, %48, %51 : vector<16x16xi1>, vector<16x16xf32>
    %53 = arith.maximumf %47, %52 : vector<16x16xf32>
    %c15_i32_21 = arith.constant 15 : i32
    %54 = tpu.dynamic_rotate %53 by %c15_i32_21 dim 0 : vector<16x16xf32>, i32 -> vector<16x16xf32>
    %c15_i32_22 = arith.constant 15 : i32
    %55 = vector.broadcast %c15_i32_22 : i32 to vector<16x16xi32>
    %56 = arith.cmpi slt, %3, %55 : vector<16x16xi32>
    %cst_23 = arith.constant 0.000000e+00 : f32
    %57 = vector.broadcast %cst_23 : f32 to vector<16x16xf32>
    %58 = arith.select %56, %54, %57 : vector<16x16xi1>, vector<16x16xf32>
    %59 = arith.maximumf %53, %58 : vector<16x16xf32>
    %c1_i32_24 = arith.constant 1 : i32
    %60 = tpu.dynamic_rotate %53 by %c1_i32_24 dim 0 : vector<16x16xf32>, i32 -> vector<16x16xf32>
    %c1_i32_25 = arith.constant 1 : i32
    %61 = vector.broadcast %c1_i32_25 : i32 to vector<16x16xi32>
    %62 = arith.cmpi sge, %3, %61 : vector<16x16xi32>
    %cst_26 = arith.constant 0.000000e+00 : f32
    %63 = vector.broadcast %cst_26 : f32 to vector<16x16xf32>
    %64 = arith.select %62, %60, %63 : vector<16x16xi1>, vector<16x16xf32>
    %65 = arith.maximumf %59, %64 : vector<16x16xf32>
    %66 = arith.subf %65, %39 : vector<16x16xf32>
    %c15_i32_27 = arith.constant 15 : i32
    %67 = tpu.dynamic_rotate %41 by %c15_i32_27 dim 1 : vector<16x16xf32>, i32 -> vector<16x16xf32>
    %c15_i32_28 = arith.constant 15 : i32
    %68 = vector.broadcast %c15_i32_28 : i32 to vector<16x16xi32>
    %69 = arith.cmpi slt, %4, %68 : vector<16x16xi32>
    %cst_29 = arith.constant 0.000000e+00 : f32
    %70 = vector.broadcast %cst_29 : f32 to vector<16x16xf32>
    %71 = arith.select %69, %67, %70 : vector<16x16xi1>, vector<16x16xf32>
    %72 = arith.maximumf %41, %71 : vector<16x16xf32>
    %c1_i32_30 = arith.constant 1 : i32
    %73 = tpu.dynamic_rotate %41 by %c1_i32_30 dim 1 : vector<16x16xf32>, i32 -> vector<16x16xf32>
    %c1_i32_31 = arith.constant 1 : i32
    %74 = vector.broadcast %c1_i32_31 : i32 to vector<16x16xi32>
    %75 = arith.cmpi sge, %4, %74 : vector<16x16xi32>
    %cst_32 = arith.constant 0.000000e+00 : f32
    %76 = vector.broadcast %cst_32 : f32 to vector<16x16xf32>
    %77 = arith.select %75, %73, %76 : vector<16x16xi1>, vector<16x16xf32>
    %78 = arith.maximumf %72, %77 : vector<16x16xf32>
    %c15_i32_33 = arith.constant 15 : i32
    %79 = tpu.dynamic_rotate %78 by %c15_i32_33 dim 0 : vector<16x16xf32>, i32 -> vector<16x16xf32>
    %c15_i32_34 = arith.constant 15 : i32
    %80 = vector.broadcast %c15_i32_34 : i32 to vector<16x16xi32>
    %81 = arith.cmpi slt, %3, %80 : vector<16x16xi32>
    %cst_35 = arith.constant 0.000000e+00 : f32
    %82 = vector.broadcast %cst_35 : f32 to vector<16x16xf32>
    %83 = arith.select %81, %79, %82 : vector<16x16xi1>, vector<16x16xf32>
    %84 = arith.maximumf %78, %83 : vector<16x16xf32>
    %c1_i32_36 = arith.constant 1 : i32
    %85 = tpu.dynamic_rotate %78 by %c1_i32_36 dim 0 : vector<16x16xf32>, i32 -> vector<16x16xf32>
    %c1_i32_37 = arith.constant 1 : i32
    %86 = vector.broadcast %c1_i32_37 : i32 to vector<16x16xi32>
    %87 = arith.cmpi sge, %3, %86 : vector<16x16xi32>
    %cst_38 = arith.constant 0.000000e+00 : f32
    %88 = vector.broadcast %cst_38 : f32 to vector<16x16xf32>
    %89 = arith.select %87, %85, %88 : vector<16x16xi1>, vector<16x16xf32>
    %90 = arith.maximumf %84, %89 : vector<16x16xf32>
    %91 = arith.subf %90, %41 : vector<16x16xf32>
    %c15_i32_39 = arith.constant 15 : i32
    %92 = tpu.dynamic_rotate %66 by %c15_i32_39 dim 1 : vector<16x16xf32>, i32 -> vector<16x16xf32>
    %c15_i32_40 = arith.constant 15 : i32
    %93 = vector.broadcast %c15_i32_40 : i32 to vector<16x16xi32>
    %94 = arith.cmpi slt, %4, %93 : vector<16x16xi32>
    %cst_41 = arith.constant 0.000000e+00 : f32
    %95 = vector.broadcast %cst_41 : f32 to vector<16x16xf32>
    %96 = arith.select %94, %92, %95 : vector<16x16xi1>, vector<16x16xf32>
    %97 = arith.maximumf %66, %96 : vector<16x16xf32>
    %c1_i32_42 = arith.constant 1 : i32
    %98 = tpu.dynamic_rotate %66 by %c1_i32_42 dim 1 : vector<16x16xf32>, i32 -> vector<16x16xf32>
    %c1_i32_43 = arith.constant 1 : i32
    %99 = vector.broadcast %c1_i32_43 : i32 to vector<16x16xi32>
    %100 = arith.cmpi sge, %4, %99 : vector<16x16xi32>
    %cst_44 = arith.constant 0.000000e+00 : f32
    %101 = vector.broadcast %cst_44 : f32 to vector<16x16xf32>
    %102 = arith.select %100, %98, %101 : vector<16x16xi1>, vector<16x16xf32>
    %103 = arith.maximumf %97, %102 : vector<16x16xf32>
    %c14_i32 = arith.constant 14 : i32
    %104 = tpu.dynamic_rotate %66 by %c14_i32 dim 1 : vector<16x16xf32>, i32 -> vector<16x16xf32>
    %c14_i32_45 = arith.constant 14 : i32
    %105 = vector.broadcast %c14_i32_45 : i32 to vector<16x16xi32>
    %106 = arith.cmpi slt, %4, %105 : vector<16x16xi32>
    %cst_46 = arith.constant 0.000000e+00 : f32
    %107 = vector.broadcast %cst_46 : f32 to vector<16x16xf32>
    %108 = arith.select %106, %104, %107 : vector<16x16xi1>, vector<16x16xf32>
    %109 = arith.maximumf %103, %108 : vector<16x16xf32>
    %c2_i32 = arith.constant 2 : i32
    %110 = tpu.dynamic_rotate %66 by %c2_i32 dim 1 : vector<16x16xf32>, i32 -> vector<16x16xf32>
    %c2_i32_47 = arith.constant 2 : i32
    %111 = vector.broadcast %c2_i32_47 : i32 to vector<16x16xi32>
    %112 = arith.cmpi sge, %4, %111 : vector<16x16xi32>
    %cst_48 = arith.constant 0.000000e+00 : f32
    %113 = vector.broadcast %cst_48 : f32 to vector<16x16xf32>
    %114 = arith.select %112, %110, %113 : vector<16x16xi1>, vector<16x16xf32>
    %115 = arith.maximumf %109, %114 : vector<16x16xf32>
    %c15_i32_49 = arith.constant 15 : i32
    %116 = tpu.dynamic_rotate %115 by %c15_i32_49 dim 0 : vector<16x16xf32>, i32 -> vector<16x16xf32>
    %c15_i32_50 = arith.constant 15 : i32
    %117 = vector.broadcast %c15_i32_50 : i32 to vector<16x16xi32>
    %118 = arith.cmpi slt, %3, %117 : vector<16x16xi32>
    %cst_51 = arith.constant 0.000000e+00 : f32
    %119 = vector.broadcast %cst_51 : f32 to vector<16x16xf32>
    %120 = arith.select %118, %116, %119 : vector<16x16xi1>, vector<16x16xf32>
    %121 = arith.maximumf %115, %120 : vector<16x16xf32>
    %c1_i32_52 = arith.constant 1 : i32
    %122 = tpu.dynamic_rotate %115 by %c1_i32_52 dim 0 : vector<16x16xf32>, i32 -> vector<16x16xf32>
    %c1_i32_53 = arith.constant 1 : i32
    %123 = vector.broadcast %c1_i32_53 : i32 to vector<16x16xi32>
    %124 = arith.cmpi sge, %3, %123 : vector<16x16xi32>
    %cst_54 = arith.constant 0.000000e+00 : f32
    %125 = vector.broadcast %cst_54 : f32 to vector<16x16xf32>
    %126 = arith.select %124, %122, %125 : vector<16x16xi1>, vector<16x16xf32>
    %127 = arith.maximumf %121, %126 : vector<16x16xf32>
    %c14_i32_55 = arith.constant 14 : i32
    %128 = tpu.dynamic_rotate %115 by %c14_i32_55 dim 0 : vector<16x16xf32>, i32 -> vector<16x16xf32>
    %c14_i32_56 = arith.constant 14 : i32
    %129 = vector.broadcast %c14_i32_56 : i32 to vector<16x16xi32>
    %130 = arith.cmpi slt, %3, %129 : vector<16x16xi32>
    %cst_57 = arith.constant 0.000000e+00 : f32
    %131 = vector.broadcast %cst_57 : f32 to vector<16x16xf32>
    %132 = arith.select %130, %128, %131 : vector<16x16xi1>, vector<16x16xf32>
    %133 = arith.maximumf %127, %132 : vector<16x16xf32>
    %c2_i32_58 = arith.constant 2 : i32
    %134 = tpu.dynamic_rotate %115 by %c2_i32_58 dim 0 : vector<16x16xf32>, i32 -> vector<16x16xf32>
    %c2_i32_59 = arith.constant 2 : i32
    %135 = vector.broadcast %c2_i32_59 : i32 to vector<16x16xi32>
    %136 = arith.cmpi sge, %3, %135 : vector<16x16xi32>
    %cst_60 = arith.constant 0.000000e+00 : f32
    %137 = vector.broadcast %cst_60 : f32 to vector<16x16xf32>
    %138 = arith.select %136, %134, %137 : vector<16x16xi1>, vector<16x16xf32>
    %139 = arith.maximumf %133, %138 : vector<16x16xf32>
    %c15_i32_61 = arith.constant 15 : i32
    %140 = tpu.dynamic_rotate %91 by %c15_i32_61 dim 1 : vector<16x16xf32>, i32 -> vector<16x16xf32>
    %c15_i32_62 = arith.constant 15 : i32
    %141 = vector.broadcast %c15_i32_62 : i32 to vector<16x16xi32>
    %142 = arith.cmpi slt, %4, %141 : vector<16x16xi32>
    %cst_63 = arith.constant 0.000000e+00 : f32
    %143 = vector.broadcast %cst_63 : f32 to vector<16x16xf32>
    %144 = arith.select %142, %140, %143 : vector<16x16xi1>, vector<16x16xf32>
    %145 = arith.maximumf %91, %144 : vector<16x16xf32>
    %c1_i32_64 = arith.constant 1 : i32
    %146 = tpu.dynamic_rotate %91 by %c1_i32_64 dim 1 : vector<16x16xf32>, i32 -> vector<16x16xf32>
    %c1_i32_65 = arith.constant 1 : i32
    %147 = vector.broadcast %c1_i32_65 : i32 to vector<16x16xi32>
    %148 = arith.cmpi sge, %4, %147 : vector<16x16xi32>
    %cst_66 = arith.constant 0.000000e+00 : f32
    %149 = vector.broadcast %cst_66 : f32 to vector<16x16xf32>
    %150 = arith.select %148, %146, %149 : vector<16x16xi1>, vector<16x16xf32>
    %151 = arith.maximumf %145, %150 : vector<16x16xf32>
    %c14_i32_67 = arith.constant 14 : i32
    %152 = tpu.dynamic_rotate %91 by %c14_i32_67 dim 1 : vector<16x16xf32>, i32 -> vector<16x16xf32>
    %c14_i32_68 = arith.constant 14 : i32
    %153 = vector.broadcast %c14_i32_68 : i32 to vector<16x16xi32>
    %154 = arith.cmpi slt, %4, %153 : vector<16x16xi32>
    %cst_69 = arith.constant 0.000000e+00 : f32
    %155 = vector.broadcast %cst_69 : f32 to vector<16x16xf32>
    %156 = arith.select %154, %152, %155 : vector<16x16xi1>, vector<16x16xf32>
    %157 = arith.maximumf %151, %156 : vector<16x16xf32>
    %c2_i32_70 = arith.constant 2 : i32
    %158 = tpu.dynamic_rotate %91 by %c2_i32_70 dim 1 : vector<16x16xf32>, i32 -> vector<16x16xf32>
    %c2_i32_71 = arith.constant 2 : i32
    %159 = vector.broadcast %c2_i32_71 : i32 to vector<16x16xi32>
    %160 = arith.cmpi sge, %4, %159 : vector<16x16xi32>
    %cst_72 = arith.constant 0.000000e+00 : f32
    %161 = vector.broadcast %cst_72 : f32 to vector<16x16xf32>
    %162 = arith.select %160, %158, %161 : vector<16x16xi1>, vector<16x16xf32>
    %163 = arith.maximumf %157, %162 : vector<16x16xf32>
    %c15_i32_73 = arith.constant 15 : i32
    %164 = tpu.dynamic_rotate %163 by %c15_i32_73 dim 0 : vector<16x16xf32>, i32 -> vector<16x16xf32>
    %c15_i32_74 = arith.constant 15 : i32
    %165 = vector.broadcast %c15_i32_74 : i32 to vector<16x16xi32>
    %166 = arith.cmpi slt, %3, %165 : vector<16x16xi32>
    %cst_75 = arith.constant 0.000000e+00 : f32
    %167 = vector.broadcast %cst_75 : f32 to vector<16x16xf32>
    %168 = arith.select %166, %164, %167 : vector<16x16xi1>, vector<16x16xf32>
    %169 = arith.maximumf %163, %168 : vector<16x16xf32>
    %c1_i32_76 = arith.constant 1 : i32
    %170 = tpu.dynamic_rotate %163 by %c1_i32_76 dim 0 : vector<16x16xf32>, i32 -> vector<16x16xf32>
    %c1_i32_77 = arith.constant 1 : i32
    %171 = vector.broadcast %c1_i32_77 : i32 to vector<16x16xi32>
    %172 = arith.cmpi sge, %3, %171 : vector<16x16xi32>
    %cst_78 = arith.constant 0.000000e+00 : f32
    %173 = vector.broadcast %cst_78 : f32 to vector<16x16xf32>
    %174 = arith.select %172, %170, %173 : vector<16x16xi1>, vector<16x16xf32>
    %175 = arith.maximumf %169, %174 : vector<16x16xf32>
    %c14_i32_79 = arith.constant 14 : i32
    %176 = tpu.dynamic_rotate %163 by %c14_i32_79 dim 0 : vector<16x16xf32>, i32 -> vector<16x16xf32>
    %c14_i32_80 = arith.constant 14 : i32
    %177 = vector.broadcast %c14_i32_80 : i32 to vector<16x16xi32>
    %178 = arith.cmpi slt, %3, %177 : vector<16x16xi32>
    %cst_81 = arith.constant 0.000000e+00 : f32
    %179 = vector.broadcast %cst_81 : f32 to vector<16x16xf32>
    %180 = arith.select %178, %176, %179 : vector<16x16xi1>, vector<16x16xf32>
    %181 = arith.maximumf %175, %180 : vector<16x16xf32>
    %c2_i32_82 = arith.constant 2 : i32
    %182 = tpu.dynamic_rotate %163 by %c2_i32_82 dim 0 : vector<16x16xf32>, i32 -> vector<16x16xf32>
    %c2_i32_83 = arith.constant 2 : i32
    %183 = vector.broadcast %c2_i32_83 : i32 to vector<16x16xi32>
    %184 = arith.cmpi sge, %3, %183 : vector<16x16xi32>
    %cst_84 = arith.constant 0.000000e+00 : f32
    %185 = vector.broadcast %cst_84 : f32 to vector<16x16xf32>
    %186 = arith.select %184, %182, %185 : vector<16x16xi1>, vector<16x16xf32>
    %187 = arith.maximumf %181, %186 : vector<16x16xf32>
    %188 = arith.mulf %91, %139 : vector<16x16xf32>
    %189 = vector.shape_cast %188 : vector<16x16xf32> to vector<1x16x16xf32>
    %cst_85 = arith.constant dense<0.000000e+00> : vector<1xf32>
    %190 = vector.multi_reduction <add>, %189, %cst_85 [1, 2] : vector<1x16x16xf32> to vector<1xf32>
    %191 = vector.shape_cast %190 : vector<1xf32> to vector<1x1x1xf32>
    %192 = vector.extract %191[0, 0, 0] : f32 from vector<1x1x1xf32>
    %193 = vector.broadcast %192 : f32 to vector<1x1xf32>
    %194 = vector.shape_cast %91 : vector<16x16xf32> to vector<1x16x16xf32>
    %cst_86 = arith.constant dense<0.000000e+00> : vector<1xf32>
    %195 = vector.multi_reduction <add>, %194, %cst_86 [1, 2] : vector<1x16x16xf32> to vector<1xf32>
    %196 = vector.shape_cast %195 : vector<1xf32> to vector<1x1x1xf32>
    %197 = vector.extract %196[0, 0, 0] : f32 from vector<1x1x1xf32>
    %198 = vector.broadcast %197 : f32 to vector<1x1xf32>
    %cst_87 = arith.constant 1.000000e-07 : f32
    %199 = vector.broadcast %cst_87 : f32 to vector<1x1xf32>
    %200 = arith.addf %198, %199 : vector<1x1xf32>
    %201 = arith.mulf %187, %66 : vector<16x16xf32>
    %202 = vector.shape_cast %201 : vector<16x16xf32> to vector<1x16x16xf32>
    %cst_88 = arith.constant dense<0.000000e+00> : vector<1xf32>
    %203 = vector.multi_reduction <add>, %202, %cst_88 [1, 2] : vector<1x16x16xf32> to vector<1xf32>
    %204 = vector.shape_cast %203 : vector<1xf32> to vector<1x1x1xf32>
    %205 = vector.extract %204[0, 0, 0] : f32 from vector<1x1x1xf32>
    %206 = vector.broadcast %205 : f32 to vector<1x1xf32>
    %207 = vector.shape_cast %66 : vector<16x16xf32> to vector<1x16x16xf32>
    %cst_89 = arith.constant dense<0.000000e+00> : vector<1xf32>
    %208 = vector.multi_reduction <add>, %207, %cst_89 [1, 2] : vector<1x16x16xf32> to vector<1xf32>
    %209 = vector.shape_cast %208 : vector<1xf32> to vector<1x1x1xf32>
    %210 = vector.extract %209[0, 0, 0] : f32 from vector<1x1x1xf32>
    %211 = vector.broadcast %210 : f32 to vector<1x1xf32>
    %cst_90 = arith.constant 1.000000e-07 : f32
    %212 = vector.broadcast %cst_90 : f32 to vector<1x1xf32>
    %213 = arith.addf %211, %212 : vector<1x1xf32>
    %214 = arith.divf %193, %200 : vector<1x1xf32>
    %215 = arith.divf %206, %213 : vector<1x1xf32>
    %cst_91 = arith.constant 2.000000e+00 : f32
    %216 = vector.broadcast %cst_91 : f32 to vector<1x1xf32>
    %217 = arith.mulf %216, %214 : vector<1x1xf32>
    %218 = arith.mulf %217, %215 : vector<1x1xf32>
    %219 = arith.addf %214, %215 : vector<1x1xf32>
    %cst_92 = arith.constant 1.000000e-07 : f32
    %220 = vector.broadcast %cst_92 : f32 to vector<1x1xf32>
    %221 = arith.addf %219, %220 : vector<1x1xf32>
    %222 = arith.divf %218, %221 : vector<1x1xf32>
    %cst_93 = arith.constant 1.000000e+00 : f32
    %223 = vector.broadcast %cst_93 : f32 to vector<1x1xf32>
    %224 = arith.subf %223, %222 : vector<1x1xf32>
    %225 = arith.addf %8, %224 : vector<1x1xf32>
    %c1 = arith.constant 1 : index
    %c0_94 = arith.constant 0 : index
    %c0_95 = arith.constant 0 : index
    %226 = vector.load %arg1[%c1, %c0_94, %c0_95] : memref<8x16x16xf32, #tpu.memory_space<vmem>>, vector<1x16x16xf32>
    %227 = vector.shape_cast %226 : vector<1x16x16xf32> to vector<16x16xf32>
    %c1_96 = arith.constant 1 : index
    %c0_97 = arith.constant 0 : index
    %c0_98 = arith.constant 0 : index
    %228 = vector.load %arg2[%c1_96, %c0_97, %c0_98] : memref<8x16x16xf32, #tpu.memory_space<vmem>>, vector<1x16x16xf32>
    %229 = vector.shape_cast %228 : vector<1x16x16xf32> to vector<16x16xf32>
    %230 = math.absf %227 : vector<16x16xf32>
    %cst_99 = arith.constant 0.000000e+00 : f32
    %231 = vector.broadcast %cst_99 : f32 to vector<16x16xf32>
    %232 = arith.subf %231, %230 : vector<16x16xf32>
    %233 = math.exp %232 : vector<16x16xf32>
    %cst_100 = arith.constant 1.000000e+00 : f32
    %234 = vector.broadcast %cst_100 : f32 to vector<16x16xf32>
    %235 = arith.addf %234, %233 : vector<16x16xf32>
    %cst_101 = arith.constant 1.000000e+00 : f32
    %236 = vector.broadcast %cst_101 : f32 to vector<16x16xf32>
    %237 = arith.divf %236, %235 : vector<16x16xf32>
    %cst_102 = arith.constant 0.000000e+00 : f32
    %238 = vector.broadcast %cst_102 : f32 to vector<16x16xf32>
    %239 = arith.cmpf oge, %227, %238 : vector<16x16xf32>
    %240 = arith.mulf %233, %237 : vector<16x16xf32>
    %241 = arith.select %239, %237, %240 : vector<16x16xi1>, vector<16x16xf32>
    %cst_103 = arith.constant 0.000000e+00 : f32
    %242 = vector.broadcast %cst_103 : f32 to vector<16x16xf32>
    %243 = arith.maximumf %227, %242 : vector<16x16xf32>
    %244 = arith.mulf %227, %229 : vector<16x16xf32>
    %245 = arith.subf %243, %244 : vector<16x16xf32>
    %cst_104 = arith.constant 1.000000e+00 : f32
    %246 = vector.broadcast %cst_104 : f32 to vector<16x16xf32>
    %247 = arith.addf %246, %233 : vector<16x16xf32>
    %248 = math.log %247 : vector<16x16xf32>
    %249 = arith.addf %245, %248 : vector<16x16xf32>
    %250 = arith.mulf %241, %229 : vector<16x16xf32>
    %251 = arith.addf %34, %250 : vector<16x16xf32>
    %252 = arith.addf %241, %229 : vector<16x16xf32>
    %253 = arith.addf %36, %252 : vector<16x16xf32>
    %254 = arith.addf %37, %249 : vector<16x16xf32>
    %cst_105 = arith.constant 1.000000e+00 : f32
    %255 = vector.broadcast %cst_105 : f32 to vector<16x16xf32>
    %256 = arith.subf %255, %229 : vector<16x16xf32>
    %cst_106 = arith.constant 1.000000e+00 : f32
    %257 = vector.broadcast %cst_106 : f32 to vector<16x16xf32>
    %258 = arith.subf %257, %241 : vector<16x16xf32>
    %c15_i32_107 = arith.constant 15 : i32
    %259 = tpu.dynamic_rotate %256 by %c15_i32_107 dim 1 : vector<16x16xf32>, i32 -> vector<16x16xf32>
    %c15_i32_108 = arith.constant 15 : i32
    %260 = vector.broadcast %c15_i32_108 : i32 to vector<16x16xi32>
    %261 = arith.cmpi slt, %4, %260 : vector<16x16xi32>
    %cst_109 = arith.constant 0.000000e+00 : f32
    %262 = vector.broadcast %cst_109 : f32 to vector<16x16xf32>
    %263 = arith.select %261, %259, %262 : vector<16x16xi1>, vector<16x16xf32>
    %264 = arith.maximumf %256, %263 : vector<16x16xf32>
    %c1_i32_110 = arith.constant 1 : i32
    %265 = tpu.dynamic_rotate %256 by %c1_i32_110 dim 1 : vector<16x16xf32>, i32 -> vector<16x16xf32>
    %c1_i32_111 = arith.constant 1 : i32
    %266 = vector.broadcast %c1_i32_111 : i32 to vector<16x16xi32>
    %267 = arith.cmpi sge, %4, %266 : vector<16x16xi32>
    %cst_112 = arith.constant 0.000000e+00 : f32
    %268 = vector.broadcast %cst_112 : f32 to vector<16x16xf32>
    %269 = arith.select %267, %265, %268 : vector<16x16xi1>, vector<16x16xf32>
    %270 = arith.maximumf %264, %269 : vector<16x16xf32>
    %c15_i32_113 = arith.constant 15 : i32
    %271 = tpu.dynamic_rotate %270 by %c15_i32_113 dim 0 : vector<16x16xf32>, i32 -> vector<16x16xf32>
    %c15_i32_114 = arith.constant 15 : i32
    %272 = vector.broadcast %c15_i32_114 : i32 to vector<16x16xi32>
    %273 = arith.cmpi slt, %3, %272 : vector<16x16xi32>
    %cst_115 = arith.constant 0.000000e+00 : f32
    %274 = vector.broadcast %cst_115 : f32 to vector<16x16xf32>
    %275 = arith.select %273, %271, %274 : vector<16x16xi1>, vector<16x16xf32>
    %276 = arith.maximumf %270, %275 : vector<16x16xf32>
    %c1_i32_116 = arith.constant 1 : i32
    %277 = tpu.dynamic_rotate %270 by %c1_i32_116 dim 0 : vector<16x16xf32>, i32 -> vector<16x16xf32>
    %c1_i32_117 = arith.constant 1 : i32
    %278 = vector.broadcast %c1_i32_117 : i32 to vector<16x16xi32>
    %279 = arith.cmpi sge, %3, %278 : vector<16x16xi32>
    %cst_118 = arith.constant 0.000000e+00 : f32
    %280 = vector.broadcast %cst_118 : f32 to vector<16x16xf32>
    %281 = arith.select %279, %277, %280 : vector<16x16xi1>, vector<16x16xf32>
    %282 = arith.maximumf %276, %281 : vector<16x16xf32>
    %283 = arith.subf %282, %256 : vector<16x16xf32>
    %c15_i32_119 = arith.constant 15 : i32
    %284 = tpu.dynamic_rotate %258 by %c15_i32_119 dim 1 : vector<16x16xf32>, i32 -> vector<16x16xf32>
    %c15_i32_120 = arith.constant 15 : i32
    %285 = vector.broadcast %c15_i32_120 : i32 to vector<16x16xi32>
    %286 = arith.cmpi slt, %4, %285 : vector<16x16xi32>
    %cst_121 = arith.constant 0.000000e+00 : f32
    %287 = vector.broadcast %cst_121 : f32 to vector<16x16xf32>
    %288 = arith.select %286, %284, %287 : vector<16x16xi1>, vector<16x16xf32>
    %289 = arith.maximumf %258, %288 : vector<16x16xf32>
    %c1_i32_122 = arith.constant 1 : i32
    %290 = tpu.dynamic_rotate %258 by %c1_i32_122 dim 1 : vector<16x16xf32>, i32 -> vector<16x16xf32>
    %c1_i32_123 = arith.constant 1 : i32
    %291 = vector.broadcast %c1_i32_123 : i32 to vector<16x16xi32>
    %292 = arith.cmpi sge, %4, %291 : vector<16x16xi32>
    %cst_124 = arith.constant 0.000000e+00 : f32
    %293 = vector.broadcast %cst_124 : f32 to vector<16x16xf32>
    %294 = arith.select %292, %290, %293 : vector<16x16xi1>, vector<16x16xf32>
    %295 = arith.maximumf %289, %294 : vector<16x16xf32>
    %c15_i32_125 = arith.constant 15 : i32
    %296 = tpu.dynamic_rotate %295 by %c15_i32_125 dim 0 : vector<16x16xf32>, i32 -> vector<16x16xf32>
    %c15_i32_126 = arith.constant 15 : i32
    %297 = vector.broadcast %c15_i32_126 : i32 to vector<16x16xi32>
    %298 = arith.cmpi slt, %3, %297 : vector<16x16xi32>
    %cst_127 = arith.constant 0.000000e+00 : f32
    %299 = vector.broadcast %cst_127 : f32 to vector<16x16xf32>
    %300 = arith.select %298, %296, %299 : vector<16x16xi1>, vector<16x16xf32>
    %301 = arith.maximumf %295, %300 : vector<16x16xf32>
    %c1_i32_128 = arith.constant 1 : i32
    %302 = tpu.dynamic_rotate %295 by %c1_i32_128 dim 0 : vector<16x16xf32>, i32 -> vector<16x16xf32>
    %c1_i32_129 = arith.constant 1 : i32
    %303 = vector.broadcast %c1_i32_129 : i32 to vector<16x16xi32>
    %304 = arith.cmpi sge, %3, %303 : vector<16x16xi32>
    %cst_130 = arith.constant 0.000000e+00 : f32
    %305 = vector.broadcast %cst_130 : f32 to vector<16x16xf32>
    %306 = arith.select %304, %302, %305 : vector<16x16xi1>, vector<16x16xf32>
    %307 = arith.maximumf %301, %306 : vector<16x16xf32>
    %308 = arith.subf %307, %258 : vector<16x16xf32>
    %c15_i32_131 = arith.constant 15 : i32
    %309 = tpu.dynamic_rotate %283 by %c15_i32_131 dim 1 : vector<16x16xf32>, i32 -> vector<16x16xf32>
    %c15_i32_132 = arith.constant 15 : i32
    %310 = vector.broadcast %c15_i32_132 : i32 to vector<16x16xi32>
    %311 = arith.cmpi slt, %4, %310 : vector<16x16xi32>
    %cst_133 = arith.constant 0.000000e+00 : f32
    %312 = vector.broadcast %cst_133 : f32 to vector<16x16xf32>
    %313 = arith.select %311, %309, %312 : vector<16x16xi1>, vector<16x16xf32>
    %314 = arith.maximumf %283, %313 : vector<16x16xf32>
    %c1_i32_134 = arith.constant 1 : i32
    %315 = tpu.dynamic_rotate %283 by %c1_i32_134 dim 1 : vector<16x16xf32>, i32 -> vector<16x16xf32>
    %c1_i32_135 = arith.constant 1 : i32
    %316 = vector.broadcast %c1_i32_135 : i32 to vector<16x16xi32>
    %317 = arith.cmpi sge, %4, %316 : vector<16x16xi32>
    %cst_136 = arith.constant 0.000000e+00 : f32
    %318 = vector.broadcast %cst_136 : f32 to vector<16x16xf32>
    %319 = arith.select %317, %315, %318 : vector<16x16xi1>, vector<16x16xf32>
    %320 = arith.maximumf %314, %319 : vector<16x16xf32>
    %c14_i32_137 = arith.constant 14 : i32
    %321 = tpu.dynamic_rotate %283 by %c14_i32_137 dim 1 : vector<16x16xf32>, i32 -> vector<16x16xf32>
    %c14_i32_138 = arith.constant 14 : i32
    %322 = vector.broadcast %c14_i32_138 : i32 to vector<16x16xi32>
    %323 = arith.cmpi slt, %4, %322 : vector<16x16xi32>
    %cst_139 = arith.constant 0.000000e+00 : f32
    %324 = vector.broadcast %cst_139 : f32 to vector<16x16xf32>
    %325 = arith.select %323, %321, %324 : vector<16x16xi1>, vector<16x16xf32>
    %326 = arith.maximumf %320, %325 : vector<16x16xf32>
    %c2_i32_140 = arith.constant 2 : i32
    %327 = tpu.dynamic_rotate %283 by %c2_i32_140 dim 1 : vector<16x16xf32>, i32 -> vector<16x16xf32>
    %c2_i32_141 = arith.constant 2 : i32
    %328 = vector.broadcast %c2_i32_141 : i32 to vector<16x16xi32>
    %329 = arith.cmpi sge, %4, %328 : vector<16x16xi32>
    %cst_142 = arith.constant 0.000000e+00 : f32
    %330 = vector.broadcast %cst_142 : f32 to vector<16x16xf32>
    %331 = arith.select %329, %327, %330 : vector<16x16xi1>, vector<16x16xf32>
    %332 = arith.maximumf %326, %331 : vector<16x16xf32>
    %c15_i32_143 = arith.constant 15 : i32
    %333 = tpu.dynamic_rotate %332 by %c15_i32_143 dim 0 : vector<16x16xf32>, i32 -> vector<16x16xf32>
    %c15_i32_144 = arith.constant 15 : i32
    %334 = vector.broadcast %c15_i32_144 : i32 to vector<16x16xi32>
    %335 = arith.cmpi slt, %3, %334 : vector<16x16xi32>
    %cst_145 = arith.constant 0.000000e+00 : f32
    %336 = vector.broadcast %cst_145 : f32 to vector<16x16xf32>
    %337 = arith.select %335, %333, %336 : vector<16x16xi1>, vector<16x16xf32>
    %338 = arith.maximumf %332, %337 : vector<16x16xf32>
    %c1_i32_146 = arith.constant 1 : i32
    %339 = tpu.dynamic_rotate %332 by %c1_i32_146 dim 0 : vector<16x16xf32>, i32 -> vector<16x16xf32>
    %c1_i32_147 = arith.constant 1 : i32
    %340 = vector.broadcast %c1_i32_147 : i32 to vector<16x16xi32>
    %341 = arith.cmpi sge, %3, %340 : vector<16x16xi32>
    %cst_148 = arith.constant 0.000000e+00 : f32
    %342 = vector.broadcast %cst_148 : f32 to vector<16x16xf32>
    %343 = arith.select %341, %339, %342 : vector<16x16xi1>, vector<16x16xf32>
    %344 = arith.maximumf %338, %343 : vector<16x16xf32>
    %c14_i32_149 = arith.constant 14 : i32
    %345 = tpu.dynamic_rotate %332 by %c14_i32_149 dim 0 : vector<16x16xf32>, i32 -> vector<16x16xf32>
    %c14_i32_150 = arith.constant 14 : i32
    %346 = vector.broadcast %c14_i32_150 : i32 to vector<16x16xi32>
    %347 = arith.cmpi slt, %3, %346 : vector<16x16xi32>
    %cst_151 = arith.constant 0.000000e+00 : f32
    %348 = vector.broadcast %cst_151 : f32 to vector<16x16xf32>
    %349 = arith.select %347, %345, %348 : vector<16x16xi1>, vector<16x16xf32>
    %350 = arith.maximumf %344, %349 : vector<16x16xf32>
    %c2_i32_152 = arith.constant 2 : i32
    %351 = tpu.dynamic_rotate %332 by %c2_i32_152 dim 0 : vector<16x16xf32>, i32 -> vector<16x16xf32>
    %c2_i32_153 = arith.constant 2 : i32
    %352 = vector.broadcast %c2_i32_153 : i32 to vector<16x16xi32>
    %353 = arith.cmpi sge, %3, %352 : vector<16x16xi32>
    %cst_154 = arith.constant 0.000000e+00 : f32
    %354 = vector.broadcast %cst_154 : f32 to vector<16x16xf32>
    %355 = arith.select %353, %351, %354 : vector<16x16xi1>, vector<16x16xf32>
    %356 = arith.maximumf %350, %355 : vector<16x16xf32>
    %c15_i32_155 = arith.constant 15 : i32
    %357 = tpu.dynamic_rotate %308 by %c15_i32_155 dim 1 : vector<16x16xf32>, i32 -> vector<16x16xf32>
    %c15_i32_156 = arith.constant 15 : i32
    %358 = vector.broadcast %c15_i32_156 : i32 to vector<16x16xi32>
    %359 = arith.cmpi slt, %4, %358 : vector<16x16xi32>
    %cst_157 = arith.constant 0.000000e+00 : f32
    %360 = vector.broadcast %cst_157 : f32 to vector<16x16xf32>
    %361 = arith.select %359, %357, %360 : vector<16x16xi1>, vector<16x16xf32>
    %362 = arith.maximumf %308, %361 : vector<16x16xf32>
    %c1_i32_158 = arith.constant 1 : i32
    %363 = tpu.dynamic_rotate %308 by %c1_i32_158 dim 1 : vector<16x16xf32>, i32 -> vector<16x16xf32>
    %c1_i32_159 = arith.constant 1 : i32
    %364 = vector.broadcast %c1_i32_159 : i32 to vector<16x16xi32>
    %365 = arith.cmpi sge, %4, %364 : vector<16x16xi32>
    %cst_160 = arith.constant 0.000000e+00 : f32
    %366 = vector.broadcast %cst_160 : f32 to vector<16x16xf32>
    %367 = arith.select %365, %363, %366 : vector<16x16xi1>, vector<16x16xf32>
    %368 = arith.maximumf %362, %367 : vector<16x16xf32>
    %c14_i32_161 = arith.constant 14 : i32
    %369 = tpu.dynamic_rotate %308 by %c14_i32_161 dim 1 : vector<16x16xf32>, i32 -> vector<16x16xf32>
    %c14_i32_162 = arith.constant 14 : i32
    %370 = vector.broadcast %c14_i32_162 : i32 to vector<16x16xi32>
    %371 = arith.cmpi slt, %4, %370 : vector<16x16xi32>
    %cst_163 = arith.constant 0.000000e+00 : f32
    %372 = vector.broadcast %cst_163 : f32 to vector<16x16xf32>
    %373 = arith.select %371, %369, %372 : vector<16x16xi1>, vector<16x16xf32>
    %374 = arith.maximumf %368, %373 : vector<16x16xf32>
    %c2_i32_164 = arith.constant 2 : i32
    %375 = tpu.dynamic_rotate %308 by %c2_i32_164 dim 1 : vector<16x16xf32>, i32 -> vector<16x16xf32>
    %c2_i32_165 = arith.constant 2 : i32
    %376 = vector.broadcast %c2_i32_165 : i32 to vector<16x16xi32>
    %377 = arith.cmpi sge, %4, %376 : vector<16x16xi32>
    %cst_166 = arith.constant 0.000000e+00 : f32
    %378 = vector.broadcast %cst_166 : f32 to vector<16x16xf32>
    %379 = arith.select %377, %375, %378 : vector<16x16xi1>, vector<16x16xf32>
    %380 = arith.maximumf %374, %379 : vector<16x16xf32>
    %c15_i32_167 = arith.constant 15 : i32
    %381 = tpu.dynamic_rotate %380 by %c15_i32_167 dim 0 : vector<16x16xf32>, i32 -> vector<16x16xf32>
    %c15_i32_168 = arith.constant 15 : i32
    %382 = vector.broadcast %c15_i32_168 : i32 to vector<16x16xi32>
    %383 = arith.cmpi slt, %3, %382 : vector<16x16xi32>
    %cst_169 = arith.constant 0.000000e+00 : f32
    %384 = vector.broadcast %cst_169 : f32 to vector<16x16xf32>
    %385 = arith.select %383, %381, %384 : vector<16x16xi1>, vector<16x16xf32>
    %386 = arith.maximumf %380, %385 : vector<16x16xf32>
    %c1_i32_170 = arith.constant 1 : i32
    %387 = tpu.dynamic_rotate %380 by %c1_i32_170 dim 0 : vector<16x16xf32>, i32 -> vector<16x16xf32>
    %c1_i32_171 = arith.constant 1 : i32
    %388 = vector.broadcast %c1_i32_171 : i32 to vector<16x16xi32>
    %389 = arith.cmpi sge, %3, %388 : vector<16x16xi32>
    %cst_172 = arith.constant 0.000000e+00 : f32
    %390 = vector.broadcast %cst_172 : f32 to vector<16x16xf32>
    %391 = arith.select %389, %387, %390 : vector<16x16xi1>, vector<16x16xf32>
    %392 = arith.maximumf %386, %391 : vector<16x16xf32>
    %c14_i32_173 = arith.constant 14 : i32
    %393 = tpu.dynamic_rotate %380 by %c14_i32_173 dim 0 : vector<16x16xf32>, i32 -> vector<16x16xf32>
    %c14_i32_174 = arith.constant 14 : i32
    %394 = vector.broadcast %c14_i32_174 : i32 to vector<16x16xi32>
    %395 = arith.cmpi slt, %3, %394 : vector<16x16xi32>
    %cst_175 = arith.constant 0.000000e+00 : f32
    %396 = vector.broadcast %cst_175 : f32 to vector<16x16xf32>
    %397 = arith.select %395, %393, %396 : vector<16x16xi1>, vector<16x16xf32>
    %398 = arith.maximumf %392, %397 : vector<16x16xf32>
    %c2_i32_176 = arith.constant 2 : i32
    %399 = tpu.dynamic_rotate %380 by %c2_i32_176 dim 0 : vector<16x16xf32>, i32 -> vector<16x16xf32>
    %c2_i32_177 = arith.constant 2 : i32
    %400 = vector.broadcast %c2_i32_177 : i32 to vector<16x16xi32>
    %401 = arith.cmpi sge, %3, %400 : vector<16x16xi32>
    %cst_178 = arith.constant 0.000000e+00 : f32
    %402 = vector.broadcast %cst_178 : f32 to vector<16x16xf32>
    %403 = arith.select %401, %399, %402 : vector<16x16xi1>, vector<16x16xf32>
    %404 = arith.maximumf %398, %403 : vector<16x16xf32>
    %405 = arith.mulf %308, %356 : vector<16x16xf32>
    %406 = vector.shape_cast %405 : vector<16x16xf32> to vector<1x16x16xf32>
    %cst_179 = arith.constant dense<0.000000e+00> : vector<1xf32>
    %407 = vector.multi_reduction <add>, %406, %cst_179 [1, 2] : vector<1x16x16xf32> to vector<1xf32>
    %408 = vector.shape_cast %407 : vector<1xf32> to vector<1x1x1xf32>
    %409 = vector.extract %408[0, 0, 0] : f32 from vector<1x1x1xf32>
    %410 = vector.broadcast %409 : f32 to vector<1x1xf32>
    %411 = vector.shape_cast %308 : vector<16x16xf32> to vector<1x16x16xf32>
    %cst_180 = arith.constant dense<0.000000e+00> : vector<1xf32>
    %412 = vector.multi_reduction <add>, %411, %cst_180 [1, 2] : vector<1x16x16xf32> to vector<1xf32>
    %413 = vector.shape_cast %412 : vector<1xf32> to vector<1x1x1xf32>
    %414 = vector.extract %413[0, 0, 0] : f32 from vector<1x1x1xf32>
    %415 = vector.broadcast %414 : f32 to vector<1x1xf32>
    %cst_181 = arith.constant 1.000000e-07 : f32
    %416 = vector.broadcast %cst_181 : f32 to vector<1x1xf32>
    %417 = arith.addf %415, %416 : vector<1x1xf32>
    %418 = arith.mulf %404, %283 : vector<16x16xf32>
    %419 = vector.shape_cast %418 : vector<16x16xf32> to vector<1x16x16xf32>
    %cst_182 = arith.constant dense<0.000000e+00> : vector<1xf32>
    %420 = vector.multi_reduction <add>, %419, %cst_182 [1, 2] : vector<1x16x16xf32> to vector<1xf32>
    %421 = vector.shape_cast %420 : vector<1xf32> to vector<1x1x1xf32>
    %422 = vector.extract %421[0, 0, 0] : f32 from vector<1x1x1xf32>
    %423 = vector.broadcast %422 : f32 to vector<1x1xf32>
    %424 = vector.shape_cast %283 : vector<16x16xf32> to vector<1x16x16xf32>
    %cst_183 = arith.constant dense<0.000000e+00> : vector<1xf32>
    %425 = vector.multi_reduction <add>, %424, %cst_183 [1, 2] : vector<1x16x16xf32> to vector<1xf32>
    %426 = vector.shape_cast %425 : vector<1xf32> to vector<1x1x1xf32>
    %427 = vector.extract %426[0, 0, 0] : f32 from vector<1x1x1xf32>
    %428 = vector.broadcast %427 : f32 to vector<1x1xf32>
    %cst_184 = arith.constant 1.000000e-07 : f32
    %429 = vector.broadcast %cst_184 : f32 to vector<1x1xf32>
    %430 = arith.addf %428, %429 : vector<1x1xf32>
    %431 = arith.divf %410, %417 : vector<1x1xf32>
    %432 = arith.divf %423, %430 : vector<1x1xf32>
    %cst_185 = arith.constant 2.000000e+00 : f32
    %433 = vector.broadcast %cst_185 : f32 to vector<1x1xf32>
    %434 = arith.mulf %433, %431 : vector<1x1xf32>
    %435 = arith.mulf %434, %432 : vector<1x1xf32>
    %436 = arith.addf %431, %432 : vector<1x1xf32>
    %cst_186 = arith.constant 1.000000e-07 : f32
    %437 = vector.broadcast %cst_186 : f32 to vector<1x1xf32>
    %438 = arith.addf %436, %437 : vector<1x1xf32>
    %439 = arith.divf %435, %438 : vector<1x1xf32>
    %cst_187 = arith.constant 1.000000e+00 : f32
    %440 = vector.broadcast %cst_187 : f32 to vector<1x1xf32>
    %441 = arith.subf %440, %439 : vector<1x1xf32>
    %442 = arith.addf %225, %441 : vector<1x1xf32>
    %c2 = arith.constant 2 : index
    %c0_188 = arith.constant 0 : index
    %c0_189 = arith.constant 0 : index
    %443 = vector.load %arg1[%c2, %c0_188, %c0_189] : memref<8x16x16xf32, #tpu.memory_space<vmem>>, vector<1x16x16xf32>
    %444 = vector.shape_cast %443 : vector<1x16x16xf32> to vector<16x16xf32>
    %c2_190 = arith.constant 2 : index
    %c0_191 = arith.constant 0 : index
    %c0_192 = arith.constant 0 : index
    %445 = vector.load %arg2[%c2_190, %c0_191, %c0_192] : memref<8x16x16xf32, #tpu.memory_space<vmem>>, vector<1x16x16xf32>
    %446 = vector.shape_cast %445 : vector<1x16x16xf32> to vector<16x16xf32>
    %447 = math.absf %444 : vector<16x16xf32>
    %cst_193 = arith.constant 0.000000e+00 : f32
    %448 = vector.broadcast %cst_193 : f32 to vector<16x16xf32>
    %449 = arith.subf %448, %447 : vector<16x16xf32>
    %450 = math.exp %449 : vector<16x16xf32>
    %cst_194 = arith.constant 1.000000e+00 : f32
    %451 = vector.broadcast %cst_194 : f32 to vector<16x16xf32>
    %452 = arith.addf %451, %450 : vector<16x16xf32>
    %cst_195 = arith.constant 1.000000e+00 : f32
    %453 = vector.broadcast %cst_195 : f32 to vector<16x16xf32>
    %454 = arith.divf %453, %452 : vector<16x16xf32>
    %cst_196 = arith.constant 0.000000e+00 : f32
    %455 = vector.broadcast %cst_196 : f32 to vector<16x16xf32>
    %456 = arith.cmpf oge, %444, %455 : vector<16x16xf32>
    %457 = arith.mulf %450, %454 : vector<16x16xf32>
    %458 = arith.select %456, %454, %457 : vector<16x16xi1>, vector<16x16xf32>
    %cst_197 = arith.constant 0.000000e+00 : f32
    %459 = vector.broadcast %cst_197 : f32 to vector<16x16xf32>
    %460 = arith.maximumf %444, %459 : vector<16x16xf32>
    %461 = arith.mulf %444, %446 : vector<16x16xf32>
    %462 = arith.subf %460, %461 : vector<16x16xf32>
    %cst_198 = arith.constant 1.000000e+00 : f32
    %463 = vector.broadcast %cst_198 : f32 to vector<16x16xf32>
    %464 = arith.addf %463, %450 : vector<16x16xf32>
    %465 = math.log %464 : vector<16x16xf32>
    %466 = arith.addf %462, %465 : vector<16x16xf32>
    %467 = arith.mulf %458, %446 : vector<16x16xf32>
    %468 = arith.addf %251, %467 : vector<16x16xf32>
    %469 = arith.addf %458, %446 : vector<16x16xf32>
    %470 = arith.addf %253, %469 : vector<16x16xf32>
    %471 = arith.addf %254, %466 : vector<16x16xf32>
    %cst_199 = arith.constant 1.000000e+00 : f32
    %472 = vector.broadcast %cst_199 : f32 to vector<16x16xf32>
    %473 = arith.subf %472, %446 : vector<16x16xf32>
    %cst_200 = arith.constant 1.000000e+00 : f32
    %474 = vector.broadcast %cst_200 : f32 to vector<16x16xf32>
    %475 = arith.subf %474, %458 : vector<16x16xf32>
    %c15_i32_201 = arith.constant 15 : i32
    %476 = tpu.dynamic_rotate %473 by %c15_i32_201 dim 1 : vector<16x16xf32>, i32 -> vector<16x16xf32>
    %c15_i32_202 = arith.constant 15 : i32
    %477 = vector.broadcast %c15_i32_202 : i32 to vector<16x16xi32>
    %478 = arith.cmpi slt, %4, %477 : vector<16x16xi32>
    %cst_203 = arith.constant 0.000000e+00 : f32
    %479 = vector.broadcast %cst_203 : f32 to vector<16x16xf32>
    %480 = arith.select %478, %476, %479 : vector<16x16xi1>, vector<16x16xf32>
    %481 = arith.maximumf %473, %480 : vector<16x16xf32>
    %c1_i32_204 = arith.constant 1 : i32
    %482 = tpu.dynamic_rotate %473 by %c1_i32_204 dim 1 : vector<16x16xf32>, i32 -> vector<16x16xf32>
    %c1_i32_205 = arith.constant 1 : i32
    %483 = vector.broadcast %c1_i32_205 : i32 to vector<16x16xi32>
    %484 = arith.cmpi sge, %4, %483 : vector<16x16xi32>
    %cst_206 = arith.constant 0.000000e+00 : f32
    %485 = vector.broadcast %cst_206 : f32 to vector<16x16xf32>
    %486 = arith.select %484, %482, %485 : vector<16x16xi1>, vector<16x16xf32>
    %487 = arith.maximumf %481, %486 : vector<16x16xf32>
    %c15_i32_207 = arith.constant 15 : i32
    %488 = tpu.dynamic_rotate %487 by %c15_i32_207 dim 0 : vector<16x16xf32>, i32 -> vector<16x16xf32>
    %c15_i32_208 = arith.constant 15 : i32
    %489 = vector.broadcast %c15_i32_208 : i32 to vector<16x16xi32>
    %490 = arith.cmpi slt, %3, %489 : vector<16x16xi32>
    %cst_209 = arith.constant 0.000000e+00 : f32
    %491 = vector.broadcast %cst_209 : f32 to vector<16x16xf32>
    %492 = arith.select %490, %488, %491 : vector<16x16xi1>, vector<16x16xf32>
    %493 = arith.maximumf %487, %492 : vector<16x16xf32>
    %c1_i32_210 = arith.constant 1 : i32
    %494 = tpu.dynamic_rotate %487 by %c1_i32_210 dim 0 : vector<16x16xf32>, i32 -> vector<16x16xf32>
    %c1_i32_211 = arith.constant 1 : i32
    %495 = vector.broadcast %c1_i32_211 : i32 to vector<16x16xi32>
    %496 = arith.cmpi sge, %3, %495 : vector<16x16xi32>
    %cst_212 = arith.constant 0.000000e+00 : f32
    %497 = vector.broadcast %cst_212 : f32 to vector<16x16xf32>
    %498 = arith.select %496, %494, %497 : vector<16x16xi1>, vector<16x16xf32>
    %499 = arith.maximumf %493, %498 : vector<16x16xf32>
    %500 = arith.subf %499, %473 : vector<16x16xf32>
    %c15_i32_213 = arith.constant 15 : i32
    %501 = tpu.dynamic_rotate %475 by %c15_i32_213 dim 1 : vector<16x16xf32>, i32 -> vector<16x16xf32>
    %c15_i32_214 = arith.constant 15 : i32
    %502 = vector.broadcast %c15_i32_214 : i32 to vector<16x16xi32>
    %503 = arith.cmpi slt, %4, %502 : vector<16x16xi32>
    %cst_215 = arith.constant 0.000000e+00 : f32
    %504 = vector.broadcast %cst_215 : f32 to vector<16x16xf32>
    %505 = arith.select %503, %501, %504 : vector<16x16xi1>, vector<16x16xf32>
    %506 = arith.maximumf %475, %505 : vector<16x16xf32>
    %c1_i32_216 = arith.constant 1 : i32
    %507 = tpu.dynamic_rotate %475 by %c1_i32_216 dim 1 : vector<16x16xf32>, i32 -> vector<16x16xf32>
    %c1_i32_217 = arith.constant 1 : i32
    %508 = vector.broadcast %c1_i32_217 : i32 to vector<16x16xi32>
    %509 = arith.cmpi sge, %4, %508 : vector<16x16xi32>
    %cst_218 = arith.constant 0.000000e+00 : f32
    %510 = vector.broadcast %cst_218 : f32 to vector<16x16xf32>
    %511 = arith.select %509, %507, %510 : vector<16x16xi1>, vector<16x16xf32>
    %512 = arith.maximumf %506, %511 : vector<16x16xf32>
    %c15_i32_219 = arith.constant 15 : i32
    %513 = tpu.dynamic_rotate %512 by %c15_i32_219 dim 0 : vector<16x16xf32>, i32 -> vector<16x16xf32>
    %c15_i32_220 = arith.constant 15 : i32
    %514 = vector.broadcast %c15_i32_220 : i32 to vector<16x16xi32>
    %515 = arith.cmpi slt, %3, %514 : vector<16x16xi32>
    %cst_221 = arith.constant 0.000000e+00 : f32
    %516 = vector.broadcast %cst_221 : f32 to vector<16x16xf32>
    %517 = arith.select %515, %513, %516 : vector<16x16xi1>, vector<16x16xf32>
    %518 = arith.maximumf %512, %517 : vector<16x16xf32>
    %c1_i32_222 = arith.constant 1 : i32
    %519 = tpu.dynamic_rotate %512 by %c1_i32_222 dim 0 : vector<16x16xf32>, i32 -> vector<16x16xf32>
    %c1_i32_223 = arith.constant 1 : i32
    %520 = vector.broadcast %c1_i32_223 : i32 to vector<16x16xi32>
    %521 = arith.cmpi sge, %3, %520 : vector<16x16xi32>
    %cst_224 = arith.constant 0.000000e+00 : f32
    %522 = vector.broadcast %cst_224 : f32 to vector<16x16xf32>
    %523 = arith.select %521, %519, %522 : vector<16x16xi1>, vector<16x16xf32>
    %524 = arith.maximumf %518, %523 : vector<16x16xf32>
    %525 = arith.subf %524, %475 : vector<16x16xf32>
    %c15_i32_225 = arith.constant 15 : i32
    %526 = tpu.dynamic_rotate %500 by %c15_i32_225 dim 1 : vector<16x16xf32>, i32 -> vector<16x16xf32>
    %c15_i32_226 = arith.constant 15 : i32
    %527 = vector.broadcast %c15_i32_226 : i32 to vector<16x16xi32>
    %528 = arith.cmpi slt, %4, %527 : vector<16x16xi32>
    %cst_227 = arith.constant 0.000000e+00 : f32
    %529 = vector.broadcast %cst_227 : f32 to vector<16x16xf32>
    %530 = arith.select %528, %526, %529 : vector<16x16xi1>, vector<16x16xf32>
    %531 = arith.maximumf %500, %530 : vector<16x16xf32>
    %c1_i32_228 = arith.constant 1 : i32
    %532 = tpu.dynamic_rotate %500 by %c1_i32_228 dim 1 : vector<16x16xf32>, i32 -> vector<16x16xf32>
    %c1_i32_229 = arith.constant 1 : i32
    %533 = vector.broadcast %c1_i32_229 : i32 to vector<16x16xi32>
    %534 = arith.cmpi sge, %4, %533 : vector<16x16xi32>
    %cst_230 = arith.constant 0.000000e+00 : f32
    %535 = vector.broadcast %cst_230 : f32 to vector<16x16xf32>
    %536 = arith.select %534, %532, %535 : vector<16x16xi1>, vector<16x16xf32>
    %537 = arith.maximumf %531, %536 : vector<16x16xf32>
    %c14_i32_231 = arith.constant 14 : i32
    %538 = tpu.dynamic_rotate %500 by %c14_i32_231 dim 1 : vector<16x16xf32>, i32 -> vector<16x16xf32>
    %c14_i32_232 = arith.constant 14 : i32
    %539 = vector.broadcast %c14_i32_232 : i32 to vector<16x16xi32>
    %540 = arith.cmpi slt, %4, %539 : vector<16x16xi32>
    %cst_233 = arith.constant 0.000000e+00 : f32
    %541 = vector.broadcast %cst_233 : f32 to vector<16x16xf32>
    %542 = arith.select %540, %538, %541 : vector<16x16xi1>, vector<16x16xf32>
    %543 = arith.maximumf %537, %542 : vector<16x16xf32>
    %c2_i32_234 = arith.constant 2 : i32
    %544 = tpu.dynamic_rotate %500 by %c2_i32_234 dim 1 : vector<16x16xf32>, i32 -> vector<16x16xf32>
    %c2_i32_235 = arith.constant 2 : i32
    %545 = vector.broadcast %c2_i32_235 : i32 to vector<16x16xi32>
    %546 = arith.cmpi sge, %4, %545 : vector<16x16xi32>
    %cst_236 = arith.constant 0.000000e+00 : f32
    %547 = vector.broadcast %cst_236 : f32 to vector<16x16xf32>
    %548 = arith.select %546, %544, %547 : vector<16x16xi1>, vector<16x16xf32>
    %549 = arith.maximumf %543, %548 : vector<16x16xf32>
    %c15_i32_237 = arith.constant 15 : i32
    %550 = tpu.dynamic_rotate %549 by %c15_i32_237 dim 0 : vector<16x16xf32>, i32 -> vector<16x16xf32>
    %c15_i32_238 = arith.constant 15 : i32
    %551 = vector.broadcast %c15_i32_238 : i32 to vector<16x16xi32>
    %552 = arith.cmpi slt, %3, %551 : vector<16x16xi32>
    %cst_239 = arith.constant 0.000000e+00 : f32
    %553 = vector.broadcast %cst_239 : f32 to vector<16x16xf32>
    %554 = arith.select %552, %550, %553 : vector<16x16xi1>, vector<16x16xf32>
    %555 = arith.maximumf %549, %554 : vector<16x16xf32>
    %c1_i32_240 = arith.constant 1 : i32
    %556 = tpu.dynamic_rotate %549 by %c1_i32_240 dim 0 : vector<16x16xf32>, i32 -> vector<16x16xf32>
    %c1_i32_241 = arith.constant 1 : i32
    %557 = vector.broadcast %c1_i32_241 : i32 to vector<16x16xi32>
    %558 = arith.cmpi sge, %3, %557 : vector<16x16xi32>
    %cst_242 = arith.constant 0.000000e+00 : f32
    %559 = vector.broadcast %cst_242 : f32 to vector<16x16xf32>
    %560 = arith.select %558, %556, %559 : vector<16x16xi1>, vector<16x16xf32>
    %561 = arith.maximumf %555, %560 : vector<16x16xf32>
    %c14_i32_243 = arith.constant 14 : i32
    %562 = tpu.dynamic_rotate %549 by %c14_i32_243 dim 0 : vector<16x16xf32>, i32 -> vector<16x16xf32>
    %c14_i32_244 = arith.constant 14 : i32
    %563 = vector.broadcast %c14_i32_244 : i32 to vector<16x16xi32>
    %564 = arith.cmpi slt, %3, %563 : vector<16x16xi32>
    %cst_245 = arith.constant 0.000000e+00 : f32
    %565 = vector.broadcast %cst_245 : f32 to vector<16x16xf32>
    %566 = arith.select %564, %562, %565 : vector<16x16xi1>, vector<16x16xf32>
    %567 = arith.maximumf %561, %566 : vector<16x16xf32>
    %c2_i32_246 = arith.constant 2 : i32
    %568 = tpu.dynamic_rotate %549 by %c2_i32_246 dim 0 : vector<16x16xf32>, i32 -> vector<16x16xf32>
    %c2_i32_247 = arith.constant 2 : i32
    %569 = vector.broadcast %c2_i32_247 : i32 to vector<16x16xi32>
    %570 = arith.cmpi sge, %3, %569 : vector<16x16xi32>
    %cst_248 = arith.constant 0.000000e+00 : f32
    %571 = vector.broadcast %cst_248 : f32 to vector<16x16xf32>
    %572 = arith.select %570, %568, %571 : vector<16x16xi1>, vector<16x16xf32>
    %573 = arith.maximumf %567, %572 : vector<16x16xf32>
    %c15_i32_249 = arith.constant 15 : i32
    %574 = tpu.dynamic_rotate %525 by %c15_i32_249 dim 1 : vector<16x16xf32>, i32 -> vector<16x16xf32>
    %c15_i32_250 = arith.constant 15 : i32
    %575 = vector.broadcast %c15_i32_250 : i32 to vector<16x16xi32>
    %576 = arith.cmpi slt, %4, %575 : vector<16x16xi32>
    %cst_251 = arith.constant 0.000000e+00 : f32
    %577 = vector.broadcast %cst_251 : f32 to vector<16x16xf32>
    %578 = arith.select %576, %574, %577 : vector<16x16xi1>, vector<16x16xf32>
    %579 = arith.maximumf %525, %578 : vector<16x16xf32>
    %c1_i32_252 = arith.constant 1 : i32
    %580 = tpu.dynamic_rotate %525 by %c1_i32_252 dim 1 : vector<16x16xf32>, i32 -> vector<16x16xf32>
    %c1_i32_253 = arith.constant 1 : i32
    %581 = vector.broadcast %c1_i32_253 : i32 to vector<16x16xi32>
    %582 = arith.cmpi sge, %4, %581 : vector<16x16xi32>
    %cst_254 = arith.constant 0.000000e+00 : f32
    %583 = vector.broadcast %cst_254 : f32 to vector<16x16xf32>
    %584 = arith.select %582, %580, %583 : vector<16x16xi1>, vector<16x16xf32>
    %585 = arith.maximumf %579, %584 : vector<16x16xf32>
    %c14_i32_255 = arith.constant 14 : i32
    %586 = tpu.dynamic_rotate %525 by %c14_i32_255 dim 1 : vector<16x16xf32>, i32 -> vector<16x16xf32>
    %c14_i32_256 = arith.constant 14 : i32
    %587 = vector.broadcast %c14_i32_256 : i32 to vector<16x16xi32>
    %588 = arith.cmpi slt, %4, %587 : vector<16x16xi32>
    %cst_257 = arith.constant 0.000000e+00 : f32
    %589 = vector.broadcast %cst_257 : f32 to vector<16x16xf32>
    %590 = arith.select %588, %586, %589 : vector<16x16xi1>, vector<16x16xf32>
    %591 = arith.maximumf %585, %590 : vector<16x16xf32>
    %c2_i32_258 = arith.constant 2 : i32
    %592 = tpu.dynamic_rotate %525 by %c2_i32_258 dim 1 : vector<16x16xf32>, i32 -> vector<16x16xf32>
    %c2_i32_259 = arith.constant 2 : i32
    %593 = vector.broadcast %c2_i32_259 : i32 to vector<16x16xi32>
    %594 = arith.cmpi sge, %4, %593 : vector<16x16xi32>
    %cst_260 = arith.constant 0.000000e+00 : f32
    %595 = vector.broadcast %cst_260 : f32 to vector<16x16xf32>
    %596 = arith.select %594, %592, %595 : vector<16x16xi1>, vector<16x16xf32>
    %597 = arith.maximumf %591, %596 : vector<16x16xf32>
    %c15_i32_261 = arith.constant 15 : i32
    %598 = tpu.dynamic_rotate %597 by %c15_i32_261 dim 0 : vector<16x16xf32>, i32 -> vector<16x16xf32>
    %c15_i32_262 = arith.constant 15 : i32
    %599 = vector.broadcast %c15_i32_262 : i32 to vector<16x16xi32>
    %600 = arith.cmpi slt, %3, %599 : vector<16x16xi32>
    %cst_263 = arith.constant 0.000000e+00 : f32
    %601 = vector.broadcast %cst_263 : f32 to vector<16x16xf32>
    %602 = arith.select %600, %598, %601 : vector<16x16xi1>, vector<16x16xf32>
    %603 = arith.maximumf %597, %602 : vector<16x16xf32>
    %c1_i32_264 = arith.constant 1 : i32
    %604 = tpu.dynamic_rotate %597 by %c1_i32_264 dim 0 : vector<16x16xf32>, i32 -> vector<16x16xf32>
    %c1_i32_265 = arith.constant 1 : i32
    %605 = vector.broadcast %c1_i32_265 : i32 to vector<16x16xi32>
    %606 = arith.cmpi sge, %3, %605 : vector<16x16xi32>
    %cst_266 = arith.constant 0.000000e+00 : f32
    %607 = vector.broadcast %cst_266 : f32 to vector<16x16xf32>
    %608 = arith.select %606, %604, %607 : vector<16x16xi1>, vector<16x16xf32>
    %609 = arith.maximumf %603, %608 : vector<16x16xf32>
    %c14_i32_267 = arith.constant 14 : i32
    %610 = tpu.dynamic_rotate %597 by %c14_i32_267 dim 0 : vector<16x16xf32>, i32 -> vector<16x16xf32>
    %c14_i32_268 = arith.constant 14 : i32
    %611 = vector.broadcast %c14_i32_268 : i32 to vector<16x16xi32>
    %612 = arith.cmpi slt, %3, %611 : vector<16x16xi32>
    %cst_269 = arith.constant 0.000000e+00 : f32
    %613 = vector.broadcast %cst_269 : f32 to vector<16x16xf32>
    %614 = arith.select %612, %610, %613 : vector<16x16xi1>, vector<16x16xf32>
    %615 = arith.maximumf %609, %614 : vector<16x16xf32>
    %c2_i32_270 = arith.constant 2 : i32
    %616 = tpu.dynamic_rotate %597 by %c2_i32_270 dim 0 : vector<16x16xf32>, i32 -> vector<16x16xf32>
    %c2_i32_271 = arith.constant 2 : i32
    %617 = vector.broadcast %c2_i32_271 : i32 to vector<16x16xi32>
    %618 = arith.cmpi sge, %3, %617 : vector<16x16xi32>
    %cst_272 = arith.constant 0.000000e+00 : f32
    %619 = vector.broadcast %cst_272 : f32 to vector<16x16xf32>
    %620 = arith.select %618, %616, %619 : vector<16x16xi1>, vector<16x16xf32>
    %621 = arith.maximumf %615, %620 : vector<16x16xf32>
    %622 = arith.mulf %525, %573 : vector<16x16xf32>
    %623 = vector.shape_cast %622 : vector<16x16xf32> to vector<1x16x16xf32>
    %cst_273 = arith.constant dense<0.000000e+00> : vector<1xf32>
    %624 = vector.multi_reduction <add>, %623, %cst_273 [1, 2] : vector<1x16x16xf32> to vector<1xf32>
    %625 = vector.shape_cast %624 : vector<1xf32> to vector<1x1x1xf32>
    %626 = vector.extract %625[0, 0, 0] : f32 from vector<1x1x1xf32>
    %627 = vector.broadcast %626 : f32 to vector<1x1xf32>
    %628 = vector.shape_cast %525 : vector<16x16xf32> to vector<1x16x16xf32>
    %cst_274 = arith.constant dense<0.000000e+00> : vector<1xf32>
    %629 = vector.multi_reduction <add>, %628, %cst_274 [1, 2] : vector<1x16x16xf32> to vector<1xf32>
    %630 = vector.shape_cast %629 : vector<1xf32> to vector<1x1x1xf32>
    %631 = vector.extract %630[0, 0, 0] : f32 from vector<1x1x1xf32>
    %632 = vector.broadcast %631 : f32 to vector<1x1xf32>
    %cst_275 = arith.constant 1.000000e-07 : f32
    %633 = vector.broadcast %cst_275 : f32 to vector<1x1xf32>
    %634 = arith.addf %632, %633 : vector<1x1xf32>
    %635 = arith.mulf %621, %500 : vector<16x16xf32>
    %636 = vector.shape_cast %635 : vector<16x16xf32> to vector<1x16x16xf32>
    %cst_276 = arith.constant dense<0.000000e+00> : vector<1xf32>
    %637 = vector.multi_reduction <add>, %636, %cst_276 [1, 2] : vector<1x16x16xf32> to vector<1xf32>
    %638 = vector.shape_cast %637 : vector<1xf32> to vector<1x1x1xf32>
    %639 = vector.extract %638[0, 0, 0] : f32 from vector<1x1x1xf32>
    %640 = vector.broadcast %639 : f32 to vector<1x1xf32>
    %641 = vector.shape_cast %500 : vector<16x16xf32> to vector<1x16x16xf32>
    %cst_277 = arith.constant dense<0.000000e+00> : vector<1xf32>
    %642 = vector.multi_reduction <add>, %641, %cst_277 [1, 2] : vector<1x16x16xf32> to vector<1xf32>
    %643 = vector.shape_cast %642 : vector<1xf32> to vector<1x1x1xf32>
    %644 = vector.extract %643[0, 0, 0] : f32 from vector<1x1x1xf32>
    %645 = vector.broadcast %644 : f32 to vector<1x1xf32>
    %cst_278 = arith.constant 1.000000e-07 : f32
    %646 = vector.broadcast %cst_278 : f32 to vector<1x1xf32>
    %647 = arith.addf %645, %646 : vector<1x1xf32>
    %648 = arith.divf %627, %634 : vector<1x1xf32>
    %649 = arith.divf %640, %647 : vector<1x1xf32>
    %cst_279 = arith.constant 2.000000e+00 : f32
    %650 = vector.broadcast %cst_279 : f32 to vector<1x1xf32>
    %651 = arith.mulf %650, %648 : vector<1x1xf32>
    %652 = arith.mulf %651, %649 : vector<1x1xf32>
    %653 = arith.addf %648, %649 : vector<1x1xf32>
    %cst_280 = arith.constant 1.000000e-07 : f32
    %654 = vector.broadcast %cst_280 : f32 to vector<1x1xf32>
    %655 = arith.addf %653, %654 : vector<1x1xf32>
    %656 = arith.divf %652, %655 : vector<1x1xf32>
    %cst_281 = arith.constant 1.000000e+00 : f32
    %657 = vector.broadcast %cst_281 : f32 to vector<1x1xf32>
    %658 = arith.subf %657, %656 : vector<1x1xf32>
    %659 = arith.addf %442, %658 : vector<1x1xf32>
    %c3 = arith.constant 3 : index
    %c0_282 = arith.constant 0 : index
    %c0_283 = arith.constant 0 : index
    %660 = vector.load %arg1[%c3, %c0_282, %c0_283] : memref<8x16x16xf32, #tpu.memory_space<vmem>>, vector<1x16x16xf32>
    %661 = vector.shape_cast %660 : vector<1x16x16xf32> to vector<16x16xf32>
    %c3_284 = arith.constant 3 : index
    %c0_285 = arith.constant 0 : index
    %c0_286 = arith.constant 0 : index
    %662 = vector.load %arg2[%c3_284, %c0_285, %c0_286] : memref<8x16x16xf32, #tpu.memory_space<vmem>>, vector<1x16x16xf32>
    %663 = vector.shape_cast %662 : vector<1x16x16xf32> to vector<16x16xf32>
    %664 = math.absf %661 : vector<16x16xf32>
    %cst_287 = arith.constant 0.000000e+00 : f32
    %665 = vector.broadcast %cst_287 : f32 to vector<16x16xf32>
    %666 = arith.subf %665, %664 : vector<16x16xf32>
    %667 = math.exp %666 : vector<16x16xf32>
    %cst_288 = arith.constant 1.000000e+00 : f32
    %668 = vector.broadcast %cst_288 : f32 to vector<16x16xf32>
    %669 = arith.addf %668, %667 : vector<16x16xf32>
    %cst_289 = arith.constant 1.000000e+00 : f32
    %670 = vector.broadcast %cst_289 : f32 to vector<16x16xf32>
    %671 = arith.divf %670, %669 : vector<16x16xf32>
    %cst_290 = arith.constant 0.000000e+00 : f32
    %672 = vector.broadcast %cst_290 : f32 to vector<16x16xf32>
    %673 = arith.cmpf oge, %661, %672 : vector<16x16xf32>
    %674 = arith.mulf %667, %671 : vector<16x16xf32>
    %675 = arith.select %673, %671, %674 : vector<16x16xi1>, vector<16x16xf32>
    %cst_291 = arith.constant 0.000000e+00 : f32
    %676 = vector.broadcast %cst_291 : f32 to vector<16x16xf32>
    %677 = arith.maximumf %661, %676 : vector<16x16xf32>
    %678 = arith.mulf %661, %663 : vector<16x16xf32>
    %679 = arith.subf %677, %678 : vector<16x16xf32>
    %cst_292 = arith.constant 1.000000e+00 : f32
    %680 = vector.broadcast %cst_292 : f32 to vector<16x16xf32>
    %681 = arith.addf %680, %667 : vector<16x16xf32>
    %682 = math.log %681 : vector<16x16xf32>
    %683 = arith.addf %679, %682 : vector<16x16xf32>
    %684 = arith.mulf %675, %663 : vector<16x16xf32>
    %685 = arith.addf %468, %684 : vector<16x16xf32>
    %686 = arith.addf %675, %663 : vector<16x16xf32>
    %687 = arith.addf %470, %686 : vector<16x16xf32>
    %688 = arith.addf %471, %683 : vector<16x16xf32>
    %cst_293 = arith.constant 1.000000e+00 : f32
    %689 = vector.broadcast %cst_293 : f32 to vector<16x16xf32>
    %690 = arith.subf %689, %663 : vector<16x16xf32>
    %cst_294 = arith.constant 1.000000e+00 : f32
    %691 = vector.broadcast %cst_294 : f32 to vector<16x16xf32>
    %692 = arith.subf %691, %675 : vector<16x16xf32>
    %c15_i32_295 = arith.constant 15 : i32
    %693 = tpu.dynamic_rotate %690 by %c15_i32_295 dim 1 : vector<16x16xf32>, i32 -> vector<16x16xf32>
    %c15_i32_296 = arith.constant 15 : i32
    %694 = vector.broadcast %c15_i32_296 : i32 to vector<16x16xi32>
    %695 = arith.cmpi slt, %4, %694 : vector<16x16xi32>
    %cst_297 = arith.constant 0.000000e+00 : f32
    %696 = vector.broadcast %cst_297 : f32 to vector<16x16xf32>
    %697 = arith.select %695, %693, %696 : vector<16x16xi1>, vector<16x16xf32>
    %698 = arith.maximumf %690, %697 : vector<16x16xf32>
    %c1_i32_298 = arith.constant 1 : i32
    %699 = tpu.dynamic_rotate %690 by %c1_i32_298 dim 1 : vector<16x16xf32>, i32 -> vector<16x16xf32>
    %c1_i32_299 = arith.constant 1 : i32
    %700 = vector.broadcast %c1_i32_299 : i32 to vector<16x16xi32>
    %701 = arith.cmpi sge, %4, %700 : vector<16x16xi32>
    %cst_300 = arith.constant 0.000000e+00 : f32
    %702 = vector.broadcast %cst_300 : f32 to vector<16x16xf32>
    %703 = arith.select %701, %699, %702 : vector<16x16xi1>, vector<16x16xf32>
    %704 = arith.maximumf %698, %703 : vector<16x16xf32>
    %c15_i32_301 = arith.constant 15 : i32
    %705 = tpu.dynamic_rotate %704 by %c15_i32_301 dim 0 : vector<16x16xf32>, i32 -> vector<16x16xf32>
    %c15_i32_302 = arith.constant 15 : i32
    %706 = vector.broadcast %c15_i32_302 : i32 to vector<16x16xi32>
    %707 = arith.cmpi slt, %3, %706 : vector<16x16xi32>
    %cst_303 = arith.constant 0.000000e+00 : f32
    %708 = vector.broadcast %cst_303 : f32 to vector<16x16xf32>
    %709 = arith.select %707, %705, %708 : vector<16x16xi1>, vector<16x16xf32>
    %710 = arith.maximumf %704, %709 : vector<16x16xf32>
    %c1_i32_304 = arith.constant 1 : i32
    %711 = tpu.dynamic_rotate %704 by %c1_i32_304 dim 0 : vector<16x16xf32>, i32 -> vector<16x16xf32>
    %c1_i32_305 = arith.constant 1 : i32
    %712 = vector.broadcast %c1_i32_305 : i32 to vector<16x16xi32>
    %713 = arith.cmpi sge, %3, %712 : vector<16x16xi32>
    %cst_306 = arith.constant 0.000000e+00 : f32
    %714 = vector.broadcast %cst_306 : f32 to vector<16x16xf32>
    %715 = arith.select %713, %711, %714 : vector<16x16xi1>, vector<16x16xf32>
    %716 = arith.maximumf %710, %715 : vector<16x16xf32>
    %717 = arith.subf %716, %690 : vector<16x16xf32>
    %c15_i32_307 = arith.constant 15 : i32
    %718 = tpu.dynamic_rotate %692 by %c15_i32_307 dim 1 : vector<16x16xf32>, i32 -> vector<16x16xf32>
    %c15_i32_308 = arith.constant 15 : i32
    %719 = vector.broadcast %c15_i32_308 : i32 to vector<16x16xi32>
    %720 = arith.cmpi slt, %4, %719 : vector<16x16xi32>
    %cst_309 = arith.constant 0.000000e+00 : f32
    %721 = vector.broadcast %cst_309 : f32 to vector<16x16xf32>
    %722 = arith.select %720, %718, %721 : vector<16x16xi1>, vector<16x16xf32>
    %723 = arith.maximumf %692, %722 : vector<16x16xf32>
    %c1_i32_310 = arith.constant 1 : i32
    %724 = tpu.dynamic_rotate %692 by %c1_i32_310 dim 1 : vector<16x16xf32>, i32 -> vector<16x16xf32>
    %c1_i32_311 = arith.constant 1 : i32
    %725 = vector.broadcast %c1_i32_311 : i32 to vector<16x16xi32>
    %726 = arith.cmpi sge, %4, %725 : vector<16x16xi32>
    %cst_312 = arith.constant 0.000000e+00 : f32
    %727 = vector.broadcast %cst_312 : f32 to vector<16x16xf32>
    %728 = arith.select %726, %724, %727 : vector<16x16xi1>, vector<16x16xf32>
    %729 = arith.maximumf %723, %728 : vector<16x16xf32>
    %c15_i32_313 = arith.constant 15 : i32
    %730 = tpu.dynamic_rotate %729 by %c15_i32_313 dim 0 : vector<16x16xf32>, i32 -> vector<16x16xf32>
    %c15_i32_314 = arith.constant 15 : i32
    %731 = vector.broadcast %c15_i32_314 : i32 to vector<16x16xi32>
    %732 = arith.cmpi slt, %3, %731 : vector<16x16xi32>
    %cst_315 = arith.constant 0.000000e+00 : f32
    %733 = vector.broadcast %cst_315 : f32 to vector<16x16xf32>
    %734 = arith.select %732, %730, %733 : vector<16x16xi1>, vector<16x16xf32>
    %735 = arith.maximumf %729, %734 : vector<16x16xf32>
    %c1_i32_316 = arith.constant 1 : i32
    %736 = tpu.dynamic_rotate %729 by %c1_i32_316 dim 0 : vector<16x16xf32>, i32 -> vector<16x16xf32>
    %c1_i32_317 = arith.constant 1 : i32
    %737 = vector.broadcast %c1_i32_317 : i32 to vector<16x16xi32>
    %738 = arith.cmpi sge, %3, %737 : vector<16x16xi32>
    %cst_318 = arith.constant 0.000000e+00 : f32
    %739 = vector.broadcast %cst_318 : f32 to vector<16x16xf32>
    %740 = arith.select %738, %736, %739 : vector<16x16xi1>, vector<16x16xf32>
    %741 = arith.maximumf %735, %740 : vector<16x16xf32>
    %742 = arith.subf %741, %692 : vector<16x16xf32>
    %c15_i32_319 = arith.constant 15 : i32
    %743 = tpu.dynamic_rotate %717 by %c15_i32_319 dim 1 : vector<16x16xf32>, i32 -> vector<16x16xf32>
    %c15_i32_320 = arith.constant 15 : i32
    %744 = vector.broadcast %c15_i32_320 : i32 to vector<16x16xi32>
    %745 = arith.cmpi slt, %4, %744 : vector<16x16xi32>
    %cst_321 = arith.constant 0.000000e+00 : f32
    %746 = vector.broadcast %cst_321 : f32 to vector<16x16xf32>
    %747 = arith.select %745, %743, %746 : vector<16x16xi1>, vector<16x16xf32>
    %748 = arith.maximumf %717, %747 : vector<16x16xf32>
    %c1_i32_322 = arith.constant 1 : i32
    %749 = tpu.dynamic_rotate %717 by %c1_i32_322 dim 1 : vector<16x16xf32>, i32 -> vector<16x16xf32>
    %c1_i32_323 = arith.constant 1 : i32
    %750 = vector.broadcast %c1_i32_323 : i32 to vector<16x16xi32>
    %751 = arith.cmpi sge, %4, %750 : vector<16x16xi32>
    %cst_324 = arith.constant 0.000000e+00 : f32
    %752 = vector.broadcast %cst_324 : f32 to vector<16x16xf32>
    %753 = arith.select %751, %749, %752 : vector<16x16xi1>, vector<16x16xf32>
    %754 = arith.maximumf %748, %753 : vector<16x16xf32>
    %c14_i32_325 = arith.constant 14 : i32
    %755 = tpu.dynamic_rotate %717 by %c14_i32_325 dim 1 : vector<16x16xf32>, i32 -> vector<16x16xf32>
    %c14_i32_326 = arith.constant 14 : i32
    %756 = vector.broadcast %c14_i32_326 : i32 to vector<16x16xi32>
    %757 = arith.cmpi slt, %4, %756 : vector<16x16xi32>
    %cst_327 = arith.constant 0.000000e+00 : f32
    %758 = vector.broadcast %cst_327 : f32 to vector<16x16xf32>
    %759 = arith.select %757, %755, %758 : vector<16x16xi1>, vector<16x16xf32>
    %760 = arith.maximumf %754, %759 : vector<16x16xf32>
    %c2_i32_328 = arith.constant 2 : i32
    %761 = tpu.dynamic_rotate %717 by %c2_i32_328 dim 1 : vector<16x16xf32>, i32 -> vector<16x16xf32>
    %c2_i32_329 = arith.constant 2 : i32
    %762 = vector.broadcast %c2_i32_329 : i32 to vector<16x16xi32>
    %763 = arith.cmpi sge, %4, %762 : vector<16x16xi32>
    %cst_330 = arith.constant 0.000000e+00 : f32
    %764 = vector.broadcast %cst_330 : f32 to vector<16x16xf32>
    %765 = arith.select %763, %761, %764 : vector<16x16xi1>, vector<16x16xf32>
    %766 = arith.maximumf %760, %765 : vector<16x16xf32>
    %c15_i32_331 = arith.constant 15 : i32
    %767 = tpu.dynamic_rotate %766 by %c15_i32_331 dim 0 : vector<16x16xf32>, i32 -> vector<16x16xf32>
    %c15_i32_332 = arith.constant 15 : i32
    %768 = vector.broadcast %c15_i32_332 : i32 to vector<16x16xi32>
    %769 = arith.cmpi slt, %3, %768 : vector<16x16xi32>
    %cst_333 = arith.constant 0.000000e+00 : f32
    %770 = vector.broadcast %cst_333 : f32 to vector<16x16xf32>
    %771 = arith.select %769, %767, %770 : vector<16x16xi1>, vector<16x16xf32>
    %772 = arith.maximumf %766, %771 : vector<16x16xf32>
    %c1_i32_334 = arith.constant 1 : i32
    %773 = tpu.dynamic_rotate %766 by %c1_i32_334 dim 0 : vector<16x16xf32>, i32 -> vector<16x16xf32>
    %c1_i32_335 = arith.constant 1 : i32
    %774 = vector.broadcast %c1_i32_335 : i32 to vector<16x16xi32>
    %775 = arith.cmpi sge, %3, %774 : vector<16x16xi32>
    %cst_336 = arith.constant 0.000000e+00 : f32
    %776 = vector.broadcast %cst_336 : f32 to vector<16x16xf32>
    %777 = arith.select %775, %773, %776 : vector<16x16xi1>, vector<16x16xf32>
    %778 = arith.maximumf %772, %777 : vector<16x16xf32>
    %c14_i32_337 = arith.constant 14 : i32
    %779 = tpu.dynamic_rotate %766 by %c14_i32_337 dim 0 : vector<16x16xf32>, i32 -> vector<16x16xf32>
    %c14_i32_338 = arith.constant 14 : i32
    %780 = vector.broadcast %c14_i32_338 : i32 to vector<16x16xi32>
    %781 = arith.cmpi slt, %3, %780 : vector<16x16xi32>
    %cst_339 = arith.constant 0.000000e+00 : f32
    %782 = vector.broadcast %cst_339 : f32 to vector<16x16xf32>
    %783 = arith.select %781, %779, %782 : vector<16x16xi1>, vector<16x16xf32>
    %784 = arith.maximumf %778, %783 : vector<16x16xf32>
    %c2_i32_340 = arith.constant 2 : i32
    %785 = tpu.dynamic_rotate %766 by %c2_i32_340 dim 0 : vector<16x16xf32>, i32 -> vector<16x16xf32>
    %c2_i32_341 = arith.constant 2 : i32
    %786 = vector.broadcast %c2_i32_341 : i32 to vector<16x16xi32>
    %787 = arith.cmpi sge, %3, %786 : vector<16x16xi32>
    %cst_342 = arith.constant 0.000000e+00 : f32
    %788 = vector.broadcast %cst_342 : f32 to vector<16x16xf32>
    %789 = arith.select %787, %785, %788 : vector<16x16xi1>, vector<16x16xf32>
    %790 = arith.maximumf %784, %789 : vector<16x16xf32>
    %c15_i32_343 = arith.constant 15 : i32
    %791 = tpu.dynamic_rotate %742 by %c15_i32_343 dim 1 : vector<16x16xf32>, i32 -> vector<16x16xf32>
    %c15_i32_344 = arith.constant 15 : i32
    %792 = vector.broadcast %c15_i32_344 : i32 to vector<16x16xi32>
    %793 = arith.cmpi slt, %4, %792 : vector<16x16xi32>
    %cst_345 = arith.constant 0.000000e+00 : f32
    %794 = vector.broadcast %cst_345 : f32 to vector<16x16xf32>
    %795 = arith.select %793, %791, %794 : vector<16x16xi1>, vector<16x16xf32>
    %796 = arith.maximumf %742, %795 : vector<16x16xf32>
    %c1_i32_346 = arith.constant 1 : i32
    %797 = tpu.dynamic_rotate %742 by %c1_i32_346 dim 1 : vector<16x16xf32>, i32 -> vector<16x16xf32>
    %c1_i32_347 = arith.constant 1 : i32
    %798 = vector.broadcast %c1_i32_347 : i32 to vector<16x16xi32>
    %799 = arith.cmpi sge, %4, %798 : vector<16x16xi32>
    %cst_348 = arith.constant 0.000000e+00 : f32
    %800 = vector.broadcast %cst_348 : f32 to vector<16x16xf32>
    %801 = arith.select %799, %797, %800 : vector<16x16xi1>, vector<16x16xf32>
    %802 = arith.maximumf %796, %801 : vector<16x16xf32>
    %c14_i32_349 = arith.constant 14 : i32
    %803 = tpu.dynamic_rotate %742 by %c14_i32_349 dim 1 : vector<16x16xf32>, i32 -> vector<16x16xf32>
    %c14_i32_350 = arith.constant 14 : i32
    %804 = vector.broadcast %c14_i32_350 : i32 to vector<16x16xi32>
    %805 = arith.cmpi slt, %4, %804 : vector<16x16xi32>
    %cst_351 = arith.constant 0.000000e+00 : f32
    %806 = vector.broadcast %cst_351 : f32 to vector<16x16xf32>
    %807 = arith.select %805, %803, %806 : vector<16x16xi1>, vector<16x16xf32>
    %808 = arith.maximumf %802, %807 : vector<16x16xf32>
    %c2_i32_352 = arith.constant 2 : i32
    %809 = tpu.dynamic_rotate %742 by %c2_i32_352 dim 1 : vector<16x16xf32>, i32 -> vector<16x16xf32>
    %c2_i32_353 = arith.constant 2 : i32
    %810 = vector.broadcast %c2_i32_353 : i32 to vector<16x16xi32>
    %811 = arith.cmpi sge, %4, %810 : vector<16x16xi32>
    %cst_354 = arith.constant 0.000000e+00 : f32
    %812 = vector.broadcast %cst_354 : f32 to vector<16x16xf32>
    %813 = arith.select %811, %809, %812 : vector<16x16xi1>, vector<16x16xf32>
    %814 = arith.maximumf %808, %813 : vector<16x16xf32>
    %c15_i32_355 = arith.constant 15 : i32
    %815 = tpu.dynamic_rotate %814 by %c15_i32_355 dim 0 : vector<16x16xf32>, i32 -> vector<16x16xf32>
    %c15_i32_356 = arith.constant 15 : i32
    %816 = vector.broadcast %c15_i32_356 : i32 to vector<16x16xi32>
    %817 = arith.cmpi slt, %3, %816 : vector<16x16xi32>
    %cst_357 = arith.constant 0.000000e+00 : f32
    %818 = vector.broadcast %cst_357 : f32 to vector<16x16xf32>
    %819 = arith.select %817, %815, %818 : vector<16x16xi1>, vector<16x16xf32>
    %820 = arith.maximumf %814, %819 : vector<16x16xf32>
    %c1_i32_358 = arith.constant 1 : i32
    %821 = tpu.dynamic_rotate %814 by %c1_i32_358 dim 0 : vector<16x16xf32>, i32 -> vector<16x16xf32>
    %c1_i32_359 = arith.constant 1 : i32
    %822 = vector.broadcast %c1_i32_359 : i32 to vector<16x16xi32>
    %823 = arith.cmpi sge, %3, %822 : vector<16x16xi32>
    %cst_360 = arith.constant 0.000000e+00 : f32
    %824 = vector.broadcast %cst_360 : f32 to vector<16x16xf32>
    %825 = arith.select %823, %821, %824 : vector<16x16xi1>, vector<16x16xf32>
    %826 = arith.maximumf %820, %825 : vector<16x16xf32>
    %c14_i32_361 = arith.constant 14 : i32
    %827 = tpu.dynamic_rotate %814 by %c14_i32_361 dim 0 : vector<16x16xf32>, i32 -> vector<16x16xf32>
    %c14_i32_362 = arith.constant 14 : i32
    %828 = vector.broadcast %c14_i32_362 : i32 to vector<16x16xi32>
    %829 = arith.cmpi slt, %3, %828 : vector<16x16xi32>
    %cst_363 = arith.constant 0.000000e+00 : f32
    %830 = vector.broadcast %cst_363 : f32 to vector<16x16xf32>
    %831 = arith.select %829, %827, %830 : vector<16x16xi1>, vector<16x16xf32>
    %832 = arith.maximumf %826, %831 : vector<16x16xf32>
    %c2_i32_364 = arith.constant 2 : i32
    %833 = tpu.dynamic_rotate %814 by %c2_i32_364 dim 0 : vector<16x16xf32>, i32 -> vector<16x16xf32>
    %c2_i32_365 = arith.constant 2 : i32
    %834 = vector.broadcast %c2_i32_365 : i32 to vector<16x16xi32>
    %835 = arith.cmpi sge, %3, %834 : vector<16x16xi32>
    %cst_366 = arith.constant 0.000000e+00 : f32
    %836 = vector.broadcast %cst_366 : f32 to vector<16x16xf32>
    %837 = arith.select %835, %833, %836 : vector<16x16xi1>, vector<16x16xf32>
    %838 = arith.maximumf %832, %837 : vector<16x16xf32>
    %839 = arith.mulf %742, %790 : vector<16x16xf32>
    %840 = vector.shape_cast %839 : vector<16x16xf32> to vector<1x16x16xf32>
    %cst_367 = arith.constant dense<0.000000e+00> : vector<1xf32>
    %841 = vector.multi_reduction <add>, %840, %cst_367 [1, 2] : vector<1x16x16xf32> to vector<1xf32>
    %842 = vector.shape_cast %841 : vector<1xf32> to vector<1x1x1xf32>
    %843 = vector.extract %842[0, 0, 0] : f32 from vector<1x1x1xf32>
    %844 = vector.broadcast %843 : f32 to vector<1x1xf32>
    %845 = vector.shape_cast %742 : vector<16x16xf32> to vector<1x16x16xf32>
    %cst_368 = arith.constant dense<0.000000e+00> : vector<1xf32>
    %846 = vector.multi_reduction <add>, %845, %cst_368 [1, 2] : vector<1x16x16xf32> to vector<1xf32>
    %847 = vector.shape_cast %846 : vector<1xf32> to vector<1x1x1xf32>
    %848 = vector.extract %847[0, 0, 0] : f32 from vector<1x1x1xf32>
    %849 = vector.broadcast %848 : f32 to vector<1x1xf32>
    %cst_369 = arith.constant 1.000000e-07 : f32
    %850 = vector.broadcast %cst_369 : f32 to vector<1x1xf32>
    %851 = arith.addf %849, %850 : vector<1x1xf32>
    %852 = arith.mulf %838, %717 : vector<16x16xf32>
    %853 = vector.shape_cast %852 : vector<16x16xf32> to vector<1x16x16xf32>
    %cst_370 = arith.constant dense<0.000000e+00> : vector<1xf32>
    %854 = vector.multi_reduction <add>, %853, %cst_370 [1, 2] : vector<1x16x16xf32> to vector<1xf32>
    %855 = vector.shape_cast %854 : vector<1xf32> to vector<1x1x1xf32>
    %856 = vector.extract %855[0, 0, 0] : f32 from vector<1x1x1xf32>
    %857 = vector.broadcast %856 : f32 to vector<1x1xf32>
    %858 = vector.shape_cast %717 : vector<16x16xf32> to vector<1x16x16xf32>
    %cst_371 = arith.constant dense<0.000000e+00> : vector<1xf32>
    %859 = vector.multi_reduction <add>, %858, %cst_371 [1, 2] : vector<1x16x16xf32> to vector<1xf32>
    %860 = vector.shape_cast %859 : vector<1xf32> to vector<1x1x1xf32>
    %861 = vector.extract %860[0, 0, 0] : f32 from vector<1x1x1xf32>
    %862 = vector.broadcast %861 : f32 to vector<1x1xf32>
    %cst_372 = arith.constant 1.000000e-07 : f32
    %863 = vector.broadcast %cst_372 : f32 to vector<1x1xf32>
    %864 = arith.addf %862, %863 : vector<1x1xf32>
    %865 = arith.divf %844, %851 : vector<1x1xf32>
    %866 = arith.divf %857, %864 : vector<1x1xf32>
    %cst_373 = arith.constant 2.000000e+00 : f32
    %867 = vector.broadcast %cst_373 : f32 to vector<1x1xf32>
    %868 = arith.mulf %867, %865 : vector<1x1xf32>
    %869 = arith.mulf %868, %866 : vector<1x1xf32>
    %870 = arith.addf %865, %866 : vector<1x1xf32>
    %cst_374 = arith.constant 1.000000e-07 : f32
    %871 = vector.broadcast %cst_374 : f32 to vector<1x1xf32>
    %872 = arith.addf %870, %871 : vector<1x1xf32>
    %873 = arith.divf %869, %872 : vector<1x1xf32>
    %cst_375 = arith.constant 1.000000e+00 : f32
    %874 = vector.broadcast %cst_375 : f32 to vector<1x1xf32>
    %875 = arith.subf %874, %873 : vector<1x1xf32>
    %876 = arith.addf %659, %875 : vector<1x1xf32>
    %c4 = arith.constant 4 : index
    %c0_376 = arith.constant 0 : index
    %c0_377 = arith.constant 0 : index
    %877 = vector.load %arg1[%c4, %c0_376, %c0_377] : memref<8x16x16xf32, #tpu.memory_space<vmem>>, vector<1x16x16xf32>
    %878 = vector.shape_cast %877 : vector<1x16x16xf32> to vector<16x16xf32>
    %c4_378 = arith.constant 4 : index
    %c0_379 = arith.constant 0 : index
    %c0_380 = arith.constant 0 : index
    %879 = vector.load %arg2[%c4_378, %c0_379, %c0_380] : memref<8x16x16xf32, #tpu.memory_space<vmem>>, vector<1x16x16xf32>
    %880 = vector.shape_cast %879 : vector<1x16x16xf32> to vector<16x16xf32>
    %881 = math.absf %878 : vector<16x16xf32>
    %cst_381 = arith.constant 0.000000e+00 : f32
    %882 = vector.broadcast %cst_381 : f32 to vector<16x16xf32>
    %883 = arith.subf %882, %881 : vector<16x16xf32>
    %884 = math.exp %883 : vector<16x16xf32>
    %cst_382 = arith.constant 1.000000e+00 : f32
    %885 = vector.broadcast %cst_382 : f32 to vector<16x16xf32>
    %886 = arith.addf %885, %884 : vector<16x16xf32>
    %cst_383 = arith.constant 1.000000e+00 : f32
    %887 = vector.broadcast %cst_383 : f32 to vector<16x16xf32>
    %888 = arith.divf %887, %886 : vector<16x16xf32>
    %cst_384 = arith.constant 0.000000e+00 : f32
    %889 = vector.broadcast %cst_384 : f32 to vector<16x16xf32>
    %890 = arith.cmpf oge, %878, %889 : vector<16x16xf32>
    %891 = arith.mulf %884, %888 : vector<16x16xf32>
    %892 = arith.select %890, %888, %891 : vector<16x16xi1>, vector<16x16xf32>
    %cst_385 = arith.constant 0.000000e+00 : f32
    %893 = vector.broadcast %cst_385 : f32 to vector<16x16xf32>
    %894 = arith.maximumf %878, %893 : vector<16x16xf32>
    %895 = arith.mulf %878, %880 : vector<16x16xf32>
    %896 = arith.subf %894, %895 : vector<16x16xf32>
    %cst_386 = arith.constant 1.000000e+00 : f32
    %897 = vector.broadcast %cst_386 : f32 to vector<16x16xf32>
    %898 = arith.addf %897, %884 : vector<16x16xf32>
    %899 = math.log %898 : vector<16x16xf32>
    %900 = arith.addf %896, %899 : vector<16x16xf32>
    %901 = arith.mulf %892, %880 : vector<16x16xf32>
    %902 = arith.addf %685, %901 : vector<16x16xf32>
    %903 = arith.addf %892, %880 : vector<16x16xf32>
    %904 = arith.addf %687, %903 : vector<16x16xf32>
    %905 = arith.addf %688, %900 : vector<16x16xf32>
    %cst_387 = arith.constant 1.000000e+00 : f32
    %906 = vector.broadcast %cst_387 : f32 to vector<16x16xf32>
    %907 = arith.subf %906, %880 : vector<16x16xf32>
    %cst_388 = arith.constant 1.000000e+00 : f32
    %908 = vector.broadcast %cst_388 : f32 to vector<16x16xf32>
    %909 = arith.subf %908, %892 : vector<16x16xf32>
    %c15_i32_389 = arith.constant 15 : i32
    %910 = tpu.dynamic_rotate %907 by %c15_i32_389 dim 1 : vector<16x16xf32>, i32 -> vector<16x16xf32>
    %c15_i32_390 = arith.constant 15 : i32
    %911 = vector.broadcast %c15_i32_390 : i32 to vector<16x16xi32>
    %912 = arith.cmpi slt, %4, %911 : vector<16x16xi32>
    %cst_391 = arith.constant 0.000000e+00 : f32
    %913 = vector.broadcast %cst_391 : f32 to vector<16x16xf32>
    %914 = arith.select %912, %910, %913 : vector<16x16xi1>, vector<16x16xf32>
    %915 = arith.maximumf %907, %914 : vector<16x16xf32>
    %c1_i32_392 = arith.constant 1 : i32
    %916 = tpu.dynamic_rotate %907 by %c1_i32_392 dim 1 : vector<16x16xf32>, i32 -> vector<16x16xf32>
    %c1_i32_393 = arith.constant 1 : i32
    %917 = vector.broadcast %c1_i32_393 : i32 to vector<16x16xi32>
    %918 = arith.cmpi sge, %4, %917 : vector<16x16xi32>
    %cst_394 = arith.constant 0.000000e+00 : f32
    %919 = vector.broadcast %cst_394 : f32 to vector<16x16xf32>
    %920 = arith.select %918, %916, %919 : vector<16x16xi1>, vector<16x16xf32>
    %921 = arith.maximumf %915, %920 : vector<16x16xf32>
    %c15_i32_395 = arith.constant 15 : i32
    %922 = tpu.dynamic_rotate %921 by %c15_i32_395 dim 0 : vector<16x16xf32>, i32 -> vector<16x16xf32>
    %c15_i32_396 = arith.constant 15 : i32
    %923 = vector.broadcast %c15_i32_396 : i32 to vector<16x16xi32>
    %924 = arith.cmpi slt, %3, %923 : vector<16x16xi32>
    %cst_397 = arith.constant 0.000000e+00 : f32
    %925 = vector.broadcast %cst_397 : f32 to vector<16x16xf32>
    %926 = arith.select %924, %922, %925 : vector<16x16xi1>, vector<16x16xf32>
    %927 = arith.maximumf %921, %926 : vector<16x16xf32>
    %c1_i32_398 = arith.constant 1 : i32
    %928 = tpu.dynamic_rotate %921 by %c1_i32_398 dim 0 : vector<16x16xf32>, i32 -> vector<16x16xf32>
    %c1_i32_399 = arith.constant 1 : i32
    %929 = vector.broadcast %c1_i32_399 : i32 to vector<16x16xi32>
    %930 = arith.cmpi sge, %3, %929 : vector<16x16xi32>
    %cst_400 = arith.constant 0.000000e+00 : f32
    %931 = vector.broadcast %cst_400 : f32 to vector<16x16xf32>
    %932 = arith.select %930, %928, %931 : vector<16x16xi1>, vector<16x16xf32>
    %933 = arith.maximumf %927, %932 : vector<16x16xf32>
    %934 = arith.subf %933, %907 : vector<16x16xf32>
    %c15_i32_401 = arith.constant 15 : i32
    %935 = tpu.dynamic_rotate %909 by %c15_i32_401 dim 1 : vector<16x16xf32>, i32 -> vector<16x16xf32>
    %c15_i32_402 = arith.constant 15 : i32
    %936 = vector.broadcast %c15_i32_402 : i32 to vector<16x16xi32>
    %937 = arith.cmpi slt, %4, %936 : vector<16x16xi32>
    %cst_403 = arith.constant 0.000000e+00 : f32
    %938 = vector.broadcast %cst_403 : f32 to vector<16x16xf32>
    %939 = arith.select %937, %935, %938 : vector<16x16xi1>, vector<16x16xf32>
    %940 = arith.maximumf %909, %939 : vector<16x16xf32>
    %c1_i32_404 = arith.constant 1 : i32
    %941 = tpu.dynamic_rotate %909 by %c1_i32_404 dim 1 : vector<16x16xf32>, i32 -> vector<16x16xf32>
    %c1_i32_405 = arith.constant 1 : i32
    %942 = vector.broadcast %c1_i32_405 : i32 to vector<16x16xi32>
    %943 = arith.cmpi sge, %4, %942 : vector<16x16xi32>
    %cst_406 = arith.constant 0.000000e+00 : f32
    %944 = vector.broadcast %cst_406 : f32 to vector<16x16xf32>
    %945 = arith.select %943, %941, %944 : vector<16x16xi1>, vector<16x16xf32>
    %946 = arith.maximumf %940, %945 : vector<16x16xf32>
    %c15_i32_407 = arith.constant 15 : i32
    %947 = tpu.dynamic_rotate %946 by %c15_i32_407 dim 0 : vector<16x16xf32>, i32 -> vector<16x16xf32>
    %c15_i32_408 = arith.constant 15 : i32
    %948 = vector.broadcast %c15_i32_408 : i32 to vector<16x16xi32>
    %949 = arith.cmpi slt, %3, %948 : vector<16x16xi32>
    %cst_409 = arith.constant 0.000000e+00 : f32
    %950 = vector.broadcast %cst_409 : f32 to vector<16x16xf32>
    %951 = arith.select %949, %947, %950 : vector<16x16xi1>, vector<16x16xf32>
    %952 = arith.maximumf %946, %951 : vector<16x16xf32>
    %c1_i32_410 = arith.constant 1 : i32
    %953 = tpu.dynamic_rotate %946 by %c1_i32_410 dim 0 : vector<16x16xf32>, i32 -> vector<16x16xf32>
    %c1_i32_411 = arith.constant 1 : i32
    %954 = vector.broadcast %c1_i32_411 : i32 to vector<16x16xi32>
    %955 = arith.cmpi sge, %3, %954 : vector<16x16xi32>
    %cst_412 = arith.constant 0.000000e+00 : f32
    %956 = vector.broadcast %cst_412 : f32 to vector<16x16xf32>
    %957 = arith.select %955, %953, %956 : vector<16x16xi1>, vector<16x16xf32>
    %958 = arith.maximumf %952, %957 : vector<16x16xf32>
    %959 = arith.subf %958, %909 : vector<16x16xf32>
    %c15_i32_413 = arith.constant 15 : i32
    %960 = tpu.dynamic_rotate %934 by %c15_i32_413 dim 1 : vector<16x16xf32>, i32 -> vector<16x16xf32>
    %c15_i32_414 = arith.constant 15 : i32
    %961 = vector.broadcast %c15_i32_414 : i32 to vector<16x16xi32>
    %962 = arith.cmpi slt, %4, %961 : vector<16x16xi32>
    %cst_415 = arith.constant 0.000000e+00 : f32
    %963 = vector.broadcast %cst_415 : f32 to vector<16x16xf32>
    %964 = arith.select %962, %960, %963 : vector<16x16xi1>, vector<16x16xf32>
    %965 = arith.maximumf %934, %964 : vector<16x16xf32>
    %c1_i32_416 = arith.constant 1 : i32
    %966 = tpu.dynamic_rotate %934 by %c1_i32_416 dim 1 : vector<16x16xf32>, i32 -> vector<16x16xf32>
    %c1_i32_417 = arith.constant 1 : i32
    %967 = vector.broadcast %c1_i32_417 : i32 to vector<16x16xi32>
    %968 = arith.cmpi sge, %4, %967 : vector<16x16xi32>
    %cst_418 = arith.constant 0.000000e+00 : f32
    %969 = vector.broadcast %cst_418 : f32 to vector<16x16xf32>
    %970 = arith.select %968, %966, %969 : vector<16x16xi1>, vector<16x16xf32>
    %971 = arith.maximumf %965, %970 : vector<16x16xf32>
    %c14_i32_419 = arith.constant 14 : i32
    %972 = tpu.dynamic_rotate %934 by %c14_i32_419 dim 1 : vector<16x16xf32>, i32 -> vector<16x16xf32>
    %c14_i32_420 = arith.constant 14 : i32
    %973 = vector.broadcast %c14_i32_420 : i32 to vector<16x16xi32>
    %974 = arith.cmpi slt, %4, %973 : vector<16x16xi32>
    %cst_421 = arith.constant 0.000000e+00 : f32
    %975 = vector.broadcast %cst_421 : f32 to vector<16x16xf32>
    %976 = arith.select %974, %972, %975 : vector<16x16xi1>, vector<16x16xf32>
    %977 = arith.maximumf %971, %976 : vector<16x16xf32>
    %c2_i32_422 = arith.constant 2 : i32
    %978 = tpu.dynamic_rotate %934 by %c2_i32_422 dim 1 : vector<16x16xf32>, i32 -> vector<16x16xf32>
    %c2_i32_423 = arith.constant 2 : i32
    %979 = vector.broadcast %c2_i32_423 : i32 to vector<16x16xi32>
    %980 = arith.cmpi sge, %4, %979 : vector<16x16xi32>
    %cst_424 = arith.constant 0.000000e+00 : f32
    %981 = vector.broadcast %cst_424 : f32 to vector<16x16xf32>
    %982 = arith.select %980, %978, %981 : vector<16x16xi1>, vector<16x16xf32>
    %983 = arith.maximumf %977, %982 : vector<16x16xf32>
    %c15_i32_425 = arith.constant 15 : i32
    %984 = tpu.dynamic_rotate %983 by %c15_i32_425 dim 0 : vector<16x16xf32>, i32 -> vector<16x16xf32>
    %c15_i32_426 = arith.constant 15 : i32
    %985 = vector.broadcast %c15_i32_426 : i32 to vector<16x16xi32>
    %986 = arith.cmpi slt, %3, %985 : vector<16x16xi32>
    %cst_427 = arith.constant 0.000000e+00 : f32
    %987 = vector.broadcast %cst_427 : f32 to vector<16x16xf32>
    %988 = arith.select %986, %984, %987 : vector<16x16xi1>, vector<16x16xf32>
    %989 = arith.maximumf %983, %988 : vector<16x16xf32>
    %c1_i32_428 = arith.constant 1 : i32
    %990 = tpu.dynamic_rotate %983 by %c1_i32_428 dim 0 : vector<16x16xf32>, i32 -> vector<16x16xf32>
    %c1_i32_429 = arith.constant 1 : i32
    %991 = vector.broadcast %c1_i32_429 : i32 to vector<16x16xi32>
    %992 = arith.cmpi sge, %3, %991 : vector<16x16xi32>
    %cst_430 = arith.constant 0.000000e+00 : f32
    %993 = vector.broadcast %cst_430 : f32 to vector<16x16xf32>
    %994 = arith.select %992, %990, %993 : vector<16x16xi1>, vector<16x16xf32>
    %995 = arith.maximumf %989, %994 : vector<16x16xf32>
    %c14_i32_431 = arith.constant 14 : i32
    %996 = tpu.dynamic_rotate %983 by %c14_i32_431 dim 0 : vector<16x16xf32>, i32 -> vector<16x16xf32>
    %c14_i32_432 = arith.constant 14 : i32
    %997 = vector.broadcast %c14_i32_432 : i32 to vector<16x16xi32>
    %998 = arith.cmpi slt, %3, %997 : vector<16x16xi32>
    %cst_433 = arith.constant 0.000000e+00 : f32
    %999 = vector.broadcast %cst_433 : f32 to vector<16x16xf32>
    %1000 = arith.select %998, %996, %999 : vector<16x16xi1>, vector<16x16xf32>
    %1001 = arith.maximumf %995, %1000 : vector<16x16xf32>
    %c2_i32_434 = arith.constant 2 : i32
    %1002 = tpu.dynamic_rotate %983 by %c2_i32_434 dim 0 : vector<16x16xf32>, i32 -> vector<16x16xf32>
    %c2_i32_435 = arith.constant 2 : i32
    %1003 = vector.broadcast %c2_i32_435 : i32 to vector<16x16xi32>
    %1004 = arith.cmpi sge, %3, %1003 : vector<16x16xi32>
    %cst_436 = arith.constant 0.000000e+00 : f32
    %1005 = vector.broadcast %cst_436 : f32 to vector<16x16xf32>
    %1006 = arith.select %1004, %1002, %1005 : vector<16x16xi1>, vector<16x16xf32>
    %1007 = arith.maximumf %1001, %1006 : vector<16x16xf32>
    %c15_i32_437 = arith.constant 15 : i32
    %1008 = tpu.dynamic_rotate %959 by %c15_i32_437 dim 1 : vector<16x16xf32>, i32 -> vector<16x16xf32>
    %c15_i32_438 = arith.constant 15 : i32
    %1009 = vector.broadcast %c15_i32_438 : i32 to vector<16x16xi32>
    %1010 = arith.cmpi slt, %4, %1009 : vector<16x16xi32>
    %cst_439 = arith.constant 0.000000e+00 : f32
    %1011 = vector.broadcast %cst_439 : f32 to vector<16x16xf32>
    %1012 = arith.select %1010, %1008, %1011 : vector<16x16xi1>, vector<16x16xf32>
    %1013 = arith.maximumf %959, %1012 : vector<16x16xf32>
    %c1_i32_440 = arith.constant 1 : i32
    %1014 = tpu.dynamic_rotate %959 by %c1_i32_440 dim 1 : vector<16x16xf32>, i32 -> vector<16x16xf32>
    %c1_i32_441 = arith.constant 1 : i32
    %1015 = vector.broadcast %c1_i32_441 : i32 to vector<16x16xi32>
    %1016 = arith.cmpi sge, %4, %1015 : vector<16x16xi32>
    %cst_442 = arith.constant 0.000000e+00 : f32
    %1017 = vector.broadcast %cst_442 : f32 to vector<16x16xf32>
    %1018 = arith.select %1016, %1014, %1017 : vector<16x16xi1>, vector<16x16xf32>
    %1019 = arith.maximumf %1013, %1018 : vector<16x16xf32>
    %c14_i32_443 = arith.constant 14 : i32
    %1020 = tpu.dynamic_rotate %959 by %c14_i32_443 dim 1 : vector<16x16xf32>, i32 -> vector<16x16xf32>
    %c14_i32_444 = arith.constant 14 : i32
    %1021 = vector.broadcast %c14_i32_444 : i32 to vector<16x16xi32>
    %1022 = arith.cmpi slt, %4, %1021 : vector<16x16xi32>
    %cst_445 = arith.constant 0.000000e+00 : f32
    %1023 = vector.broadcast %cst_445 : f32 to vector<16x16xf32>
    %1024 = arith.select %1022, %1020, %1023 : vector<16x16xi1>, vector<16x16xf32>
    %1025 = arith.maximumf %1019, %1024 : vector<16x16xf32>
    %c2_i32_446 = arith.constant 2 : i32
    %1026 = tpu.dynamic_rotate %959 by %c2_i32_446 dim 1 : vector<16x16xf32>, i32 -> vector<16x16xf32>
    %c2_i32_447 = arith.constant 2 : i32
    %1027 = vector.broadcast %c2_i32_447 : i32 to vector<16x16xi32>
    %1028 = arith.cmpi sge, %4, %1027 : vector<16x16xi32>
    %cst_448 = arith.constant 0.000000e+00 : f32
    %1029 = vector.broadcast %cst_448 : f32 to vector<16x16xf32>
    %1030 = arith.select %1028, %1026, %1029 : vector<16x16xi1>, vector<16x16xf32>
    %1031 = arith.maximumf %1025, %1030 : vector<16x16xf32>
    %c15_i32_449 = arith.constant 15 : i32
    %1032 = tpu.dynamic_rotate %1031 by %c15_i32_449 dim 0 : vector<16x16xf32>, i32 -> vector<16x16xf32>
    %c15_i32_450 = arith.constant 15 : i32
    %1033 = vector.broadcast %c15_i32_450 : i32 to vector<16x16xi32>
    %1034 = arith.cmpi slt, %3, %1033 : vector<16x16xi32>
    %cst_451 = arith.constant 0.000000e+00 : f32
    %1035 = vector.broadcast %cst_451 : f32 to vector<16x16xf32>
    %1036 = arith.select %1034, %1032, %1035 : vector<16x16xi1>, vector<16x16xf32>
    %1037 = arith.maximumf %1031, %1036 : vector<16x16xf32>
    %c1_i32_452 = arith.constant 1 : i32
    %1038 = tpu.dynamic_rotate %1031 by %c1_i32_452 dim 0 : vector<16x16xf32>, i32 -> vector<16x16xf32>
    %c1_i32_453 = arith.constant 1 : i32
    %1039 = vector.broadcast %c1_i32_453 : i32 to vector<16x16xi32>
    %1040 = arith.cmpi sge, %3, %1039 : vector<16x16xi32>
    %cst_454 = arith.constant 0.000000e+00 : f32
    %1041 = vector.broadcast %cst_454 : f32 to vector<16x16xf32>
    %1042 = arith.select %1040, %1038, %1041 : vector<16x16xi1>, vector<16x16xf32>
    %1043 = arith.maximumf %1037, %1042 : vector<16x16xf32>
    %c14_i32_455 = arith.constant 14 : i32
    %1044 = tpu.dynamic_rotate %1031 by %c14_i32_455 dim 0 : vector<16x16xf32>, i32 -> vector<16x16xf32>
    %c14_i32_456 = arith.constant 14 : i32
    %1045 = vector.broadcast %c14_i32_456 : i32 to vector<16x16xi32>
    %1046 = arith.cmpi slt, %3, %1045 : vector<16x16xi32>
    %cst_457 = arith.constant 0.000000e+00 : f32
    %1047 = vector.broadcast %cst_457 : f32 to vector<16x16xf32>
    %1048 = arith.select %1046, %1044, %1047 : vector<16x16xi1>, vector<16x16xf32>
    %1049 = arith.maximumf %1043, %1048 : vector<16x16xf32>
    %c2_i32_458 = arith.constant 2 : i32
    %1050 = tpu.dynamic_rotate %1031 by %c2_i32_458 dim 0 : vector<16x16xf32>, i32 -> vector<16x16xf32>
    %c2_i32_459 = arith.constant 2 : i32
    %1051 = vector.broadcast %c2_i32_459 : i32 to vector<16x16xi32>
    %1052 = arith.cmpi sge, %3, %1051 : vector<16x16xi32>
    %cst_460 = arith.constant 0.000000e+00 : f32
    %1053 = vector.broadcast %cst_460 : f32 to vector<16x16xf32>
    %1054 = arith.select %1052, %1050, %1053 : vector<16x16xi1>, vector<16x16xf32>
    %1055 = arith.maximumf %1049, %1054 : vector<16x16xf32>
    %1056 = arith.mulf %959, %1007 : vector<16x16xf32>
    %1057 = vector.shape_cast %1056 : vector<16x16xf32> to vector<1x16x16xf32>
    %cst_461 = arith.constant dense<0.000000e+00> : vector<1xf32>
    %1058 = vector.multi_reduction <add>, %1057, %cst_461 [1, 2] : vector<1x16x16xf32> to vector<1xf32>
    %1059 = vector.shape_cast %1058 : vector<1xf32> to vector<1x1x1xf32>
    %1060 = vector.extract %1059[0, 0, 0] : f32 from vector<1x1x1xf32>
    %1061 = vector.broadcast %1060 : f32 to vector<1x1xf32>
    %1062 = vector.shape_cast %959 : vector<16x16xf32> to vector<1x16x16xf32>
    %cst_462 = arith.constant dense<0.000000e+00> : vector<1xf32>
    %1063 = vector.multi_reduction <add>, %1062, %cst_462 [1, 2] : vector<1x16x16xf32> to vector<1xf32>
    %1064 = vector.shape_cast %1063 : vector<1xf32> to vector<1x1x1xf32>
    %1065 = vector.extract %1064[0, 0, 0] : f32 from vector<1x1x1xf32>
    %1066 = vector.broadcast %1065 : f32 to vector<1x1xf32>
    %cst_463 = arith.constant 1.000000e-07 : f32
    %1067 = vector.broadcast %cst_463 : f32 to vector<1x1xf32>
    %1068 = arith.addf %1066, %1067 : vector<1x1xf32>
    %1069 = arith.mulf %1055, %934 : vector<16x16xf32>
    %1070 = vector.shape_cast %1069 : vector<16x16xf32> to vector<1x16x16xf32>
    %cst_464 = arith.constant dense<0.000000e+00> : vector<1xf32>
    %1071 = vector.multi_reduction <add>, %1070, %cst_464 [1, 2] : vector<1x16x16xf32> to vector<1xf32>
    %1072 = vector.shape_cast %1071 : vector<1xf32> to vector<1x1x1xf32>
    %1073 = vector.extract %1072[0, 0, 0] : f32 from vector<1x1x1xf32>
    %1074 = vector.broadcast %1073 : f32 to vector<1x1xf32>
    %1075 = vector.shape_cast %934 : vector<16x16xf32> to vector<1x16x16xf32>
    %cst_465 = arith.constant dense<0.000000e+00> : vector<1xf32>
    %1076 = vector.multi_reduction <add>, %1075, %cst_465 [1, 2] : vector<1x16x16xf32> to vector<1xf32>
    %1077 = vector.shape_cast %1076 : vector<1xf32> to vector<1x1x1xf32>
    %1078 = vector.extract %1077[0, 0, 0] : f32 from vector<1x1x1xf32>
    %1079 = vector.broadcast %1078 : f32 to vector<1x1xf32>
    %cst_466 = arith.constant 1.000000e-07 : f32
    %1080 = vector.broadcast %cst_466 : f32 to vector<1x1xf32>
    %1081 = arith.addf %1079, %1080 : vector<1x1xf32>
    %1082 = arith.divf %1061, %1068 : vector<1x1xf32>
    %1083 = arith.divf %1074, %1081 : vector<1x1xf32>
    %cst_467 = arith.constant 2.000000e+00 : f32
    %1084 = vector.broadcast %cst_467 : f32 to vector<1x1xf32>
    %1085 = arith.mulf %1084, %1082 : vector<1x1xf32>
    %1086 = arith.mulf %1085, %1083 : vector<1x1xf32>
    %1087 = arith.addf %1082, %1083 : vector<1x1xf32>
    %cst_468 = arith.constant 1.000000e-07 : f32
    %1088 = vector.broadcast %cst_468 : f32 to vector<1x1xf32>
    %1089 = arith.addf %1087, %1088 : vector<1x1xf32>
    %1090 = arith.divf %1086, %1089 : vector<1x1xf32>
    %cst_469 = arith.constant 1.000000e+00 : f32
    %1091 = vector.broadcast %cst_469 : f32 to vector<1x1xf32>
    %1092 = arith.subf %1091, %1090 : vector<1x1xf32>
    %1093 = arith.addf %876, %1092 : vector<1x1xf32>
    %c5 = arith.constant 5 : index
    %c0_470 = arith.constant 0 : index
    %c0_471 = arith.constant 0 : index
    %1094 = vector.load %arg1[%c5, %c0_470, %c0_471] : memref<8x16x16xf32, #tpu.memory_space<vmem>>, vector<1x16x16xf32>
    %1095 = vector.shape_cast %1094 : vector<1x16x16xf32> to vector<16x16xf32>
    %c5_472 = arith.constant 5 : index
    %c0_473 = arith.constant 0 : index
    %c0_474 = arith.constant 0 : index
    %1096 = vector.load %arg2[%c5_472, %c0_473, %c0_474] : memref<8x16x16xf32, #tpu.memory_space<vmem>>, vector<1x16x16xf32>
    %1097 = vector.shape_cast %1096 : vector<1x16x16xf32> to vector<16x16xf32>
    %1098 = math.absf %1095 : vector<16x16xf32>
    %cst_475 = arith.constant 0.000000e+00 : f32
    %1099 = vector.broadcast %cst_475 : f32 to vector<16x16xf32>
    %1100 = arith.subf %1099, %1098 : vector<16x16xf32>
    %1101 = math.exp %1100 : vector<16x16xf32>
    %cst_476 = arith.constant 1.000000e+00 : f32
    %1102 = vector.broadcast %cst_476 : f32 to vector<16x16xf32>
    %1103 = arith.addf %1102, %1101 : vector<16x16xf32>
    %cst_477 = arith.constant 1.000000e+00 : f32
    %1104 = vector.broadcast %cst_477 : f32 to vector<16x16xf32>
    %1105 = arith.divf %1104, %1103 : vector<16x16xf32>
    %cst_478 = arith.constant 0.000000e+00 : f32
    %1106 = vector.broadcast %cst_478 : f32 to vector<16x16xf32>
    %1107 = arith.cmpf oge, %1095, %1106 : vector<16x16xf32>
    %1108 = arith.mulf %1101, %1105 : vector<16x16xf32>
    %1109 = arith.select %1107, %1105, %1108 : vector<16x16xi1>, vector<16x16xf32>
    %cst_479 = arith.constant 0.000000e+00 : f32
    %1110 = vector.broadcast %cst_479 : f32 to vector<16x16xf32>
    %1111 = arith.maximumf %1095, %1110 : vector<16x16xf32>
    %1112 = arith.mulf %1095, %1097 : vector<16x16xf32>
    %1113 = arith.subf %1111, %1112 : vector<16x16xf32>
    %cst_480 = arith.constant 1.000000e+00 : f32
    %1114 = vector.broadcast %cst_480 : f32 to vector<16x16xf32>
    %1115 = arith.addf %1114, %1101 : vector<16x16xf32>
    %1116 = math.log %1115 : vector<16x16xf32>
    %1117 = arith.addf %1113, %1116 : vector<16x16xf32>
    %1118 = arith.mulf %1109, %1097 : vector<16x16xf32>
    %1119 = arith.addf %902, %1118 : vector<16x16xf32>
    %1120 = arith.addf %1109, %1097 : vector<16x16xf32>
    %1121 = arith.addf %904, %1120 : vector<16x16xf32>
    %1122 = arith.addf %905, %1117 : vector<16x16xf32>
    %cst_481 = arith.constant 1.000000e+00 : f32
    %1123 = vector.broadcast %cst_481 : f32 to vector<16x16xf32>
    %1124 = arith.subf %1123, %1097 : vector<16x16xf32>
    %cst_482 = arith.constant 1.000000e+00 : f32
    %1125 = vector.broadcast %cst_482 : f32 to vector<16x16xf32>
    %1126 = arith.subf %1125, %1109 : vector<16x16xf32>
    %c15_i32_483 = arith.constant 15 : i32
    %1127 = tpu.dynamic_rotate %1124 by %c15_i32_483 dim 1 : vector<16x16xf32>, i32 -> vector<16x16xf32>
    %c15_i32_484 = arith.constant 15 : i32
    %1128 = vector.broadcast %c15_i32_484 : i32 to vector<16x16xi32>
    %1129 = arith.cmpi slt, %4, %1128 : vector<16x16xi32>
    %cst_485 = arith.constant 0.000000e+00 : f32
    %1130 = vector.broadcast %cst_485 : f32 to vector<16x16xf32>
    %1131 = arith.select %1129, %1127, %1130 : vector<16x16xi1>, vector<16x16xf32>
    %1132 = arith.maximumf %1124, %1131 : vector<16x16xf32>
    %c1_i32_486 = arith.constant 1 : i32
    %1133 = tpu.dynamic_rotate %1124 by %c1_i32_486 dim 1 : vector<16x16xf32>, i32 -> vector<16x16xf32>
    %c1_i32_487 = arith.constant 1 : i32
    %1134 = vector.broadcast %c1_i32_487 : i32 to vector<16x16xi32>
    %1135 = arith.cmpi sge, %4, %1134 : vector<16x16xi32>
    %cst_488 = arith.constant 0.000000e+00 : f32
    %1136 = vector.broadcast %cst_488 : f32 to vector<16x16xf32>
    %1137 = arith.select %1135, %1133, %1136 : vector<16x16xi1>, vector<16x16xf32>
    %1138 = arith.maximumf %1132, %1137 : vector<16x16xf32>
    %c15_i32_489 = arith.constant 15 : i32
    %1139 = tpu.dynamic_rotate %1138 by %c15_i32_489 dim 0 : vector<16x16xf32>, i32 -> vector<16x16xf32>
    %c15_i32_490 = arith.constant 15 : i32
    %1140 = vector.broadcast %c15_i32_490 : i32 to vector<16x16xi32>
    %1141 = arith.cmpi slt, %3, %1140 : vector<16x16xi32>
    %cst_491 = arith.constant 0.000000e+00 : f32
    %1142 = vector.broadcast %cst_491 : f32 to vector<16x16xf32>
    %1143 = arith.select %1141, %1139, %1142 : vector<16x16xi1>, vector<16x16xf32>
    %1144 = arith.maximumf %1138, %1143 : vector<16x16xf32>
    %c1_i32_492 = arith.constant 1 : i32
    %1145 = tpu.dynamic_rotate %1138 by %c1_i32_492 dim 0 : vector<16x16xf32>, i32 -> vector<16x16xf32>
    %c1_i32_493 = arith.constant 1 : i32
    %1146 = vector.broadcast %c1_i32_493 : i32 to vector<16x16xi32>
    %1147 = arith.cmpi sge, %3, %1146 : vector<16x16xi32>
    %cst_494 = arith.constant 0.000000e+00 : f32
    %1148 = vector.broadcast %cst_494 : f32 to vector<16x16xf32>
    %1149 = arith.select %1147, %1145, %1148 : vector<16x16xi1>, vector<16x16xf32>
    %1150 = arith.maximumf %1144, %1149 : vector<16x16xf32>
    %1151 = arith.subf %1150, %1124 : vector<16x16xf32>
    %c15_i32_495 = arith.constant 15 : i32
    %1152 = tpu.dynamic_rotate %1126 by %c15_i32_495 dim 1 : vector<16x16xf32>, i32 -> vector<16x16xf32>
    %c15_i32_496 = arith.constant 15 : i32
    %1153 = vector.broadcast %c15_i32_496 : i32 to vector<16x16xi32>
    %1154 = arith.cmpi slt, %4, %1153 : vector<16x16xi32>
    %cst_497 = arith.constant 0.000000e+00 : f32
    %1155 = vector.broadcast %cst_497 : f32 to vector<16x16xf32>
    %1156 = arith.select %1154, %1152, %1155 : vector<16x16xi1>, vector<16x16xf32>
    %1157 = arith.maximumf %1126, %1156 : vector<16x16xf32>
    %c1_i32_498 = arith.constant 1 : i32
    %1158 = tpu.dynamic_rotate %1126 by %c1_i32_498 dim 1 : vector<16x16xf32>, i32 -> vector<16x16xf32>
    %c1_i32_499 = arith.constant 1 : i32
    %1159 = vector.broadcast %c1_i32_499 : i32 to vector<16x16xi32>
    %1160 = arith.cmpi sge, %4, %1159 : vector<16x16xi32>
    %cst_500 = arith.constant 0.000000e+00 : f32
    %1161 = vector.broadcast %cst_500 : f32 to vector<16x16xf32>
    %1162 = arith.select %1160, %1158, %1161 : vector<16x16xi1>, vector<16x16xf32>
    %1163 = arith.maximumf %1157, %1162 : vector<16x16xf32>
    %c15_i32_501 = arith.constant 15 : i32
    %1164 = tpu.dynamic_rotate %1163 by %c15_i32_501 dim 0 : vector<16x16xf32>, i32 -> vector<16x16xf32>
    %c15_i32_502 = arith.constant 15 : i32
    %1165 = vector.broadcast %c15_i32_502 : i32 to vector<16x16xi32>
    %1166 = arith.cmpi slt, %3, %1165 : vector<16x16xi32>
    %cst_503 = arith.constant 0.000000e+00 : f32
    %1167 = vector.broadcast %cst_503 : f32 to vector<16x16xf32>
    %1168 = arith.select %1166, %1164, %1167 : vector<16x16xi1>, vector<16x16xf32>
    %1169 = arith.maximumf %1163, %1168 : vector<16x16xf32>
    %c1_i32_504 = arith.constant 1 : i32
    %1170 = tpu.dynamic_rotate %1163 by %c1_i32_504 dim 0 : vector<16x16xf32>, i32 -> vector<16x16xf32>
    %c1_i32_505 = arith.constant 1 : i32
    %1171 = vector.broadcast %c1_i32_505 : i32 to vector<16x16xi32>
    %1172 = arith.cmpi sge, %3, %1171 : vector<16x16xi32>
    %cst_506 = arith.constant 0.000000e+00 : f32
    %1173 = vector.broadcast %cst_506 : f32 to vector<16x16xf32>
    %1174 = arith.select %1172, %1170, %1173 : vector<16x16xi1>, vector<16x16xf32>
    %1175 = arith.maximumf %1169, %1174 : vector<16x16xf32>
    %1176 = arith.subf %1175, %1126 : vector<16x16xf32>
    %c15_i32_507 = arith.constant 15 : i32
    %1177 = tpu.dynamic_rotate %1151 by %c15_i32_507 dim 1 : vector<16x16xf32>, i32 -> vector<16x16xf32>
    %c15_i32_508 = arith.constant 15 : i32
    %1178 = vector.broadcast %c15_i32_508 : i32 to vector<16x16xi32>
    %1179 = arith.cmpi slt, %4, %1178 : vector<16x16xi32>
    %cst_509 = arith.constant 0.000000e+00 : f32
    %1180 = vector.broadcast %cst_509 : f32 to vector<16x16xf32>
    %1181 = arith.select %1179, %1177, %1180 : vector<16x16xi1>, vector<16x16xf32>
    %1182 = arith.maximumf %1151, %1181 : vector<16x16xf32>
    %c1_i32_510 = arith.constant 1 : i32
    %1183 = tpu.dynamic_rotate %1151 by %c1_i32_510 dim 1 : vector<16x16xf32>, i32 -> vector<16x16xf32>
    %c1_i32_511 = arith.constant 1 : i32
    %1184 = vector.broadcast %c1_i32_511 : i32 to vector<16x16xi32>
    %1185 = arith.cmpi sge, %4, %1184 : vector<16x16xi32>
    %cst_512 = arith.constant 0.000000e+00 : f32
    %1186 = vector.broadcast %cst_512 : f32 to vector<16x16xf32>
    %1187 = arith.select %1185, %1183, %1186 : vector<16x16xi1>, vector<16x16xf32>
    %1188 = arith.maximumf %1182, %1187 : vector<16x16xf32>
    %c14_i32_513 = arith.constant 14 : i32
    %1189 = tpu.dynamic_rotate %1151 by %c14_i32_513 dim 1 : vector<16x16xf32>, i32 -> vector<16x16xf32>
    %c14_i32_514 = arith.constant 14 : i32
    %1190 = vector.broadcast %c14_i32_514 : i32 to vector<16x16xi32>
    %1191 = arith.cmpi slt, %4, %1190 : vector<16x16xi32>
    %cst_515 = arith.constant 0.000000e+00 : f32
    %1192 = vector.broadcast %cst_515 : f32 to vector<16x16xf32>
    %1193 = arith.select %1191, %1189, %1192 : vector<16x16xi1>, vector<16x16xf32>
    %1194 = arith.maximumf %1188, %1193 : vector<16x16xf32>
    %c2_i32_516 = arith.constant 2 : i32
    %1195 = tpu.dynamic_rotate %1151 by %c2_i32_516 dim 1 : vector<16x16xf32>, i32 -> vector<16x16xf32>
    %c2_i32_517 = arith.constant 2 : i32
    %1196 = vector.broadcast %c2_i32_517 : i32 to vector<16x16xi32>
    %1197 = arith.cmpi sge, %4, %1196 : vector<16x16xi32>
    %cst_518 = arith.constant 0.000000e+00 : f32
    %1198 = vector.broadcast %cst_518 : f32 to vector<16x16xf32>
    %1199 = arith.select %1197, %1195, %1198 : vector<16x16xi1>, vector<16x16xf32>
    %1200 = arith.maximumf %1194, %1199 : vector<16x16xf32>
    %c15_i32_519 = arith.constant 15 : i32
    %1201 = tpu.dynamic_rotate %1200 by %c15_i32_519 dim 0 : vector<16x16xf32>, i32 -> vector<16x16xf32>
    %c15_i32_520 = arith.constant 15 : i32
    %1202 = vector.broadcast %c15_i32_520 : i32 to vector<16x16xi32>
    %1203 = arith.cmpi slt, %3, %1202 : vector<16x16xi32>
    %cst_521 = arith.constant 0.000000e+00 : f32
    %1204 = vector.broadcast %cst_521 : f32 to vector<16x16xf32>
    %1205 = arith.select %1203, %1201, %1204 : vector<16x16xi1>, vector<16x16xf32>
    %1206 = arith.maximumf %1200, %1205 : vector<16x16xf32>
    %c1_i32_522 = arith.constant 1 : i32
    %1207 = tpu.dynamic_rotate %1200 by %c1_i32_522 dim 0 : vector<16x16xf32>, i32 -> vector<16x16xf32>
    %c1_i32_523 = arith.constant 1 : i32
    %1208 = vector.broadcast %c1_i32_523 : i32 to vector<16x16xi32>
    %1209 = arith.cmpi sge, %3, %1208 : vector<16x16xi32>
    %cst_524 = arith.constant 0.000000e+00 : f32
    %1210 = vector.broadcast %cst_524 : f32 to vector<16x16xf32>
    %1211 = arith.select %1209, %1207, %1210 : vector<16x16xi1>, vector<16x16xf32>
    %1212 = arith.maximumf %1206, %1211 : vector<16x16xf32>
    %c14_i32_525 = arith.constant 14 : i32
    %1213 = tpu.dynamic_rotate %1200 by %c14_i32_525 dim 0 : vector<16x16xf32>, i32 -> vector<16x16xf32>
    %c14_i32_526 = arith.constant 14 : i32
    %1214 = vector.broadcast %c14_i32_526 : i32 to vector<16x16xi32>
    %1215 = arith.cmpi slt, %3, %1214 : vector<16x16xi32>
    %cst_527 = arith.constant 0.000000e+00 : f32
    %1216 = vector.broadcast %cst_527 : f32 to vector<16x16xf32>
    %1217 = arith.select %1215, %1213, %1216 : vector<16x16xi1>, vector<16x16xf32>
    %1218 = arith.maximumf %1212, %1217 : vector<16x16xf32>
    %c2_i32_528 = arith.constant 2 : i32
    %1219 = tpu.dynamic_rotate %1200 by %c2_i32_528 dim 0 : vector<16x16xf32>, i32 -> vector<16x16xf32>
    %c2_i32_529 = arith.constant 2 : i32
    %1220 = vector.broadcast %c2_i32_529 : i32 to vector<16x16xi32>
    %1221 = arith.cmpi sge, %3, %1220 : vector<16x16xi32>
    %cst_530 = arith.constant 0.000000e+00 : f32
    %1222 = vector.broadcast %cst_530 : f32 to vector<16x16xf32>
    %1223 = arith.select %1221, %1219, %1222 : vector<16x16xi1>, vector<16x16xf32>
    %1224 = arith.maximumf %1218, %1223 : vector<16x16xf32>
    %c15_i32_531 = arith.constant 15 : i32
    %1225 = tpu.dynamic_rotate %1176 by %c15_i32_531 dim 1 : vector<16x16xf32>, i32 -> vector<16x16xf32>
    %c15_i32_532 = arith.constant 15 : i32
    %1226 = vector.broadcast %c15_i32_532 : i32 to vector<16x16xi32>
    %1227 = arith.cmpi slt, %4, %1226 : vector<16x16xi32>
    %cst_533 = arith.constant 0.000000e+00 : f32
    %1228 = vector.broadcast %cst_533 : f32 to vector<16x16xf32>
    %1229 = arith.select %1227, %1225, %1228 : vector<16x16xi1>, vector<16x16xf32>
    %1230 = arith.maximumf %1176, %1229 : vector<16x16xf32>
    %c1_i32_534 = arith.constant 1 : i32
    %1231 = tpu.dynamic_rotate %1176 by %c1_i32_534 dim 1 : vector<16x16xf32>, i32 -> vector<16x16xf32>
    %c1_i32_535 = arith.constant 1 : i32
    %1232 = vector.broadcast %c1_i32_535 : i32 to vector<16x16xi32>
    %1233 = arith.cmpi sge, %4, %1232 : vector<16x16xi32>
    %cst_536 = arith.constant 0.000000e+00 : f32
    %1234 = vector.broadcast %cst_536 : f32 to vector<16x16xf32>
    %1235 = arith.select %1233, %1231, %1234 : vector<16x16xi1>, vector<16x16xf32>
    %1236 = arith.maximumf %1230, %1235 : vector<16x16xf32>
    %c14_i32_537 = arith.constant 14 : i32
    %1237 = tpu.dynamic_rotate %1176 by %c14_i32_537 dim 1 : vector<16x16xf32>, i32 -> vector<16x16xf32>
    %c14_i32_538 = arith.constant 14 : i32
    %1238 = vector.broadcast %c14_i32_538 : i32 to vector<16x16xi32>
    %1239 = arith.cmpi slt, %4, %1238 : vector<16x16xi32>
    %cst_539 = arith.constant 0.000000e+00 : f32
    %1240 = vector.broadcast %cst_539 : f32 to vector<16x16xf32>
    %1241 = arith.select %1239, %1237, %1240 : vector<16x16xi1>, vector<16x16xf32>
    %1242 = arith.maximumf %1236, %1241 : vector<16x16xf32>
    %c2_i32_540 = arith.constant 2 : i32
    %1243 = tpu.dynamic_rotate %1176 by %c2_i32_540 dim 1 : vector<16x16xf32>, i32 -> vector<16x16xf32>
    %c2_i32_541 = arith.constant 2 : i32
    %1244 = vector.broadcast %c2_i32_541 : i32 to vector<16x16xi32>
    %1245 = arith.cmpi sge, %4, %1244 : vector<16x16xi32>
    %cst_542 = arith.constant 0.000000e+00 : f32
    %1246 = vector.broadcast %cst_542 : f32 to vector<16x16xf32>
    %1247 = arith.select %1245, %1243, %1246 : vector<16x16xi1>, vector<16x16xf32>
    %1248 = arith.maximumf %1242, %1247 : vector<16x16xf32>
    %c15_i32_543 = arith.constant 15 : i32
    %1249 = tpu.dynamic_rotate %1248 by %c15_i32_543 dim 0 : vector<16x16xf32>, i32 -> vector<16x16xf32>
    %c15_i32_544 = arith.constant 15 : i32
    %1250 = vector.broadcast %c15_i32_544 : i32 to vector<16x16xi32>
    %1251 = arith.cmpi slt, %3, %1250 : vector<16x16xi32>
    %cst_545 = arith.constant 0.000000e+00 : f32
    %1252 = vector.broadcast %cst_545 : f32 to vector<16x16xf32>
    %1253 = arith.select %1251, %1249, %1252 : vector<16x16xi1>, vector<16x16xf32>
    %1254 = arith.maximumf %1248, %1253 : vector<16x16xf32>
    %c1_i32_546 = arith.constant 1 : i32
    %1255 = tpu.dynamic_rotate %1248 by %c1_i32_546 dim 0 : vector<16x16xf32>, i32 -> vector<16x16xf32>
    %c1_i32_547 = arith.constant 1 : i32
    %1256 = vector.broadcast %c1_i32_547 : i32 to vector<16x16xi32>
    %1257 = arith.cmpi sge, %3, %1256 : vector<16x16xi32>
    %cst_548 = arith.constant 0.000000e+00 : f32
    %1258 = vector.broadcast %cst_548 : f32 to vector<16x16xf32>
    %1259 = arith.select %1257, %1255, %1258 : vector<16x16xi1>, vector<16x16xf32>
    %1260 = arith.maximumf %1254, %1259 : vector<16x16xf32>
    %c14_i32_549 = arith.constant 14 : i32
    %1261 = tpu.dynamic_rotate %1248 by %c14_i32_549 dim 0 : vector<16x16xf32>, i32 -> vector<16x16xf32>
    %c14_i32_550 = arith.constant 14 : i32
    %1262 = vector.broadcast %c14_i32_550 : i32 to vector<16x16xi32>
    %1263 = arith.cmpi slt, %3, %1262 : vector<16x16xi32>
    %cst_551 = arith.constant 0.000000e+00 : f32
    %1264 = vector.broadcast %cst_551 : f32 to vector<16x16xf32>
    %1265 = arith.select %1263, %1261, %1264 : vector<16x16xi1>, vector<16x16xf32>
    %1266 = arith.maximumf %1260, %1265 : vector<16x16xf32>
    %c2_i32_552 = arith.constant 2 : i32
    %1267 = tpu.dynamic_rotate %1248 by %c2_i32_552 dim 0 : vector<16x16xf32>, i32 -> vector<16x16xf32>
    %c2_i32_553 = arith.constant 2 : i32
    %1268 = vector.broadcast %c2_i32_553 : i32 to vector<16x16xi32>
    %1269 = arith.cmpi sge, %3, %1268 : vector<16x16xi32>
    %cst_554 = arith.constant 0.000000e+00 : f32
    %1270 = vector.broadcast %cst_554 : f32 to vector<16x16xf32>
    %1271 = arith.select %1269, %1267, %1270 : vector<16x16xi1>, vector<16x16xf32>
    %1272 = arith.maximumf %1266, %1271 : vector<16x16xf32>
    %1273 = arith.mulf %1176, %1224 : vector<16x16xf32>
    %1274 = vector.shape_cast %1273 : vector<16x16xf32> to vector<1x16x16xf32>
    %cst_555 = arith.constant dense<0.000000e+00> : vector<1xf32>
    %1275 = vector.multi_reduction <add>, %1274, %cst_555 [1, 2] : vector<1x16x16xf32> to vector<1xf32>
    %1276 = vector.shape_cast %1275 : vector<1xf32> to vector<1x1x1xf32>
    %1277 = vector.extract %1276[0, 0, 0] : f32 from vector<1x1x1xf32>
    %1278 = vector.broadcast %1277 : f32 to vector<1x1xf32>
    %1279 = vector.shape_cast %1176 : vector<16x16xf32> to vector<1x16x16xf32>
    %cst_556 = arith.constant dense<0.000000e+00> : vector<1xf32>
    %1280 = vector.multi_reduction <add>, %1279, %cst_556 [1, 2] : vector<1x16x16xf32> to vector<1xf32>
    %1281 = vector.shape_cast %1280 : vector<1xf32> to vector<1x1x1xf32>
    %1282 = vector.extract %1281[0, 0, 0] : f32 from vector<1x1x1xf32>
    %1283 = vector.broadcast %1282 : f32 to vector<1x1xf32>
    %cst_557 = arith.constant 1.000000e-07 : f32
    %1284 = vector.broadcast %cst_557 : f32 to vector<1x1xf32>
    %1285 = arith.addf %1283, %1284 : vector<1x1xf32>
    %1286 = arith.mulf %1272, %1151 : vector<16x16xf32>
    %1287 = vector.shape_cast %1286 : vector<16x16xf32> to vector<1x16x16xf32>
    %cst_558 = arith.constant dense<0.000000e+00> : vector<1xf32>
    %1288 = vector.multi_reduction <add>, %1287, %cst_558 [1, 2] : vector<1x16x16xf32> to vector<1xf32>
    %1289 = vector.shape_cast %1288 : vector<1xf32> to vector<1x1x1xf32>
    %1290 = vector.extract %1289[0, 0, 0] : f32 from vector<1x1x1xf32>
    %1291 = vector.broadcast %1290 : f32 to vector<1x1xf32>
    %1292 = vector.shape_cast %1151 : vector<16x16xf32> to vector<1x16x16xf32>
    %cst_559 = arith.constant dense<0.000000e+00> : vector<1xf32>
    %1293 = vector.multi_reduction <add>, %1292, %cst_559 [1, 2] : vector<1x16x16xf32> to vector<1xf32>
    %1294 = vector.shape_cast %1293 : vector<1xf32> to vector<1x1x1xf32>
    %1295 = vector.extract %1294[0, 0, 0] : f32 from vector<1x1x1xf32>
    %1296 = vector.broadcast %1295 : f32 to vector<1x1xf32>
    %cst_560 = arith.constant 1.000000e-07 : f32
    %1297 = vector.broadcast %cst_560 : f32 to vector<1x1xf32>
    %1298 = arith.addf %1296, %1297 : vector<1x1xf32>
    %1299 = arith.divf %1278, %1285 : vector<1x1xf32>
    %1300 = arith.divf %1291, %1298 : vector<1x1xf32>
    %cst_561 = arith.constant 2.000000e+00 : f32
    %1301 = vector.broadcast %cst_561 : f32 to vector<1x1xf32>
    %1302 = arith.mulf %1301, %1299 : vector<1x1xf32>
    %1303 = arith.mulf %1302, %1300 : vector<1x1xf32>
    %1304 = arith.addf %1299, %1300 : vector<1x1xf32>
    %cst_562 = arith.constant 1.000000e-07 : f32
    %1305 = vector.broadcast %cst_562 : f32 to vector<1x1xf32>
    %1306 = arith.addf %1304, %1305 : vector<1x1xf32>
    %1307 = arith.divf %1303, %1306 : vector<1x1xf32>
    %cst_563 = arith.constant 1.000000e+00 : f32
    %1308 = vector.broadcast %cst_563 : f32 to vector<1x1xf32>
    %1309 = arith.subf %1308, %1307 : vector<1x1xf32>
    %1310 = arith.addf %1093, %1309 : vector<1x1xf32>
    %c6 = arith.constant 6 : index
    %c0_564 = arith.constant 0 : index
    %c0_565 = arith.constant 0 : index
    %1311 = vector.load %arg1[%c6, %c0_564, %c0_565] : memref<8x16x16xf32, #tpu.memory_space<vmem>>, vector<1x16x16xf32>
    %1312 = vector.shape_cast %1311 : vector<1x16x16xf32> to vector<16x16xf32>
    %c6_566 = arith.constant 6 : index
    %c0_567 = arith.constant 0 : index
    %c0_568 = arith.constant 0 : index
    %1313 = vector.load %arg2[%c6_566, %c0_567, %c0_568] : memref<8x16x16xf32, #tpu.memory_space<vmem>>, vector<1x16x16xf32>
    %1314 = vector.shape_cast %1313 : vector<1x16x16xf32> to vector<16x16xf32>
    %1315 = math.absf %1312 : vector<16x16xf32>
    %cst_569 = arith.constant 0.000000e+00 : f32
    %1316 = vector.broadcast %cst_569 : f32 to vector<16x16xf32>
    %1317 = arith.subf %1316, %1315 : vector<16x16xf32>
    %1318 = math.exp %1317 : vector<16x16xf32>
    %cst_570 = arith.constant 1.000000e+00 : f32
    %1319 = vector.broadcast %cst_570 : f32 to vector<16x16xf32>
    %1320 = arith.addf %1319, %1318 : vector<16x16xf32>
    %cst_571 = arith.constant 1.000000e+00 : f32
    %1321 = vector.broadcast %cst_571 : f32 to vector<16x16xf32>
    %1322 = arith.divf %1321, %1320 : vector<16x16xf32>
    %cst_572 = arith.constant 0.000000e+00 : f32
    %1323 = vector.broadcast %cst_572 : f32 to vector<16x16xf32>
    %1324 = arith.cmpf oge, %1312, %1323 : vector<16x16xf32>
    %1325 = arith.mulf %1318, %1322 : vector<16x16xf32>
    %1326 = arith.select %1324, %1322, %1325 : vector<16x16xi1>, vector<16x16xf32>
    %cst_573 = arith.constant 0.000000e+00 : f32
    %1327 = vector.broadcast %cst_573 : f32 to vector<16x16xf32>
    %1328 = arith.maximumf %1312, %1327 : vector<16x16xf32>
    %1329 = arith.mulf %1312, %1314 : vector<16x16xf32>
    %1330 = arith.subf %1328, %1329 : vector<16x16xf32>
    %cst_574 = arith.constant 1.000000e+00 : f32
    %1331 = vector.broadcast %cst_574 : f32 to vector<16x16xf32>
    %1332 = arith.addf %1331, %1318 : vector<16x16xf32>
    %1333 = math.log %1332 : vector<16x16xf32>
    %1334 = arith.addf %1330, %1333 : vector<16x16xf32>
    %1335 = arith.mulf %1326, %1314 : vector<16x16xf32>
    %1336 = arith.addf %1119, %1335 : vector<16x16xf32>
    %1337 = arith.addf %1326, %1314 : vector<16x16xf32>
    %1338 = arith.addf %1121, %1337 : vector<16x16xf32>
    %1339 = arith.addf %1122, %1334 : vector<16x16xf32>
    %cst_575 = arith.constant 1.000000e+00 : f32
    %1340 = vector.broadcast %cst_575 : f32 to vector<16x16xf32>
    %1341 = arith.subf %1340, %1314 : vector<16x16xf32>
    %cst_576 = arith.constant 1.000000e+00 : f32
    %1342 = vector.broadcast %cst_576 : f32 to vector<16x16xf32>
    %1343 = arith.subf %1342, %1326 : vector<16x16xf32>
    %c15_i32_577 = arith.constant 15 : i32
    %1344 = tpu.dynamic_rotate %1341 by %c15_i32_577 dim 1 : vector<16x16xf32>, i32 -> vector<16x16xf32>
    %c15_i32_578 = arith.constant 15 : i32
    %1345 = vector.broadcast %c15_i32_578 : i32 to vector<16x16xi32>
    %1346 = arith.cmpi slt, %4, %1345 : vector<16x16xi32>
    %cst_579 = arith.constant 0.000000e+00 : f32
    %1347 = vector.broadcast %cst_579 : f32 to vector<16x16xf32>
    %1348 = arith.select %1346, %1344, %1347 : vector<16x16xi1>, vector<16x16xf32>
    %1349 = arith.maximumf %1341, %1348 : vector<16x16xf32>
    %c1_i32_580 = arith.constant 1 : i32
    %1350 = tpu.dynamic_rotate %1341 by %c1_i32_580 dim 1 : vector<16x16xf32>, i32 -> vector<16x16xf32>
    %c1_i32_581 = arith.constant 1 : i32
    %1351 = vector.broadcast %c1_i32_581 : i32 to vector<16x16xi32>
    %1352 = arith.cmpi sge, %4, %1351 : vector<16x16xi32>
    %cst_582 = arith.constant 0.000000e+00 : f32
    %1353 = vector.broadcast %cst_582 : f32 to vector<16x16xf32>
    %1354 = arith.select %1352, %1350, %1353 : vector<16x16xi1>, vector<16x16xf32>
    %1355 = arith.maximumf %1349, %1354 : vector<16x16xf32>
    %c15_i32_583 = arith.constant 15 : i32
    %1356 = tpu.dynamic_rotate %1355 by %c15_i32_583 dim 0 : vector<16x16xf32>, i32 -> vector<16x16xf32>
    %c15_i32_584 = arith.constant 15 : i32
    %1357 = vector.broadcast %c15_i32_584 : i32 to vector<16x16xi32>
    %1358 = arith.cmpi slt, %3, %1357 : vector<16x16xi32>
    %cst_585 = arith.constant 0.000000e+00 : f32
    %1359 = vector.broadcast %cst_585 : f32 to vector<16x16xf32>
    %1360 = arith.select %1358, %1356, %1359 : vector<16x16xi1>, vector<16x16xf32>
    %1361 = arith.maximumf %1355, %1360 : vector<16x16xf32>
    %c1_i32_586 = arith.constant 1 : i32
    %1362 = tpu.dynamic_rotate %1355 by %c1_i32_586 dim 0 : vector<16x16xf32>, i32 -> vector<16x16xf32>
    %c1_i32_587 = arith.constant 1 : i32
    %1363 = vector.broadcast %c1_i32_587 : i32 to vector<16x16xi32>
    %1364 = arith.cmpi sge, %3, %1363 : vector<16x16xi32>
    %cst_588 = arith.constant 0.000000e+00 : f32
    %1365 = vector.broadcast %cst_588 : f32 to vector<16x16xf32>
    %1366 = arith.select %1364, %1362, %1365 : vector<16x16xi1>, vector<16x16xf32>
    %1367 = arith.maximumf %1361, %1366 : vector<16x16xf32>
    %1368 = arith.subf %1367, %1341 : vector<16x16xf32>
    %c15_i32_589 = arith.constant 15 : i32
    %1369 = tpu.dynamic_rotate %1343 by %c15_i32_589 dim 1 : vector<16x16xf32>, i32 -> vector<16x16xf32>
    %c15_i32_590 = arith.constant 15 : i32
    %1370 = vector.broadcast %c15_i32_590 : i32 to vector<16x16xi32>
    %1371 = arith.cmpi slt, %4, %1370 : vector<16x16xi32>
    %cst_591 = arith.constant 0.000000e+00 : f32
    %1372 = vector.broadcast %cst_591 : f32 to vector<16x16xf32>
    %1373 = arith.select %1371, %1369, %1372 : vector<16x16xi1>, vector<16x16xf32>
    %1374 = arith.maximumf %1343, %1373 : vector<16x16xf32>
    %c1_i32_592 = arith.constant 1 : i32
    %1375 = tpu.dynamic_rotate %1343 by %c1_i32_592 dim 1 : vector<16x16xf32>, i32 -> vector<16x16xf32>
    %c1_i32_593 = arith.constant 1 : i32
    %1376 = vector.broadcast %c1_i32_593 : i32 to vector<16x16xi32>
    %1377 = arith.cmpi sge, %4, %1376 : vector<16x16xi32>
    %cst_594 = arith.constant 0.000000e+00 : f32
    %1378 = vector.broadcast %cst_594 : f32 to vector<16x16xf32>
    %1379 = arith.select %1377, %1375, %1378 : vector<16x16xi1>, vector<16x16xf32>
    %1380 = arith.maximumf %1374, %1379 : vector<16x16xf32>
    %c15_i32_595 = arith.constant 15 : i32
    %1381 = tpu.dynamic_rotate %1380 by %c15_i32_595 dim 0 : vector<16x16xf32>, i32 -> vector<16x16xf32>
    %c15_i32_596 = arith.constant 15 : i32
    %1382 = vector.broadcast %c15_i32_596 : i32 to vector<16x16xi32>
    %1383 = arith.cmpi slt, %3, %1382 : vector<16x16xi32>
    %cst_597 = arith.constant 0.000000e+00 : f32
    %1384 = vector.broadcast %cst_597 : f32 to vector<16x16xf32>
    %1385 = arith.select %1383, %1381, %1384 : vector<16x16xi1>, vector<16x16xf32>
    %1386 = arith.maximumf %1380, %1385 : vector<16x16xf32>
    %c1_i32_598 = arith.constant 1 : i32
    %1387 = tpu.dynamic_rotate %1380 by %c1_i32_598 dim 0 : vector<16x16xf32>, i32 -> vector<16x16xf32>
    %c1_i32_599 = arith.constant 1 : i32
    %1388 = vector.broadcast %c1_i32_599 : i32 to vector<16x16xi32>
    %1389 = arith.cmpi sge, %3, %1388 : vector<16x16xi32>
    %cst_600 = arith.constant 0.000000e+00 : f32
    %1390 = vector.broadcast %cst_600 : f32 to vector<16x16xf32>
    %1391 = arith.select %1389, %1387, %1390 : vector<16x16xi1>, vector<16x16xf32>
    %1392 = arith.maximumf %1386, %1391 : vector<16x16xf32>
    %1393 = arith.subf %1392, %1343 : vector<16x16xf32>
    %c15_i32_601 = arith.constant 15 : i32
    %1394 = tpu.dynamic_rotate %1368 by %c15_i32_601 dim 1 : vector<16x16xf32>, i32 -> vector<16x16xf32>
    %c15_i32_602 = arith.constant 15 : i32
    %1395 = vector.broadcast %c15_i32_602 : i32 to vector<16x16xi32>
    %1396 = arith.cmpi slt, %4, %1395 : vector<16x16xi32>
    %cst_603 = arith.constant 0.000000e+00 : f32
    %1397 = vector.broadcast %cst_603 : f32 to vector<16x16xf32>
    %1398 = arith.select %1396, %1394, %1397 : vector<16x16xi1>, vector<16x16xf32>
    %1399 = arith.maximumf %1368, %1398 : vector<16x16xf32>
    %c1_i32_604 = arith.constant 1 : i32
    %1400 = tpu.dynamic_rotate %1368 by %c1_i32_604 dim 1 : vector<16x16xf32>, i32 -> vector<16x16xf32>
    %c1_i32_605 = arith.constant 1 : i32
    %1401 = vector.broadcast %c1_i32_605 : i32 to vector<16x16xi32>
    %1402 = arith.cmpi sge, %4, %1401 : vector<16x16xi32>
    %cst_606 = arith.constant 0.000000e+00 : f32
    %1403 = vector.broadcast %cst_606 : f32 to vector<16x16xf32>
    %1404 = arith.select %1402, %1400, %1403 : vector<16x16xi1>, vector<16x16xf32>
    %1405 = arith.maximumf %1399, %1404 : vector<16x16xf32>
    %c14_i32_607 = arith.constant 14 : i32
    %1406 = tpu.dynamic_rotate %1368 by %c14_i32_607 dim 1 : vector<16x16xf32>, i32 -> vector<16x16xf32>
    %c14_i32_608 = arith.constant 14 : i32
    %1407 = vector.broadcast %c14_i32_608 : i32 to vector<16x16xi32>
    %1408 = arith.cmpi slt, %4, %1407 : vector<16x16xi32>
    %cst_609 = arith.constant 0.000000e+00 : f32
    %1409 = vector.broadcast %cst_609 : f32 to vector<16x16xf32>
    %1410 = arith.select %1408, %1406, %1409 : vector<16x16xi1>, vector<16x16xf32>
    %1411 = arith.maximumf %1405, %1410 : vector<16x16xf32>
    %c2_i32_610 = arith.constant 2 : i32
    %1412 = tpu.dynamic_rotate %1368 by %c2_i32_610 dim 1 : vector<16x16xf32>, i32 -> vector<16x16xf32>
    %c2_i32_611 = arith.constant 2 : i32
    %1413 = vector.broadcast %c2_i32_611 : i32 to vector<16x16xi32>
    %1414 = arith.cmpi sge, %4, %1413 : vector<16x16xi32>
    %cst_612 = arith.constant 0.000000e+00 : f32
    %1415 = vector.broadcast %cst_612 : f32 to vector<16x16xf32>
    %1416 = arith.select %1414, %1412, %1415 : vector<16x16xi1>, vector<16x16xf32>
    %1417 = arith.maximumf %1411, %1416 : vector<16x16xf32>
    %c15_i32_613 = arith.constant 15 : i32
    %1418 = tpu.dynamic_rotate %1417 by %c15_i32_613 dim 0 : vector<16x16xf32>, i32 -> vector<16x16xf32>
    %c15_i32_614 = arith.constant 15 : i32
    %1419 = vector.broadcast %c15_i32_614 : i32 to vector<16x16xi32>
    %1420 = arith.cmpi slt, %3, %1419 : vector<16x16xi32>
    %cst_615 = arith.constant 0.000000e+00 : f32
    %1421 = vector.broadcast %cst_615 : f32 to vector<16x16xf32>
    %1422 = arith.select %1420, %1418, %1421 : vector<16x16xi1>, vector<16x16xf32>
    %1423 = arith.maximumf %1417, %1422 : vector<16x16xf32>
    %c1_i32_616 = arith.constant 1 : i32
    %1424 = tpu.dynamic_rotate %1417 by %c1_i32_616 dim 0 : vector<16x16xf32>, i32 -> vector<16x16xf32>
    %c1_i32_617 = arith.constant 1 : i32
    %1425 = vector.broadcast %c1_i32_617 : i32 to vector<16x16xi32>
    %1426 = arith.cmpi sge, %3, %1425 : vector<16x16xi32>
    %cst_618 = arith.constant 0.000000e+00 : f32
    %1427 = vector.broadcast %cst_618 : f32 to vector<16x16xf32>
    %1428 = arith.select %1426, %1424, %1427 : vector<16x16xi1>, vector<16x16xf32>
    %1429 = arith.maximumf %1423, %1428 : vector<16x16xf32>
    %c14_i32_619 = arith.constant 14 : i32
    %1430 = tpu.dynamic_rotate %1417 by %c14_i32_619 dim 0 : vector<16x16xf32>, i32 -> vector<16x16xf32>
    %c14_i32_620 = arith.constant 14 : i32
    %1431 = vector.broadcast %c14_i32_620 : i32 to vector<16x16xi32>
    %1432 = arith.cmpi slt, %3, %1431 : vector<16x16xi32>
    %cst_621 = arith.constant 0.000000e+00 : f32
    %1433 = vector.broadcast %cst_621 : f32 to vector<16x16xf32>
    %1434 = arith.select %1432, %1430, %1433 : vector<16x16xi1>, vector<16x16xf32>
    %1435 = arith.maximumf %1429, %1434 : vector<16x16xf32>
    %c2_i32_622 = arith.constant 2 : i32
    %1436 = tpu.dynamic_rotate %1417 by %c2_i32_622 dim 0 : vector<16x16xf32>, i32 -> vector<16x16xf32>
    %c2_i32_623 = arith.constant 2 : i32
    %1437 = vector.broadcast %c2_i32_623 : i32 to vector<16x16xi32>
    %1438 = arith.cmpi sge, %3, %1437 : vector<16x16xi32>
    %cst_624 = arith.constant 0.000000e+00 : f32
    %1439 = vector.broadcast %cst_624 : f32 to vector<16x16xf32>
    %1440 = arith.select %1438, %1436, %1439 : vector<16x16xi1>, vector<16x16xf32>
    %1441 = arith.maximumf %1435, %1440 : vector<16x16xf32>
    %c15_i32_625 = arith.constant 15 : i32
    %1442 = tpu.dynamic_rotate %1393 by %c15_i32_625 dim 1 : vector<16x16xf32>, i32 -> vector<16x16xf32>
    %c15_i32_626 = arith.constant 15 : i32
    %1443 = vector.broadcast %c15_i32_626 : i32 to vector<16x16xi32>
    %1444 = arith.cmpi slt, %4, %1443 : vector<16x16xi32>
    %cst_627 = arith.constant 0.000000e+00 : f32
    %1445 = vector.broadcast %cst_627 : f32 to vector<16x16xf32>
    %1446 = arith.select %1444, %1442, %1445 : vector<16x16xi1>, vector<16x16xf32>
    %1447 = arith.maximumf %1393, %1446 : vector<16x16xf32>
    %c1_i32_628 = arith.constant 1 : i32
    %1448 = tpu.dynamic_rotate %1393 by %c1_i32_628 dim 1 : vector<16x16xf32>, i32 -> vector<16x16xf32>
    %c1_i32_629 = arith.constant 1 : i32
    %1449 = vector.broadcast %c1_i32_629 : i32 to vector<16x16xi32>
    %1450 = arith.cmpi sge, %4, %1449 : vector<16x16xi32>
    %cst_630 = arith.constant 0.000000e+00 : f32
    %1451 = vector.broadcast %cst_630 : f32 to vector<16x16xf32>
    %1452 = arith.select %1450, %1448, %1451 : vector<16x16xi1>, vector<16x16xf32>
    %1453 = arith.maximumf %1447, %1452 : vector<16x16xf32>
    %c14_i32_631 = arith.constant 14 : i32
    %1454 = tpu.dynamic_rotate %1393 by %c14_i32_631 dim 1 : vector<16x16xf32>, i32 -> vector<16x16xf32>
    %c14_i32_632 = arith.constant 14 : i32
    %1455 = vector.broadcast %c14_i32_632 : i32 to vector<16x16xi32>
    %1456 = arith.cmpi slt, %4, %1455 : vector<16x16xi32>
    %cst_633 = arith.constant 0.000000e+00 : f32
    %1457 = vector.broadcast %cst_633 : f32 to vector<16x16xf32>
    %1458 = arith.select %1456, %1454, %1457 : vector<16x16xi1>, vector<16x16xf32>
    %1459 = arith.maximumf %1453, %1458 : vector<16x16xf32>
    %c2_i32_634 = arith.constant 2 : i32
    %1460 = tpu.dynamic_rotate %1393 by %c2_i32_634 dim 1 : vector<16x16xf32>, i32 -> vector<16x16xf32>
    %c2_i32_635 = arith.constant 2 : i32
    %1461 = vector.broadcast %c2_i32_635 : i32 to vector<16x16xi32>
    %1462 = arith.cmpi sge, %4, %1461 : vector<16x16xi32>
    %cst_636 = arith.constant 0.000000e+00 : f32
    %1463 = vector.broadcast %cst_636 : f32 to vector<16x16xf32>
    %1464 = arith.select %1462, %1460, %1463 : vector<16x16xi1>, vector<16x16xf32>
    %1465 = arith.maximumf %1459, %1464 : vector<16x16xf32>
    %c15_i32_637 = arith.constant 15 : i32
    %1466 = tpu.dynamic_rotate %1465 by %c15_i32_637 dim 0 : vector<16x16xf32>, i32 -> vector<16x16xf32>
    %c15_i32_638 = arith.constant 15 : i32
    %1467 = vector.broadcast %c15_i32_638 : i32 to vector<16x16xi32>
    %1468 = arith.cmpi slt, %3, %1467 : vector<16x16xi32>
    %cst_639 = arith.constant 0.000000e+00 : f32
    %1469 = vector.broadcast %cst_639 : f32 to vector<16x16xf32>
    %1470 = arith.select %1468, %1466, %1469 : vector<16x16xi1>, vector<16x16xf32>
    %1471 = arith.maximumf %1465, %1470 : vector<16x16xf32>
    %c1_i32_640 = arith.constant 1 : i32
    %1472 = tpu.dynamic_rotate %1465 by %c1_i32_640 dim 0 : vector<16x16xf32>, i32 -> vector<16x16xf32>
    %c1_i32_641 = arith.constant 1 : i32
    %1473 = vector.broadcast %c1_i32_641 : i32 to vector<16x16xi32>
    %1474 = arith.cmpi sge, %3, %1473 : vector<16x16xi32>
    %cst_642 = arith.constant 0.000000e+00 : f32
    %1475 = vector.broadcast %cst_642 : f32 to vector<16x16xf32>
    %1476 = arith.select %1474, %1472, %1475 : vector<16x16xi1>, vector<16x16xf32>
    %1477 = arith.maximumf %1471, %1476 : vector<16x16xf32>
    %c14_i32_643 = arith.constant 14 : i32
    %1478 = tpu.dynamic_rotate %1465 by %c14_i32_643 dim 0 : vector<16x16xf32>, i32 -> vector<16x16xf32>
    %c14_i32_644 = arith.constant 14 : i32
    %1479 = vector.broadcast %c14_i32_644 : i32 to vector<16x16xi32>
    %1480 = arith.cmpi slt, %3, %1479 : vector<16x16xi32>
    %cst_645 = arith.constant 0.000000e+00 : f32
    %1481 = vector.broadcast %cst_645 : f32 to vector<16x16xf32>
    %1482 = arith.select %1480, %1478, %1481 : vector<16x16xi1>, vector<16x16xf32>
    %1483 = arith.maximumf %1477, %1482 : vector<16x16xf32>
    %c2_i32_646 = arith.constant 2 : i32
    %1484 = tpu.dynamic_rotate %1465 by %c2_i32_646 dim 0 : vector<16x16xf32>, i32 -> vector<16x16xf32>
    %c2_i32_647 = arith.constant 2 : i32
    %1485 = vector.broadcast %c2_i32_647 : i32 to vector<16x16xi32>
    %1486 = arith.cmpi sge, %3, %1485 : vector<16x16xi32>
    %cst_648 = arith.constant 0.000000e+00 : f32
    %1487 = vector.broadcast %cst_648 : f32 to vector<16x16xf32>
    %1488 = arith.select %1486, %1484, %1487 : vector<16x16xi1>, vector<16x16xf32>
    %1489 = arith.maximumf %1483, %1488 : vector<16x16xf32>
    %1490 = arith.mulf %1393, %1441 : vector<16x16xf32>
    %1491 = vector.shape_cast %1490 : vector<16x16xf32> to vector<1x16x16xf32>
    %cst_649 = arith.constant dense<0.000000e+00> : vector<1xf32>
    %1492 = vector.multi_reduction <add>, %1491, %cst_649 [1, 2] : vector<1x16x16xf32> to vector<1xf32>
    %1493 = vector.shape_cast %1492 : vector<1xf32> to vector<1x1x1xf32>
    %1494 = vector.extract %1493[0, 0, 0] : f32 from vector<1x1x1xf32>
    %1495 = vector.broadcast %1494 : f32 to vector<1x1xf32>
    %1496 = vector.shape_cast %1393 : vector<16x16xf32> to vector<1x16x16xf32>
    %cst_650 = arith.constant dense<0.000000e+00> : vector<1xf32>
    %1497 = vector.multi_reduction <add>, %1496, %cst_650 [1, 2] : vector<1x16x16xf32> to vector<1xf32>
    %1498 = vector.shape_cast %1497 : vector<1xf32> to vector<1x1x1xf32>
    %1499 = vector.extract %1498[0, 0, 0] : f32 from vector<1x1x1xf32>
    %1500 = vector.broadcast %1499 : f32 to vector<1x1xf32>
    %cst_651 = arith.constant 1.000000e-07 : f32
    %1501 = vector.broadcast %cst_651 : f32 to vector<1x1xf32>
    %1502 = arith.addf %1500, %1501 : vector<1x1xf32>
    %1503 = arith.mulf %1489, %1368 : vector<16x16xf32>
    %1504 = vector.shape_cast %1503 : vector<16x16xf32> to vector<1x16x16xf32>
    %cst_652 = arith.constant dense<0.000000e+00> : vector<1xf32>
    %1505 = vector.multi_reduction <add>, %1504, %cst_652 [1, 2] : vector<1x16x16xf32> to vector<1xf32>
    %1506 = vector.shape_cast %1505 : vector<1xf32> to vector<1x1x1xf32>
    %1507 = vector.extract %1506[0, 0, 0] : f32 from vector<1x1x1xf32>
    %1508 = vector.broadcast %1507 : f32 to vector<1x1xf32>
    %1509 = vector.shape_cast %1368 : vector<16x16xf32> to vector<1x16x16xf32>
    %cst_653 = arith.constant dense<0.000000e+00> : vector<1xf32>
    %1510 = vector.multi_reduction <add>, %1509, %cst_653 [1, 2] : vector<1x16x16xf32> to vector<1xf32>
    %1511 = vector.shape_cast %1510 : vector<1xf32> to vector<1x1x1xf32>
    %1512 = vector.extract %1511[0, 0, 0] : f32 from vector<1x1x1xf32>
    %1513 = vector.broadcast %1512 : f32 to vector<1x1xf32>
    %cst_654 = arith.constant 1.000000e-07 : f32
    %1514 = vector.broadcast %cst_654 : f32 to vector<1x1xf32>
    %1515 = arith.addf %1513, %1514 : vector<1x1xf32>
    %1516 = arith.divf %1495, %1502 : vector<1x1xf32>
    %1517 = arith.divf %1508, %1515 : vector<1x1xf32>
    %cst_655 = arith.constant 2.000000e+00 : f32
    %1518 = vector.broadcast %cst_655 : f32 to vector<1x1xf32>
    %1519 = arith.mulf %1518, %1516 : vector<1x1xf32>
    %1520 = arith.mulf %1519, %1517 : vector<1x1xf32>
    %1521 = arith.addf %1516, %1517 : vector<1x1xf32>
    %cst_656 = arith.constant 1.000000e-07 : f32
    %1522 = vector.broadcast %cst_656 : f32 to vector<1x1xf32>
    %1523 = arith.addf %1521, %1522 : vector<1x1xf32>
    %1524 = arith.divf %1520, %1523 : vector<1x1xf32>
    %cst_657 = arith.constant 1.000000e+00 : f32
    %1525 = vector.broadcast %cst_657 : f32 to vector<1x1xf32>
    %1526 = arith.subf %1525, %1524 : vector<1x1xf32>
    %1527 = arith.addf %1310, %1526 : vector<1x1xf32>
    %c7 = arith.constant 7 : index
    %c0_658 = arith.constant 0 : index
    %c0_659 = arith.constant 0 : index
    %1528 = vector.load %arg1[%c7, %c0_658, %c0_659] : memref<8x16x16xf32, #tpu.memory_space<vmem>>, vector<1x16x16xf32>
    %1529 = vector.shape_cast %1528 : vector<1x16x16xf32> to vector<16x16xf32>
    %c7_660 = arith.constant 7 : index
    %c0_661 = arith.constant 0 : index
    %c0_662 = arith.constant 0 : index
    %1530 = vector.load %arg2[%c7_660, %c0_661, %c0_662] : memref<8x16x16xf32, #tpu.memory_space<vmem>>, vector<1x16x16xf32>
    %1531 = vector.shape_cast %1530 : vector<1x16x16xf32> to vector<16x16xf32>
    %1532 = math.absf %1529 : vector<16x16xf32>
    %cst_663 = arith.constant 0.000000e+00 : f32
    %1533 = vector.broadcast %cst_663 : f32 to vector<16x16xf32>
    %1534 = arith.subf %1533, %1532 : vector<16x16xf32>
    %1535 = math.exp %1534 : vector<16x16xf32>
    %cst_664 = arith.constant 1.000000e+00 : f32
    %1536 = vector.broadcast %cst_664 : f32 to vector<16x16xf32>
    %1537 = arith.addf %1536, %1535 : vector<16x16xf32>
    %cst_665 = arith.constant 1.000000e+00 : f32
    %1538 = vector.broadcast %cst_665 : f32 to vector<16x16xf32>
    %1539 = arith.divf %1538, %1537 : vector<16x16xf32>
    %cst_666 = arith.constant 0.000000e+00 : f32
    %1540 = vector.broadcast %cst_666 : f32 to vector<16x16xf32>
    %1541 = arith.cmpf oge, %1529, %1540 : vector<16x16xf32>
    %1542 = arith.mulf %1535, %1539 : vector<16x16xf32>
    %1543 = arith.select %1541, %1539, %1542 : vector<16x16xi1>, vector<16x16xf32>
    %cst_667 = arith.constant 0.000000e+00 : f32
    %1544 = vector.broadcast %cst_667 : f32 to vector<16x16xf32>
    %1545 = arith.maximumf %1529, %1544 : vector<16x16xf32>
    %1546 = arith.mulf %1529, %1531 : vector<16x16xf32>
    %1547 = arith.subf %1545, %1546 : vector<16x16xf32>
    %cst_668 = arith.constant 1.000000e+00 : f32
    %1548 = vector.broadcast %cst_668 : f32 to vector<16x16xf32>
    %1549 = arith.addf %1548, %1535 : vector<16x16xf32>
    %1550 = math.log %1549 : vector<16x16xf32>
    %1551 = arith.addf %1547, %1550 : vector<16x16xf32>
    %1552 = arith.mulf %1543, %1531 : vector<16x16xf32>
    %1553 = arith.addf %1336, %1552 : vector<16x16xf32>
    %1554 = arith.addf %1543, %1531 : vector<16x16xf32>
    %1555 = arith.addf %1338, %1554 : vector<16x16xf32>
    %1556 = arith.addf %1339, %1551 : vector<16x16xf32>
    %cst_669 = arith.constant 1.000000e+00 : f32
    %1557 = vector.broadcast %cst_669 : f32 to vector<16x16xf32>
    %1558 = arith.subf %1557, %1531 : vector<16x16xf32>
    %cst_670 = arith.constant 1.000000e+00 : f32
    %1559 = vector.broadcast %cst_670 : f32 to vector<16x16xf32>
    %1560 = arith.subf %1559, %1543 : vector<16x16xf32>
    %c15_i32_671 = arith.constant 15 : i32
    %1561 = tpu.dynamic_rotate %1558 by %c15_i32_671 dim 1 : vector<16x16xf32>, i32 -> vector<16x16xf32>
    %c15_i32_672 = arith.constant 15 : i32
    %1562 = vector.broadcast %c15_i32_672 : i32 to vector<16x16xi32>
    %1563 = arith.cmpi slt, %4, %1562 : vector<16x16xi32>
    %cst_673 = arith.constant 0.000000e+00 : f32
    %1564 = vector.broadcast %cst_673 : f32 to vector<16x16xf32>
    %1565 = arith.select %1563, %1561, %1564 : vector<16x16xi1>, vector<16x16xf32>
    %1566 = arith.maximumf %1558, %1565 : vector<16x16xf32>
    %c1_i32_674 = arith.constant 1 : i32
    %1567 = tpu.dynamic_rotate %1558 by %c1_i32_674 dim 1 : vector<16x16xf32>, i32 -> vector<16x16xf32>
    %c1_i32_675 = arith.constant 1 : i32
    %1568 = vector.broadcast %c1_i32_675 : i32 to vector<16x16xi32>
    %1569 = arith.cmpi sge, %4, %1568 : vector<16x16xi32>
    %cst_676 = arith.constant 0.000000e+00 : f32
    %1570 = vector.broadcast %cst_676 : f32 to vector<16x16xf32>
    %1571 = arith.select %1569, %1567, %1570 : vector<16x16xi1>, vector<16x16xf32>
    %1572 = arith.maximumf %1566, %1571 : vector<16x16xf32>
    %c15_i32_677 = arith.constant 15 : i32
    %1573 = tpu.dynamic_rotate %1572 by %c15_i32_677 dim 0 : vector<16x16xf32>, i32 -> vector<16x16xf32>
    %c15_i32_678 = arith.constant 15 : i32
    %1574 = vector.broadcast %c15_i32_678 : i32 to vector<16x16xi32>
    %1575 = arith.cmpi slt, %3, %1574 : vector<16x16xi32>
    %cst_679 = arith.constant 0.000000e+00 : f32
    %1576 = vector.broadcast %cst_679 : f32 to vector<16x16xf32>
    %1577 = arith.select %1575, %1573, %1576 : vector<16x16xi1>, vector<16x16xf32>
    %1578 = arith.maximumf %1572, %1577 : vector<16x16xf32>
    %c1_i32_680 = arith.constant 1 : i32
    %1579 = tpu.dynamic_rotate %1572 by %c1_i32_680 dim 0 : vector<16x16xf32>, i32 -> vector<16x16xf32>
    %c1_i32_681 = arith.constant 1 : i32
    %1580 = vector.broadcast %c1_i32_681 : i32 to vector<16x16xi32>
    %1581 = arith.cmpi sge, %3, %1580 : vector<16x16xi32>
    %cst_682 = arith.constant 0.000000e+00 : f32
    %1582 = vector.broadcast %cst_682 : f32 to vector<16x16xf32>
    %1583 = arith.select %1581, %1579, %1582 : vector<16x16xi1>, vector<16x16xf32>
    %1584 = arith.maximumf %1578, %1583 : vector<16x16xf32>
    %1585 = arith.subf %1584, %1558 : vector<16x16xf32>
    %c15_i32_683 = arith.constant 15 : i32
    %1586 = tpu.dynamic_rotate %1560 by %c15_i32_683 dim 1 : vector<16x16xf32>, i32 -> vector<16x16xf32>
    %c15_i32_684 = arith.constant 15 : i32
    %1587 = vector.broadcast %c15_i32_684 : i32 to vector<16x16xi32>
    %1588 = arith.cmpi slt, %4, %1587 : vector<16x16xi32>
    %cst_685 = arith.constant 0.000000e+00 : f32
    %1589 = vector.broadcast %cst_685 : f32 to vector<16x16xf32>
    %1590 = arith.select %1588, %1586, %1589 : vector<16x16xi1>, vector<16x16xf32>
    %1591 = arith.maximumf %1560, %1590 : vector<16x16xf32>
    %c1_i32_686 = arith.constant 1 : i32
    %1592 = tpu.dynamic_rotate %1560 by %c1_i32_686 dim 1 : vector<16x16xf32>, i32 -> vector<16x16xf32>
    %c1_i32_687 = arith.constant 1 : i32
    %1593 = vector.broadcast %c1_i32_687 : i32 to vector<16x16xi32>
    %1594 = arith.cmpi sge, %4, %1593 : vector<16x16xi32>
    %cst_688 = arith.constant 0.000000e+00 : f32
    %1595 = vector.broadcast %cst_688 : f32 to vector<16x16xf32>
    %1596 = arith.select %1594, %1592, %1595 : vector<16x16xi1>, vector<16x16xf32>
    %1597 = arith.maximumf %1591, %1596 : vector<16x16xf32>
    %c15_i32_689 = arith.constant 15 : i32
    %1598 = tpu.dynamic_rotate %1597 by %c15_i32_689 dim 0 : vector<16x16xf32>, i32 -> vector<16x16xf32>
    %c15_i32_690 = arith.constant 15 : i32
    %1599 = vector.broadcast %c15_i32_690 : i32 to vector<16x16xi32>
    %1600 = arith.cmpi slt, %3, %1599 : vector<16x16xi32>
    %cst_691 = arith.constant 0.000000e+00 : f32
    %1601 = vector.broadcast %cst_691 : f32 to vector<16x16xf32>
    %1602 = arith.select %1600, %1598, %1601 : vector<16x16xi1>, vector<16x16xf32>
    %1603 = arith.maximumf %1597, %1602 : vector<16x16xf32>
    %c1_i32_692 = arith.constant 1 : i32
    %1604 = tpu.dynamic_rotate %1597 by %c1_i32_692 dim 0 : vector<16x16xf32>, i32 -> vector<16x16xf32>
    %c1_i32_693 = arith.constant 1 : i32
    %1605 = vector.broadcast %c1_i32_693 : i32 to vector<16x16xi32>
    %1606 = arith.cmpi sge, %3, %1605 : vector<16x16xi32>
    %cst_694 = arith.constant 0.000000e+00 : f32
    %1607 = vector.broadcast %cst_694 : f32 to vector<16x16xf32>
    %1608 = arith.select %1606, %1604, %1607 : vector<16x16xi1>, vector<16x16xf32>
    %1609 = arith.maximumf %1603, %1608 : vector<16x16xf32>
    %1610 = arith.subf %1609, %1560 : vector<16x16xf32>
    %c15_i32_695 = arith.constant 15 : i32
    %1611 = tpu.dynamic_rotate %1585 by %c15_i32_695 dim 1 : vector<16x16xf32>, i32 -> vector<16x16xf32>
    %c15_i32_696 = arith.constant 15 : i32
    %1612 = vector.broadcast %c15_i32_696 : i32 to vector<16x16xi32>
    %1613 = arith.cmpi slt, %4, %1612 : vector<16x16xi32>
    %cst_697 = arith.constant 0.000000e+00 : f32
    %1614 = vector.broadcast %cst_697 : f32 to vector<16x16xf32>
    %1615 = arith.select %1613, %1611, %1614 : vector<16x16xi1>, vector<16x16xf32>
    %1616 = arith.maximumf %1585, %1615 : vector<16x16xf32>
    %c1_i32_698 = arith.constant 1 : i32
    %1617 = tpu.dynamic_rotate %1585 by %c1_i32_698 dim 1 : vector<16x16xf32>, i32 -> vector<16x16xf32>
    %c1_i32_699 = arith.constant 1 : i32
    %1618 = vector.broadcast %c1_i32_699 : i32 to vector<16x16xi32>
    %1619 = arith.cmpi sge, %4, %1618 : vector<16x16xi32>
    %cst_700 = arith.constant 0.000000e+00 : f32
    %1620 = vector.broadcast %cst_700 : f32 to vector<16x16xf32>
    %1621 = arith.select %1619, %1617, %1620 : vector<16x16xi1>, vector<16x16xf32>
    %1622 = arith.maximumf %1616, %1621 : vector<16x16xf32>
    %c14_i32_701 = arith.constant 14 : i32
    %1623 = tpu.dynamic_rotate %1585 by %c14_i32_701 dim 1 : vector<16x16xf32>, i32 -> vector<16x16xf32>
    %c14_i32_702 = arith.constant 14 : i32
    %1624 = vector.broadcast %c14_i32_702 : i32 to vector<16x16xi32>
    %1625 = arith.cmpi slt, %4, %1624 : vector<16x16xi32>
    %cst_703 = arith.constant 0.000000e+00 : f32
    %1626 = vector.broadcast %cst_703 : f32 to vector<16x16xf32>
    %1627 = arith.select %1625, %1623, %1626 : vector<16x16xi1>, vector<16x16xf32>
    %1628 = arith.maximumf %1622, %1627 : vector<16x16xf32>
    %c2_i32_704 = arith.constant 2 : i32
    %1629 = tpu.dynamic_rotate %1585 by %c2_i32_704 dim 1 : vector<16x16xf32>, i32 -> vector<16x16xf32>
    %c2_i32_705 = arith.constant 2 : i32
    %1630 = vector.broadcast %c2_i32_705 : i32 to vector<16x16xi32>
    %1631 = arith.cmpi sge, %4, %1630 : vector<16x16xi32>
    %cst_706 = arith.constant 0.000000e+00 : f32
    %1632 = vector.broadcast %cst_706 : f32 to vector<16x16xf32>
    %1633 = arith.select %1631, %1629, %1632 : vector<16x16xi1>, vector<16x16xf32>
    %1634 = arith.maximumf %1628, %1633 : vector<16x16xf32>
    %c15_i32_707 = arith.constant 15 : i32
    %1635 = tpu.dynamic_rotate %1634 by %c15_i32_707 dim 0 : vector<16x16xf32>, i32 -> vector<16x16xf32>
    %c15_i32_708 = arith.constant 15 : i32
    %1636 = vector.broadcast %c15_i32_708 : i32 to vector<16x16xi32>
    %1637 = arith.cmpi slt, %3, %1636 : vector<16x16xi32>
    %cst_709 = arith.constant 0.000000e+00 : f32
    %1638 = vector.broadcast %cst_709 : f32 to vector<16x16xf32>
    %1639 = arith.select %1637, %1635, %1638 : vector<16x16xi1>, vector<16x16xf32>
    %1640 = arith.maximumf %1634, %1639 : vector<16x16xf32>
    %c1_i32_710 = arith.constant 1 : i32
    %1641 = tpu.dynamic_rotate %1634 by %c1_i32_710 dim 0 : vector<16x16xf32>, i32 -> vector<16x16xf32>
    %c1_i32_711 = arith.constant 1 : i32
    %1642 = vector.broadcast %c1_i32_711 : i32 to vector<16x16xi32>
    %1643 = arith.cmpi sge, %3, %1642 : vector<16x16xi32>
    %cst_712 = arith.constant 0.000000e+00 : f32
    %1644 = vector.broadcast %cst_712 : f32 to vector<16x16xf32>
    %1645 = arith.select %1643, %1641, %1644 : vector<16x16xi1>, vector<16x16xf32>
    %1646 = arith.maximumf %1640, %1645 : vector<16x16xf32>
    %c14_i32_713 = arith.constant 14 : i32
    %1647 = tpu.dynamic_rotate %1634 by %c14_i32_713 dim 0 : vector<16x16xf32>, i32 -> vector<16x16xf32>
    %c14_i32_714 = arith.constant 14 : i32
    %1648 = vector.broadcast %c14_i32_714 : i32 to vector<16x16xi32>
    %1649 = arith.cmpi slt, %3, %1648 : vector<16x16xi32>
    %cst_715 = arith.constant 0.000000e+00 : f32
    %1650 = vector.broadcast %cst_715 : f32 to vector<16x16xf32>
    %1651 = arith.select %1649, %1647, %1650 : vector<16x16xi1>, vector<16x16xf32>
    %1652 = arith.maximumf %1646, %1651 : vector<16x16xf32>
    %c2_i32_716 = arith.constant 2 : i32
    %1653 = tpu.dynamic_rotate %1634 by %c2_i32_716 dim 0 : vector<16x16xf32>, i32 -> vector<16x16xf32>
    %c2_i32_717 = arith.constant 2 : i32
    %1654 = vector.broadcast %c2_i32_717 : i32 to vector<16x16xi32>
    %1655 = arith.cmpi sge, %3, %1654 : vector<16x16xi32>
    %cst_718 = arith.constant 0.000000e+00 : f32
    %1656 = vector.broadcast %cst_718 : f32 to vector<16x16xf32>
    %1657 = arith.select %1655, %1653, %1656 : vector<16x16xi1>, vector<16x16xf32>
    %1658 = arith.maximumf %1652, %1657 : vector<16x16xf32>
    %c15_i32_719 = arith.constant 15 : i32
    %1659 = tpu.dynamic_rotate %1610 by %c15_i32_719 dim 1 : vector<16x16xf32>, i32 -> vector<16x16xf32>
    %c15_i32_720 = arith.constant 15 : i32
    %1660 = vector.broadcast %c15_i32_720 : i32 to vector<16x16xi32>
    %1661 = arith.cmpi slt, %4, %1660 : vector<16x16xi32>
    %cst_721 = arith.constant 0.000000e+00 : f32
    %1662 = vector.broadcast %cst_721 : f32 to vector<16x16xf32>
    %1663 = arith.select %1661, %1659, %1662 : vector<16x16xi1>, vector<16x16xf32>
    %1664 = arith.maximumf %1610, %1663 : vector<16x16xf32>
    %c1_i32_722 = arith.constant 1 : i32
    %1665 = tpu.dynamic_rotate %1610 by %c1_i32_722 dim 1 : vector<16x16xf32>, i32 -> vector<16x16xf32>
    %c1_i32_723 = arith.constant 1 : i32
    %1666 = vector.broadcast %c1_i32_723 : i32 to vector<16x16xi32>
    %1667 = arith.cmpi sge, %4, %1666 : vector<16x16xi32>
    %cst_724 = arith.constant 0.000000e+00 : f32
    %1668 = vector.broadcast %cst_724 : f32 to vector<16x16xf32>
    %1669 = arith.select %1667, %1665, %1668 : vector<16x16xi1>, vector<16x16xf32>
    %1670 = arith.maximumf %1664, %1669 : vector<16x16xf32>
    %c14_i32_725 = arith.constant 14 : i32
    %1671 = tpu.dynamic_rotate %1610 by %c14_i32_725 dim 1 : vector<16x16xf32>, i32 -> vector<16x16xf32>
    %c14_i32_726 = arith.constant 14 : i32
    %1672 = vector.broadcast %c14_i32_726 : i32 to vector<16x16xi32>
    %1673 = arith.cmpi slt, %4, %1672 : vector<16x16xi32>
    %cst_727 = arith.constant 0.000000e+00 : f32
    %1674 = vector.broadcast %cst_727 : f32 to vector<16x16xf32>
    %1675 = arith.select %1673, %1671, %1674 : vector<16x16xi1>, vector<16x16xf32>
    %1676 = arith.maximumf %1670, %1675 : vector<16x16xf32>
    %c2_i32_728 = arith.constant 2 : i32
    %1677 = tpu.dynamic_rotate %1610 by %c2_i32_728 dim 1 : vector<16x16xf32>, i32 -> vector<16x16xf32>
    %c2_i32_729 = arith.constant 2 : i32
    %1678 = vector.broadcast %c2_i32_729 : i32 to vector<16x16xi32>
    %1679 = arith.cmpi sge, %4, %1678 : vector<16x16xi32>
    %cst_730 = arith.constant 0.000000e+00 : f32
    %1680 = vector.broadcast %cst_730 : f32 to vector<16x16xf32>
    %1681 = arith.select %1679, %1677, %1680 : vector<16x16xi1>, vector<16x16xf32>
    %1682 = arith.maximumf %1676, %1681 : vector<16x16xf32>
    %c15_i32_731 = arith.constant 15 : i32
    %1683 = tpu.dynamic_rotate %1682 by %c15_i32_731 dim 0 : vector<16x16xf32>, i32 -> vector<16x16xf32>
    %c15_i32_732 = arith.constant 15 : i32
    %1684 = vector.broadcast %c15_i32_732 : i32 to vector<16x16xi32>
    %1685 = arith.cmpi slt, %3, %1684 : vector<16x16xi32>
    %cst_733 = arith.constant 0.000000e+00 : f32
    %1686 = vector.broadcast %cst_733 : f32 to vector<16x16xf32>
    %1687 = arith.select %1685, %1683, %1686 : vector<16x16xi1>, vector<16x16xf32>
    %1688 = arith.maximumf %1682, %1687 : vector<16x16xf32>
    %c1_i32_734 = arith.constant 1 : i32
    %1689 = tpu.dynamic_rotate %1682 by %c1_i32_734 dim 0 : vector<16x16xf32>, i32 -> vector<16x16xf32>
    %c1_i32_735 = arith.constant 1 : i32
    %1690 = vector.broadcast %c1_i32_735 : i32 to vector<16x16xi32>
    %1691 = arith.cmpi sge, %3, %1690 : vector<16x16xi32>
    %cst_736 = arith.constant 0.000000e+00 : f32
    %1692 = vector.broadcast %cst_736 : f32 to vector<16x16xf32>
    %1693 = arith.select %1691, %1689, %1692 : vector<16x16xi1>, vector<16x16xf32>
    %1694 = arith.maximumf %1688, %1693 : vector<16x16xf32>
    %c14_i32_737 = arith.constant 14 : i32
    %1695 = tpu.dynamic_rotate %1682 by %c14_i32_737 dim 0 : vector<16x16xf32>, i32 -> vector<16x16xf32>
    %c14_i32_738 = arith.constant 14 : i32
    %1696 = vector.broadcast %c14_i32_738 : i32 to vector<16x16xi32>
    %1697 = arith.cmpi slt, %3, %1696 : vector<16x16xi32>
    %cst_739 = arith.constant 0.000000e+00 : f32
    %1698 = vector.broadcast %cst_739 : f32 to vector<16x16xf32>
    %1699 = arith.select %1697, %1695, %1698 : vector<16x16xi1>, vector<16x16xf32>
    %1700 = arith.maximumf %1694, %1699 : vector<16x16xf32>
    %c2_i32_740 = arith.constant 2 : i32
    %1701 = tpu.dynamic_rotate %1682 by %c2_i32_740 dim 0 : vector<16x16xf32>, i32 -> vector<16x16xf32>
    %c2_i32_741 = arith.constant 2 : i32
    %1702 = vector.broadcast %c2_i32_741 : i32 to vector<16x16xi32>
    %1703 = arith.cmpi sge, %3, %1702 : vector<16x16xi32>
    %cst_742 = arith.constant 0.000000e+00 : f32
    %1704 = vector.broadcast %cst_742 : f32 to vector<16x16xf32>
    %1705 = arith.select %1703, %1701, %1704 : vector<16x16xi1>, vector<16x16xf32>
    %1706 = arith.maximumf %1700, %1705 : vector<16x16xf32>
    %1707 = arith.mulf %1610, %1658 : vector<16x16xf32>
    %1708 = vector.shape_cast %1707 : vector<16x16xf32> to vector<1x16x16xf32>
    %cst_743 = arith.constant dense<0.000000e+00> : vector<1xf32>
    %1709 = vector.multi_reduction <add>, %1708, %cst_743 [1, 2] : vector<1x16x16xf32> to vector<1xf32>
    %1710 = vector.shape_cast %1709 : vector<1xf32> to vector<1x1x1xf32>
    %1711 = vector.extract %1710[0, 0, 0] : f32 from vector<1x1x1xf32>
    %1712 = vector.broadcast %1711 : f32 to vector<1x1xf32>
    %1713 = vector.shape_cast %1610 : vector<16x16xf32> to vector<1x16x16xf32>
    %cst_744 = arith.constant dense<0.000000e+00> : vector<1xf32>
    %1714 = vector.multi_reduction <add>, %1713, %cst_744 [1, 2] : vector<1x16x16xf32> to vector<1xf32>
    %1715 = vector.shape_cast %1714 : vector<1xf32> to vector<1x1x1xf32>
    %1716 = vector.extract %1715[0, 0, 0] : f32 from vector<1x1x1xf32>
    %1717 = vector.broadcast %1716 : f32 to vector<1x1xf32>
    %cst_745 = arith.constant 1.000000e-07 : f32
    %1718 = vector.broadcast %cst_745 : f32 to vector<1x1xf32>
    %1719 = arith.addf %1717, %1718 : vector<1x1xf32>
    %1720 = arith.mulf %1706, %1585 : vector<16x16xf32>
    %1721 = vector.shape_cast %1720 : vector<16x16xf32> to vector<1x16x16xf32>
    %cst_746 = arith.constant dense<0.000000e+00> : vector<1xf32>
    %1722 = vector.multi_reduction <add>, %1721, %cst_746 [1, 2] : vector<1x16x16xf32> to vector<1xf32>
    %1723 = vector.shape_cast %1722 : vector<1xf32> to vector<1x1x1xf32>
    %1724 = vector.extract %1723[0, 0, 0] : f32 from vector<1x1x1xf32>
    %1725 = vector.broadcast %1724 : f32 to vector<1x1xf32>
    %1726 = vector.shape_cast %1585 : vector<16x16xf32> to vector<1x16x16xf32>
    %cst_747 = arith.constant dense<0.000000e+00> : vector<1xf32>
    %1727 = vector.multi_reduction <add>, %1726, %cst_747 [1, 2] : vector<1x16x16xf32> to vector<1xf32>
    %1728 = vector.shape_cast %1727 : vector<1xf32> to vector<1x1x1xf32>
    %1729 = vector.extract %1728[0, 0, 0] : f32 from vector<1x1x1xf32>
    %1730 = vector.broadcast %1729 : f32 to vector<1x1xf32>
    %cst_748 = arith.constant 1.000000e-07 : f32
    %1731 = vector.broadcast %cst_748 : f32 to vector<1x1xf32>
    %1732 = arith.addf %1730, %1731 : vector<1x1xf32>
    %1733 = arith.divf %1712, %1719 : vector<1x1xf32>
    %1734 = arith.divf %1725, %1732 : vector<1x1xf32>
    %cst_749 = arith.constant 2.000000e+00 : f32
    %1735 = vector.broadcast %cst_749 : f32 to vector<1x1xf32>
    %1736 = arith.mulf %1735, %1733 : vector<1x1xf32>
    %1737 = arith.mulf %1736, %1734 : vector<1x1xf32>
    %1738 = arith.addf %1733, %1734 : vector<1x1xf32>
    %cst_750 = arith.constant 1.000000e-07 : f32
    %1739 = vector.broadcast %cst_750 : f32 to vector<1x1xf32>
    %1740 = arith.addf %1738, %1739 : vector<1x1xf32>
    %1741 = arith.divf %1737, %1740 : vector<1x1xf32>
    %cst_751 = arith.constant 1.000000e+00 : f32
    %1742 = vector.broadcast %cst_751 : f32 to vector<1x1xf32>
    %1743 = arith.subf %1742, %1741 : vector<1x1xf32>
    %1744 = arith.addf %1527, %1743 : vector<1x1xf32>
    %c0_752 = arith.constant 0 : index
    %c0_753 = arith.constant 0 : index
    %1745 = vector.load %arg4[%c0_752, %c0_753] : memref<16x16xf32, #tpu.memory_space<vmem>>, vector<16x16xf32>
    %1746 = arith.addf %1745, %1553 : vector<16x16xf32>
    %c0_754 = arith.constant 0 : index
    %c0_755 = arith.constant 0 : index
    %1747 = vector.load %arg4[%c0_754, %c0_755] : memref<16x16xf32, #tpu.memory_space<vmem>>, vector<16x16xf32>
    tpu.vector_store %arg4[%c0_754, %c0_755], %1746 {strides = array<i32>} : memref<16x16xf32, #tpu.memory_space<vmem>>, vector<16x16xf32>,
    %c0_756 = arith.constant 0 : index
    %c0_757 = arith.constant 0 : index
    %1748 = vector.load %arg5[%c0_756, %c0_757] : memref<16x16xf32, #tpu.memory_space<vmem>>, vector<16x16xf32>
    %1749 = arith.addf %1748, %1555 : vector<16x16xf32>
    %c0_758 = arith.constant 0 : index
    %c0_759 = arith.constant 0 : index
    %1750 = vector.load %arg5[%c0_758, %c0_759] : memref<16x16xf32, #tpu.memory_space<vmem>>, vector<16x16xf32>
    tpu.vector_store %arg5[%c0_758, %c0_759], %1749 {strides = array<i32>} : memref<16x16xf32, #tpu.memory_space<vmem>>, vector<16x16xf32>,
    %c0_760 = arith.constant 0 : index
    %c0_761 = arith.constant 0 : index
    %1751 = vector.load %arg6[%c0_760, %c0_761] : memref<16x16xf32, #tpu.memory_space<vmem>>, vector<16x16xf32>
    %1752 = arith.addf %1751, %1556 : vector<16x16xf32>
    %c0_762 = arith.constant 0 : index
    %c0_763 = arith.constant 0 : index
    %1753 = vector.load %arg6[%c0_762, %c0_763] : memref<16x16xf32, #tpu.memory_space<vmem>>, vector<16x16xf32>
    tpu.vector_store %arg6[%c0_762, %c0_763], %1752 {strides = array<i32>} : memref<16x16xf32, #tpu.memory_space<vmem>>, vector<16x16xf32>,
    %c0_764 = arith.constant 0 : index
    %c0_765 = arith.constant 0 : index
    %1754 = vector.load %arg7[%c0_764, %c0_765] : memref<1x1xf32, #tpu.memory_space<vmem>>, vector<1x1xf32>
    %1755 = arith.addf %1754, %1744 : vector<1x1xf32>
    %c0_766 = arith.constant 0 : index
    %c0_767 = arith.constant 0 : index
    %1756 = vector.load %arg7[%c0_766, %c0_767] : memref<1x1xf32, #tpu.memory_space<vmem>>, vector<1x1xf32>
    tpu.vector_store %arg7[%c0_766, %c0_767], %1755 {strides = array<i32>} : memref<1x1xf32, #tpu.memory_space<vmem>>, vector<1x1xf32>,
    %c0_i32_768 = arith.constant 0 : i32
    %1757 = arith.cmpi eq, %arg0, %c0_i32_768 : i32
    %1758 = arith.extui %1757 : i1 to i32
    %c0_i32_769 = arith.constant 0 : i32
    %1759 = arith.cmpi ne, %1758, %c0_i32_769 : i32
    scf.if %1759 {
      %c0_770 = arith.constant 0 : index
      %c0_771 = arith.constant 0 : index
      %1760 = vector.load %arg4[%c0_770, %c0_771] : memref<16x16xf32, #tpu.memory_space<vmem>>, vector<16x16xf32>
      %1761 = vector.shape_cast %1760 : vector<16x16xf32> to vector<1x16x16xf32>
      %cst_772 = arith.constant dense<0.000000e+00> : vector<1xf32>
      %1762 = vector.multi_reduction <add>, %1761, %cst_772 [1, 2] : vector<1x16x16xf32> to vector<1xf32>
      %1763 = vector.shape_cast %1762 : vector<1xf32> to vector<1x1x1xf32>
      %1764 = vector.extract %1763[0, 0, 0] : f32 from vector<1x1x1xf32>
      %1765 = vector.broadcast %1764 : f32 to vector<1x1xf32>
      %c0_773 = arith.constant 0 : index
      %c0_774 = arith.constant 0 : index
      %1766 = vector.load %arg5[%c0_773, %c0_774] : memref<16x16xf32, #tpu.memory_space<vmem>>, vector<16x16xf32>
      %1767 = vector.shape_cast %1766 : vector<16x16xf32> to vector<1x16x16xf32>
      %cst_775 = arith.constant dense<0.000000e+00> : vector<1xf32>
      %1768 = vector.multi_reduction <add>, %1767, %cst_775 [1, 2] : vector<1x16x16xf32> to vector<1xf32>
      %1769 = vector.shape_cast %1768 : vector<1xf32> to vector<1x1x1xf32>
      %1770 = vector.extract %1769[0, 0, 0] : f32 from vector<1x1x1xf32>
      %1771 = vector.broadcast %1770 : f32 to vector<1x1xf32>
      %c0_776 = arith.constant 0 : index
      %c0_777 = arith.constant 0 : index
      %1772 = vector.load %arg6[%c0_776, %c0_777] : memref<16x16xf32, #tpu.memory_space<vmem>>, vector<16x16xf32>
      %1773 = vector.shape_cast %1772 : vector<16x16xf32> to vector<1x16x16xf32>
      %cst_778 = arith.constant dense<0.000000e+00> : vector<1xf32>
      %1774 = vector.multi_reduction <add>, %1773, %cst_778 [1, 2] : vector<1x16x16xf32> to vector<1xf32>
      %1775 = vector.shape_cast %1774 : vector<1xf32> to vector<1x1x1xf32>
      %1776 = vector.extract %1775[0, 0, 0] : f32 from vector<1x1x1xf32>
      %1777 = vector.broadcast %1776 : f32 to vector<1x1xf32>
      %cst_779 = arith.constant 2.000000e+00 : f32
      %1778 = vector.broadcast %cst_779 : f32 to vector<1x1xf32>
      %1779 = arith.mulf %1778, %1765 : vector<1x1xf32>
      %cst_780 = arith.constant 1.000000e+00 : f32
      %1780 = vector.broadcast %cst_780 : f32 to vector<1x1xf32>
      %1781 = arith.addf %1779, %1780 : vector<1x1xf32>
      %cst_781 = arith.constant 1.000000e+00 : f32
      %1782 = vector.broadcast %cst_781 : f32 to vector<1x1xf32>
      %1783 = arith.addf %1771, %1782 : vector<1x1xf32>
      %1784 = arith.divf %1781, %1783 : vector<1x1xf32>
      %cst_782 = arith.constant 1.000000e+00 : f32
      %1785 = vector.broadcast %cst_782 : f32 to vector<1x1xf32>
      %1786 = arith.subf %1785, %1784 : vector<1x1xf32>
      %cst_783 = arith.constant 2.048000e+03 : f32
      %1787 = vector.broadcast %cst_783 : f32 to vector<1x1xf32>
      %1788 = arith.divf %1777, %1787 : vector<1x1xf32>
      %1789 = arith.addf %1788, %1786 : vector<1x1xf32>
      %c0_784 = arith.constant 0 : index
      %c0_785 = arith.constant 0 : index
      %1790 = vector.load %arg7[%c0_784, %c0_785] : memref<1x1xf32, #tpu.memory_space<vmem>>, vector<1x1xf32>
      %cst_786 = arith.constant 8.000000e+00 : f32
      %1791 = vector.broadcast %cst_786 : f32 to vector<1x1xf32>
      %1792 = arith.divf %1790, %1791 : vector<1x1xf32>
      %cst_787 = arith.constant 5.000000e-01 : f32
      %1793 = vector.broadcast %cst_787 : f32 to vector<1x1xf32>
      %1794 = arith.mulf %1793, %1789 : vector<1x1xf32>
      %cst_788 = arith.constant 5.000000e-01 : f32
      %1795 = vector.broadcast %cst_788 : f32 to vector<1x1xf32>
      %1796 = arith.mulf %1795, %1792 : vector<1x1xf32>
      %1797 = arith.addf %1794, %1796 : vector<1x1xf32>
      %c0_789 = arith.constant 0 : index
      %c0_790 = arith.constant 0 : index
      %1798 = vector.load %arg3[%c0_789, %c0_790] : memref<1x1xf32, #tpu.memory_space<vmem>>, vector<1x1xf32>
      tpu.vector_store %arg3[%c0_789, %c0_790], %1797 {strides = array<i32>} : memref<1x1xf32, #tpu.memory_space<vmem>>, vector<1x1xf32>,
    } else {
    }
    return
  }
  func.func @transform_0(%arg0: i32) -> (i32, i32, i32) {
    %c0_i32 = arith.constant 0 : i32
    %c0_i32_0 = arith.constant 0 : i32
    %c0_i32_1 = arith.constant 0 : i32
    return %arg0, %c0_i32, %c0_i32_0 : i32, i32, i32
  }
  func.func @transform_1(%arg0: i32) -> (i32, i32, i32) {
    %c0_i32 = arith.constant 0 : i32
    %c0_i32_0 = arith.constant 0 : i32
    %c0_i32_1 = arith.constant 0 : i32
    return %arg0, %c0_i32, %c0_i32_0 : i32, i32, i32
  }
  func.func @transform_2(%arg0: i32) -> (i32, i32) {
    %c0_i32 = arith.constant 0 : i32
    %c0_i32_0 = arith.constant 0 : i32
    %c0_i32_1 = arith.constant 0 : i32
    return %c0_i32, %c0_i32_0 : i32, i32
  }
}

</mosaic_0001>

<llo_original>
// kernel: tpu_custom_call.1
$region0: #{tpu_custom_call.1}
  #allocation0 [shape = 'u32[]', space=smem, size = 0x4, offset = 0x4, fixed_abs, tag = 'smem constant byte address 0x4 - core index']
  #allocation1 [shape = 'u32[144,128]{1,0:T(1,128)}', space=vmem, size = 0x12000, scoped, tag = 'internal scratch']
  #allocation2 [shape = 'f32[16,16]{1,0:T(8,128)}', space=vmem, size = 0x2000, scoped, tag = 'scratch operand']
  #allocation3 [shape = 'f32[16,16]{1,0:T(8,128)}', space=vmem, size = 0x2000, scoped, tag = 'scratch operand']
  #allocation4 [shape = 'f32[16,16]{1,0:T(8,128)}', space=vmem, size = 0x2000, scoped, tag = 'scratch operand']
  #allocation5 [shape = 'f32[1,1]{1,0:T(1,128)}', space=vmem, size = 0x200, scoped, tag = 'scratch operand']
  %s0 = inlined_call_operand.hbm [shape: f32[8,16,16], index: 0, kind: input, shape index: {}]
  %s1 = inlined_call_operand.hbm [shape: f32[8,16,16], index: 1, kind: input, shape index: {}]
  %s2 = inlined_call_operand.hbm [shape: f32[1,1], index: 2, kind: output, shape index: {}]
  %s3 = sld [smem:[#allocation0]]
  $region34: #{tpu_custom_call.1} parent=0
    _
  %s5 = ssub.s32 1, %s3
  %s6 = scalar_select 0, %s5, %s3
  $region1: #{tpu_custom_call.1} parent=0
    #allocation6 [shape = 'u8[65536]{0}', space=vmem, size = 0x10000, scoped, tag = 'input window, operand 0, single buffered']
    #allocation7 [shape = 's32[1]{0}', space=sflag, size = 0x4, scoped, tag = 'scoped memory for tpu_custom_call.1']
    #allocation8 [shape = 's32[1]{0}', space=sflag, size = 0x4, scoped, tag = 'scoped memory for tpu_custom_call.1']
    #allocation9 [shape = 'u8[65536]{0}', space=vmem, size = 0x10000, scoped, tag = 'input window, operand 1, single buffered']
    #allocation10 [shape = 's32[1]{0}', space=sflag, size = 0x4, scoped, tag = 'scoped memory for tpu_custom_call.1']
    #allocation11 [shape = 'u8[512]{0}', space=vmem, size = 0x400, scoped, tag = 'output window, operand 0, single buffered']
    %7 = vsyncpa [#allocation7], 0
    %8 = vsyncpa [#allocation10], 0
    %9 = vsyncpa [#allocation8], 0
    // Predicated region
    $region2: #{tpu_custom_call.1} parent=1 // pred_check
      _
    $region3: #{tpu_custom_call.1} parent=1 // pred_check_branch
      %11 = sbr.rel (0) target = $region5
    $region4: #{tpu_custom_call.1} parent=1 // pred_region
      %s13 = ssub.s32 2048, 2048
      %14 = vsyncadd [#allocation7], %s13
      %s15 = sshll.u32 [#allocation6], 4
      %s16 = int_to_ptr.vmem [resolvable:$true] %s15
      %21 = dma.hbm_to_vmem [thread:$0]  %s0, 2048, %s16, [#allocation7], 128, 128, 8
    $region5: #{tpu_custom_call.1} parent=1 // pred_fallthru
      _
    // Predicated region
    $region6: #{tpu_custom_call.1} parent=1 // pred_check
      _
    $region7: #{tpu_custom_call.1} parent=1 // pred_check_branch
      %23 = sbr.rel (0) target = $region9
    $region8: #{tpu_custom_call.1} parent=1 // pred_region
      %s25 = ssub.s32 2048, 2048
      %26 = vsyncadd [#allocation10], %s25
      %s27 = sshll.u32 [#allocation9], 4
      %s28 = int_to_ptr.vmem [resolvable:$true] %s27
      %33 = dma.hbm_to_vmem [thread:$0]  %s1, 2048, %s28, [#allocation10], 128, 128, 8
    $region9: #{tpu_custom_call.1} parent=1 // pred_fallthru
      _
    // Predicated region
    $region10: #{tpu_custom_call.1} parent=1 // pred_check
      _
    $region11: #{tpu_custom_call.1} parent=1 // pred_check_branch
      %35 = sbr.rel (0) target = $region13
    $region12: #{tpu_custom_call.1} parent=1 // pred_region
      %36 = dma.done [#allocation7], 2048
    $region13: #{tpu_custom_call.1} parent=1 // pred_fallthru
      _
    // Predicated region
    $region14: #{tpu_custom_call.1} parent=1 // pred_check
      _
    $region15: #{tpu_custom_call.1} parent=1 // pred_check_branch
      %38 = sbr.rel (0) target = $region17
    $region16: #{tpu_custom_call.1} parent=1 // pred_region
      %39 = dma.done [#allocation10], 2048
    $region17: #{tpu_custom_call.1} parent=1 // pred_fallthru
      _
    %p40 = scmp.eq.s32.totalorder 0, 0
    // Predicated region
    $region18: #{tpu_custom_call.1} parent=1 // pred_check
      %p41 = pneg %p40
    $region19: #{tpu_custom_call.1} parent=1 // pred_check_branch
      %43 = sbr.rel (%p41) target = $region21
    $region20: #{tpu_custom_call.1} parent=1 // pred_region
      %vm44 = vcmask 130048
      %45 = vst.msk [vmem:[#allocation2] sm:$0xff] %vm44, 0.0
      %46 = vst.msk [vmem:[#allocation2 + $0x8] sm:$0xff] %vm44, 0.0
      %47 = vst.msk [vmem:[#allocation3] sm:$0xff] %vm44, 0.0
      %48 = vst.msk [vmem:[#allocation3 + $0x8] sm:$0xff] %vm44, 0.0
      %49 = vst.msk [vmem:[#allocation4] sm:$0xff] %vm44, 0.0
      %50 = vst.msk [vmem:[#allocation4 + $0x8] sm:$0xff] %vm44, 0.0
      %vm51 = vcmask 0
      %52 = vst.msk [vmem:[#allocation5] sm:$0x1] %vm51, 0.0
    $region21: #{tpu_custom_call.1} parent=1 // pred_fallthru
      _
    %v53 = vlaneseq
    %v54 = vshrl.u32 %v53, 7
    %v55 = vadd.s32 %v54, 8
    %v56 = vlaneseq
    %v57 = vand.u32 %v56, 127
    %v58 = vld [vmem:[#allocation6] sm:$0xff]
    %v59 = vld [vmem:[#allocation6 + $0x8] sm:$0xff]
    %v60 = vld [vmem:[#allocation9] sm:$0xff]
    %v61 = vld [vmem:[#allocation9 + $0x8] sm:$0xff]
    %v62 = vand.u32 2147483647, %v58
    %v63 = vand.u32 2147483647, %v59
    %v64 = vsub.f32 0.0, %v62
    %v65 = vsub.f32 0.0, %v63
    %v66 = vmul.f32 %v64, 1.442695
    %v67 = vpow.pop %v66
    %v68 = vmul.f32 %v65, 1.442695
    %v69 = vpow.pop %v68
    %v70 = vadd.f32 %v67, 1.0
    %v71 = vadd.f32 %v69, 1.0
    %v72 = vrcp.pop %v70
    %v73 = vmul.f32 1.0, %v72
    %v74 = vrcp.pop %v71
    %v75 = vmul.f32 1.0, %v74
    %vm76 = vcmp.ge.f32.partialorder %v58, 0.0
    %vm77 = vcmp.ge.f32.partialorder %v59, 0.0
    %v78 = vmul.f32 %v67, %v73
    %v79 = vmul.f32 %v69, %v75
    %v80 = vsel %vm76, %v73, %v78
    %v81 = vsel %vm77, %v75, %v79
    %v82 = vmax.f32 %v58, 0.0
    %v83 = vmax.f32 %v59, 0.0
    %v84 = vmul.f32 %v58, %v60
    %v85 = vmul.f32 %v59, %v61
    %v86 = vsub.f32 %v82, %v84
    %v87 = vsub.f32 %v83, %v85
    %v88 = vlog2.pop %v70
    %v89 = vmul.f32 %v88, 0.6931472
    %v90 = vlog2.pop %v71
    %v91 = vmul.f32 %v90, 0.6931472
    %v92 = vadd.f32 %v86, %v89
    %v93 = vadd.f32 %v87, %v91
    %v94 = vmul.f32 %v80, %v60
    %v95 = vmul.f32 %v81, %v61
    %v96 = vadd.f32 %v94, 0.0
    %v97 = vadd.f32 %v95, 0.0
    %v98 = vadd.f32 %v80, %v60
    %v99 = vadd.f32 %v81, %v61
    %v100 = vadd.f32 %v98, 0.0
    %v101 = vadd.f32 %v99, 0.0
    %v102 = vadd.f32 %v92, 0.0
    %v103 = vadd.f32 %v93, 0.0
    %v104 = vsub.f32 1.0, %v60
    %v105 = vsub.f32 1.0, %v61
    %v106 = vsub.f32 1.0, %v80
    %v107 = vsub.f32 1.0, %v81
    %vm108 = vcmask 1047680
    %109 = vrot.lane.b32.xlu0 %v104, 16
    %v110 = vpop.permute.xlu0 %109
    %v111 = vsel %vm108, %v110, %v104
    %112 = vrot.lane.b32.xlu0 %v105, 16
    %v113 = vpop.permute.xlu0 %112
    %v114 = vsel %vm108, %v113, %v105
    %115 = vrot.lane.b32.xlu0 %v111, 16
    %v116 = vpop.permute.xlu0 %115
    %117 = vrot.lane.b32.xlu0 %v114, 16
    %v118 = vpop.permute.xlu0 %117
    %v119 = vsel %vm108, %v116, %v104
    %v120 = vsel %vm108, %v118, %v105
    %vm121 = vcmp.lt.s32.totalorder %v57, 15
    %124 = vrot.lane.b32.xlu0 %v119, 127
    %v125 = vpop.permute.xlu0 %124
    %126 = vrot.lane.b32.xlu0 %v120, 127
    %v127 = vpop.permute.xlu0 %126
    %v130 = vsel %vm121, %v125, 0.0
    %v131 = vsel %vm121, %v127, 0.0
    %v132 = vmax.f32 %v104, %v130
    %v133 = vmax.f32 %v105, %v131
    %vm134 = vcmp.ge.s32.totalorder %v57, 1
    %135 = vrot.lane.b32.xlu0 %v119, 113
    %v136 = vpop.permute.xlu0 %135
    %137 = vrot.lane.b32.xlu0 %v120, 113
    %v138 = vpop.permute.xlu0 %137
    %v141 = vsel %vm134, %v136, 0.0
    %v142 = vsel %vm134, %v138, 0.0
    %v143 = vmax.f32 %v132, %v141
    %v144 = vmax.f32 %v133, %v142
    %v145 = vrot.slane %v143, 1
    %v146 = vrot.slane %v144, 1
    %vm147 = vcmp.lt.s32.totalorder %v54, 7
    %v148 = vsel %vm147, %v145, %v146
    %v149 = vsel %vm147, %v146, %v145
    %vm150 = vcmp.lt.s32.totalorder %v54, 15
    %vm151 = vcmp.lt.s32.totalorder %v55, 15
    %v152 = vsel %vm150, %v148, 0.0
    %v153 = vsel %vm151, %v149, 0.0
    %v154 = vmax.f32 %v143, %v152
    %v155 = vmax.f32 %v144, %v153
    %v156 = vrot.slane %v143, 7
    %v157 = vrot.slane %v144, 7
    %vm158 = vcmp.lt.s32.totalorder %v54, 1
    %v159 = vsel %vm158, %v156, %v157
    %v160 = vsel %vm158, %v157, %v156
    %vm161 = vcmp.ge.s32.totalorder %v54, 1
    %vm162 = vcmp.ge.s32.totalorder %v55, 1
    %v163 = vsel %vm161, %v160, 0.0
    %v164 = vsel %vm162, %v159, 0.0
    %v165 = vmax.f32 %v154, %v163
    %v166 = vmax.f32 %v155, %v164
    %v167 = vsub.f32 %v165, %v104
    %v168 = vsub.f32 %v166, %v105
    %169 = vrot.lane.b32.xlu0 %v106, 16
    %v170 = vpop.permute.xlu0 %169
    %v171 = vsel %vm108, %v170, %v106
    %172 = vrot.lane.b32.xlu0 %v107, 16
    %v173 = vpop.permute.xlu0 %172
    %v174 = vsel %vm108, %v173, %v107
    %175 = vrot.lane.b32.xlu0 %v171, 16
    %v176 = vpop.permute.xlu0 %175
    %177 = vrot.lane.b32.xlu0 %v174, 16
    %v178 = vpop.permute.xlu0 %177
    %v179 = vsel %vm108, %v176, %v106
    %v180 = vsel %vm108, %v178, %v107
    %183 = vrot.lane.b32.xlu0 %v179, 127
    %v184 = vpop.permute.xlu0 %183
    %185 = vrot.lane.b32.xlu0 %v180, 127
    %v186 = vpop.permute.xlu0 %185
    %v189 = vsel %vm121, %v184, 0.0
    %v190 = vsel %vm121, %v186, 0.0
    %v191 = vmax.f32 %v106, %v189
    %v192 = vmax.f32 %v107, %v190
    %193 = vrot.lane.b32.xlu0 %v179, 113
    %v194 = vpop.permute.xlu0 %193
    %195 = vrot.lane.b32.xlu0 %v180, 113
    %v196 = vpop.permute.xlu0 %195
    %v199 = vsel %vm134, %v194, 0.0
    %v200 = vsel %vm134, %v196, 0.0
    %v201 = vmax.f32 %v191, %v199
    %v202 = vmax.f32 %v192, %v200
    %v203 = vrot.slane %v201, 1
    %v204 = vrot.slane %v202, 1
    %v205 = vsel %vm147, %v203, %v204
    %v206 = vsel %vm147, %v204, %v203
    %v207 = vsel %vm150, %v205, 0.0
    %v208 = vsel %vm151, %v206, 0.0
    %v209 = vmax.f32 %v201, %v207
    %v210 = vmax.f32 %v202, %v208
    %v211 = vrot.slane %v201, 7
    %v212 = vrot.slane %v202, 7
    %v213 = vsel %vm158, %v211, %v212
    %v214 = vsel %vm158, %v212, %v211
    %v215 = vsel %vm161, %v214, 0.0
    %v216 = vsel %vm162, %v213, 0.0
    %v217 = vmax.f32 %v209, %v215
    %v218 = vmax.f32 %v210, %v216
    %v219 = vsub.f32 %v217, %v106
    %v220 = vsub.f32 %v218, %v107
    %221 = vrot.lane.b32.xlu0 %v167, 16
    %v222 = vpop.permute.xlu0 %221
    %v223 = vsel %vm108, %v222, %v167
    %224 = vrot.lane.b32.xlu0 %v168, 16
    %v225 = vpop.permute.xlu0 %224
    %v226 = vsel %vm108, %v225, %v168
    %227 = vrot.lane.b32.xlu0 %v223, 16
    %v228 = vpop.permute.xlu0 %227
    %229 = vrot.lane.b32.xlu0 %v226, 16
    %v230 = vpop.permute.xlu0 %229
    %v231 = vsel %vm108, %v228, %v167
    %v232 = vsel %vm108, %v230, %v168
    %235 = vrot.lane.b32.xlu0 %v231, 127
    %v236 = vpop.permute.xlu0 %235
    %237 = vrot.lane.b32.xlu0 %v232, 127
    %v238 = vpop.permute.xlu0 %237
    %v241 = vsel %vm121, %v236, 0.0
    %v242 = vsel %vm121, %v238, 0.0
    %v243 = vmax.f32 %v167, %v241
    %v244 = vmax.f32 %v168, %v242
    %245 = vrot.lane.b32.xlu0 %v231, 113
    %v246 = vpop.permute.xlu0 %245
    %247 = vrot.lane.b32.xlu0 %v232, 113
    %v248 = vpop.permute.xlu0 %247
    %v251 = vsel %vm134, %v246, 0.0
    %v252 = vsel %vm134, %v248, 0.0
    %v253 = vmax.f32 %v243, %v251
    %v254 = vmax.f32 %v244, %v252
    %vm255 = vcmp.lt.s32.totalorder %v57, 14
    %256 = vrot.lane.b32.xlu0 %v231, 126
    %v257 = vpop.permute.xlu0 %256
    %258 = vrot.lane.b32.xlu0 %v232, 126
    %v259 = vpop.permute.xlu0 %258
    %v262 = vsel %vm255, %v257, 0.0
    %v263 = vsel %vm255, %v259, 0.0
    %v264 = vmax.f32 %v253, %v262
    %v265 = vmax.f32 %v254, %v263
    %vm266 = vcmp.ge.s32.totalorder %v57, 2
    %267 = vrot.lane.b32.xlu0 %v231, 114
    %v268 = vpop.permute.xlu0 %267
    %269 = vrot.lane.b32.xlu0 %v232, 114
    %v270 = vpop.permute.xlu0 %269
    %v273 = vsel %vm266, %v268, 0.0
    %v274 = vsel %vm266, %v270, 0.0
    %v275 = vmax.f32 %v264, %v273
    %v276 = vmax.f32 %v265, %v274
    %v277 = vrot.slane %v275, 1
    %v278 = vrot.slane %v276, 1
    %v279 = vsel %vm147, %v277, %v278
    %v280 = vsel %vm147, %v278, %v277
    %v281 = vsel %vm150, %v279, 0.0
    %v282 = vsel %vm151, %v280, 0.0
    %v283 = vmax.f32 %v275, %v281
    %v284 = vmax.f32 %v276, %v282
    %v285 = vrot.slane %v275, 7
    %v286 = vrot.slane %v276, 7
    %v287 = vsel %vm158, %v285, %v286
    %v288 = vsel %vm158, %v286, %v285
    %v289 = vsel %vm161, %v288, 0.0
    %v290 = vsel %vm162, %v287, 0.0
    %v291 = vmax.f32 %v283, %v289
    %v292 = vmax.f32 %v284, %v290
    %v293 = vrot.slane %v275, 2
    %v294 = vrot.slane %v276, 2
    %vm295 = vcmp.lt.s32.totalorder %v54, 6
    %v296 = vsel %vm295, %v293, %v294
    %v297 = vsel %vm295, %v294, %v293
    %vm298 = vcmp.lt.s32.totalorder %v54, 14
    %vm299 = vcmp.lt.s32.totalorder %v55, 14
    %v300 = vsel %vm298, %v296, 0.0
    %v301 = vsel %vm299, %v297, 0.0
    %v302 = vmax.f32 %v291, %v300
    %v303 = vmax.f32 %v292, %v301
    %v304 = vrot.slane %v275, 6
    %v305 = vrot.slane %v276, 6
    %vm306 = vcmp.lt.s32.totalorder %v54, 2
    %v307 = vsel %vm306, %v304, %v305
    %v308 = vsel %vm306, %v305, %v304
    %vm309 = vcmp.ge.s32.totalorder %v54, 2
    %vm310 = vcmp.ge.s32.totalorder %v55, 2
    %v311 = vsel %vm309, %v308, 0.0
    %v312 = vsel %vm310, %v307, 0.0
    %v313 = vmax.f32 %v302, %v311
    %v314 = vmax.f32 %v303, %v312
    %315 = vrot.lane.b32.xlu0 %v219, 16
    %v316 = vpop.permute.xlu0 %315
    %v317 = vsel %vm108, %v316, %v219
    %318 = vrot.lane.b32.xlu0 %v220, 16
    %v319 = vpop.permute.xlu0 %318
    %v320 = vsel %vm108, %v319, %v220
    %321 = vrot.lane.b32.xlu0 %v317, 16
    %v322 = vpop.permute.xlu0 %321
    %323 = vrot.lane.b32.xlu0 %v320, 16
    %v324 = vpop.permute.xlu0 %323
    %v325 = vsel %vm108, %v322, %v219
    %v326 = vsel %vm108, %v324, %v220
    %329 = vrot.lane.b32.xlu0 %v325, 127
    %v330 = vpop.permute.xlu0 %329
    %331 = vrot.lane.b32.xlu0 %v326, 127
    %v332 = vpop.permute.xlu0 %331
    %v335 = vsel %vm121, %v330, 0.0
    %v336 = vsel %vm121, %v332, 0.0
    %v337 = vmax.f32 %v219, %v335
    %v338 = vmax.f32 %v220, %v336
    %339 = vrot.lane.b32.xlu0 %v325, 113
    %v340 = vpop.permute.xlu0 %339
    %341 = vrot.lane.b32.xlu0 %v326, 113
    %v342 = vpop.permute.xlu0 %341
    %v345 = vsel %vm134, %v340, 0.0
    %v346 = vsel %vm134, %v342, 0.0
    %v347 = vmax.f32 %v337, %v345
    %v348 = vmax.f32 %v338, %v346
    %349 = vrot.lane.b32.xlu0 %v325, 126
    %v350 = vpop.permute.xlu0 %349
    %351 = vrot.lane.b32.xlu0 %v326, 126
    %v352 = vpop.permute.xlu0 %351
    %v355 = vsel %vm255, %v350, 0.0
    %v356 = vsel %vm255, %v352, 0.0
    %v357 = vmax.f32 %v347, %v355
    %v358 = vmax.f32 %v348, %v356
    %359 = vrot.lane.b32.xlu0 %v325, 114
    %v360 = vpop.permute.xlu0 %359
    %361 = vrot.lane.b32.xlu0 %v326, 114
    %v362 = vpop.permute.xlu0 %361
    %v365 = vsel %vm266, %v360, 0.0
    %v366 = vsel %vm266, %v362, 0.0
    %v367 = vmax.f32 %v357, %v365
    %v368 = vmax.f32 %v358, %v366
    %v369 = vrot.slane %v367, 1
    %v370 = vrot.slane %v368, 1
    %v371 = vsel %vm147, %v369, %v370
    %v372 = vsel %vm147, %v370, %v369
    %v373 = vsel %vm150, %v371, 0.0
    %v374 = vsel %vm151, %v372, 0.0
    %v375 = vmax.f32 %v367, %v373
    %v376 = vmax.f32 %v368, %v374
    %v377 = vrot.slane %v367, 7
    %v378 = vrot.slane %v368, 7
    %v379 = vsel %vm158, %v377, %v378
    %v380 = vsel %vm158, %v378, %v377
    %v381 = vsel %vm161, %v380, 0.0
    %v382 = vsel %vm162, %v379, 0.0
    %v383 = vmax.f32 %v375, %v381
    %v384 = vmax.f32 %v376, %v382
    %v385 = vrot.slane %v367, 2
    %v386 = vrot.slane %v368, 2
    %v387 = vsel %vm295, %v385, %v386
    %v388 = vsel %vm295, %v386, %v385
    %v389 = vsel %vm298, %v387, 0.0
    %v390 = vsel %vm299, %v388, 0.0
    %v391 = vmax.f32 %v383, %v389
    %v392 = vmax.f32 %v384, %v390
    %v393 = vrot.slane %v367, 6
    %v394 = vrot.slane %v368, 6
    %v395 = vsel %vm306, %v393, %v394
    %v396 = vsel %vm306, %v394, %v393
    %v397 = vsel %vm309, %v396, 0.0
    %v398 = vsel %vm310, %v395, 0.0
    %v399 = vmax.f32 %v391, %v397
    %v400 = vmax.f32 %v392, %v398
    %v401 = vmul.f32 %v219, %v313
    %v402 = vmul.f32 %v220, %v314
    %vm403 = vcmask 130048
    %v404 = vsel %vm403, %v401, 0.0
    %v405 = vsel %vm403, %v402, 0.0
    %v406 = vadd.f32 %v404, %v405
    %407 = vadd.xlane.f32.xlu0 %v406
    %v408 = vpop.xlane.xlu0 %407
    %v409 = vrot.slane %v408, 4
    %v410 = vadd.f32 %v408, %v409
    %v411 = vrot.slane %v410, 2
    %v412 = vadd.f32 %v410, %v411
    %v413 = vrot.slane %v412, 1
    %v414 = vadd.f32 %v412, %v413
    %s415 = vtos %v414
    %v416 = vstv %s415
    %v417 = vsel %vm403, %v219, 0.0
    %v418 = vsel %vm403, %v220, 0.0
    %v419 = vadd.f32 %v417, %v418
    %420 = vadd.xlane.f32.xlu0 %v419
    %v421 = vpop.xlane.xlu0 %420
    %v422 = vrot.slane %v421, 4
    %v423 = vadd.f32 %v421, %v422
    %v424 = vrot.slane %v423, 2
    %v425 = vadd.f32 %v423, %v424
    %v426 = vrot.slane %v425, 1
    %v427 = vadd.f32 %v425, %v426
    %s428 = vtos %v427
    %v429 = vstv %s428
    %v430 = vadd.f32 %v429, 1e-07
    %v431 = vmul.f32 %v399, %v167
    %v432 = vmul.f32 %v400, %v168
    %v433 = vsel %vm403, %v431, 0.0
    %v434 = vsel %vm403, %v432, 0.0
    %v435 = vadd.f32 %v433, %v434
    %436 = vadd.xlane.f32.xlu0 %v435
    %v437 = vpop.xlane.xlu0 %436
    %v438 = vrot.slane %v437, 4
    %v439 = vadd.f32 %v437, %v438
    %v440 = vrot.slane %v439, 2
    %v441 = vadd.f32 %v439, %v440
    %v442 = vrot.slane %v441, 1
    %v443 = vadd.f32 %v441, %v442
    %s444 = vtos %v443
    %v445 = vstv %s444
    %v446 = vsel %vm403, %v167, 0.0
    %v447 = vsel %vm403, %v168, 0.0
    %v448 = vadd.f32 %v446, %v447
    %449 = vadd.xlane.f32.xlu0 %v448
    %v450 = vpop.xlane.xlu0 %449
    %v451 = vrot.slane %v450, 4
    %v452 = vadd.f32 %v450, %v451
    %v453 = vrot.slane %v452, 2
    %v454 = vadd.f32 %v452, %v453
    %v455 = vrot.slane %v454, 1
    %v456 = vadd.f32 %v454, %v455
    %s457 = vtos %v456
    %v458 = vstv %s457
    %v459 = vadd.f32 %v458, 1e-07
    %v460 = vrcp.pop %v430
    %v461 = vmul.f32 %v416, %v460
    %v462 = vrcp.pop %v459
    %v463 = vmul.f32 %v445, %v462
    %v464 = vmul.f32 %v461, 2.0
    %v465 = vmul.f32 %v464, %v463
    %v466 = vadd.f32 %v461, %v463
    %v467 = vadd.f32 %v466, 1e-07
    %v468 = vrcp.pop %v467
    %v469 = vmul.f32 %v465, %v468
    %v470 = vsub.f32 1.0, %v469
    %v471 = vadd.f32 %v470, 0.0
    %s472 = scalar_lea.vmem [#allocation6], 16
    %v473 = vld [vmem:[%s472] sm:$0xff]
    %v474 = vld [vmem:[%s472 + $0x8] sm:$0xff]
    %s475 = scalar_lea.vmem [#allocation9], 16
    %v476 = vld [vmem:[%s475] sm:$0xff]
    %v477 = vld [vmem:[%s475 + $0x8] sm:$0xff]
    %v478 = vand.u32 2147483647, %v473
    %v479 = vand.u32 2147483647, %v474
    %v480 = vsub.f32 0.0, %v478
    %v481 = vsub.f32 0.0, %v479
    %v482 = vmul.f32 %v480, 1.442695
    %v483 = vpow.pop %v482
    %v484 = vmul.f32 %v481, 1.442695
    %v485 = vpow.pop %v484
    %v486 = vadd.f32 %v483, 1.0
    %v487 = vadd.f32 %v485, 1.0
    %v488 = vrcp.pop %v486
    %v489 = vmul.f32 1.0, %v488
    %v490 = vrcp.pop %v487
    %v491 = vmul.f32 1.0, %v490
    %vm492 = vcmp.ge.f32.partialorder %v473, 0.0
    %vm493 = vcmp.ge.f32.partialorder %v474, 0.0
    %v494 = vmul.f32 %v483, %v489
    %v495 = vmul.f32 %v485, %v491
    %v496 = vsel %vm492, %v489, %v494
    %v497 = vsel %vm493, %v491, %v495
    %v498 = vmax.f32 %v473, 0.0
    %v499 = vmax.f32 %v474, 0.0
    %v500 = vmul.f32 %v473, %v476
    %v501 = vmul.f32 %v474, %v477
    %v502 = vsub.f32 %v498, %v500
    %v503 = vsub.f32 %v499, %v501
    %v504 = vlog2.pop %v486
    %v505 = vmul.f32 %v504, 0.6931472
    %v506 = vlog2.pop %v487
    %v507 = vmul.f32 %v506, 0.6931472
    %v508 = vadd.f32 %v502, %v505
    %v509 = vadd.f32 %v503, %v507
    %v510 = vmul.f32 %v496, %v476
    %v511 = vmul.f32 %v497, %v477
    %v512 = vadd.f32 %v96, %v510
    %v513 = vadd.f32 %v97, %v511
    %v514 = vadd.f32 %v496, %v476
    %v515 = vadd.f32 %v497, %v477
    %v516 = vadd.f32 %v100, %v514
    %v517 = vadd.f32 %v101, %v515
    %v518 = vadd.f32 %v102, %v508
    %v519 = vadd.f32 %v103, %v509
    %v520 = vsub.f32 1.0, %v476
    %v521 = vsub.f32 1.0, %v477
    %v522 = vsub.f32 1.0, %v496
    %v523 = vsub.f32 1.0, %v497
    %524 = vrot.lane.b32.xlu0 %v520, 16
    %v525 = vpop.permute.xlu0 %524
    %v526 = vsel %vm108, %v525, %v520
    %527 = vrot.lane.b32.xlu0 %v521, 16
    %v528 = vpop.permute.xlu0 %527
    %v529 = vsel %vm108, %v528, %v521
    %530 = vrot.lane.b32.xlu0 %v526, 16
    %v531 = vpop.permute.xlu0 %530
    %532 = vrot.lane.b32.xlu0 %v529, 16
    %v533 = vpop.permute.xlu0 %532
    %v534 = vsel %vm108, %v531, %v520
    %v535 = vsel %vm108, %v533, %v521
    %538 = vrot.lane.b32.xlu0 %v534, 127
    %v539 = vpop.permute.xlu0 %538
    %540 = vrot.lane.b32.xlu0 %v535, 127
    %v541 = vpop.permute.xlu0 %540
    %v544 = vsel %vm121, %v539, 0.0
    %v545 = vsel %vm121, %v541, 0.0
    %v546 = vmax.f32 %v520, %v544
    %v547 = vmax.f32 %v521, %v545
    %548 = vrot.lane.b32.xlu0 %v534, 113
    %v549 = vpop.permute.xlu0 %548
    %550 = vrot.lane.b32.xlu0 %v535, 113
    %v551 = vpop.permute.xlu0 %550
    %v554 = vsel %vm134, %v549, 0.0
    %v555 = vsel %vm134, %v551, 0.0
    %v556 = vmax.f32 %v546, %v554
    %v557 = vmax.f32 %v547, %v555
    %v558 = vrot.slane %v556, 1
    %v559 = vrot.slane %v557, 1
    %v560 = vsel %vm147, %v558, %v559
    %v561 = vsel %vm147, %v559, %v558
    %v562 = vsel %vm150, %v560, 0.0
    %v563 = vsel %vm151, %v561, 0.0
    %v564 = vmax.f32 %v556, %v562
    %v565 = vmax.f32 %v557, %v563
    %v566 = vrot.slane %v556, 7
    %v567 = vrot.slane %v557, 7
    %v568 = vsel %vm158, %v566, %v567
    %v569 = vsel %vm158, %v567, %v566
    %v570 = vsel %vm161, %v569, 0.0
    %v571 = vsel %vm162, %v568, 0.0
    %v572 = vmax.f32 %v564, %v570
    %v573 = vmax.f32 %v565, %v571
    %v574 = vsub.f32 %v572, %v520
    %v575 = vsub.f32 %v573, %v521
    %576 = vrot.lane.b32.xlu0 %v522, 16
    %v577 = vpop.permute.xlu0 %576
    %v578 = vsel %vm108, %v577, %v522
    %579 = vrot.lane.b32.xlu0 %v523, 16
    %v580 = vpop.permute.xlu0 %579
    %v581 = vsel %vm108, %v580, %v523
    %582 = vrot.lane.b32.xlu0 %v578, 16
    %v583 = vpop.permute.xlu0 %582
    %584 = vrot.lane.b32.xlu0 %v581, 16
    %v585 = vpop.permute.xlu0 %584
    %v586 = vsel %vm108, %v583, %v522
    %v587 = vsel %vm108, %v585, %v523
    %590 = vrot.lane.b32.xlu0 %v586, 127
    %v591 = vpop.permute.xlu0 %590
    %592 = vrot.lane.b32.xlu0 %v587, 127
    %v593 = vpop.permute.xlu0 %592
    %v596 = vsel %vm121, %v591, 0.0
    %v597 = vsel %vm121, %v593, 0.0
    %v598 = vmax.f32 %v522, %v596
    %v599 = vmax.f32 %v523, %v597
    %600 = vrot.lane.b32.xlu0 %v586, 113
    %v601 = vpop.permute.xlu0 %600
    %602 = vrot.lane.b32.xlu0 %v587, 113
    %v603 = vpop.permute.xlu0 %602
    %v606 = vsel %vm134, %v601, 0.0
    %v607 = vsel %vm134, %v603, 0.0
    %v608 = vmax.f32 %v598, %v606
    %v609 = vmax.f32 %v599, %v607
    %v610 = vrot.slane %v608, 1
    %v611 = vrot.slane %v609, 1
    %v612 = vsel %vm147, %v610, %v611
    %v613 = vsel %vm147, %v611, %v610
    %v614 = vsel %vm150, %v612, 0.0
    %v615 = vsel %vm151, %v613, 0.0
    %v616 = vmax.f32 %v608, %v614
    %v617 = vmax.f32 %v609, %v615
    %v618 = vrot.slane %v608, 7
    %v619 = vrot.slane %v609, 7
    %v620 = vsel %vm158, %v618, %v619
    %v621 = vsel %vm158, %v619, %v618
    %v622 = vsel %vm161, %v621, 0.0
    %v623 = vsel %vm162, %v620, 0.0
    %v624 = vmax.f32 %v616, %v622
    %v625 = vmax.f32 %v617, %v623
    %v626 = vsub.f32 %v624, %v522
    %v627 = vsub.f32 %v625, %v523
    %628 = vrot.lane.b32.xlu0 %v574, 16
    %v629 = vpop.permute.xlu0 %628
    %v630 = vsel %vm108, %v629, %v574
    %631 = vrot.lane.b32.xlu0 %v575, 16
    %v632 = vpop.permute.xlu0 %631
    %v633 = vsel %vm108, %v632, %v575
    %634 = vrot.lane.b32.xlu0 %v630, 16
    %v635 = vpop.permute.xlu0 %634
    %636 = vrot.lane.b32.xlu0 %v633, 16
    %v637 = vpop.permute.xlu0 %636
    %v638 = vsel %vm108, %v635, %v574
    %v639 = vsel %vm108, %v637, %v575
    %642 = vrot.lane.b32.xlu0 %v638, 127
    %v643 = vpop.permute.xlu0 %642
    %644 = vrot.lane.b32.xlu0 %v639, 127
    %v645 = vpop.permute.xlu0 %644
    %v648 = vsel %vm121, %v643, 0.0
    %v649 = vsel %vm121, %v645, 0.0
    %v650 = vmax.f32 %v574, %v648
    %v651 = vmax.f32 %v575, %v649
    %652 = vrot.lane.b32.xlu0 %v638, 113
    %v653 = vpop.permute.xlu0 %652
    %654 = vrot.lane.b32.xlu0 %v639, 113
    %v655 = vpop.permute.xlu0 %654
    %v658 = vsel %vm134, %v653, 0.0
    %v659 = vsel %vm134, %v655, 0.0
    %v660 = vmax.f32 %v650, %v658
    %v661 = vmax.f32 %v651, %v659
    %662 = vrot.lane.b32.xlu0 %v638, 126
    %v663 = vpop.permute.xlu0 %662
    %664 = vrot.lane.b32.xlu0 %v639, 126
    %v665 = vpop.permute.xlu0 %664
    %v668 = vsel %vm255, %v663, 0.0
    %v669 = vsel %vm255, %v665, 0.0
    %v670 = vmax.f32 %v660, %v668
    %v671 = vmax.f32 %v661, %v669
    %672 = vrot.lane.b32.xlu0 %v638, 114
    %v673 = vpop.permute.xlu0 %672
    %674 = vrot.lane.b32.xlu0 %v639, 114
    %v675 = vpop.permute.xlu0 %674
    %v678 = vsel %vm266, %v673, 0.0
    %v679 = vsel %vm266, %v675, 0.0
    %v680 = vmax.f32 %v670, %v678
    %v681 = vmax.f32 %v671, %v679
    %v682 = vrot.slane %v680, 1
    %v683 = vrot.slane %v681, 1
    %v684 = vsel %vm147, %v682, %v683
    %v685 = vsel %vm147, %v683, %v682
    %v686 = vsel %vm150, %v684, 0.0
    %v687 = vsel %vm151, %v685, 0.0
    %v688 = vmax.f32 %v680, %v686
    %v689 = vmax.f32 %v681, %v687
    %v690 = vrot.slane %v680, 7
    %v691 = vrot.slane %v681, 7
    %v692 = vsel %vm158, %v690, %v691
    %v693 = vsel %vm158, %v691, %v690
    %v694 = vsel %vm161, %v693, 0.0
    %v695 = vsel %vm162, %v692, 0.0
    %v696 = vmax.f32 %v688, %v694
    %v697 = vmax.f32 %v689, %v695
    %v698 = vrot.slane %v680, 2
    %v699 = vrot.slane %v681, 2
    %v700 = vsel %vm295, %v698, %v699
    %v701 = vsel %vm295, %v699, %v698
    %v702 = vsel %vm298, %v700, 0.0
    %v703 = vsel %vm299, %v701, 0.0
    %v704 = vmax.f32 %v696, %v702
    %v705 = vmax.f32 %v697, %v703
    %v706 = vrot.slane %v680, 6
    %v707 = vrot.slane %v681, 6
    %v708 = vsel %vm306, %v706, %v707
    %v709 = vsel %vm306, %v707, %v706
    %v710 = vsel %vm309, %v709, 0.0
    %v711 = vsel %vm310, %v708, 0.0
    %v712 = vmax.f32 %v704, %v710
    %v713 = vmax.f32 %v705, %v711
    %714 = vrot.lane.b32.xlu0 %v626, 16
    %v715 = vpop.permute.xlu0 %714
    %v716 = vsel %vm108, %v715, %v626
    %717 = vrot.lane.b32.xlu0 %v627, 16
    %v718 = vpop.permute.xlu0 %717
    %v719 = vsel %vm108, %v718, %v627
    %720 = vrot.lane.b32.xlu0 %v716, 16
    %v721 = vpop.permute.xlu0 %720
    %722 = vrot.lane.b32.xlu0 %v719, 16
    %v723 = vpop.permute.xlu0 %722
    %v724 = vsel %vm108, %v721, %v626
    %v725 = vsel %vm108, %v723, %v627
    %728 = vrot.lane.b32.xlu0 %v724, 127
    %v729 = vpop.permute.xlu0 %728
    %730 = vrot.lane.b32.xlu0 %v725, 127
    %v731 = vpop.permute.xlu0 %730
    %v734 = vsel %vm121, %v729, 0.0
    %v735 = vsel %vm121, %v731, 0.0
    %v736 = vmax.f32 %v626, %v734
    %v737 = vmax.f32 %v627, %v735
    %738 = vrot.lane.b32.xlu0 %v724, 113
    %v739 = vpop.permute.xlu0 %738
    %740 = vrot.lane.b32.xlu0 %v725, 113
    %v741 = vpop.permute.xlu0 %740
    %v744 = vsel %vm134, %v739, 0.0
    %v745 = vsel %vm134, %v741, 0.0
    %v746 = vmax.f32 %v736, %v744
    %v747 = vmax.f32 %v737, %v745
    %748 = vrot.lane.b32.xlu0 %v724, 126
    %v749 = vpop.permute.xlu0 %748
    %750 = vrot.lane.b32.xlu0 %v725, 126
    %v751 = vpop.permute.xlu0 %750
    %v754 = vsel %vm255, %v749, 0.0
    %v755 = vsel %vm255, %v751, 0.0
    %v756 = vmax.f32 %v746, %v754
    %v757 = vmax.f32 %v747, %v755
    %758 = vrot.lane.b32.xlu0 %v724, 114
    %v759 = vpop.permute.xlu0 %758
    %760 = vrot.lane.b32.xlu0 %v725, 114
    %v761 = vpop.permute.xlu0 %760
    %v764 = vsel %vm266, %v759, 0.0
    %v765 = vsel %vm266, %v761, 0.0
    %v766 = vmax.f32 %v756, %v764
    %v767 = vmax.f32 %v757, %v765
    %v768 = vrot.slane %v766, 1
    %v769 = vrot.slane %v767, 1
    %v770 = vsel %vm147, %v768, %v769
    %v771 = vsel %vm147, %v769, %v768
    %v772 = vsel %vm150, %v770, 0.0
    %v773 = vsel %vm151, %v771, 0.0
    %v774 = vmax.f32 %v766, %v772
    %v775 = vmax.f32 %v767, %v773
    %v776 = vrot.slane %v766, 7
    %v777 = vrot.slane %v767, 7
    %v778 = vsel %vm158, %v776, %v777
    %v779 = vsel %vm158, %v777, %v776
    %v780 = vsel %vm161, %v779, 0.0
    %v781 = vsel %vm162, %v778, 0.0
    %v782 = vmax.f32 %v774, %v780
    %v783 = vmax.f32 %v775, %v781
    %v784 = vrot.slane %v766, 2
    %v785 = vrot.slane %v767, 2
    %v786 = vsel %vm295, %v784, %v785
    %v787 = vsel %vm295, %v785, %v784
    %v788 = vsel %vm298, %v786, 0.0
    %v789 = vsel %vm299, %v787, 0.0
    %v790 = vmax.f32 %v782, %v788
    %v791 = vmax.f32 %v783, %v789
    %v792 = vrot.slane %v766, 6
    %v793 = vrot.slane %v767, 6
    %v794 = vsel %vm306, %v792, %v793
    %v795 = vsel %vm306, %v793, %v792
    %v796 = vsel %vm309, %v795, 0.0
    %v797 = vsel %vm310, %v794, 0.0
    %v798 = vmax.f32 %v790, %v796
    %v799 = vmax.f32 %v791, %v797
    %v800 = vmul.f32 %v626, %v712
    %v801 = vmul.f32 %v627, %v713
    %v802 = vsel %vm403, %v800, 0.0
    %v803 = vsel %vm403, %v801, 0.0
    %v804 = vadd.f32 %v802, %v803
    %805 = vadd.xlane.f32.xlu0 %v804
    %v806 = vpop.xlane.xlu0 %805
    %v807 = vrot.slane %v806, 4
    %v808 = vadd.f32 %v806, %v807
    %v809 = vrot.slane %v808, 2
    %v810 = vadd.f32 %v808, %v809
    %v811 = vrot.slane %v810, 1
    %v812 = vadd.f32 %v810, %v811
    %s813 = vtos %v812
    %v814 = vstv %s813
    %v815 = vsel %vm403, %v626, 0.0
    %v816 = vsel %vm403, %v627, 0.0
    %v817 = vadd.f32 %v815, %v816
    %818 = vadd.xlane.f32.xlu0 %v817
    %v819 = vpop.xlane.xlu0 %818
    %v820 = vrot.slane %v819, 4
    %v821 = vadd.f32 %v819, %v820
    %v822 = vrot.slane %v821, 2
    %v823 = vadd.f32 %v821, %v822
    %v824 = vrot.slane %v823, 1
    %v825 = vadd.f32 %v823, %v824
    %s826 = vtos %v825
    %v827 = vstv %s826
    %v828 = vadd.f32 %v827, 1e-07
    %v829 = vmul.f32 %v798, %v574
    %v830 = vmul.f32 %v799, %v575
    %v831 = vsel %vm403, %v829, 0.0
    %v832 = vsel %vm403, %v830, 0.0
    %v833 = vadd.f32 %v831, %v832
    %834 = vadd.xlane.f32.xlu0 %v833
    %v835 = vpop.xlane.xlu0 %834
    %v836 = vrot.slane %v835, 4
    %v837 = vadd.f32 %v835, %v836
    %v838 = vrot.slane %v837, 2
    %v839 = vadd.f32 %v837, %v838
    %v840 = vrot.slane %v839, 1
    %v841 = vadd.f32 %v839, %v840
    %s842 = vtos %v841
    %v843 = vstv %s842
    %v844 = vsel %vm403, %v574, 0.0
    %v845 = vsel %vm403, %v575, 0.0
    %v846 = vadd.f32 %v844, %v845
    %847 = vadd.xlane.f32.xlu0 %v846
    %v848 = vpop.xlane.xlu0 %847
    %v849 = vrot.slane %v848, 4
    %v850 = vadd.f32 %v848, %v849
    %v851 = vrot.slane %v850, 2
    %v852 = vadd.f32 %v850, %v851
    %v853 = vrot.slane %v852, 1
    %v854 = vadd.f32 %v852, %v853
    %s855 = vtos %v854
    %v856 = vstv %s855
    %v857 = vadd.f32 %v856, 1e-07
    %v858 = vrcp.pop %v828
    %v859 = vmul.f32 %v814, %v858
    %v860 = vrcp.pop %v857
    %v861 = vmul.f32 %v843, %v860
    %v862 = vmul.f32 %v859, 2.0
    %v863 = vmul.f32 %v862, %v861
    %v864 = vadd.f32 %v859, %v861
    %v865 = vadd.f32 %v864, 1e-07
    %v866 = vrcp.pop %v865
    %v867 = vmul.f32 %v863, %v866
    %v868 = vsub.f32 1.0, %v867
    %v869 = vadd.f32 %v471, %v868
    %s870 = scalar_lea.vmem [#allocation6], 32
    %v871 = vld [vmem:[%s870] sm:$0xff]
    %v872 = vld [vmem:[%s870 + $0x8] sm:$0xff]
    %s873 = scalar_lea.vmem [#allocation9], 32
    %v874 = vld [vmem:[%s873] sm:$0xff]
    %v875 = vld [vmem:[%s873 + $0x8] sm:$0xff]
    %v876 = vand.u32 2147483647, %v871
    %v877 = vand.u32 2147483647, %v872
    %v878 = vsub.f32 0.0, %v876
    %v879 = vsub.f32 0.0, %v877
    %v880 = vmul.f32 %v878, 1.442695
    %v881 = vpow.pop %v880
    %v882 = vmul.f32 %v879, 1.442695
    %v883 = vpow.pop %v882
    %v884 = vadd.f32 %v881, 1.0
    %v885 = vadd.f32 %v883, 1.0
    %v886 = vrcp.pop %v884
    %v887 = vmul.f32 1.0, %v886
    %v888 = vrcp.pop %v885
    %v889 = vmul.f32 1.0, %v888
    %vm890 = vcmp.ge.f32.partialorder %v871, 0.0
    %vm891 = vcmp.ge.f32.partialorder %v872, 0.0
    %v892 = vmul.f32 %v881, %v887
    %v893 = vmul.f32 %v883, %v889
    %v894 = vsel %vm890, %v887, %v892
    %v895 = vsel %vm891, %v889, %v893
    %v896 = vmax.f32 %v871, 0.0
    %v897 = vmax.f32 %v872, 0.0
    %v898 = vmul.f32 %v871, %v874
    %v899 = vmul.f32 %v872, %v875
    %v900 = vsub.f32 %v896, %v898
    %v901 = vsub.f32 %v897, %v899
    %v902 = vlog2.pop %v884
    %v903 = vmul.f32 %v902, 0.6931472
    %v904 = vlog2.pop %v885
    %v905 = vmul.f32 %v904, 0.6931472
    %v906 = vadd.f32 %v900, %v903
    %v907 = vadd.f32 %v901, %v905
    %v908 = vmul.f32 %v894, %v874
    %v909 = vmul.f32 %v895, %v875
    %v910 = vadd.f32 %v512, %v908
    %v911 = vadd.f32 %v513, %v909
    %v912 = vadd.f32 %v894, %v874
    %v913 = vadd.f32 %v895, %v875
    %v914 = vadd.f32 %v516, %v912
    %v915 = vadd.f32 %v517, %v913
    %v916 = vadd.f32 %v518, %v906
    %v917 = vadd.f32 %v519, %v907
    %v918 = vsub.f32 1.0, %v874
    %v919 = vsub.f32 1.0, %v875
    %v920 = vsub.f32 1.0, %v894
    %v921 = vsub.f32 1.0, %v895
    %922 = vrot.lane.b32.xlu0 %v918, 16
    %v923 = vpop.permute.xlu0 %922
    %v924 = vsel %vm108, %v923, %v918
    %925 = vrot.lane.b32.xlu0 %v919, 16
    %v926 = vpop.permute.xlu0 %925
    %v927 = vsel %vm108, %v926, %v919
    %928 = vrot.lane.b32.xlu0 %v924, 16
    %v929 = vpop.permute.xlu0 %928
    %930 = vrot.lane.b32.xlu0 %v927, 16
    %v931 = vpop.permute.xlu0 %930
    %v932 = vsel %vm108, %v929, %v918
    %v933 = vsel %vm108, %v931, %v919
    %936 = vrot.lane.b32.xlu0 %v932, 127
    %v937 = vpop.permute.xlu0 %936
    %938 = vrot.lane.b32.xlu0 %v933, 127
    %v939 = vpop.permute.xlu0 %938
    %v942 = vsel %vm121, %v937, 0.0
    %v943 = vsel %vm121, %v939, 0.0
    %v944 = vmax.f32 %v918, %v942
    %v945 = vmax.f32 %v919, %v943
    %946 = vrot.lane.b32.xlu0 %v932, 113
    %v947 = vpop.permute.xlu0 %946
    %948 = vrot.lane.b32.xlu0 %v933, 113
    %v949 = vpop.permute.xlu0 %948
    %v952 = vsel %vm134, %v947, 0.0
    %v953 = vsel %vm134, %v949, 0.0
    %v954 = vmax.f32 %v944, %v952
    %v955 = vmax.f32 %v945, %v953
    %v956 = vrot.slane %v954, 1
    %v957 = vrot.slane %v955, 1
    %v958 = vsel %vm147, %v956, %v957
    %v959 = vsel %vm147, %v957, %v956
    %v960 = vsel %vm150, %v958, 0.0
    %v961 = vsel %vm151, %v959, 0.0
    %v962 = vmax.f32 %v954, %v960
    %v963 = vmax.f32 %v955, %v961
    %v964 = vrot.slane %v954, 7
    %v965 = vrot.slane %v955, 7
    %v966 = vsel %vm158, %v964, %v965
    %v967 = vsel %vm158, %v965, %v964
    %v968 = vsel %vm161, %v967, 0.0
    %v969 = vsel %vm162, %v966, 0.0
    %v970 = vmax.f32 %v962, %v968
    %v971 = vmax.f32 %v963, %v969
    %v972 = vsub.f32 %v970, %v918
    %v973 = vsub.f32 %v971, %v919
    %974 = vrot.lane.b32.xlu0 %v920, 16
    %v975 = vpop.permute.xlu0 %974
    %v976 = vsel %vm108, %v975, %v920
    %977 = vrot.lane.b32.xlu0 %v921, 16
    %v978 = vpop.permute.xlu0 %977
    %v979 = vsel %vm108, %v978, %v921
    %980 = vrot.lane.b32.xlu0 %v976, 16
    %v981 = vpop.permute.xlu0 %980
    %982 = vrot.lane.b32.xlu0 %v979, 16
    %v983 = vpop.permute.xlu0 %982
    %v984 = vsel %vm108, %v981, %v920
    %v985 = vsel %vm108, %v983, %v921
    %988 = vrot.lane.b32.xlu0 %v984, 127
    %v989 = vpop.permute.xlu0 %988
    %990 = vrot.lane.b32.xlu0 %v985, 127
    %v991 = vpop.permute.xlu0 %990
    %v994 = vsel %vm121, %v989, 0.0
    %v995 = vsel %vm121, %v991, 0.0
    %v996 = vmax.f32 %v920, %v994
    %v997 = vmax.f32 %v921, %v995
    %998 = vrot.lane.b32.xlu0 %v984, 113
    %v999 = vpop.permute.xlu0 %998
    %1000 = vrot.lane.b32.xlu0 %v985, 113
    %v1001 = vpop.permute.xlu0 %1000
    %v1004 = vsel %vm134, %v999, 0.0
    %v1005 = vsel %vm134, %v1001, 0.0
    %v1006 = vmax.f32 %v996, %v1004
    %v1007 = vmax.f32 %v997, %v1005
    %v1008 = vrot.slane %v1006, 1
    %v1009 = vrot.slane %v1007, 1
    %v1010 = vsel %vm147, %v1008, %v1009
    %v1011 = vsel %vm147, %v1009, %v1008
    %v1012 = vsel %vm150, %v1010, 0.0
    %v1013 = vsel %vm151, %v1011, 0.0
    %v1014 = vmax.f32 %v1006, %v1012
    %v1015 = vmax.f32 %v1007, %v1013
    %v1016 = vrot.slane %v1006, 7
    %v1017 = vrot.slane %v1007, 7
    %v1018 = vsel %vm158, %v1016, %v1017
    %v1019 = vsel %vm158, %v1017, %v1016
    %v1020 = vsel %vm161, %v1019, 0.0
    %v1021 = vsel %vm162, %v1018, 0.0
    %v1022 = vmax.f32 %v1014, %v1020
    %v1023 = vmax.f32 %v1015, %v1021
    %v1024 = vsub.f32 %v1022, %v920
    %v1025 = vsub.f32 %v1023, %v921
    %1026 = vrot.lane.b32.xlu0 %v972, 16
    %v1027 = vpop.permute.xlu0 %1026
    %v1028 = vsel %vm108, %v1027, %v972
    %1029 = vrot.lane.b32.xlu0 %v973, 16
    %v1030 = vpop.permute.xlu0 %1029
    %v1031 = vsel %vm108, %v1030, %v973
    %1032 = vrot.lane.b32.xlu0 %v1028, 16
    %v1033 = vpop.permute.xlu0 %1032
    %1034 = vrot.lane.b32.xlu0 %v1031, 16
    %v1035 = vpop.permute.xlu0 %1034
    %v1036 = vsel %vm108, %v1033, %v972
    %v1037 = vsel %vm108, %v1035, %v973
    %1040 = vrot.lane.b32.xlu0 %v1036, 127
    %v1041 = vpop.permute.xlu0 %1040
    %1042 = vrot.lane.b32.xlu0 %v1037, 127
    %v1043 = vpop.permute.xlu0 %1042
    %v1046 = vsel %vm121, %v1041, 0.0
    %v1047 = vsel %vm121, %v1043, 0.0
    %v1048 = vmax.f32 %v972, %v1046
    %v1049 = vmax.f32 %v973, %v1047
    %1050 = vrot.lane.b32.xlu0 %v1036, 113
    %v1051 = vpop.permute.xlu0 %1050
    %1052 = vrot.lane.b32.xlu0 %v1037, 113
    %v1053 = vpop.permute.xlu0 %1052
    %v1056 = vsel %vm134, %v1051, 0.0
    %v1057 = vsel %vm134, %v1053, 0.0
    %v1058 = vmax.f32 %v1048, %v1056
    %v1059 = vmax.f32 %v1049, %v1057
    %1060 = vrot.lane.b32.xlu0 %v1036, 126
    %v1061 = vpop.permute.xlu0 %1060
    %1062 = vrot.lane.b32.xlu0 %v1037, 126
    %v1063 = vpop.permute.xlu0 %1062
    %v1066 = vsel %vm255, %v1061, 0.0
    %v1067 = vsel %vm255, %v1063, 0.0
    %v1068 = vmax.f32 %v1058, %v1066
    %v1069 = vmax.f32 %v1059, %v1067
    %1070 = vrot.lane.b32.xlu0 %v1036, 114
    %v1071 = vpop.permute.xlu0 %1070
    %1072 = vrot.lane.b32.xlu0 %v1037, 114
    %v1073 = vpop.permute.xlu0 %1072
    %v1076 = vsel %vm266, %v1071, 0.0
    %v1077 = vsel %vm266, %v1073, 0.0
    %v1078 = vmax.f32 %v1068, %v1076
    %v1079 = vmax.f32 %v1069, %v1077
    %v1080 = vrot.slane %v1078, 1
    %v1081 = vrot.slane %v1079, 1
    %v1082 = vsel %vm147, %v1080, %v1081
    %v1083 = vsel %vm147, %v1081, %v1080
    %v1084 = vsel %vm150, %v1082, 0.0
    %v1085 = vsel %vm151, %v1083, 0.0
    %v1086 = vmax.f32 %v1078, %v1084
    %v1087 = vmax.f32 %v1079, %v1085
    %v1088 = vrot.slane %v1078, 7
    %v1089 = vrot.slane %v1079, 7
    %v1090 = vsel %vm158, %v1088, %v1089
    %v1091 = vsel %vm158, %v1089, %v1088
    %v1092 = vsel %vm161, %v1091, 0.0
    %v1093 = vsel %vm162, %v1090, 0.0
    %v1094 = vmax.f32 %v1086, %v1092
    %v1095 = vmax.f32 %v1087, %v1093
    %v1096 = vrot.slane %v1078, 2
    %v1097 = vrot.slane %v1079, 2
    %v1098 = vsel %vm295, %v1096, %v1097
    %v1099 = vsel %vm295, %v1097, %v1096
    %v1100 = vsel %vm298, %v1098, 0.0
    %v1101 = vsel %vm299, %v1099, 0.0
    %v1102 = vmax.f32 %v1094, %v1100
    %v1103 = vmax.f32 %v1095, %v1101
    %v1104 = vrot.slane %v1078, 6
    %v1105 = vrot.slane %v1079, 6
    %v1106 = vsel %vm306, %v1104, %v1105
    %v1107 = vsel %vm306, %v1105, %v1104
    %v1108 = vsel %vm309, %v1107, 0.0
    %v1109 = vsel %vm310, %v1106, 0.0
    %v1110 = vmax.f32 %v1102, %v1108
    %v1111 = vmax.f32 %v1103, %v1109
    %1112 = vrot.lane.b32.xlu0 %v1024, 16
    %v1113 = vpop.permute.xlu0 %1112
    %v1114 = vsel %vm108, %v1113, %v1024
    %1115 = vrot.lane.b32.xlu0 %v1025, 16
    %v1116 = vpop.permute.xlu0 %1115
    %v1117 = vsel %vm108, %v1116, %v1025
    %1118 = vrot.lane.b32.xlu0 %v1114, 16
    %v1119 = vpop.permute.xlu0 %1118
    %1120 = vrot.lane.b32.xlu0 %v1117, 16
    %v1121 = vpop.permute.xlu0 %1120
    %v1122 = vsel %vm108, %v1119, %v1024
    %v1123 = vsel %vm108, %v1121, %v1025
    %1126 = vrot.lane.b32.xlu0 %v1122, 127
    %v1127 = vpop.permute.xlu0 %1126
    %1128 = vrot.lane.b32.xlu0 %v1123, 127
    %v1129 = vpop.permute.xlu0 %1128
    %v1132 = vsel %vm121, %v1127, 0.0
    %v1133 = vsel %vm121, %v1129, 0.0
    %v1134 = vmax.f32 %v1024, %v1132
    %v1135 = vmax.f32 %v1025, %v1133
    %1136 = vrot.lane.b32.xlu0 %v1122, 113
    %v1137 = vpop.permute.xlu0 %1136
    %1138 = vrot.lane.b32.xlu0 %v1123, 113
    %v1139 = vpop.permute.xlu0 %1138
    %v1142 = vsel %vm134, %v1137, 0.0
    %v1143 = vsel %vm134, %v1139, 0.0
    %v1144 = vmax.f32 %v1134, %v1142
    %v1145 = vmax.f32 %v1135, %v1143
    %1146 = vrot.lane.b32.xlu0 %v1122, 126
    %v1147 = vpop.permute.xlu0 %1146
    %1148 = vrot.lane.b32.xlu0 %v1123, 126
    %v1149 = vpop.permute.xlu0 %1148
    %v1152 = vsel %vm255, %v1147, 0.0
    %v1153 = vsel %vm255, %v1149, 0.0
    %v1154 = vmax.f32 %v1144, %v1152
    %v1155 = vmax.f32 %v1145, %v1153
    %1156 = vrot.lane.b32.xlu0 %v1122, 114
    %v1157 = vpop.permute.xlu0 %1156
    %1158 = vrot.lane.b32.xlu0 %v1123, 114
    %v1159 = vpop.permute.xlu0 %1158
    %v1162 = vsel %vm266, %v1157, 0.0
    %v1163 = vsel %vm266, %v1159, 0.0
    %v1164 = vmax.f32 %v1154, %v1162
    %v1165 = vmax.f32 %v1155, %v1163
    %v1166 = vrot.slane %v1164, 1
    %v1167 = vrot.slane %v1165, 1
    %v1168 = vsel %vm147, %v1166, %v1167
    %v1169 = vsel %vm147, %v1167, %v1166
    %v1170 = vsel %vm150, %v1168, 0.0
    %v1171 = vsel %vm151, %v1169, 0.0
    %v1172 = vmax.f32 %v1164, %v1170
    %v1173 = vmax.f32 %v1165, %v1171
    %v1174 = vrot.slane %v1164, 7
    %v1175 = vrot.slane %v1165, 7
    %v1176 = vsel %vm158, %v1174, %v1175
    %v1177 = vsel %vm158, %v1175, %v1174
    %v1178 = vsel %vm161, %v1177, 0.0
    %v1179 = vsel %vm162, %v1176, 0.0
    %v1180 = vmax.f32 %v1172, %v1178
    %v1181 = vmax.f32 %v1173, %v1179
    %v1182 = vrot.slane %v1164, 2
    %v1183 = vrot.slane %v1165, 2
    %v1184 = vsel %vm295, %v1182, %v1183
    %v1185 = vsel %vm295, %v1183, %v1182
    %v1186 = vsel %vm298, %v1184, 0.0
    %v1187 = vsel %vm299, %v1185, 0.0
    %v1188 = vmax.f32 %v1180, %v1186
    %v1189 = vmax.f32 %v1181, %v1187
    %v1190 = vrot.slane %v1164, 6
    %v1191 = vrot.slane %v1165, 6
    %v1192 = vsel %vm306, %v1190, %v1191
    %v1193 = vsel %vm306, %v1191, %v1190
    %v1194 = vsel %vm309, %v1193, 0.0
    %v1195 = vsel %vm310, %v1192, 0.0
    %v1196 = vmax.f32 %v1188, %v1194
    %v1197 = vmax.f32 %v1189, %v1195
    %v1198 = vmul.f32 %v1024, %v1110
    %v1199 = vmul.f32 %v1025, %v1111
    %v1200 = vsel %vm403, %v1198, 0.0
    %v1201 = vsel %vm403, %v1199, 0.0
    %v1202 = vadd.f32 %v1200, %v1201
    %1203 = vadd.xlane.f32.xlu0 %v1202
    %v1204 = vpop.xlane.xlu0 %1203
    %v1205 = vrot.slane %v1204, 4
    %v1206 = vadd.f32 %v1204, %v1205
    %v1207 = vrot.slane %v1206, 2
    %v1208 = vadd.f32 %v1206, %v1207
    %v1209 = vrot.slane %v1208, 1
    %v1210 = vadd.f32 %v1208, %v1209
    %s1211 = vtos %v1210
    %v1212 = vstv %s1211
    %v1213 = vsel %vm403, %v1024, 0.0
    %v1214 = vsel %vm403, %v1025, 0.0
    %v1215 = vadd.f32 %v1213, %v1214
    %1216 = vadd.xlane.f32.xlu0 %v1215
    %v1217 = vpop.xlane.xlu0 %1216
    %v1218 = vrot.slane %v1217, 4
    %v1219 = vadd.f32 %v1217, %v1218
    %v1220 = vrot.slane %v1219, 2
    %v1221 = vadd.f32 %v1219, %v1220
    %v1222 = vrot.slane %v1221, 1
    %v1223 = vadd.f32 %v1221, %v1222
    %s1224 = vtos %v1223
    %v1225 = vstv %s1224
    %v1226 = vadd.f32 %v1225, 1e-07
    %v1227 = vmul.f32 %v1196, %v972
    %v1228 = vmul.f32 %v1197, %v973
    %v1229 = vsel %vm403, %v1227, 0.0
    %v1230 = vsel %vm403, %v1228, 0.0
    %v1231 = vadd.f32 %v1229, %v1230
    %1232 = vadd.xlane.f32.xlu0 %v1231
    %v1233 = vpop.xlane.xlu0 %1232
    %v1234 = vrot.slane %v1233, 4
    %v1235 = vadd.f32 %v1233, %v1234
    %v1236 = vrot.slane %v1235, 2
    %v1237 = vadd.f32 %v1235, %v1236
    %v1238 = vrot.slane %v1237, 1
    %v1239 = vadd.f32 %v1237, %v1238
    %s1240 = vtos %v1239
    %v1241 = vstv %s1240
    %v1242 = vsel %vm403, %v972, 0.0
    %v1243 = vsel %vm403, %v973, 0.0
    %v1244 = vadd.f32 %v1242, %v1243
    %1245 = vadd.xlane.f32.xlu0 %v1244
    %v1246 = vpop.xlane.xlu0 %1245
    %v1247 = vrot.slane %v1246, 4
    %v1248 = vadd.f32 %v1246, %v1247
    %v1249 = vrot.slane %v1248, 2
    %v1250 = vadd.f32 %v1248, %v1249
    %v1251 = vrot.slane %v1250, 1
    %v1252 = vadd.f32 %v1250, %v1251
    %s1253 = vtos %v1252
    %v1254 = vstv %s1253
    %v1255 = vadd.f32 %v1254, 1e-07
    %v1256 = vrcp.pop %v1226
    %v1257 = vmul.f32 %v1212, %v1256
    %v1258 = vrcp.pop %v1255
    %v1259 = vmul.f32 %v1241, %v1258
    %v1260 = vmul.f32 %v1257, 2.0
    %v1261 = vmul.f32 %v1260, %v1259
    %v1262 = vadd.f32 %v1257, %v1259
    %v1263 = vadd.f32 %v1262, 1e-07
    %v1264 = vrcp.pop %v1263
    %v1265 = vmul.f32 %v1261, %v1264
    %v1266 = vsub.f32 1.0, %v1265
    %v1267 = vadd.f32 %v869, %v1266
    %s1268 = scalar_lea.vmem [#allocation6], 48
    %v1269 = vld [vmem:[%s1268] sm:$0xff]
    %v1270 = vld [vmem:[%s1268 + $0x8] sm:$0xff]
    %s1271 = scalar_lea.vmem [#allocation9], 48
    %v1272 = vld [vmem:[%s1271] sm:$0xff]
    %v1273 = vld [vmem:[%s1271 + $0x8] sm:$0xff]
    %v1274 = vand.u32 2147483647, %v1269
    %v1275 = vand.u32 2147483647, %v1270
    %v1276 = vsub.f32 0.0, %v1274
    %v1277 = vsub.f32 0.0, %v1275
    %v1278 = vmul.f32 %v1276, 1.442695
    %v1279 = vpow.pop %v1278
    %v1280 = vmul.f32 %v1277, 1.442695
    %v1281 = vpow.pop %v1280
    %v1282 = vadd.f32 %v1279, 1.0
    %v1283 = vadd.f32 %v1281, 1.0
    %v1284 = vrcp.pop %v1282
    %v1285 = vmul.f32 1.0, %v1284
    %v1286 = vrcp.pop %v1283
    %v1287 = vmul.f32 1.0, %v1286
    %vm1288 = vcmp.ge.f32.partialorder %v1269, 0.0
    %vm1289 = vcmp.ge.f32.partialorder %v1270, 0.0
    %v1290 = vmul.f32 %v1279, %v1285
    %v1291 = vmul.f32 %v1281, %v1287
    %v1292 = vsel %vm1288, %v1285, %v1290
    %v1293 = vsel %vm1289, %v1287, %v1291
    %v1294 = vmax.f32 %v1269, 0.0
    %v1295 = vmax.f32 %v1270, 0.0
    %v1296 = vmul.f32 %v1269, %v1272
    %v1297 = vmul.f32 %v1270, %v1273
    %v1298 = vsub.f32 %v1294, %v1296
    %v1299 = vsub.f32 %v1295, %v1297
    %v1300 = vlog2.pop %v1282
    %v1301 = vmul.f32 %v1300, 0.6931472
    %v1302 = vlog2.pop %v1283
    %v1303 = vmul.f32 %v1302, 0.6931472
    %v1304 = vadd.f32 %v1298, %v1301
    %v1305 = vadd.f32 %v1299, %v1303
    %v1306 = vmul.f32 %v1292, %v1272
    %v1307 = vmul.f32 %v1293, %v1273
    %v1308 = vadd.f32 %v910, %v1306
    %v1309 = vadd.f32 %v911, %v1307
    %v1310 = vadd.f32 %v1292, %v1272
    %v1311 = vadd.f32 %v1293, %v1273
    %v1312 = vadd.f32 %v914, %v1310
    %v1313 = vadd.f32 %v915, %v1311
    %v1314 = vadd.f32 %v916, %v1304
    %v1315 = vadd.f32 %v917, %v1305
    %v1316 = vsub.f32 1.0, %v1272
    %v1317 = vsub.f32 1.0, %v1273
    %v1318 = vsub.f32 1.0, %v1292
    %v1319 = vsub.f32 1.0, %v1293
    %1320 = vrot.lane.b32.xlu0 %v1316, 16
    %v1321 = vpop.permute.xlu0 %1320
    %v1322 = vsel %vm108, %v1321, %v1316
    %1323 = vrot.lane.b32.xlu0 %v1317, 16
    %v1324 = vpop.permute.xlu0 %1323
    %v1325 = vsel %vm108, %v1324, %v1317
    %1326 = vrot.lane.b32.xlu0 %v1322, 16
    %v1327 = vpop.permute.xlu0 %1326
    %1328 = vrot.lane.b32.xlu0 %v1325, 16
    %v1329 = vpop.permute.xlu0 %1328
    %v1330 = vsel %vm108, %v1327, %v1316
    %v1331 = vsel %vm108, %v1329, %v1317
    %1334 = vrot.lane.b32.xlu0 %v1330, 127
    %v1335 = vpop.permute.xlu0 %1334
    %1336 = vrot.lane.b32.xlu0 %v1331, 127
    %v1337 = vpop.permute.xlu0 %1336
    %v1340 = vsel %vm121, %v1335, 0.0
    %v1341 = vsel %vm121, %v1337, 0.0
    %v1342 = vmax.f32 %v1316, %v1340
    %v1343 = vmax.f32 %v1317, %v1341
    %1344 = vrot.lane.b32.xlu0 %v1330, 113
    %v1345 = vpop.permute.xlu0 %1344
    %1346 = vrot.lane.b32.xlu0 %v1331, 113
    %v1347 = vpop.permute.xlu0 %1346
    %v1350 = vsel %vm134, %v1345, 0.0
    %v1351 = vsel %vm134, %v1347, 0.0
    %v1352 = vmax.f32 %v1342, %v1350
    %v1353 = vmax.f32 %v1343, %v1351
    %v1354 = vrot.slane %v1352, 1
    %v1355 = vrot.slane %v1353, 1
    %v1356 = vsel %vm147, %v1354, %v1355
    %v1357 = vsel %vm147, %v1355, %v1354
    %v1358 = vsel %vm150, %v1356, 0.0
    %v1359 = vsel %vm151, %v1357, 0.0
    %v1360 = vmax.f32 %v1352, %v1358
    %v1361 = vmax.f32 %v1353, %v1359
    %v1362 = vrot.slane %v1352, 7
    %v1363 = vrot.slane %v1353, 7
    %v1364 = vsel %vm158, %v1362, %v1363
    %v1365 = vsel %vm158, %v1363, %v1362
    %v1366 = vsel %vm161, %v1365, 0.0
    %v1367 = vsel %vm162, %v1364, 0.0
    %v1368 = vmax.f32 %v1360, %v1366
    %v1369 = vmax.f32 %v1361, %v1367
    %v1370 = vsub.f32 %v1368, %v1316
    %v1371 = vsub.f32 %v1369, %v1317
    %1372 = vrot.lane.b32.xlu0 %v1318, 16
    %v1373 = vpop.permute.xlu0 %1372
    %v1374 = vsel %vm108, %v1373, %v1318
    %1375 = vrot.lane.b32.xlu0 %v1319, 16
    %v1376 = vpop.permute.xlu0 %1375
    %v1377 = vsel %vm108, %v1376, %v1319
    %1378 = vrot.lane.b32.xlu0 %v1374, 16
    %v1379 = vpop.permute.xlu0 %1378
    %1380 = vrot.lane.b32.xlu0 %v1377, 16
    %v1381 = vpop.permute.xlu0 %1380
    %v1382 = vsel %vm108, %v1379, %v1318
    %v1383 = vsel %vm108, %v1381, %v1319
    %1386 = vrot.lane.b32.xlu0 %v1382, 127
    %v1387 = vpop.permute.xlu0 %1386
    %1388 = vrot.lane.b32.xlu0 %v1383, 127
    %v1389 = vpop.permute.xlu0 %1388
    %v1392 = vsel %vm121, %v1387, 0.0
    %v1393 = vsel %vm121, %v1389, 0.0
    %v1394 = vmax.f32 %v1318, %v1392
    %v1395 = vmax.f32 %v1319, %v1393
    %1396 = vrot.lane.b32.xlu0 %v1382, 113
    %v1397 = vpop.permute.xlu0 %1396
    %1398 = vrot.lane.b32.xlu0 %v1383, 113
    %v1399 = vpop.permute.xlu0 %1398
    %v1402 = vsel %vm134, %v1397, 0.0
    %v1403 = vsel %vm134, %v1399, 0.0
    %v1404 = vmax.f32 %v1394, %v1402
    %v1405 = vmax.f32 %v1395, %v1403
    %v1406 = vrot.slane %v1404, 1
    %v1407 = vrot.slane %v1405, 1
    %v1408 = vsel %vm147, %v1406, %v1407
    %v1409 = vsel %vm147, %v1407, %v1406
    %v1410 = vsel %vm150, %v1408, 0.0
    %v1411 = vsel %vm151, %v1409, 0.0
    %v1412 = vmax.f32 %v1404, %v1410
    %v1413 = vmax.f32 %v1405, %v1411
    %v1414 = vrot.slane %v1404, 7
    %v1415 = vrot.slane %v1405, 7
    %v1416 = vsel %vm158, %v1414, %v1415
    %v1417 = vsel %vm158, %v1415, %v1414
    %v1418 = vsel %vm161, %v1417, 0.0
    %v1419 = vsel %vm162, %v1416, 0.0
    %v1420 = vmax.f32 %v1412, %v1418
    %v1421 = vmax.f32 %v1413, %v1419
    %v1422 = vsub.f32 %v1420, %v1318
    %v1423 = vsub.f32 %v1421, %v1319
    %1424 = vrot.lane.b32.xlu0 %v1370, 16
    %v1425 = vpop.permute.xlu0 %1424
    %v1426 = vsel %vm108, %v1425, %v1370
    %1427 = vrot.lane.b32.xlu0 %v1371, 16
    %v1428 = vpop.permute.xlu0 %1427
    %v1429 = vsel %vm108, %v1428, %v1371
    %1430 = vrot.lane.b32.xlu0 %v1426, 16
    %v1431 = vpop.permute.xlu0 %1430
    %1432 = vrot.lane.b32.xlu0 %v1429, 16
    %v1433 = vpop.permute.xlu0 %1432
    %v1434 = vsel %vm108, %v1431, %v1370
    %v1435 = vsel %vm108, %v1433, %v1371
    %1438 = vrot.lane.b32.xlu0 %v1434, 127
    %v1439 = vpop.permute.xlu0 %1438
    %1440 = vrot.lane.b32.xlu0 %v1435, 127
    %v1441 = vpop.permute.xlu0 %1440
    %v1444 = vsel %vm121, %v1439, 0.0
    %v1445 = vsel %vm121, %v1441, 0.0
    %v1446 = vmax.f32 %v1370, %v1444
    %v1447 = vmax.f32 %v1371, %v1445
    %1448 = vrot.lane.b32.xlu0 %v1434, 113
    %v1449 = vpop.permute.xlu0 %1448
    %1450 = vrot.lane.b32.xlu0 %v1435, 113
    %v1451 = vpop.permute.xlu0 %1450
    %v1454 = vsel %vm134, %v1449, 0.0
    %v1455 = vsel %vm134, %v1451, 0.0
    %v1456 = vmax.f32 %v1446, %v1454
    %v1457 = vmax.f32 %v1447, %v1455
    %1458 = vrot.lane.b32.xlu0 %v1434, 126
    %v1459 = vpop.permute.xlu0 %1458
    %1460 = vrot.lane.b32.xlu0 %v1435, 126
    %v1461 = vpop.permute.xlu0 %1460
    %v1464 = vsel %vm255, %v1459, 0.0
    %v1465 = vsel %vm255, %v1461, 0.0
    %v1466 = vmax.f32 %v1456, %v1464
    %v1467 = vmax.f32 %v1457, %v1465
    %1468 = vrot.lane.b32.xlu0 %v1434, 114
    %v1469 = vpop.permute.xlu0 %1468
    %1470 = vrot.lane.b32.xlu0 %v1435, 114
    %v1471 = vpop.permute.xlu0 %1470
    %v1474 = vsel %vm266, %v1469, 0.0
    %v1475 = vsel %vm266, %v1471, 0.0
    %v1476 = vmax.f32 %v1466, %v1474
    %v1477 = vmax.f32 %v1467, %v1475
    %v1478 = vrot.slane %v1476, 1
    %v1479 = vrot.slane %v1477, 1
    %v1480 = vsel %vm147, %v1478, %v1479
    %v1481 = vsel %vm147, %v1479, %v1478
    %v1482 = vsel %vm150, %v1480, 0.0
    %v1483 = vsel %vm151, %v1481, 0.0
    %v1484 = vmax.f32 %v1476, %v1482
    %v1485 = vmax.f32 %v1477, %v1483
    %v1486 = vrot.slane %v1476, 7
    %v1487 = vrot.slane %v1477, 7
    %v1488 = vsel %vm158, %v1486, %v1487
    %v1489 = vsel %vm158, %v1487, %v1486
    %v1490 = vsel %vm161, %v1489, 0.0
    %v1491 = vsel %vm162, %v1488, 0.0
    %v1492 = vmax.f32 %v1484, %v1490
    %v1493 = vmax.f32 %v1485, %v1491
    %v1494 = vrot.slane %v1476, 2
    %v1495 = vrot.slane %v1477, 2
    %v1496 = vsel %vm295, %v1494, %v1495
    %v1497 = vsel %vm295, %v1495, %v1494
    %v1498 = vsel %vm298, %v1496, 0.0
    %v1499 = vsel %vm299, %v1497, 0.0
    %v1500 = vmax.f32 %v1492, %v1498
    %v1501 = vmax.f32 %v1493, %v1499
    %v1502 = vrot.slane %v1476, 6
    %v1503 = vrot.slane %v1477, 6
    %v1504 = vsel %vm306, %v1502, %v1503
    %v1505 = vsel %vm306, %v1503, %v1502
    %v1506 = vsel %vm309, %v1505, 0.0
    %v1507 = vsel %vm310, %v1504, 0.0
    %v1508 = vmax.f32 %v1500, %v1506
    %v1509 = vmax.f32 %v1501, %v1507
    %1510 = vrot.lane.b32.xlu0 %v1422, 16
    %v1511 = vpop.permute.xlu0 %1510
    %v1512 = vsel %vm108, %v1511, %v1422
    %1513 = vrot.lane.b32.xlu0 %v1423, 16
    %v1514 = vpop.permute.xlu0 %1513
    %v1515 = vsel %vm108, %v1514, %v1423
    %1516 = vrot.lane.b32.xlu0 %v1512, 16
    %v1517 = vpop.permute.xlu0 %1516
    %1518 = vrot.lane.b32.xlu0 %v1515, 16
    %v1519 = vpop.permute.xlu0 %1518
    %v1520 = vsel %vm108, %v1517, %v1422
    %v1521 = vsel %vm108, %v1519, %v1423
    %1524 = vrot.lane.b32.xlu0 %v1520, 127
    %v1525 = vpop.permute.xlu0 %1524
    %1526 = vrot.lane.b32.xlu0 %v1521, 127
    %v1527 = vpop.permute.xlu0 %1526
    %v1530 = vsel %vm121, %v1525, 0.0
    %v1531 = vsel %vm121, %v1527, 0.0
    %v1532 = vmax.f32 %v1422, %v1530
    %v1533 = vmax.f32 %v1423, %v1531
    %1534 = vrot.lane.b32.xlu0 %v1520, 113
    %v1535 = vpop.permute.xlu0 %1534
    %1536 = vrot.lane.b32.xlu0 %v1521, 113
    %v1537 = vpop.permute.xlu0 %1536
    %v1540 = vsel %vm134, %v1535, 0.0
    %v1541 = vsel %vm134, %v1537, 0.0
    %v1542 = vmax.f32 %v1532, %v1540
    %v1543 = vmax.f32 %v1533, %v1541
    %1544 = vrot.lane.b32.xlu0 %v1520, 126
    %v1545 = vpop.permute.xlu0 %1544
    %1546 = vrot.lane.b32.xlu0 %v1521, 126
    %v1547 = vpop.permute.xlu0 %1546
    %v1550 = vsel %vm255, %v1545, 0.0
    %v1551 = vsel %vm255, %v1547, 0.0
    %v1552 = vmax.f32 %v1542, %v1550
    %v1553 = vmax.f32 %v1543, %v1551
    %1554 = vrot.lane.b32.xlu0 %v1520, 114
    %v1555 = vpop.permute.xlu0 %1554
    %1556 = vrot.lane.b32.xlu0 %v1521, 114
    %v1557 = vpop.permute.xlu0 %1556
    %v1560 = vsel %vm266, %v1555, 0.0
    %v1561 = vsel %vm266, %v1557, 0.0
    %v1562 = vmax.f32 %v1552, %v1560
    %v1563 = vmax.f32 %v1553, %v1561
    %v1564 = vrot.slane %v1562, 1
    %v1565 = vrot.slane %v1563, 1
    %v1566 = vsel %vm147, %v1564, %v1565
    %v1567 = vsel %vm147, %v1565, %v1564
    %v1568 = vsel %vm150, %v1566, 0.0
    %v1569 = vsel %vm151, %v1567, 0.0
    %v1570 = vmax.f32 %v1562, %v1568
    %v1571 = vmax.f32 %v1563, %v1569
    %v1572 = vrot.slane %v1562, 7
    %v1573 = vrot.slane %v1563, 7
    %v1574 = vsel %vm158, %v1572, %v1573
    %v1575 = vsel %vm158, %v1573, %v1572
    %v1576 = vsel %vm161, %v1575, 0.0
    %v1577 = vsel %vm162, %v1574, 0.0
    %v1578 = vmax.f32 %v1570, %v1576
    %v1579 = vmax.f32 %v1571, %v1577
    %v1580 = vrot.slane %v1562, 2
    %v1581 = vrot.slane %v1563, 2
    %v1582 = vsel %vm295, %v1580, %v1581
    %v1583 = vsel %vm295, %v1581, %v1580
    %v1584 = vsel %vm298, %v1582, 0.0
    %v1585 = vsel %vm299, %v1583, 0.0
    %v1586 = vmax.f32 %v1578, %v1584
    %v1587 = vmax.f32 %v1579, %v1585
    %v1588 = vrot.slane %v1562, 6
    %v1589 = vrot.slane %v1563, 6
    %v1590 = vsel %vm306, %v1588, %v1589
    %v1591 = vsel %vm306, %v1589, %v1588
    %v1592 = vsel %vm309, %v1591, 0.0
    %v1593 = vsel %vm310, %v1590, 0.0
    %v1594 = vmax.f32 %v1586, %v1592
    %v1595 = vmax.f32 %v1587, %v1593
    %v1596 = vmul.f32 %v1422, %v1508
    %v1597 = vmul.f32 %v1423, %v1509
    %v1598 = vsel %vm403, %v1596, 0.0
    %v1599 = vsel %vm403, %v1597, 0.0
    %v1600 = vadd.f32 %v1598, %v1599
    %1601 = vadd.xlane.f32.xlu0 %v1600
    %v1602 = vpop.xlane.xlu0 %1601
    %v1603 = vrot.slane %v1602, 4
    %v1604 = vadd.f32 %v1602, %v1603
    %v1605 = vrot.slane %v1604, 2
    %v1606 = vadd.f32 %v1604, %v1605
    %v1607 = vrot.slane %v1606, 1
    %v1608 = vadd.f32 %v1606, %v1607
    %s1609 = vtos %v1608
    %v1610 = vstv %s1609
    %v1611 = vsel %vm403, %v1422, 0.0
    %v1612 = vsel %vm403, %v1423, 0.0
    %v1613 = vadd.f32 %v1611, %v1612
    %1614 = vadd.xlane.f32.xlu0 %v1613
    %v1615 = vpop.xlane.xlu0 %1614
    %v1616 = vrot.slane %v1615, 4
    %v1617 = vadd.f32 %v1615, %v1616
    %v1618 = vrot.slane %v1617, 2
    %v1619 = vadd.f32 %v1617, %v1618
    %v1620 = vrot.slane %v1619, 1
    %v1621 = vadd.f32 %v1619, %v1620
    %s1622 = vtos %v1621
    %v1623 = vstv %s1622
    %v1624 = vadd.f32 %v1623, 1e-07
    %v1625 = vmul.f32 %v1594, %v1370
    %v1626 = vmul.f32 %v1595, %v1371
    %v1627 = vsel %vm403, %v1625, 0.0
    %v1628 = vsel %vm403, %v1626, 0.0
    %v1629 = vadd.f32 %v1627, %v1628
    %1630 = vadd.xlane.f32.xlu0 %v1629
    %v1631 = vpop.xlane.xlu0 %1630
    %v1632 = vrot.slane %v1631, 4
    %v1633 = vadd.f32 %v1631, %v1632
    %v1634 = vrot.slane %v1633, 2
    %v1635 = vadd.f32 %v1633, %v1634
    %v1636 = vrot.slane %v1635, 1
    %v1637 = vadd.f32 %v1635, %v1636
    %s1638 = vtos %v1637
    %v1639 = vstv %s1638
    %v1640 = vsel %vm403, %v1370, 0.0
    %v1641 = vsel %vm403, %v1371, 0.0
    %v1642 = vadd.f32 %v1640, %v1641
    %1643 = vadd.xlane.f32.xlu0 %v1642
    %v1644 = vpop.xlane.xlu0 %1643
    %v1645 = vrot.slane %v1644, 4
    %v1646 = vadd.f32 %v1644, %v1645
    %v1647 = vrot.slane %v1646, 2
    %v1648 = vadd.f32 %v1646, %v1647
    %v1649 = vrot.slane %v1648, 1
    %v1650 = vadd.f32 %v1648, %v1649
    %s1651 = vtos %v1650
    %v1652 = vstv %s1651
    %v1653 = vadd.f32 %v1652, 1e-07
    %v1654 = vrcp.pop %v1624
    %v1655 = vmul.f32 %v1610, %v1654
    %v1656 = vrcp.pop %v1653
    %v1657 = vmul.f32 %v1639, %v1656
    %v1658 = vmul.f32 %v1655, 2.0
    %v1659 = vmul.f32 %v1658, %v1657
    %v1660 = vadd.f32 %v1655, %v1657
    %v1661 = vadd.f32 %v1660, 1e-07
    %v1662 = vrcp.pop %v1661
    %v1663 = vmul.f32 %v1659, %v1662
    %v1664 = vsub.f32 1.0, %v1663
    %v1665 = vadd.f32 %v1267, %v1664
    %s1666 = scalar_lea.vmem [#allocation6], 64
    %v1667 = vld [vmem:[%s1666] sm:$0xff]
    %v1668 = vld [vmem:[%s1666 + $0x8] sm:$0xff]
    %s1669 = scalar_lea.vmem [#allocation9], 64
    %v1670 = vld [vmem:[%s1669] sm:$0xff]
    %v1671 = vld [vmem:[%s1669 + $0x8] sm:$0xff]
    %v1672 = vand.u32 2147483647, %v1667
    %v1673 = vand.u32 2147483647, %v1668
    %v1674 = vsub.f32 0.0, %v1672
    %v1675 = vsub.f32 0.0, %v1673
    %v1676 = vmul.f32 %v1674, 1.442695
    %v1677 = vpow.pop %v1676
    %v1678 = vmul.f32 %v1675, 1.442695
    %v1679 = vpow.pop %v1678
    %v1680 = vadd.f32 %v1677, 1.0
    %v1681 = vadd.f32 %v1679, 1.0
    %v1682 = vrcp.pop %v1680
    %v1683 = vmul.f32 1.0, %v1682
    %v1684 = vrcp.pop %v1681
    %v1685 = vmul.f32 1.0, %v1684
    %vm1686 = vcmp.ge.f32.partialorder %v1667, 0.0
    %vm1687 = vcmp.ge.f32.partialorder %v1668, 0.0
    %v1688 = vmul.f32 %v1677, %v1683
    %v1689 = vmul.f32 %v1679, %v1685
    %v1690 = vsel %vm1686, %v1683, %v1688
    %v1691 = vsel %vm1687, %v1685, %v1689
    %v1692 = vmax.f32 %v1667, 0.0
    %v1693 = vmax.f32 %v1668, 0.0
    %v1694 = vmul.f32 %v1667, %v1670
    %v1695 = vmul.f32 %v1668, %v1671
    %v1696 = vsub.f32 %v1692, %v1694
    %v1697 = vsub.f32 %v1693, %v1695
    %v1698 = vlog2.pop %v1680
    %v1699 = vmul.f32 %v1698, 0.6931472
    %v1700 = vlog2.pop %v1681
    %v1701 = vmul.f32 %v1700, 0.6931472
    %v1702 = vadd.f32 %v1696, %v1699
    %v1703 = vadd.f32 %v1697, %v1701
    %v1704 = vmul.f32 %v1690, %v1670
    %v1705 = vmul.f32 %v1691, %v1671
    %v1706 = vadd.f32 %v1308, %v1704
    %v1707 = vadd.f32 %v1309, %v1705
    %v1708 = vadd.f32 %v1690, %v1670
    %v1709 = vadd.f32 %v1691, %v1671
    %v1710 = vadd.f32 %v1312, %v1708
    %v1711 = vadd.f32 %v1313, %v1709
    %v1712 = vadd.f32 %v1314, %v1702
    %v1713 = vadd.f32 %v1315, %v1703
    %v1714 = vsub.f32 1.0, %v1670
    %v1715 = vsub.f32 1.0, %v1671
    %v1716 = vsub.f32 1.0, %v1690
    %v1717 = vsub.f32 1.0, %v1691
    %1718 = vrot.lane.b32.xlu0 %v1714, 16
    %v1719 = vpop.permute.xlu0 %1718
    %v1720 = vsel %vm108, %v1719, %v1714
    %1721 = vrot.lane.b32.xlu0 %v1715, 16
    %v1722 = vpop.permute.xlu0 %1721
    %v1723 = vsel %vm108, %v1722, %v1715
    %1724 = vrot.lane.b32.xlu0 %v1720, 16
    %v1725 = vpop.permute.xlu0 %1724
    %1726 = vrot.lane.b32.xlu0 %v1723, 16
    %v1727 = vpop.permute.xlu0 %1726
    %v1728 = vsel %vm108, %v1725, %v1714
    %v1729 = vsel %vm108, %v1727, %v1715
    %1732 = vrot.lane.b32.xlu0 %v1728, 127
    %v1733 = vpop.permute.xlu0 %1732
    %1734 = vrot.lane.b32.xlu0 %v1729, 127
    %v1735 = vpop.permute.xlu0 %1734
    %v1738 = vsel %vm121, %v1733, 0.0
    %v1739 = vsel %vm121, %v1735, 0.0
    %v1740 = vmax.f32 %v1714, %v1738
    %v1741 = vmax.f32 %v1715, %v1739
    %1742 = vrot.lane.b32.xlu0 %v1728, 113
    %v1743 = vpop.permute.xlu0 %1742
    %1744 = vrot.lane.b32.xlu0 %v1729, 113
    %v1745 = vpop.permute.xlu0 %1744
    %v1748 = vsel %vm134, %v1743, 0.0
    %v1749 = vsel %vm134, %v1745, 0.0
    %v1750 = vmax.f32 %v1740, %v1748
    %v1751 = vmax.f32 %v1741, %v1749
    %v1752 = vrot.slane %v1750, 1
    %v1753 = vrot.slane %v1751, 1
    %v1754 = vsel %vm147, %v1752, %v1753
    %v1755 = vsel %vm147, %v1753, %v1752
    %v1756 = vsel %vm150, %v1754, 0.0
    %v1757 = vsel %vm151, %v1755, 0.0
    %v1758 = vmax.f32 %v1750, %v1756
    %v1759 = vmax.f32 %v1751, %v1757
    %v1760 = vrot.slane %v1750, 7
    %v1761 = vrot.slane %v1751, 7
    %v1762 = vsel %vm158, %v1760, %v1761
    %v1763 = vsel %vm158, %v1761, %v1760
    %v1764 = vsel %vm161, %v1763, 0.0
    %v1765 = vsel %vm162, %v1762, 0.0
    %v1766 = vmax.f32 %v1758, %v1764
    %v1767 = vmax.f32 %v1759, %v1765
    %v1768 = vsub.f32 %v1766, %v1714
    %v1769 = vsub.f32 %v1767, %v1715
    %1770 = vrot.lane.b32.xlu0 %v1716, 16
    %v1771 = vpop.permute.xlu0 %1770
    %v1772 = vsel %vm108, %v1771, %v1716
    %1773 = vrot.lane.b32.xlu0 %v1717, 16
    %v1774 = vpop.permute.xlu0 %1773
    %v1775 = vsel %vm108, %v1774, %v1717
    %1776 = vrot.lane.b32.xlu0 %v1772, 16
    %v1777 = vpop.permute.xlu0 %1776
    %1778 = vrot.lane.b32.xlu0 %v1775, 16
    %v1779 = vpop.permute.xlu0 %1778
    %v1780 = vsel %vm108, %v1777, %v1716
    %v1781 = vsel %vm108, %v1779, %v1717
    %1784 = vrot.lane.b32.xlu0 %v1780, 127
    %v1785 = vpop.permute.xlu0 %1784
    %1786 = vrot.lane.b32.xlu0 %v1781, 127
    %v1787 = vpop.permute.xlu0 %1786
    %v1790 = vsel %vm121, %v1785, 0.0
    %v1791 = vsel %vm121, %v1787, 0.0
    %v1792 = vmax.f32 %v1716, %v1790
    %v1793 = vmax.f32 %v1717, %v1791
    %1794 = vrot.lane.b32.xlu0 %v1780, 113
    %v1795 = vpop.permute.xlu0 %1794
    %1796 = vrot.lane.b32.xlu0 %v1781, 113
    %v1797 = vpop.permute.xlu0 %1796
    %v1800 = vsel %vm134, %v1795, 0.0
    %v1801 = vsel %vm134, %v1797, 0.0
    %v1802 = vmax.f32 %v1792, %v1800
    %v1803 = vmax.f32 %v1793, %v1801
    %v1804 = vrot.slane %v1802, 1
    %v1805 = vrot.slane %v1803, 1
    %v1806 = vsel %vm147, %v1804, %v1805
    %v1807 = vsel %vm147, %v1805, %v1804
    %v1808 = vsel %vm150, %v1806, 0.0
    %v1809 = vsel %vm151, %v1807, 0.0
    %v1810 = vmax.f32 %v1802, %v1808
    %v1811 = vmax.f32 %v1803, %v1809
    %v1812 = vrot.slane %v1802, 7
    %v1813 = vrot.slane %v1803, 7
    %v1814 = vsel %vm158, %v1812, %v1813
    %v1815 = vsel %vm158, %v1813, %v1812
    %v1816 = vsel %vm161, %v1815, 0.0
    %v1817 = vsel %vm162, %v1814, 0.0
    %v1818 = vmax.f32 %v1810, %v1816
    %v1819 = vmax.f32 %v1811, %v1817
    %v1820 = vsub.f32 %v1818, %v1716
    %v1821 = vsub.f32 %v1819, %v1717
    %1822 = vrot.lane.b32.xlu0 %v1768, 16
    %v1823 = vpop.permute.xlu0 %1822
    %v1824 = vsel %vm108, %v1823, %v1768
    %1825 = vrot.lane.b32.xlu0 %v1769, 16
    %v1826 = vpop.permute.xlu0 %1825
    %v1827 = vsel %vm108, %v1826, %v1769
    %1828 = vrot.lane.b32.xlu0 %v1824, 16
    %v1829 = vpop.permute.xlu0 %1828
    %1830 = vrot.lane.b32.xlu0 %v1827, 16
    %v1831 = vpop.permute.xlu0 %1830
    %v1832 = vsel %vm108, %v1829, %v1768
    %v1833 = vsel %vm108, %v1831, %v1769
    %1836 = vrot.lane.b32.xlu0 %v1832, 127
    %v1837 = vpop.permute.xlu0 %1836
    %1838 = vrot.lane.b32.xlu0 %v1833, 127
    %v1839 = vpop.permute.xlu0 %1838
    %v1842 = vsel %vm121, %v1837, 0.0
    %v1843 = vsel %vm121, %v1839, 0.0
    %v1844 = vmax.f32 %v1768, %v1842
    %v1845 = vmax.f32 %v1769, %v1843
    %1846 = vrot.lane.b32.xlu0 %v1832, 113
    %v1847 = vpop.permute.xlu0 %1846
    %1848 = vrot.lane.b32.xlu0 %v1833, 113
    %v1849 = vpop.permute.xlu0 %1848
    %v1852 = vsel %vm134, %v1847, 0.0
    %v1853 = vsel %vm134, %v1849, 0.0
    %v1854 = vmax.f32 %v1844, %v1852
    %v1855 = vmax.f32 %v1845, %v1853
    %1856 = vrot.lane.b32.xlu0 %v1832, 126
    %v1857 = vpop.permute.xlu0 %1856
    %1858 = vrot.lane.b32.xlu0 %v1833, 126
    %v1859 = vpop.permute.xlu0 %1858
    %v1862 = vsel %vm255, %v1857, 0.0
    %v1863 = vsel %vm255, %v1859, 0.0
    %v1864 = vmax.f32 %v1854, %v1862
    %v1865 = vmax.f32 %v1855, %v1863
    %1866 = vrot.lane.b32.xlu0 %v1832, 114
    %v1867 = vpop.permute.xlu0 %1866
    %1868 = vrot.lane.b32.xlu0 %v1833, 114
    %v1869 = vpop.permute.xlu0 %1868
    %v1872 = vsel %vm266, %v1867, 0.0
    %v1873 = vsel %vm266, %v1869, 0.0
    %v1874 = vmax.f32 %v1864, %v1872
    %v1875 = vmax.f32 %v1865, %v1873
    %v1876 = vrot.slane %v1874, 1
    %v1877 = vrot.slane %v1875, 1
    %v1878 = vsel %vm147, %v1876, %v1877
    %v1879 = vsel %vm147, %v1877, %v1876
    %v1880 = vsel %vm150, %v1878, 0.0
    %v1881 = vsel %vm151, %v1879, 0.0
    %v1882 = vmax.f32 %v1874, %v1880
    %v1883 = vmax.f32 %v1875, %v1881
    %v1884 = vrot.slane %v1874, 7
    %v1885 = vrot.slane %v1875, 7
    %v1886 = vsel %vm158, %v1884, %v1885
    %v1887 = vsel %vm158, %v1885, %v1884
    %v1888 = vsel %vm161, %v1887, 0.0
    %v1889 = vsel %vm162, %v1886, 0.0
    %v1890 = vmax.f32 %v1882, %v1888
    %v1891 = vmax.f32 %v1883, %v1889
    %v1892 = vrot.slane %v1874, 2
    %v1893 = vrot.slane %v1875, 2
    %v1894 = vsel %vm295, %v1892, %v1893
    %v1895 = vsel %vm295, %v1893, %v1892
    %v1896 = vsel %vm298, %v1894, 0.0
    %v1897 = vsel %vm299, %v1895, 0.0
    %v1898 = vmax.f32 %v1890, %v1896
    %v1899 = vmax.f32 %v1891, %v1897
    %v1900 = vrot.slane %v1874, 6
    %v1901 = vrot.slane %v1875, 6
    %v1902 = vsel %vm306, %v1900, %v1901
    %v1903 = vsel %vm306, %v1901, %v1900
    %v1904 = vsel %vm309, %v1903, 0.0
    %v1905 = vsel %vm310, %v1902, 0.0
    %v1906 = vmax.f32 %v1898, %v1904
    %v1907 = vmax.f32 %v1899, %v1905
    %1908 = vrot.lane.b32.xlu0 %v1820, 16
    %v1909 = vpop.permute.xlu0 %1908
    %v1910 = vsel %vm108, %v1909, %v1820
    %1911 = vrot.lane.b32.xlu0 %v1821, 16
    %v1912 = vpop.permute.xlu0 %1911
    %v1913 = vsel %vm108, %v1912, %v1821
    %1914 = vrot.lane.b32.xlu0 %v1910, 16
    %v1915 = vpop.permute.xlu0 %1914
    %1916 = vrot.lane.b32.xlu0 %v1913, 16
    %v1917 = vpop.permute.xlu0 %1916
    %v1918 = vsel %vm108, %v1915, %v1820
    %v1919 = vsel %vm108, %v1917, %v1821
    %1922 = vrot.lane.b32.xlu0 %v1918, 127
    %v1923 = vpop.permute.xlu0 %1922
    %1924 = vrot.lane.b32.xlu0 %v1919, 127
    %v1925 = vpop.permute.xlu0 %1924
    %v1928 = vsel %vm121, %v1923, 0.0
    %v1929 = vsel %vm121, %v1925, 0.0
    %v1930 = vmax.f32 %v1820, %v1928
    %v1931 = vmax.f32 %v1821, %v1929
    %1932 = vrot.lane.b32.xlu0 %v1918, 113
    %v1933 = vpop.permute.xlu0 %1932
    %1934 = vrot.lane.b32.xlu0 %v1919, 113
    %v1935 = vpop.permute.xlu0 %1934
    %v1938 = vsel %vm134, %v1933, 0.0
    %v1939 = vsel %vm134, %v1935, 0.0
    %v1940 = vmax.f32 %v1930, %v1938
    %v1941 = vmax.f32 %v1931, %v1939
    %1942 = vrot.lane.b32.xlu0 %v1918, 126
    %v1943 = vpop.permute.xlu0 %1942
    %1944 = vrot.lane.b32.xlu0 %v1919, 126
    %v1945 = vpop.permute.xlu0 %1944
    %v1948 = vsel %vm255, %v1943, 0.0
    %v1949 = vsel %vm255, %v1945, 0.0
    %v1950 = vmax.f32 %v1940, %v1948
    %v1951 = vmax.f32 %v1941, %v1949
    %1952 = vrot.lane.b32.xlu0 %v1918, 114
    %v1953 = vpop.permute.xlu0 %1952
    %1954 = vrot.lane.b32.xlu0 %v1919, 114
    %v1955 = vpop.permute.xlu0 %1954
    %v1958 = vsel %vm266, %v1953, 0.0
    %v1959 = vsel %vm266, %v1955, 0.0
    %v1960 = vmax.f32 %v1950, %v1958
    %v1961 = vmax.f32 %v1951, %v1959
    %v1962 = vrot.slane %v1960, 1
    %v1963 = vrot.slane %v1961, 1
    %v1964 = vsel %vm147, %v1962, %v1963
    %v1965 = vsel %vm147, %v1963, %v1962
    %v1966 = vsel %vm150, %v1964, 0.0
    %v1967 = vsel %vm151, %v1965, 0.0
    %v1968 = vmax.f32 %v1960, %v1966
    %v1969 = vmax.f32 %v1961, %v1967
    %v1970 = vrot.slane %v1960, 7
    %v1971 = vrot.slane %v1961, 7
    %v1972 = vsel %vm158, %v1970, %v1971
    %v1973 = vsel %vm158, %v1971, %v1970
    %v1974 = vsel %vm161, %v1973, 0.0
    %v1975 = vsel %vm162, %v1972, 0.0
    %v1976 = vmax.f32 %v1968, %v1974
    %v1977 = vmax.f32 %v1969, %v1975
    %v1978 = vrot.slane %v1960, 2
    %v1979 = vrot.slane %v1961, 2
    %v1980 = vsel %vm295, %v1978, %v1979
    %v1981 = vsel %vm295, %v1979, %v1978
    %v1982 = vsel %vm298, %v1980, 0.0
    %v1983 = vsel %vm299, %v1981, 0.0
    %v1984 = vmax.f32 %v1976, %v1982
    %v1985 = vmax.f32 %v1977, %v1983
    %v1986 = vrot.slane %v1960, 6
    %v1987 = vrot.slane %v1961, 6
    %v1988 = vsel %vm306, %v1986, %v1987
    %v1989 = vsel %vm306, %v1987, %v1986
    %v1990 = vsel %vm309, %v1989, 0.0
    %v1991 = vsel %vm310, %v1988, 0.0
    %v1992 = vmax.f32 %v1984, %v1990
    %v1993 = vmax.f32 %v1985, %v1991
    %v1994 = vmul.f32 %v1820, %v1906
    %v1995 = vmul.f32 %v1821, %v1907
    %v1996 = vsel %vm403, %v1994, 0.0
    %v1997 = vsel %vm403, %v1995, 0.0
    %v1998 = vadd.f32 %v1996, %v1997
    %1999 = vadd.xlane.f32.xlu0 %v1998
    %v2000 = vpop.xlane.xlu0 %1999
    %v2001 = vrot.slane %v2000, 4
    %v2002 = vadd.f32 %v2000, %v2001
    %v2003 = vrot.slane %v2002, 2
    %v2004 = vadd.f32 %v2002, %v2003
    %v2005 = vrot.slane %v2004, 1
    %v2006 = vadd.f32 %v2004, %v2005
    %s2007 = vtos %v2006
    %v2008 = vstv %s2007
    %v2009 = vsel %vm403, %v1820, 0.0
    %v2010 = vsel %vm403, %v1821, 0.0
    %v2011 = vadd.f32 %v2009, %v2010
    %2012 = vadd.xlane.f32.xlu0 %v2011
    %v2013 = vpop.xlane.xlu0 %2012
    %v2014 = vrot.slane %v2013, 4
    %v2015 = vadd.f32 %v2013, %v2014
    %v2016 = vrot.slane %v2015, 2
    %v2017 = vadd.f32 %v2015, %v2016
    %v2018 = vrot.slane %v2017, 1
    %v2019 = vadd.f32 %v2017, %v2018
    %s2020 = vtos %v2019
    %v2021 = vstv %s2020
    %v2022 = vadd.f32 %v2021, 1e-07
    %v2023 = vmul.f32 %v1992, %v1768
    %v2024 = vmul.f32 %v1993, %v1769
    %v2025 = vsel %vm403, %v2023, 0.0
    %v2026 = vsel %vm403, %v2024, 0.0
    %v2027 = vadd.f32 %v2025, %v2026
    %2028 = vadd.xlane.f32.xlu0 %v2027
    %v2029 = vpop.xlane.xlu0 %2028
    %v2030 = vrot.slane %v2029, 4
    %v2031 = vadd.f32 %v2029, %v2030
    %v2032 = vrot.slane %v2031, 2
    %v2033 = vadd.f32 %v2031, %v2032
    %v2034 = vrot.slane %v2033, 1
    %v2035 = vadd.f32 %v2033, %v2034
    %s2036 = vtos %v2035
    %v2037 = vstv %s2036
    %v2038 = vsel %vm403, %v1768, 0.0
    %v2039 = vsel %vm403, %v1769, 0.0
    %v2040 = vadd.f32 %v2038, %v2039
    %2041 = vadd.xlane.f32.xlu0 %v2040
    %v2042 = vpop.xlane.xlu0 %2041
    %v2043 = vrot.slane %v2042, 4
    %v2044 = vadd.f32 %v2042, %v2043
    %v2045 = vrot.slane %v2044, 2
    %v2046 = vadd.f32 %v2044, %v2045
    %v2047 = vrot.slane %v2046, 1
    %v2048 = vadd.f32 %v2046, %v2047
    %s2049 = vtos %v2048
    %v2050 = vstv %s2049
    %v2051 = vadd.f32 %v2050, 1e-07
    %v2052 = vrcp.pop %v2022
    %v2053 = vmul.f32 %v2008, %v2052
    %v2054 = vrcp.pop %v2051
    %v2055 = vmul.f32 %v2037, %v2054
    %v2056 = vmul.f32 %v2053, 2.0
    %v2057 = vmul.f32 %v2056, %v2055
    %v2058 = vadd.f32 %v2053, %v2055
    %v2059 = vadd.f32 %v2058, 1e-07
    %v2060 = vrcp.pop %v2059
    %v2061 = vmul.f32 %v2057, %v2060
    %v2062 = vsub.f32 1.0, %v2061
    %v2063 = vadd.f32 %v1665, %v2062
    %s2064 = scalar_lea.vmem [#allocation6], 80
    %v2065 = vld [vmem:[%s2064] sm:$0xff]
    %v2066 = vld [vmem:[%s2064 + $0x8] sm:$0xff]
    %s2067 = scalar_lea.vmem [#allocation9], 80
    %v2068 = vld [vmem:[%s2067] sm:$0xff]
    %v2069 = vld [vmem:[%s2067 + $0x8] sm:$0xff]
    %v2070 = vand.u32 2147483647, %v2065
    %v2071 = vand.u32 2147483647, %v2066
    %v2072 = vsub.f32 0.0, %v2070
    %v2073 = vsub.f32 0.0, %v2071
    %v2074 = vmul.f32 %v2072, 1.442695
    %v2075 = vpow.pop %v2074
    %v2076 = vmul.f32 %v2073, 1.442695
    %v2077 = vpow.pop %v2076
    %v2078 = vadd.f32 %v2075, 1.0
    %v2079 = vadd.f32 %v2077, 1.0
    %v2080 = vrcp.pop %v2078
    %v2081 = vmul.f32 1.0, %v2080
    %v2082 = vrcp.pop %v2079
    %v2083 = vmul.f32 1.0, %v2082
    %vm2084 = vcmp.ge.f32.partialorder %v2065, 0.0
    %vm2085 = vcmp.ge.f32.partialorder %v2066, 0.0
    %v2086 = vmul.f32 %v2075, %v2081
    %v2087 = vmul.f32 %v2077, %v2083
    %v2088 = vsel %vm2084, %v2081, %v2086
    %v2089 = vsel %vm2085, %v2083, %v2087
    %v2090 = vmax.f32 %v2065, 0.0
    %v2091 = vmax.f32 %v2066, 0.0
    %v2092 = vmul.f32 %v2065, %v2068
    %v2093 = vmul.f32 %v2066, %v2069
    %v2094 = vsub.f32 %v2090, %v2092
    %v2095 = vsub.f32 %v2091, %v2093
    %v2096 = vlog2.pop %v2078
    %v2097 = vmul.f32 %v2096, 0.6931472
    %v2098 = vlog2.pop %v2079
    %v2099 = vmul.f32 %v2098, 0.6931472
    %v2100 = vadd.f32 %v2094, %v2097
    %v2101 = vadd.f32 %v2095, %v2099
    %v2102 = vmul.f32 %v2088, %v2068
    %v2103 = vmul.f32 %v2089, %v2069
    %v2104 = vadd.f32 %v1706, %v2102
    %v2105 = vadd.f32 %v1707, %v2103
    %v2106 = vadd.f32 %v2088, %v2068
    %v2107 = vadd.f32 %v2089, %v2069
    %v2108 = vadd.f32 %v1710, %v2106
    %v2109 = vadd.f32 %v1711, %v2107
    %v2110 = vadd.f32 %v1712, %v2100
    %v2111 = vadd.f32 %v1713, %v2101
    %v2112 = vsub.f32 1.0, %v2068
    %v2113 = vsub.f32 1.0, %v2069
    %v2114 = vsub.f32 1.0, %v2088
    %v2115 = vsub.f32 1.0, %v2089
    %2116 = vrot.lane.b32.xlu0 %v2112, 16
    %v2117 = vpop.permute.xlu0 %2116
    %v2118 = vsel %vm108, %v2117, %v2112
    %2119 = vrot.lane.b32.xlu0 %v2113, 16
    %v2120 = vpop.permute.xlu0 %2119
    %v2121 = vsel %vm108, %v2120, %v2113
    %2122 = vrot.lane.b32.xlu0 %v2118, 16
    %v2123 = vpop.permute.xlu0 %2122
    %2124 = vrot.lane.b32.xlu0 %v2121, 16
    %v2125 = vpop.permute.xlu0 %2124
    %v2126 = vsel %vm108, %v2123, %v2112
    %v2127 = vsel %vm108, %v2125, %v2113
    %2130 = vrot.lane.b32.xlu0 %v2126, 127
    %v2131 = vpop.permute.xlu0 %2130
    %2132 = vrot.lane.b32.xlu0 %v2127, 127
    %v2133 = vpop.permute.xlu0 %2132
    %v2136 = vsel %vm121, %v2131, 0.0
    %v2137 = vsel %vm121, %v2133, 0.0
    %v2138 = vmax.f32 %v2112, %v2136
    %v2139 = vmax.f32 %v2113, %v2137
    %2140 = vrot.lane.b32.xlu0 %v2126, 113
    %v2141 = vpop.permute.xlu0 %2140
    %2142 = vrot.lane.b32.xlu0 %v2127, 113
    %v2143 = vpop.permute.xlu0 %2142
    %v2146 = vsel %vm134, %v2141, 0.0
    %v2147 = vsel %vm134, %v2143, 0.0
    %v2148 = vmax.f32 %v2138, %v2146
    %v2149 = vmax.f32 %v2139, %v2147
    %v2150 = vrot.slane %v2148, 1
    %v2151 = vrot.slane %v2149, 1
    %v2152 = vsel %vm147, %v2150, %v2151
    %v2153 = vsel %vm147, %v2151, %v2150
    %v2154 = vsel %vm150, %v2152, 0.0
    %v2155 = vsel %vm151, %v2153, 0.0
    %v2156 = vmax.f32 %v2148, %v2154
    %v2157 = vmax.f32 %v2149, %v2155
    %v2158 = vrot.slane %v2148, 7
    %v2159 = vrot.slane %v2149, 7
    %v2160 = vsel %vm158, %v2158, %v2159
    %v2161 = vsel %vm158, %v2159, %v2158
    %v2162 = vsel %vm161, %v2161, 0.0
    %v2163 = vsel %vm162, %v2160, 0.0
    %v2164 = vmax.f32 %v2156, %v2162
    %v2165 = vmax.f32 %v2157, %v2163
    %v2166 = vsub.f32 %v2164, %v2112
    %v2167 = vsub.f32 %v2165, %v2113
    %2168 = vrot.lane.b32.xlu0 %v2114, 16
    %v2169 = vpop.permute.xlu0 %2168
    %v2170 = vsel %vm108, %v2169, %v2114
    %2171 = vrot.lane.b32.xlu0 %v2115, 16
    %v2172 = vpop.permute.xlu0 %2171
    %v2173 = vsel %vm108, %v2172, %v2115
    %2174 = vrot.lane.b32.xlu0 %v2170, 16
    %v2175 = vpop.permute.xlu0 %2174
    %2176 = vrot.lane.b32.xlu0 %v2173, 16
    %v2177 = vpop.permute.xlu0 %2176
    %v2178 = vsel %vm108, %v2175, %v2114
    %v2179 = vsel %vm108, %v2177, %v2115
    %2182 = vrot.lane.b32.xlu0 %v2178, 127
    %v2183 = vpop.permute.xlu0 %2182
    %2184 = vrot.lane.b32.xlu0 %v2179, 127
    %v2185 = vpop.permute.xlu0 %2184
    %v2188 = vsel %vm121, %v2183, 0.0
    %v2189 = vsel %vm121, %v2185, 0.0
    %v2190 = vmax.f32 %v2114, %v2188
    %v2191 = vmax.f32 %v2115, %v2189
    %2192 = vrot.lane.b32.xlu0 %v2178, 113
    %v2193 = vpop.permute.xlu0 %2192
    %2194 = vrot.lane.b32.xlu0 %v2179, 113
    %v2195 = vpop.permute.xlu0 %2194
    %v2198 = vsel %vm134, %v2193, 0.0
    %v2199 = vsel %vm134, %v2195, 0.0
    %v2200 = vmax.f32 %v2190, %v2198
    %v2201 = vmax.f32 %v2191, %v2199
    %v2202 = vrot.slane %v2200, 1
    %v2203 = vrot.slane %v2201, 1
    %v2204 = vsel %vm147, %v2202, %v2203
    %v2205 = vsel %vm147, %v2203, %v2202
    %v2206 = vsel %vm150, %v2204, 0.0
    %v2207 = vsel %vm151, %v2205, 0.0
    %v2208 = vmax.f32 %v2200, %v2206
    %v2209 = vmax.f32 %v2201, %v2207
    %v2210 = vrot.slane %v2200, 7
    %v2211 = vrot.slane %v2201, 7
    %v2212 = vsel %vm158, %v2210, %v2211
    %v2213 = vsel %vm158, %v2211, %v2210
    %v2214 = vsel %vm161, %v2213, 0.0
    %v2215 = vsel %vm162, %v2212, 0.0
    %v2216 = vmax.f32 %v2208, %v2214
    %v2217 = vmax.f32 %v2209, %v2215
    %v2218 = vsub.f32 %v2216, %v2114
    %v2219 = vsub.f32 %v2217, %v2115
    %2220 = vrot.lane.b32.xlu0 %v2166, 16
    %v2221 = vpop.permute.xlu0 %2220
    %v2222 = vsel %vm108, %v2221, %v2166
    %2223 = vrot.lane.b32.xlu0 %v2167, 16
    %v2224 = vpop.permute.xlu0 %2223
    %v2225 = vsel %vm108, %v2224, %v2167
    %2226 = vrot.lane.b32.xlu0 %v2222, 16
    %v2227 = vpop.permute.xlu0 %2226
    %2228 = vrot.lane.b32.xlu0 %v2225, 16
    %v2229 = vpop.permute.xlu0 %2228
    %v2230 = vsel %vm108, %v2227, %v2166
    %v2231 = vsel %vm108, %v2229, %v2167
    %2234 = vrot.lane.b32.xlu0 %v2230, 127
    %v2235 = vpop.permute.xlu0 %2234
    %2236 = vrot.lane.b32.xlu0 %v2231, 127
    %v2237 = vpop.permute.xlu0 %2236
    %v2240 = vsel %vm121, %v2235, 0.0
    %v2241 = vsel %vm121, %v2237, 0.0
    %v2242 = vmax.f32 %v2166, %v2240
    %v2243 = vmax.f32 %v2167, %v2241
    %2244 = vrot.lane.b32.xlu0 %v2230, 113
    %v2245 = vpop.permute.xlu0 %2244
    %2246 = vrot.lane.b32.xlu0 %v2231, 113
    %v2247 = vpop.permute.xlu0 %2246
    %v2250 = vsel %vm134, %v2245, 0.0
    %v2251 = vsel %vm134, %v2247, 0.0
    %v2252 = vmax.f32 %v2242, %v2250
    %v2253 = vmax.f32 %v2243, %v2251
    %2254 = vrot.lane.b32.xlu0 %v2230, 126
    %v2255 = vpop.permute.xlu0 %2254
    %2256 = vrot.lane.b32.xlu0 %v2231, 126
    %v2257 = vpop.permute.xlu0 %2256
    %v2260 = vsel %vm255, %v2255, 0.0
    %v2261 = vsel %vm255, %v2257, 0.0
    %v2262 = vmax.f32 %v2252, %v2260
    %v2263 = vmax.f32 %v2253, %v2261
    %2264 = vrot.lane.b32.xlu0 %v2230, 114
    %v2265 = vpop.permute.xlu0 %2264
    %2266 = vrot.lane.b32.xlu0 %v2231, 114
    %v2267 = vpop.permute.xlu0 %2266
    %v2270 = vsel %vm266, %v2265, 0.0
    %v2271 = vsel %vm266, %v2267, 0.0
    %v2272 = vmax.f32 %v2262, %v2270
    %v2273 = vmax.f32 %v2263, %v2271
    %v2274 = vrot.slane %v2272, 1
    %v2275 = vrot.slane %v2273, 1
    %v2276 = vsel %vm147, %v2274, %v2275
    %v2277 = vsel %vm147, %v2275, %v2274
    %v2278 = vsel %vm150, %v2276, 0.0
    %v2279 = vsel %vm151, %v2277, 0.0
    %v2280 = vmax.f32 %v2272, %v2278
    %v2281 = vmax.f32 %v2273, %v2279
    %v2282 = vrot.slane %v2272, 7
    %v2283 = vrot.slane %v2273, 7
    %v2284 = vsel %vm158, %v2282, %v2283
    %v2285 = vsel %vm158, %v2283, %v2282
    %v2286 = vsel %vm161, %v2285, 0.0
    %v2287 = vsel %vm162, %v2284, 0.0
    %v2288 = vmax.f32 %v2280, %v2286
    %v2289 = vmax.f32 %v2281, %v2287
    %v2290 = vrot.slane %v2272, 2
    %v2291 = vrot.slane %v2273, 2
    %v2292 = vsel %vm295, %v2290, %v2291
    %v2293 = vsel %vm295, %v2291, %v2290
    %v2294 = vsel %vm298, %v2292, 0.0
    %v2295 = vsel %vm299, %v2293, 0.0
    %v2296 = vmax.f32 %v2288, %v2294
    %v2297 = vmax.f32 %v2289, %v2295
    %v2298 = vrot.slane %v2272, 6
    %v2299 = vrot.slane %v2273, 6
    %v2300 = vsel %vm306, %v2298, %v2299
    %v2301 = vsel %vm306, %v2299, %v2298
    %v2302 = vsel %vm309, %v2301, 0.0
    %v2303 = vsel %vm310, %v2300, 0.0
    %v2304 = vmax.f32 %v2296, %v2302
    %v2305 = vmax.f32 %v2297, %v2303
    %2306 = vrot.lane.b32.xlu0 %v2218, 16
    %v2307 = vpop.permute.xlu0 %2306
    %v2308 = vsel %vm108, %v2307, %v2218
    %2309 = vrot.lane.b32.xlu0 %v2219, 16
    %v2310 = vpop.permute.xlu0 %2309
    %v2311 = vsel %vm108, %v2310, %v2219
    %2312 = vrot.lane.b32.xlu0 %v2308, 16
    %v2313 = vpop.permute.xlu0 %2312
    %2314 = vrot.lane.b32.xlu0 %v2311, 16
    %v2315 = vpop.permute.xlu0 %2314
    %v2316 = vsel %vm108, %v2313, %v2218
    %v2317 = vsel %vm108, %v2315, %v2219
    %2320 = vrot.lane.b32.xlu0 %v2316, 127
    %v2321 = vpop.permute.xlu0 %2320
    %2322 = vrot.lane.b32.xlu0 %v2317, 127
    %v2323 = vpop.permute.xlu0 %2322
    %v2326 = vsel %vm121, %v2321, 0.0
    %v2327 = vsel %vm121, %v2323, 0.0
    %v2328 = vmax.f32 %v2218, %v2326
    %v2329 = vmax.f32 %v2219, %v2327
    %2330 = vrot.lane.b32.xlu0 %v2316, 113
    %v2331 = vpop.permute.xlu0 %2330
    %2332 = vrot.lane.b32.xlu0 %v2317, 113
    %v2333 = vpop.permute.xlu0 %2332
    %v2336 = vsel %vm134, %v2331, 0.0
    %v2337 = vsel %vm134, %v2333, 0.0
    %v2338 = vmax.f32 %v2328, %v2336
    %v2339 = vmax.f32 %v2329, %v2337
    %2340 = vrot.lane.b32.xlu0 %v2316, 126
    %v2341 = vpop.permute.xlu0 %2340
    %2342 = vrot.lane.b32.xlu0 %v2317, 126
    %v2343 = vpop.permute.xlu0 %2342
    %v2346 = vsel %vm255, %v2341, 0.0
    %v2347 = vsel %vm255, %v2343, 0.0
    %v2348 = vmax.f32 %v2338, %v2346
    %v2349 = vmax.f32 %v2339, %v2347
    %2350 = vrot.lane.b32.xlu0 %v2316, 114
    %v2351 = vpop.permute.xlu0 %2350
    %2352 = vrot.lane.b32.xlu0 %v2317, 114
    %v2353 = vpop.permute.xlu0 %2352
    %v2356 = vsel %vm266, %v2351, 0.0
    %v2357 = vsel %vm266, %v2353, 0.0
    %v2358 = vmax.f32 %v2348, %v2356
    %v2359 = vmax.f32 %v2349, %v2357
    %v2360 = vrot.slane %v2358, 1
    %v2361 = vrot.slane %v2359, 1
    %v2362 = vsel %vm147, %v2360, %v2361
    %v2363 = vsel %vm147, %v2361, %v2360
    %v2364 = vsel %vm150, %v2362, 0.0
    %v2365 = vsel %vm151, %v2363, 0.0
    %v2366 = vmax.f32 %v2358, %v2364
    %v2367 = vmax.f32 %v2359, %v2365
    %v2368 = vrot.slane %v2358, 7
    %v2369 = vrot.slane %v2359, 7
    %v2370 = vsel %vm158, %v2368, %v2369
    %v2371 = vsel %vm158, %v2369, %v2368
    %v2372 = vsel %vm161, %v2371, 0.0
    %v2373 = vsel %vm162, %v2370, 0.0
    %v2374 = vmax.f32 %v2366, %v2372
    %v2375 = vmax.f32 %v2367, %v2373
    %v2376 = vrot.slane %v2358, 2
    %v2377 = vrot.slane %v2359, 2
    %v2378 = vsel %vm295, %v2376, %v2377
    %v2379 = vsel %vm295, %v2377, %v2376
    %v2380 = vsel %vm298, %v2378, 0.0
    %v2381 = vsel %vm299, %v2379, 0.0
    %v2382 = vmax.f32 %v2374, %v2380
    %v2383 = vmax.f32 %v2375, %v2381
    %v2384 = vrot.slane %v2358, 6
    %v2385 = vrot.slane %v2359, 6
    %v2386 = vsel %vm306, %v2384, %v2385
    %v2387 = vsel %vm306, %v2385, %v2384
    %v2388 = vsel %vm309, %v2387, 0.0
    %v2389 = vsel %vm310, %v2386, 0.0
    %v2390 = vmax.f32 %v2382, %v2388
    %v2391 = vmax.f32 %v2383, %v2389
    %v2392 = vmul.f32 %v2218, %v2304
    %v2393 = vmul.f32 %v2219, %v2305
    %v2394 = vsel %vm403, %v2392, 0.0
    %v2395 = vsel %vm403, %v2393, 0.0
    %v2396 = vadd.f32 %v2394, %v2395
    %2397 = vadd.xlane.f32.xlu0 %v2396
    %v2398 = vpop.xlane.xlu0 %2397
    %v2399 = vrot.slane %v2398, 4
    %v2400 = vadd.f32 %v2398, %v2399
    %v2401 = vrot.slane %v2400, 2
    %v2402 = vadd.f32 %v2400, %v2401
    %v2403 = vrot.slane %v2402, 1
    %v2404 = vadd.f32 %v2402, %v2403
    %s2405 = vtos %v2404
    %v2406 = vstv %s2405
    %v2407 = vsel %vm403, %v2218, 0.0
    %v2408 = vsel %vm403, %v2219, 0.0
    %v2409 = vadd.f32 %v2407, %v2408
    %2410 = vadd.xlane.f32.xlu0 %v2409
    %v2411 = vpop.xlane.xlu0 %2410
    %v2412 = vrot.slane %v2411, 4
    %v2413 = vadd.f32 %v2411, %v2412
    %v2414 = vrot.slane %v2413, 2
    %v2415 = vadd.f32 %v2413, %v2414
    %v2416 = vrot.slane %v2415, 1
    %v2417 = vadd.f32 %v2415, %v2416
    %s2418 = vtos %v2417
    %v2419 = vstv %s2418
    %v2420 = vadd.f32 %v2419, 1e-07
    %v2421 = vmul.f32 %v2390, %v2166
    %v2422 = vmul.f32 %v2391, %v2167
    %v2423 = vsel %vm403, %v2421, 0.0
    %v2424 = vsel %vm403, %v2422, 0.0
    %v2425 = vadd.f32 %v2423, %v2424
    %2426 = vadd.xlane.f32.xlu0 %v2425
    %v2427 = vpop.xlane.xlu0 %2426
    %v2428 = vrot.slane %v2427, 4
    %v2429 = vadd.f32 %v2427, %v2428
    %v2430 = vrot.slane %v2429, 2
    %v2431 = vadd.f32 %v2429, %v2430
    %v2432 = vrot.slane %v2431, 1
    %v2433 = vadd.f32 %v2431, %v2432
    %s2434 = vtos %v2433
    %v2435 = vstv %s2434
    %v2436 = vsel %vm403, %v2166, 0.0
    %v2437 = vsel %vm403, %v2167, 0.0
    %v2438 = vadd.f32 %v2436, %v2437
    %2439 = vadd.xlane.f32.xlu0 %v2438
    %v2440 = vpop.xlane.xlu0 %2439
    %v2441 = vrot.slane %v2440, 4
    %v2442 = vadd.f32 %v2440, %v2441
    %v2443 = vrot.slane %v2442, 2
    %v2444 = vadd.f32 %v2442, %v2443
    %v2445 = vrot.slane %v2444, 1
    %v2446 = vadd.f32 %v2444, %v2445
    %s2447 = vtos %v2446
    %v2448 = vstv %s2447
    %v2449 = vadd.f32 %v2448, 1e-07
    %v2450 = vrcp.pop %v2420
    %v2451 = vmul.f32 %v2406, %v2450
    %v2452 = vrcp.pop %v2449
    %v2453 = vmul.f32 %v2435, %v2452
    %v2454 = vmul.f32 %v2451, 2.0
    %v2455 = vmul.f32 %v2454, %v2453
    %v2456 = vadd.f32 %v2451, %v2453
    %v2457 = vadd.f32 %v2456, 1e-07
    %v2458 = vrcp.pop %v2457
    %v2459 = vmul.f32 %v2455, %v2458
    %v2460 = vsub.f32 1.0, %v2459
    %v2461 = vadd.f32 %v2063, %v2460
    %s2462 = scalar_lea.vmem [#allocation6], 96
    %v2463 = vld [vmem:[%s2462] sm:$0xff]
    %v2464 = vld [vmem:[%s2462 + $0x8] sm:$0xff]
    %s2465 = scalar_lea.vmem [#allocation9], 96
    %v2466 = vld [vmem:[%s2465] sm:$0xff]
    %v2467 = vld [vmem:[%s2465 + $0x8] sm:$0xff]
    %v2468 = vand.u32 2147483647, %v2463
    %v2469 = vand.u32 2147483647, %v2464
    %v2470 = vsub.f32 0.0, %v2468
    %v2471 = vsub.f32 0.0, %v2469
    %v2472 = vmul.f32 %v2470, 1.442695
    %v2473 = vpow.pop %v2472
    %v2474 = vmul.f32 %v2471, 1.442695
    %v2475 = vpow.pop %v2474
    %v2476 = vadd.f32 %v2473, 1.0
    %v2477 = vadd.f32 %v2475, 1.0
    %v2478 = vrcp.pop %v2476
    %v2479 = vmul.f32 1.0, %v2478
    %v2480 = vrcp.pop %v2477
    %v2481 = vmul.f32 1.0, %v2480
    %vm2482 = vcmp.ge.f32.partialorder %v2463, 0.0
    %vm2483 = vcmp.ge.f32.partialorder %v2464, 0.0
    %v2484 = vmul.f32 %v2473, %v2479
    %v2485 = vmul.f32 %v2475, %v2481
    %v2486 = vsel %vm2482, %v2479, %v2484
    %v2487 = vsel %vm2483, %v2481, %v2485
    %v2488 = vmax.f32 %v2463, 0.0
    %v2489 = vmax.f32 %v2464, 0.0
    %v2490 = vmul.f32 %v2463, %v2466
    %v2491 = vmul.f32 %v2464, %v2467
    %v2492 = vsub.f32 %v2488, %v2490
    %v2493 = vsub.f32 %v2489, %v2491
    %v2494 = vlog2.pop %v2476
    %v2495 = vmul.f32 %v2494, 0.6931472
    %v2496 = vlog2.pop %v2477
    %v2497 = vmul.f32 %v2496, 0.6931472
    %v2498 = vadd.f32 %v2492, %v2495
    %v2499 = vadd.f32 %v2493, %v2497
    %v2500 = vmul.f32 %v2486, %v2466
    %v2501 = vmul.f32 %v2487, %v2467
    %v2502 = vadd.f32 %v2104, %v2500
    %v2503 = vadd.f32 %v2105, %v2501
    %v2504 = vadd.f32 %v2486, %v2466
    %v2505 = vadd.f32 %v2487, %v2467
    %v2506 = vadd.f32 %v2108, %v2504
    %v2507 = vadd.f32 %v2109, %v2505
    %v2508 = vadd.f32 %v2110, %v2498
    %v2509 = vadd.f32 %v2111, %v2499
    %v2510 = vsub.f32 1.0, %v2466
    %v2511 = vsub.f32 1.0, %v2467
    %v2512 = vsub.f32 1.0, %v2486
    %v2513 = vsub.f32 1.0, %v2487
    %2514 = vrot.lane.b32.xlu0 %v2510, 16
    %v2515 = vpop.permute.xlu0 %2514
    %v2516 = vsel %vm108, %v2515, %v2510
    %2517 = vrot.lane.b32.xlu0 %v2511, 16
    %v2518 = vpop.permute.xlu0 %2517
    %v2519 = vsel %vm108, %v2518, %v2511
    %2520 = vrot.lane.b32.xlu0 %v2516, 16
    %v2521 = vpop.permute.xlu0 %2520
    %2522 = vrot.lane.b32.xlu0 %v2519, 16
    %v2523 = vpop.permute.xlu0 %2522
    %v2524 = vsel %vm108, %v2521, %v2510
    %v2525 = vsel %vm108, %v2523, %v2511
    %2528 = vrot.lane.b32.xlu0 %v2524, 127
    %v2529 = vpop.permute.xlu0 %2528
    %2530 = vrot.lane.b32.xlu0 %v2525, 127
    %v2531 = vpop.permute.xlu0 %2530
    %v2534 = vsel %vm121, %v2529, 0.0
    %v2535 = vsel %vm121, %v2531, 0.0
    %v2536 = vmax.f32 %v2510, %v2534
    %v2537 = vmax.f32 %v2511, %v2535
    %2538 = vrot.lane.b32.xlu0 %v2524, 113
    %v2539 = vpop.permute.xlu0 %2538
    %2540 = vrot.lane.b32.xlu0 %v2525, 113
    %v2541 = vpop.permute.xlu0 %2540
    %v2544 = vsel %vm134, %v2539, 0.0
    %v2545 = vsel %vm134, %v2541, 0.0
    %v2546 = vmax.f32 %v2536, %v2544
    %v2547 = vmax.f32 %v2537, %v2545
    %v2548 = vrot.slane %v2546, 1
    %v2549 = vrot.slane %v2547, 1
    %v2550 = vsel %vm147, %v2548, %v2549
    %v2551 = vsel %vm147, %v2549, %v2548
    %v2552 = vsel %vm150, %v2550, 0.0
    %v2553 = vsel %vm151, %v2551, 0.0
    %v2554 = vmax.f32 %v2546, %v2552
    %v2555 = vmax.f32 %v2547, %v2553
    %v2556 = vrot.slane %v2546, 7
    %v2557 = vrot.slane %v2547, 7
    %v2558 = vsel %vm158, %v2556, %v2557
    %v2559 = vsel %vm158, %v2557, %v2556
    %v2560 = vsel %vm161, %v2559, 0.0
    %v2561 = vsel %vm162, %v2558, 0.0
    %v2562 = vmax.f32 %v2554, %v2560
    %v2563 = vmax.f32 %v2555, %v2561
    %v2564 = vsub.f32 %v2562, %v2510
    %v2565 = vsub.f32 %v2563, %v2511
    %2566 = vrot.lane.b32.xlu0 %v2512, 16
    %v2567 = vpop.permute.xlu0 %2566
    %v2568 = vsel %vm108, %v2567, %v2512
    %2569 = vrot.lane.b32.xlu0 %v2513, 16
    %v2570 = vpop.permute.xlu0 %2569
    %v2571 = vsel %vm108, %v2570, %v2513
    %2572 = vrot.lane.b32.xlu0 %v2568, 16
    %v2573 = vpop.permute.xlu0 %2572
    %2574 = vrot.lane.b32.xlu0 %v2571, 16
    %v2575 = vpop.permute.xlu0 %2574
    %v2576 = vsel %vm108, %v2573, %v2512
    %v2577 = vsel %vm108, %v2575, %v2513
    %2580 = vrot.lane.b32.xlu0 %v2576, 127
    %v2581 = vpop.permute.xlu0 %2580
    %2582 = vrot.lane.b32.xlu0 %v2577, 127
    %v2583 = vpop.permute.xlu0 %2582
    %v2586 = vsel %vm121, %v2581, 0.0
    %v2587 = vsel %vm121, %v2583, 0.0
    %v2588 = vmax.f32 %v2512, %v2586
    %v2589 = vmax.f32 %v2513, %v2587
    %2590 = vrot.lane.b32.xlu0 %v2576, 113
    %v2591 = vpop.permute.xlu0 %2590
    %2592 = vrot.lane.b32.xlu0 %v2577, 113
    %v2593 = vpop.permute.xlu0 %2592
    %v2596 = vsel %vm134, %v2591, 0.0
    %v2597 = vsel %vm134, %v2593, 0.0
    %v2598 = vmax.f32 %v2588, %v2596
    %v2599 = vmax.f32 %v2589, %v2597
    %v2600 = vrot.slane %v2598, 1
    %v2601 = vrot.slane %v2599, 1
    %v2602 = vsel %vm147, %v2600, %v2601
    %v2603 = vsel %vm147, %v2601, %v2600
    %v2604 = vsel %vm150, %v2602, 0.0
    %v2605 = vsel %vm151, %v2603, 0.0
    %v2606 = vmax.f32 %v2598, %v2604
    %v2607 = vmax.f32 %v2599, %v2605
    %v2608 = vrot.slane %v2598, 7
    %v2609 = vrot.slane %v2599, 7
    %v2610 = vsel %vm158, %v2608, %v2609
    %v2611 = vsel %vm158, %v2609, %v2608
    %v2612 = vsel %vm161, %v2611, 0.0
    %v2613 = vsel %vm162, %v2610, 0.0
    %v2614 = vmax.f32 %v2606, %v2612
    %v2615 = vmax.f32 %v2607, %v2613
    %v2616 = vsub.f32 %v2614, %v2512
    %v2617 = vsub.f32 %v2615, %v2513
    %2618 = vrot.lane.b32.xlu0 %v2564, 16
    %v2619 = vpop.permute.xlu0 %2618
    %v2620 = vsel %vm108, %v2619, %v2564
    %2621 = vrot.lane.b32.xlu0 %v2565, 16
    %v2622 = vpop.permute.xlu0 %2621
    %v2623 = vsel %vm108, %v2622, %v2565
    %2624 = vrot.lane.b32.xlu0 %v2620, 16
    %v2625 = vpop.permute.xlu0 %2624
    %2626 = vrot.lane.b32.xlu0 %v2623, 16
    %v2627 = vpop.permute.xlu0 %2626
    %v2628 = vsel %vm108, %v2625, %v2564
    %v2629 = vsel %vm108, %v2627, %v2565
    %2632 = vrot.lane.b32.xlu0 %v2628, 127
    %v2633 = vpop.permute.xlu0 %2632
    %2634 = vrot.lane.b32.xlu0 %v2629, 127
    %v2635 = vpop.permute.xlu0 %2634
    %v2638 = vsel %vm121, %v2633, 0.0
    %v2639 = vsel %vm121, %v2635, 0.0
    %v2640 = vmax.f32 %v2564, %v2638
    %v2641 = vmax.f32 %v2565, %v2639
    %2642 = vrot.lane.b32.xlu0 %v2628, 113
    %v2643 = vpop.permute.xlu0 %2642
    %2644 = vrot.lane.b32.xlu0 %v2629, 113
    %v2645 = vpop.permute.xlu0 %2644
    %v2648 = vsel %vm134, %v2643, 0.0
    %v2649 = vsel %vm134, %v2645, 0.0
    %v2650 = vmax.f32 %v2640, %v2648
    %v2651 = vmax.f32 %v2641, %v2649
    %2652 = vrot.lane.b32.xlu0 %v2628, 126
    %v2653 = vpop.permute.xlu0 %2652
    %2654 = vrot.lane.b32.xlu0 %v2629, 126
    %v2655 = vpop.permute.xlu0 %2654
    %v2658 = vsel %vm255, %v2653, 0.0
    %v2659 = vsel %vm255, %v2655, 0.0
    %v2660 = vmax.f32 %v2650, %v2658
    %v2661 = vmax.f32 %v2651, %v2659
    %2662 = vrot.lane.b32.xlu0 %v2628, 114
    %v2663 = vpop.permute.xlu0 %2662
    %2664 = vrot.lane.b32.xlu0 %v2629, 114
    %v2665 = vpop.permute.xlu0 %2664
    %v2668 = vsel %vm266, %v2663, 0.0
    %v2669 = vsel %vm266, %v2665, 0.0
    %v2670 = vmax.f32 %v2660, %v2668
    %v2671 = vmax.f32 %v2661, %v2669
    %v2672 = vrot.slane %v2670, 1
    %v2673 = vrot.slane %v2671, 1
    %v2674 = vsel %vm147, %v2672, %v2673
    %v2675 = vsel %vm147, %v2673, %v2672
    %v2676 = vsel %vm150, %v2674, 0.0
    %v2677 = vsel %vm151, %v2675, 0.0
    %v2678 = vmax.f32 %v2670, %v2676
    %v2679 = vmax.f32 %v2671, %v2677
    %v2680 = vrot.slane %v2670, 7
    %v2681 = vrot.slane %v2671, 7
    %v2682 = vsel %vm158, %v2680, %v2681
    %v2683 = vsel %vm158, %v2681, %v2680
    %v2684 = vsel %vm161, %v2683, 0.0
    %v2685 = vsel %vm162, %v2682, 0.0
    %v2686 = vmax.f32 %v2678, %v2684
    %v2687 = vmax.f32 %v2679, %v2685
    %v2688 = vrot.slane %v2670, 2
    %v2689 = vrot.slane %v2671, 2
    %v2690 = vsel %vm295, %v2688, %v2689
    %v2691 = vsel %vm295, %v2689, %v2688
    %v2692 = vsel %vm298, %v2690, 0.0
    %v2693 = vsel %vm299, %v2691, 0.0
    %v2694 = vmax.f32 %v2686, %v2692
    %v2695 = vmax.f32 %v2687, %v2693
    %v2696 = vrot.slane %v2670, 6
    %v2697 = vrot.slane %v2671, 6
    %v2698 = vsel %vm306, %v2696, %v2697
    %v2699 = vsel %vm306, %v2697, %v2696
    %v2700 = vsel %vm309, %v2699, 0.0
    %v2701 = vsel %vm310, %v2698, 0.0
    %v2702 = vmax.f32 %v2694, %v2700
    %v2703 = vmax.f32 %v2695, %v2701
    %2704 = vrot.lane.b32.xlu0 %v2616, 16
    %v2705 = vpop.permute.xlu0 %2704
    %v2706 = vsel %vm108, %v2705, %v2616
    %2707 = vrot.lane.b32.xlu0 %v2617, 16
    %v2708 = vpop.permute.xlu0 %2707
    %v2709 = vsel %vm108, %v2708, %v2617
    %2710 = vrot.lane.b32.xlu0 %v2706, 16
    %v2711 = vpop.permute.xlu0 %2710
    %2712 = vrot.lane.b32.xlu0 %v2709, 16
    %v2713 = vpop.permute.xlu0 %2712
    %v2714 = vsel %vm108, %v2711, %v2616
    %v2715 = vsel %vm108, %v2713, %v2617
    %2718 = vrot.lane.b32.xlu0 %v2714, 127
    %v2719 = vpop.permute.xlu0 %2718
    %2720 = vrot.lane.b32.xlu0 %v2715, 127
    %v2721 = vpop.permute.xlu0 %2720
    %v2724 = vsel %vm121, %v2719, 0.0
    %v2725 = vsel %vm121, %v2721, 0.0
    %v2726 = vmax.f32 %v2616, %v2724
    %v2727 = vmax.f32 %v2617, %v2725
    %2728 = vrot.lane.b32.xlu0 %v2714, 113
    %v2729 = vpop.permute.xlu0 %2728
    %2730 = vrot.lane.b32.xlu0 %v2715, 113
    %v2731 = vpop.permute.xlu0 %2730
    %v2734 = vsel %vm134, %v2729, 0.0
    %v2735 = vsel %vm134, %v2731, 0.0
    %v2736 = vmax.f32 %v2726, %v2734
    %v2737 = vmax.f32 %v2727, %v2735
    %2738 = vrot.lane.b32.xlu0 %v2714, 126
    %v2739 = vpop.permute.xlu0 %2738
    %2740 = vrot.lane.b32.xlu0 %v2715, 126
    %v2741 = vpop.permute.xlu0 %2740
    %v2744 = vsel %vm255, %v2739, 0.0
    %v2745 = vsel %vm255, %v2741, 0.0
    %v2746 = vmax.f32 %v2736, %v2744
    %v2747 = vmax.f32 %v2737, %v2745
    %2748 = vrot.lane.b32.xlu0 %v2714, 114
    %v2749 = vpop.permute.xlu0 %2748
    %2750 = vrot.lane.b32.xlu0 %v2715, 114
    %v2751 = vpop.permute.xlu0 %2750
    %v2754 = vsel %vm266, %v2749, 0.0
    %v2755 = vsel %vm266, %v2751, 0.0
    %v2756 = vmax.f32 %v2746, %v2754
    %v2757 = vmax.f32 %v2747, %v2755
    %v2758 = vrot.slane %v2756, 1
    %v2759 = vrot.slane %v2757, 1
    %v2760 = vsel %vm147, %v2758, %v2759
    %v2761 = vsel %vm147, %v2759, %v2758
    %v2762 = vsel %vm150, %v2760, 0.0
    %v2763 = vsel %vm151, %v2761, 0.0
    %v2764 = vmax.f32 %v2756, %v2762
    %v2765 = vmax.f32 %v2757, %v2763
    %v2766 = vrot.slane %v2756, 7
    %v2767 = vrot.slane %v2757, 7
    %v2768 = vsel %vm158, %v2766, %v2767
    %v2769 = vsel %vm158, %v2767, %v2766
    %v2770 = vsel %vm161, %v2769, 0.0
    %v2771 = vsel %vm162, %v2768, 0.0
    %v2772 = vmax.f32 %v2764, %v2770
    %v2773 = vmax.f32 %v2765, %v2771
    %v2774 = vrot.slane %v2756, 2
    %v2775 = vrot.slane %v2757, 2
    %v2776 = vsel %vm295, %v2774, %v2775
    %v2777 = vsel %vm295, %v2775, %v2774
    %v2778 = vsel %vm298, %v2776, 0.0
    %v2779 = vsel %vm299, %v2777, 0.0
    %v2780 = vmax.f32 %v2772, %v2778
    %v2781 = vmax.f32 %v2773, %v2779
    %v2782 = vrot.slane %v2756, 6
    %v2783 = vrot.slane %v2757, 6
    %v2784 = vsel %vm306, %v2782, %v2783
    %v2785 = vsel %vm306, %v2783, %v2782
    %v2786 = vsel %vm309, %v2785, 0.0
    %v2787 = vsel %vm310, %v2784, 0.0
    %v2788 = vmax.f32 %v2780, %v2786
    %v2789 = vmax.f32 %v2781, %v2787
    %v2790 = vmul.f32 %v2616, %v2702
    %v2791 = vmul.f32 %v2617, %v2703
    %v2792 = vsel %vm403, %v2790, 0.0
    %v2793 = vsel %vm403, %v2791, 0.0
    %v2794 = vadd.f32 %v2792, %v2793
    %2795 = vadd.xlane.f32.xlu0 %v2794
    %v2796 = vpop.xlane.xlu0 %2795
    %v2797 = vrot.slane %v2796, 4
    %v2798 = vadd.f32 %v2796, %v2797
    %v2799 = vrot.slane %v2798, 2
    %v2800 = vadd.f32 %v2798, %v2799
    %v2801 = vrot.slane %v2800, 1
    %v2802 = vadd.f32 %v2800, %v2801
    %s2803 = vtos %v2802
    %v2804 = vstv %s2803
    %v2805 = vsel %vm403, %v2616, 0.0
    %v2806 = vsel %vm403, %v2617, 0.0
    %v2807 = vadd.f32 %v2805, %v2806
    %2808 = vadd.xlane.f32.xlu0 %v2807
    %v2809 = vpop.xlane.xlu0 %2808
    %v2810 = vrot.slane %v2809, 4
    %v2811 = vadd.f32 %v2809, %v2810
    %v2812 = vrot.slane %v2811, 2
    %v2813 = vadd.f32 %v2811, %v2812
    %v2814 = vrot.slane %v2813, 1
    %v2815 = vadd.f32 %v2813, %v2814
    %s2816 = vtos %v2815
    %v2817 = vstv %s2816
    %v2818 = vadd.f32 %v2817, 1e-07
    %v2819 = vmul.f32 %v2788, %v2564
    %v2820 = vmul.f32 %v2789, %v2565
    %v2821 = vsel %vm403, %v2819, 0.0
    %v2822 = vsel %vm403, %v2820, 0.0
    %v2823 = vadd.f32 %v2821, %v2822
    %2824 = vadd.xlane.f32.xlu0 %v2823
    %v2825 = vpop.xlane.xlu0 %2824
    %v2826 = vrot.slane %v2825, 4
    %v2827 = vadd.f32 %v2825, %v2826
    %v2828 = vrot.slane %v2827, 2
    %v2829 = vadd.f32 %v2827, %v2828
    %v2830 = vrot.slane %v2829, 1
    %v2831 = vadd.f32 %v2829, %v2830
    %s2832 = vtos %v2831
    %v2833 = vstv %s2832
    %v2834 = vsel %vm403, %v2564, 0.0
    %v2835 = vsel %vm403, %v2565, 0.0
    %v2836 = vadd.f32 %v2834, %v2835
    %2837 = vadd.xlane.f32.xlu0 %v2836
    %v2838 = vpop.xlane.xlu0 %2837
    %v2839 = vrot.slane %v2838, 4
    %v2840 = vadd.f32 %v2838, %v2839
    %v2841 = vrot.slane %v2840, 2
    %v2842 = vadd.f32 %v2840, %v2841
    %v2843 = vrot.slane %v2842, 1
    %v2844 = vadd.f32 %v2842, %v2843
    %s2845 = vtos %v2844
    %v2846 = vstv %s2845
    %v2847 = vadd.f32 %v2846, 1e-07
    %v2848 = vrcp.pop %v2818
    %v2849 = vmul.f32 %v2804, %v2848
    %v2850 = vrcp.pop %v2847
    %v2851 = vmul.f32 %v2833, %v2850
    %v2852 = vmul.f32 %v2849, 2.0
    %v2853 = vmul.f32 %v2852, %v2851
    %v2854 = vadd.f32 %v2849, %v2851
    %v2855 = vadd.f32 %v2854, 1e-07
    %v2856 = vrcp.pop %v2855
    %v2857 = vmul.f32 %v2853, %v2856
    %v2858 = vsub.f32 1.0, %v2857
    %v2859 = vadd.f32 %v2461, %v2858
    %s2860 = scalar_lea.vmem [#allocation6], 112
    %v2861 = vld [vmem:[%s2860] sm:$0xff]
    %v2862 = vld [vmem:[%s2860 + $0x8] sm:$0xff]
    %s2863 = scalar_lea.vmem [#allocation9], 112
    %v2864 = vld [vmem:[%s2863] sm:$0xff]
    %v2865 = vld [vmem:[%s2863 + $0x8] sm:$0xff]
    %v2866 = vand.u32 2147483647, %v2861
    %v2867 = vand.u32 2147483647, %v2862
    %v2868 = vsub.f32 0.0, %v2866
    %v2869 = vsub.f32 0.0, %v2867
    %v2870 = vmul.f32 %v2868, 1.442695
    %v2871 = vpow.pop %v2870
    %v2872 = vmul.f32 %v2869, 1.442695
    %v2873 = vpow.pop %v2872
    %v2874 = vadd.f32 %v2871, 1.0
    %v2875 = vadd.f32 %v2873, 1.0
    %v2876 = vrcp.pop %v2874
    %v2877 = vmul.f32 1.0, %v2876
    %v2878 = vrcp.pop %v2875
    %v2879 = vmul.f32 1.0, %v2878
    %vm2880 = vcmp.ge.f32.partialorder %v2861, 0.0
    %vm2881 = vcmp.ge.f32.partialorder %v2862, 0.0
    %v2882 = vmul.f32 %v2871, %v2877
    %v2883 = vmul.f32 %v2873, %v2879
    %v2884 = vsel %vm2880, %v2877, %v2882
    %v2885 = vsel %vm2881, %v2879, %v2883
    %v2886 = vmax.f32 %v2861, 0.0
    %v2887 = vmax.f32 %v2862, 0.0
    %v2888 = vmul.f32 %v2861, %v2864
    %v2889 = vmul.f32 %v2862, %v2865
    %v2890 = vsub.f32 %v2886, %v2888
    %v2891 = vsub.f32 %v2887, %v2889
    %v2892 = vlog2.pop %v2874
    %v2893 = vmul.f32 %v2892, 0.6931472
    %v2894 = vlog2.pop %v2875
    %v2895 = vmul.f32 %v2894, 0.6931472
    %v2896 = vadd.f32 %v2890, %v2893
    %v2897 = vadd.f32 %v2891, %v2895
    %v2898 = vmul.f32 %v2884, %v2864
    %v2899 = vmul.f32 %v2885, %v2865
    %v2900 = vadd.f32 %v2502, %v2898
    %v2901 = vadd.f32 %v2503, %v2899
    %v2902 = vadd.f32 %v2884, %v2864
    %v2903 = vadd.f32 %v2885, %v2865
    %v2904 = vadd.f32 %v2506, %v2902
    %v2905 = vadd.f32 %v2507, %v2903
    %v2906 = vadd.f32 %v2508, %v2896
    %v2907 = vadd.f32 %v2509, %v2897
    %v2908 = vsub.f32 1.0, %v2864
    %v2909 = vsub.f32 1.0, %v2865
    %v2910 = vsub.f32 1.0, %v2884
    %v2911 = vsub.f32 1.0, %v2885
    %2912 = vrot.lane.b32.xlu0 %v2908, 16
    %v2913 = vpop.permute.xlu0 %2912
    %v2914 = vsel %vm108, %v2913, %v2908
    %2915 = vrot.lane.b32.xlu0 %v2909, 16
    %v2916 = vpop.permute.xlu0 %2915
    %v2917 = vsel %vm108, %v2916, %v2909
    %2918 = vrot.lane.b32.xlu0 %v2914, 16
    %v2919 = vpop.permute.xlu0 %2918
    %2920 = vrot.lane.b32.xlu0 %v2917, 16
    %v2921 = vpop.permute.xlu0 %2920
    %v2922 = vsel %vm108, %v2919, %v2908
    %v2923 = vsel %vm108, %v2921, %v2909
    %2926 = vrot.lane.b32.xlu0 %v2922, 127
    %v2927 = vpop.permute.xlu0 %2926
    %2928 = vrot.lane.b32.xlu0 %v2923, 127
    %v2929 = vpop.permute.xlu0 %2928
    %v2932 = vsel %vm121, %v2927, 0.0
    %v2933 = vsel %vm121, %v2929, 0.0
    %v2934 = vmax.f32 %v2908, %v2932
    %v2935 = vmax.f32 %v2909, %v2933
    %2936 = vrot.lane.b32.xlu0 %v2922, 113
    %v2937 = vpop.permute.xlu0 %2936
    %2938 = vrot.lane.b32.xlu0 %v2923, 113
    %v2939 = vpop.permute.xlu0 %2938
    %v2942 = vsel %vm134, %v2937, 0.0
    %v2943 = vsel %vm134, %v2939, 0.0
    %v2944 = vmax.f32 %v2934, %v2942
    %v2945 = vmax.f32 %v2935, %v2943
    %v2946 = vrot.slane %v2944, 1
    %v2947 = vrot.slane %v2945, 1
    %v2948 = vsel %vm147, %v2946, %v2947
    %v2949 = vsel %vm147, %v2947, %v2946
    %v2950 = vsel %vm150, %v2948, 0.0
    %v2951 = vsel %vm151, %v2949, 0.0
    %v2952 = vmax.f32 %v2944, %v2950
    %v2953 = vmax.f32 %v2945, %v2951
    %v2954 = vrot.slane %v2944, 7
    %v2955 = vrot.slane %v2945, 7
    %v2956 = vsel %vm158, %v2954, %v2955
    %v2957 = vsel %vm158, %v2955, %v2954
    %v2958 = vsel %vm161, %v2957, 0.0
    %v2959 = vsel %vm162, %v2956, 0.0
    %v2960 = vmax.f32 %v2952, %v2958
    %v2961 = vmax.f32 %v2953, %v2959
    %v2962 = vsub.f32 %v2960, %v2908
    %v2963 = vsub.f32 %v2961, %v2909
    %2964 = vrot.lane.b32.xlu0 %v2910, 16
    %v2965 = vpop.permute.xlu0 %2964
    %v2966 = vsel %vm108, %v2965, %v2910
    %2967 = vrot.lane.b32.xlu0 %v2911, 16
    %v2968 = vpop.permute.xlu0 %2967
    %v2969 = vsel %vm108, %v2968, %v2911
    %2970 = vrot.lane.b32.xlu0 %v2966, 16
    %v2971 = vpop.permute.xlu0 %2970
    %2972 = vrot.lane.b32.xlu0 %v2969, 16
    %v2973 = vpop.permute.xlu0 %2972
    %v2974 = vsel %vm108, %v2971, %v2910
    %v2975 = vsel %vm108, %v2973, %v2911
    %2978 = vrot.lane.b32.xlu0 %v2974, 127
    %v2979 = vpop.permute.xlu0 %2978
    %2980 = vrot.lane.b32.xlu0 %v2975, 127
    %v2981 = vpop.permute.xlu0 %2980
    %v2984 = vsel %vm121, %v2979, 0.0
    %v2985 = vsel %vm121, %v2981, 0.0
    %v2986 = vmax.f32 %v2910, %v2984
    %v2987 = vmax.f32 %v2911, %v2985
    %2988 = vrot.lane.b32.xlu0 %v2974, 113
    %v2989 = vpop.permute.xlu0 %2988
    %2990 = vrot.lane.b32.xlu0 %v2975, 113
    %v2991 = vpop.permute.xlu0 %2990
    %v2994 = vsel %vm134, %v2989, 0.0
    %v2995 = vsel %vm134, %v2991, 0.0
    %v2996 = vmax.f32 %v2986, %v2994
    %v2997 = vmax.f32 %v2987, %v2995
    %v2998 = vrot.slane %v2996, 1
    %v2999 = vrot.slane %v2997, 1
    %v3000 = vsel %vm147, %v2998, %v2999
    %v3001 = vsel %vm147, %v2999, %v2998
    %v3002 = vsel %vm150, %v3000, 0.0
    %v3003 = vsel %vm151, %v3001, 0.0
    %v3004 = vmax.f32 %v2996, %v3002
    %v3005 = vmax.f32 %v2997, %v3003
    %v3006 = vrot.slane %v2996, 7
    %v3007 = vrot.slane %v2997, 7
    %v3008 = vsel %vm158, %v3006, %v3007
    %v3009 = vsel %vm158, %v3007, %v3006
    %v3010 = vsel %vm161, %v3009, 0.0
    %v3011 = vsel %vm162, %v3008, 0.0
    %v3012 = vmax.f32 %v3004, %v3010
    %v3013 = vmax.f32 %v3005, %v3011
    %v3014 = vsub.f32 %v3012, %v2910
    %v3015 = vsub.f32 %v3013, %v2911
    %3016 = vrot.lane.b32.xlu0 %v2962, 16
    %v3017 = vpop.permute.xlu0 %3016
    %v3018 = vsel %vm108, %v3017, %v2962
    %3019 = vrot.lane.b32.xlu0 %v2963, 16
    %v3020 = vpop.permute.xlu0 %3019
    %v3021 = vsel %vm108, %v3020, %v2963
    %3022 = vrot.lane.b32.xlu0 %v3018, 16
    %v3023 = vpop.permute.xlu0 %3022
    %3024 = vrot.lane.b32.xlu0 %v3021, 16
    %v3025 = vpop.permute.xlu0 %3024
    %v3026 = vsel %vm108, %v3023, %v2962
    %v3027 = vsel %vm108, %v3025, %v2963
    %3030 = vrot.lane.b32.xlu0 %v3026, 127
    %v3031 = vpop.permute.xlu0 %3030
    %3032 = vrot.lane.b32.xlu0 %v3027, 127
    %v3033 = vpop.permute.xlu0 %3032
    %v3036 = vsel %vm121, %v3031, 0.0
    %v3037 = vsel %vm121, %v3033, 0.0
    %v3038 = vmax.f32 %v2962, %v3036
    %v3039 = vmax.f32 %v2963, %v3037
    %3040 = vrot.lane.b32.xlu0 %v3026, 113
    %v3041 = vpop.permute.xlu0 %3040
    %3042 = vrot.lane.b32.xlu0 %v3027, 113
    %v3043 = vpop.permute.xlu0 %3042
    %v3046 = vsel %vm134, %v3041, 0.0
    %v3047 = vsel %vm134, %v3043, 0.0
    %v3048 = vmax.f32 %v3038, %v3046
    %v3049 = vmax.f32 %v3039, %v3047
    %3050 = vrot.lane.b32.xlu0 %v3026, 126
    %v3051 = vpop.permute.xlu0 %3050
    %3052 = vrot.lane.b32.xlu0 %v3027, 126
    %v3053 = vpop.permute.xlu0 %3052
    %v3056 = vsel %vm255, %v3051, 0.0
    %v3057 = vsel %vm255, %v3053, 0.0
    %v3058 = vmax.f32 %v3048, %v3056
    %v3059 = vmax.f32 %v3049, %v3057
    %3060 = vrot.lane.b32.xlu0 %v3026, 114
    %v3061 = vpop.permute.xlu0 %3060
    %3062 = vrot.lane.b32.xlu0 %v3027, 114
    %v3063 = vpop.permute.xlu0 %3062
    %v3066 = vsel %vm266, %v3061, 0.0
    %v3067 = vsel %vm266, %v3063, 0.0
    %v3068 = vmax.f32 %v3058, %v3066
    %v3069 = vmax.f32 %v3059, %v3067
    %v3070 = vrot.slane %v3068, 1
    %v3071 = vrot.slane %v3069, 1
    %v3072 = vsel %vm147, %v3070, %v3071
    %v3073 = vsel %vm147, %v3071, %v3070
    %v3074 = vsel %vm150, %v3072, 0.0
    %v3075 = vsel %vm151, %v3073, 0.0
    %v3076 = vmax.f32 %v3068, %v3074
    %v3077 = vmax.f32 %v3069, %v3075
    %v3078 = vrot.slane %v3068, 7
    %v3079 = vrot.slane %v3069, 7
    %v3080 = vsel %vm158, %v3078, %v3079
    %v3081 = vsel %vm158, %v3079, %v3078
    %v3082 = vsel %vm161, %v3081, 0.0
    %v3083 = vsel %vm162, %v3080, 0.0
    %v3084 = vmax.f32 %v3076, %v3082
    %v3085 = vmax.f32 %v3077, %v3083
    %v3086 = vrot.slane %v3068, 2
    %v3087 = vrot.slane %v3069, 2
    %v3088 = vsel %vm295, %v3086, %v3087
    %v3089 = vsel %vm295, %v3087, %v3086
    %v3090 = vsel %vm298, %v3088, 0.0
    %v3091 = vsel %vm299, %v3089, 0.0
    %v3092 = vmax.f32 %v3084, %v3090
    %v3093 = vmax.f32 %v3085, %v3091
    %v3094 = vrot.slane %v3068, 6
    %v3095 = vrot.slane %v3069, 6
    %v3096 = vsel %vm306, %v3094, %v3095
    %v3097 = vsel %vm306, %v3095, %v3094
    %v3098 = vsel %vm309, %v3097, 0.0
    %v3099 = vsel %vm310, %v3096, 0.0
    %v3100 = vmax.f32 %v3092, %v3098
    %v3101 = vmax.f32 %v3093, %v3099
    %3102 = vrot.lane.b32.xlu0 %v3014, 16
    %v3103 = vpop.permute.xlu0 %3102
    %v3104 = vsel %vm108, %v3103, %v3014
    %3105 = vrot.lane.b32.xlu0 %v3015, 16
    %v3106 = vpop.permute.xlu0 %3105
    %v3107 = vsel %vm108, %v3106, %v3015
    %3108 = vrot.lane.b32.xlu0 %v3104, 16
    %v3109 = vpop.permute.xlu0 %3108
    %3110 = vrot.lane.b32.xlu0 %v3107, 16
    %v3111 = vpop.permute.xlu0 %3110
    %v3112 = vsel %vm108, %v3109, %v3014
    %v3113 = vsel %vm108, %v3111, %v3015
    %3116 = vrot.lane.b32.xlu0 %v3112, 127
    %v3117 = vpop.permute.xlu0 %3116
    %3118 = vrot.lane.b32.xlu0 %v3113, 127
    %v3119 = vpop.permute.xlu0 %3118
    %v3122 = vsel %vm121, %v3117, 0.0
    %v3123 = vsel %vm121, %v3119, 0.0
    %v3124 = vmax.f32 %v3014, %v3122
    %v3125 = vmax.f32 %v3015, %v3123
    %3126 = vrot.lane.b32.xlu0 %v3112, 113
    %v3127 = vpop.permute.xlu0 %3126
    %3128 = vrot.lane.b32.xlu0 %v3113, 113
    %v3129 = vpop.permute.xlu0 %3128
    %v3132 = vsel %vm134, %v3127, 0.0
    %v3133 = vsel %vm134, %v3129, 0.0
    %v3134 = vmax.f32 %v3124, %v3132
    %v3135 = vmax.f32 %v3125, %v3133
    %3136 = vrot.lane.b32.xlu0 %v3112, 126
    %v3137 = vpop.permute.xlu0 %3136
    %3138 = vrot.lane.b32.xlu0 %v3113, 126
    %v3139 = vpop.permute.xlu0 %3138
    %v3142 = vsel %vm255, %v3137, 0.0
    %v3143 = vsel %vm255, %v3139, 0.0
    %v3144 = vmax.f32 %v3134, %v3142
    %v3145 = vmax.f32 %v3135, %v3143
    %3146 = vrot.lane.b32.xlu0 %v3112, 114
    %v3147 = vpop.permute.xlu0 %3146
    %3148 = vrot.lane.b32.xlu0 %v3113, 114
    %v3149 = vpop.permute.xlu0 %3148
    %v3152 = vsel %vm266, %v3147, 0.0
    %v3153 = vsel %vm266, %v3149, 0.0
    %v3154 = vmax.f32 %v3144, %v3152
    %v3155 = vmax.f32 %v3145, %v3153
    %v3156 = vrot.slane %v3154, 1
    %v3157 = vrot.slane %v3155, 1
    %v3158 = vsel %vm147, %v3156, %v3157
    %v3159 = vsel %vm147, %v3157, %v3156
    %v3160 = vsel %vm150, %v3158, 0.0
    %v3161 = vsel %vm151, %v3159, 0.0
    %v3162 = vmax.f32 %v3154, %v3160
    %v3163 = vmax.f32 %v3155, %v3161
    %v3164 = vrot.slane %v3154, 7
    %v3165 = vrot.slane %v3155, 7
    %v3166 = vsel %vm158, %v3164, %v3165
    %v3167 = vsel %vm158, %v3165, %v3164
    %v3168 = vsel %vm161, %v3167, 0.0
    %v3169 = vsel %vm162, %v3166, 0.0
    %v3170 = vmax.f32 %v3162, %v3168
    %v3171 = vmax.f32 %v3163, %v3169
    %v3172 = vrot.slane %v3154, 2
    %v3173 = vrot.slane %v3155, 2
    %v3174 = vsel %vm295, %v3172, %v3173
    %v3175 = vsel %vm295, %v3173, %v3172
    %v3176 = vsel %vm298, %v3174, 0.0
    %v3177 = vsel %vm299, %v3175, 0.0
    %v3178 = vmax.f32 %v3170, %v3176
    %v3179 = vmax.f32 %v3171, %v3177
    %v3180 = vrot.slane %v3154, 6
    %v3181 = vrot.slane %v3155, 6
    %v3182 = vsel %vm306, %v3180, %v3181
    %v3183 = vsel %vm306, %v3181, %v3180
    %v3184 = vsel %vm309, %v3183, 0.0
    %v3185 = vsel %vm310, %v3182, 0.0
    %v3186 = vmax.f32 %v3178, %v3184
    %v3187 = vmax.f32 %v3179, %v3185
    %v3188 = vmul.f32 %v3014, %v3100
    %v3189 = vmul.f32 %v3015, %v3101
    %v3190 = vsel %vm403, %v3188, 0.0
    %v3191 = vsel %vm403, %v3189, 0.0
    %v3192 = vadd.f32 %v3190, %v3191
    %3193 = vadd.xlane.f32.xlu0 %v3192
    %v3194 = vpop.xlane.xlu0 %3193
    %v3195 = vrot.slane %v3194, 4
    %v3196 = vadd.f32 %v3194, %v3195
    %v3197 = vrot.slane %v3196, 2
    %v3198 = vadd.f32 %v3196, %v3197
    %v3199 = vrot.slane %v3198, 1
    %v3200 = vadd.f32 %v3198, %v3199
    %s3201 = vtos %v3200
    %v3202 = vstv %s3201
    %v3203 = vsel %vm403, %v3014, 0.0
    %v3204 = vsel %vm403, %v3015, 0.0
    %v3205 = vadd.f32 %v3203, %v3204
    %3206 = vadd.xlane.f32.xlu0 %v3205
    %v3207 = vpop.xlane.xlu0 %3206
    %v3208 = vrot.slane %v3207, 4
    %v3209 = vadd.f32 %v3207, %v3208
    %v3210 = vrot.slane %v3209, 2
    %v3211 = vadd.f32 %v3209, %v3210
    %v3212 = vrot.slane %v3211, 1
    %v3213 = vadd.f32 %v3211, %v3212
    %s3214 = vtos %v3213
    %v3215 = vstv %s3214
    %v3216 = vadd.f32 %v3215, 1e-07
    %v3217 = vmul.f32 %v3186, %v2962
    %v3218 = vmul.f32 %v3187, %v2963
    %v3219 = vsel %vm403, %v3217, 0.0
    %v3220 = vsel %vm403, %v3218, 0.0
    %v3221 = vadd.f32 %v3219, %v3220
    %3222 = vadd.xlane.f32.xlu0 %v3221
    %v3223 = vpop.xlane.xlu0 %3222
    %v3224 = vrot.slane %v3223, 4
    %v3225 = vadd.f32 %v3223, %v3224
    %v3226 = vrot.slane %v3225, 2
    %v3227 = vadd.f32 %v3225, %v3226
    %v3228 = vrot.slane %v3227, 1
    %v3229 = vadd.f32 %v3227, %v3228
    %s3230 = vtos %v3229
    %v3231 = vstv %s3230
    %v3232 = vsel %vm403, %v2962, 0.0
    %v3233 = vsel %vm403, %v2963, 0.0
    %v3234 = vadd.f32 %v3232, %v3233
    %3235 = vadd.xlane.f32.xlu0 %v3234
    %v3236 = vpop.xlane.xlu0 %3235
    %v3237 = vrot.slane %v3236, 4
    %v3238 = vadd.f32 %v3236, %v3237
    %v3239 = vrot.slane %v3238, 2
    %v3240 = vadd.f32 %v3238, %v3239
    %v3241 = vrot.slane %v3240, 1
    %v3242 = vadd.f32 %v3240, %v3241
    %s3243 = vtos %v3242
    %v3244 = vstv %s3243
    %v3245 = vadd.f32 %v3244, 1e-07
    %v3246 = vrcp.pop %v3216
    %v3247 = vmul.f32 %v3202, %v3246
    %v3248 = vrcp.pop %v3245
    %v3249 = vmul.f32 %v3231, %v3248
    %v3250 = vmul.f32 %v3247, 2.0
    %v3251 = vmul.f32 %v3250, %v3249
    %v3252 = vadd.f32 %v3247, %v3249
    %v3253 = vadd.f32 %v3252, 1e-07
    %v3254 = vrcp.pop %v3253
    %v3255 = vmul.f32 %v3251, %v3254
    %v3256 = vsub.f32 1.0, %v3255
    %v3257 = vadd.f32 %v2859, %v3256
    %v3258 = vld [vmem:[#allocation2] sm:$0xff]
    %v3259 = vld [vmem:[#allocation2 + $0x8] sm:$0xff]
    %v3260 = vadd.f32 %v3258, %v2900
    %v3261 = vadd.f32 %v3259, %v2901
    %3262 = vst.msk [vmem:[#allocation2] sm:$0xff] %vm403, %v3260
    %3263 = vst.msk [vmem:[#allocation2 + $0x8] sm:$0xff] %vm403, %v3261
    %v3264 = vld [vmem:[#allocation3] sm:$0xff]
    %v3265 = vld [vmem:[#allocation3 + $0x8] sm:$0xff]
    %v3266 = vadd.f32 %v3264, %v2904
    %v3267 = vadd.f32 %v3265, %v2905
    %3268 = vst.msk [vmem:[#allocation3] sm:$0xff] %vm403, %v3266
    %3269 = vst.msk [vmem:[#allocation3 + $0x8] sm:$0xff] %vm403, %v3267
    %v3270 = vld [vmem:[#allocation4] sm:$0xff]
    %v3271 = vld [vmem:[#allocation4 + $0x8] sm:$0xff]
    %v3272 = vadd.f32 %v3270, %v2906
    %v3273 = vadd.f32 %v3271, %v2907
    %3274 = vst.msk [vmem:[#allocation4] sm:$0xff] %vm403, %v3272
    %3275 = vst.msk [vmem:[#allocation4 + $0x8] sm:$0xff] %vm403, %v3273
    %v3276 = vld [vmem:[#allocation5] sm:$0x1]
    %v3277 = vadd.f32 %v3276, %v3257
    %vm3278 = vcmask 0
    %3279 = vst.msk [vmem:[#allocation5] sm:$0x1] %vm3278, %v3277
    // Predicated region
    $region22: #{tpu_custom_call.1} parent=1 // pred_check
      %p3280 = pneg %p40
    $region23: #{tpu_custom_call.1} parent=1 // pred_check_branch
      %3282 = sbr.rel (%p3280) target = $region25
    $region24: #{tpu_custom_call.1} parent=1 // pred_region
      %v3283 = vld [vmem:[#allocation2] sm:$0xff]
      %v3284 = vld [vmem:[#allocation2 + $0x8] sm:$0xff]
      %v3285 = vsel %vm403, %v3283, 0.0
      %v3286 = vsel %vm403, %v3284, 0.0
      %v3287 = vadd.f32 %v3285, %v3286
      %3288 = vadd.xlane.f32.xlu0 %v3287
      %v3289 = vpop.xlane.xlu0 %3288
      %v3290 = vrot.slane %v3289, 4
      %v3291 = vadd.f32 %v3289, %v3290
      %v3292 = vrot.slane %v3291, 2
      %v3293 = vadd.f32 %v3291, %v3292
      %v3294 = vrot.slane %v3293, 1
      %v3295 = vadd.f32 %v3293, %v3294
      %s3296 = vtos %v3295
      %v3297 = vstv %s3296
      %v3298 = vld [vmem:[#allocation3] sm:$0xff]
      %v3299 = vld [vmem:[#allocation3 + $0x8] sm:$0xff]
      %v3300 = vsel %vm403, %v3298, 0.0
      %v3301 = vsel %vm403, %v3299, 0.0
      %v3302 = vadd.f32 %v3300, %v3301
      %3303 = vadd.xlane.f32.xlu0 %v3302
      %v3304 = vpop.xlane.xlu0 %3303
      %v3305 = vrot.slane %v3304, 4
      %v3306 = vadd.f32 %v3304, %v3305
      %v3307 = vrot.slane %v3306, 2
      %v3308 = vadd.f32 %v3306, %v3307
      %v3309 = vrot.slane %v3308, 1
      %v3310 = vadd.f32 %v3308, %v3309
      %s3311 = vtos %v3310
      %v3312 = vstv %s3311
      %v3313 = vld [vmem:[#allocation4] sm:$0xff]
      %v3314 = vld [vmem:[#allocation4 + $0x8] sm:$0xff]
      %v3315 = vsel %vm403, %v3313, 0.0
      %v3316 = vsel %vm403, %v3314, 0.0
      %v3317 = vadd.f32 %v3315, %v3316
      %3318 = vadd.xlane.f32.xlu0 %v3317
      %v3319 = vpop.xlane.xlu0 %3318
      %v3320 = vrot.slane %v3319, 4
      %v3321 = vadd.f32 %v3319, %v3320
      %v3322 = vrot.slane %v3321, 2
      %v3323 = vadd.f32 %v3321, %v3322
      %v3324 = vrot.slane %v3323, 1
      %v3325 = vadd.f32 %v3323, %v3324
      %s3326 = vtos %v3325
      %v3327 = vstv %s3326
      %v3328 = vmul.f32 %v3297, 2.0
      %v3329 = vadd.f32 %v3328, 1.0
      %v3330 = vadd.f32 %v3312, 1.0
      %v3331 = vrcp.pop %v3330
      %v3332 = vmul.f32 %v3329, %v3331
      %v3333 = vsub.f32 1.0, %v3332
      %v3334 = vrcp.pop 2048.0
      %v3335 = vmul.f32 %v3327, %v3334
      %v3336 = vadd.f32 %v3335, %v3333
      %v3337 = vld [vmem:[#allocation5] sm:$0x1]
      %v3338 = vrcp.pop 8.0
      %v3339 = vmul.f32 %v3337, %v3338
      %v3340 = vmul.f32 %v3336, 0.5
      %v3341 = vmul.f32 %v3339, 0.5
      %v3342 = vadd.f32 %v3340, %v3341
      %3343 = vst.msk [vmem:[#allocation11] sm:$0x1] %vm3278, %v3342
    $region25: #{tpu_custom_call.1} parent=1 // pred_fallthru
      _
    // Predicated region
    $region26: #{tpu_custom_call.1} parent=1 // pred_check
      _
    $region27: #{tpu_custom_call.1} parent=1 // pred_check_branch
      %3345 = sbr.rel (0) target = $region29
    $region28: #{tpu_custom_call.1} parent=1 // pred_region
      %s3347 = ssub.s32 16, 16
      %3348 = vsyncadd [#allocation8], %s3347
      %s3350 = sshll.u32 [#allocation11], 4
      %s3351 = int_to_ptr.vmem [resolvable:$true] %s3350
      %3353 = dma.vmem_to_hbm [thread:$0]  %s3351, 16, %s2, [#allocation8]
    $region29: #{tpu_custom_call.1} parent=1 // pred_fallthru
      _
    // Predicated region
    $region30: #{tpu_custom_call.1} parent=1 // pred_check
      _
    $region31: #{tpu_custom_call.1} parent=1 // pred_check_branch
      %3355 = sbr.rel (0) target = $region33
    $region32: #{tpu_custom_call.1} parent=1 // pred_region
      %3356 = dma.done [#allocation8], 16
    $region33: #{tpu_custom_call.1} parent=1 // pred_fallthru
      _
    %3357 = vsyncpa [#allocation7], 1
    %3358 = vsyncpa [#allocation10], 1
    %3359 = vsyncpa [#allocation8], 1

</llo_original>
